<compile_context>
chip_gen: v7x
topology: tpu7x:2x2x1
jax: 0.10.0
libtpu: 0.0.40
codegen_flags: <defaults>
</compile_context>

<pallas_src>
import math

import jax
import jax.numpy as jnp
from jax.experimental import pallas as pl
from jax.experimental.pallas import tpu as pltpu


# ----------------------------------------------------------------------------
# In-kernel helpers (traced inline into the fused kernel body).
# ----------------------------------------------------------------------------
def _conv3x3_relu_pool(x, w_mat, b_row):
    """x: (B, H, W, C) f32; w_mat: (9*C, Cout); b_row: (1, Cout).

    Returns (B, H//2, W//2, Cout) f32 = maxpool2x2(relu(conv3x3_same(x) + b)).
    """
    B, H, W, C = x.shape
    Cout = w_mat.shape[1]

    # Zero halo padding built in VMEM (no HBM pad HLO).
    zrow = jnp.zeros((B, 1, W, C), jnp.float32)
    xp = jnp.concatenate([zrow, x, zrow], axis=1)              # (B, H+2, W, C)
    zcol = jnp.zeros((B, H + 2, 1, C), jnp.float32)
    xp = jnp.concatenate([zcol, xp, zcol], axis=2)             # (B, H+2, W+2, C)

    # im2col: 9 shifted taps stacked along the channel (lane) axis, then one
    # MXU matmul with contraction depth 9*C.
    taps = [xp[:, dy:dy + H, dx:dx + W, :]
            for dy in range(3) for dx in range(3)]
    patches = jnp.concatenate(taps, axis=-1)                   # (B, H, W, 9C)
    acc = jnp.dot(patches.reshape(B * H * W, 9 * C), w_mat,
                  preferred_element_type=jnp.float32)          # (B*H*W, Cout)
    acc = jnp.maximum(acc + b_row, 0.0)                        # bias + ReLU

    # 2x2 max-pool stride 2 (rank<=4 reshapes; lane dim Cout preserved).
    y = jnp.max(acc.reshape(B * H * (W // 2), 2, Cout), axis=1)     # pool W
    y = jnp.max(y.reshape(B * (H // 2), 2, W // 2, Cout), axis=1)   # pool H
    return y.reshape(B, H // 2, W // 2, Cout)


def _make_cnn_kernel(n_conv, n_fc):
    """Fused kernel: refs = [x, (wc,bc)*n_conv, (wf,bf)*n_fc, out]."""
    def kernel(*refs):
        x_ref = refs[0]
        o_ref = refs[-1]
        prefs = refs[1:-1]

        x = x_ref[...].astype(jnp.float32)                     # (TB, H, W, Cin)
        k = 0
        for _ in range(n_conv):
            w = prefs[k][...]
            b = prefs[k + 1][...]
            k += 2
            x = _conv3x3_relu_pool(x, w, b)

        g = jnp.mean(x, axis=(1, 2))                           # GAP -> (TB, C)

        # TODO(synk): nn.Dropout is identity in eval mode; no RNG applied here.
        for li in range(n_fc):
            w = prefs[k][...]
            b = prefs[k + 1][...]
            k += 2
            g = jnp.dot(g, w, preferred_element_type=jnp.float32) + b
            if li < n_fc - 1:
                g = jnp.maximum(g, 0.0)                        # ReLU on hidden FCs

        o_ref[...] = (180.0 * jax.nn.sigmoid(g)).astype(o_ref.dtype)
    return kernel


def _pick_batch_tile(B, max_tb=8):
    """Largest clean batch tile: B itself if small, else a divisor (<= max_tb)."""
    if B <= max_tb:
        return B
    for tb in range(max_tb, 0, -1):
        if B % tb == 0:
            return tb
    return 1


# ----------------------------------------------------------------------------
# Wrapper: one pallas_call for the whole network.
# ----------------------------------------------------------------------------
def cnn_forward_fused(x_nhwc, params):
    B, H, W, Cin = x_nhwc.shape
    TB = _pick_batch_tile(B)

    args = [x_nhwc]
    for w, b in params["conv"]:
        kh, kw, ci, co = w.shape
        args += [w.reshape(kh * kw * ci, co), b.reshape(1, co)]  # im2col weights
    for w, b in params["fc"]:
        args += [w, b.reshape(1, -1)]
    out_dim = params["fc"][-1][0].shape[1]

    in_specs = [pl.BlockSpec((TB, H, W, Cin), lambda i: (i, 0, 0, 0))]
    for a in args[1:]:
        # Weights/biases: full block, constant index_map -> resident in VMEM.
        in_specs.append(pl.BlockSpec(a.shape, lambda i: (0, 0)))

    kernel = _make_cnn_kernel(len(params["conv"]), len(params["fc"]))
    return pl.pallas_call(
        kernel,
        out_shape=jax.ShapeDtypeStruct((B, out_dim), x_nhwc.dtype),
        grid=(B // TB,),
        in_specs=in_specs,
        out_specs=pl.BlockSpec((TB, out_dim), lambda i: (i, 0)),
        compiler_params=pltpu.CompilerParams(
            dimension_semantics=("parallel",)),
    )(*args)


# ----------------------------------------------------------------------------
# Parameter init (deterministic, PyTorch-like uniform(-1/sqrt(fan_in), ...)).
# Conv weights kept in HWIO; reshaped to (9*Cin, Cout) in the wrapper.
# ----------------------------------------------------------------------------
def init_params(key, in_channels=1, conv_channels=(32, 64, 128, 256),
                fc_dims=(128, 64), output_dim=1):
    params = {"conv": [], "fc": []}
    prev = in_channels
    for cout in conv_channels:
        key, k1, k2 = jax.random.split(key, 3)
        fan_in = prev * 3 * 3
        bound = 1.0 / math.sqrt(fan_in)
        w = jax.random.uniform(k1, (3, 3, prev, cout), jnp.float32,
                               minval=-bound, maxval=bound)
        b = jax.random.uniform(k2, (cout,), jnp.float32,
                               minval=-bound, maxval=bound)
        params["conv"].append((w, b))
        prev = cout
    dims = list(fc_dims) + [output_dim]
    in_f = conv_channels[-1]
    for d in dims:
        key, k1, k2 = jax.random.split(key, 3)
        bound = 1.0 / math.sqrt(in_f)
        w = jax.random.uniform(k1, (in_f, d), jnp.float32,
                               minval=-bound, maxval=bound)
        b = jax.random.uniform(k2, (d,), jnp.float32,
                               minval=-bound, maxval=bound)
        params["fc"].append((w, b))
        in_f = d
    return params


@jax.jit
def cnn_forward(x_nchw, params):
    x = jnp.transpose(x_nchw, (0, 2, 3, 1))   # NCHW -> NHWC (free for Cin=1)
    return cnn_forward_fused(x, params)       # (B, output_dim)


# ----------------------------------------------------------------------------
# Pure-JAX reference (XLA ops) for correctness checking.
# ----------------------------------------------------------------------------
def cnn_reference(x_nchw, params):
    x = jnp.transpose(x_nchw, (0, 2, 3, 1))
    for w, b in params["conv"]:
        x = jax.lax.conv_general_dilated(
            x, w, window_strides=(1, 1), padding="SAME",
            dimension_numbers=("NHWC", "HWIO", "NHWC"))
        x = jax.nn.relu(x + b)
        x = jax.lax.reduce_window(x, -jnp.inf, jax.lax.max,
                                  (1, 2, 2, 1), (1, 2, 2, 1), "VALID")
    g = jnp.mean(x, axis=(1, 2))
    fcs = params["fc"]
    for i, (w, b) in enumerate(fcs):
        g = g @ w + b
        if i < len(fcs) - 1:
            g = jax.nn.relu(g)
    return 180.0 * jax.nn.sigmoid(g)


if __name__ == "__main__":
    key = jax.random.PRNGKey(0)
    kx, kp = jax.random.split(key)

    B, C, H, W = 2, 1, 16, 16  # 16 -> 8 -> 4 -> 2 -> 1 after 4 pools
    x = jax.random.normal(kx, (B, C, H, W), jnp.float32)
    params = init_params(kp, in_channels=C)

    out = cnn_forward(x, params)
    out = jax.block_until_ready(out)

    assert out.shape == (B, 1), out.shape
    assert bool(jnp.all(jnp.isfinite(out)))
    assert bool(jnp.all((out >= 0.0) & (out <= 180.0)))

    ref = jax.block_until_ready(cnn_reference(x, params))
    assert bool(jnp.allclose(out, ref, atol=1e-2, rtol=1e-3)), (out, ref)

    print("KERNEL_OK")
</pallas_src>

<mosaic_0001>
module attributes {stable_mosaic.version = 11 : i64} {
  func.func @kernel(%arg0: i32, %arg1: memref<2x16x16x1xf32, #tpu.memory_space<vmem>>, %arg2: memref<9x32xf32, #tpu.memory_space<vmem>>, %arg3: memref<1x32xf32, #tpu.memory_space<vmem>>, %arg4: memref<288x64xf32, #tpu.memory_space<vmem>>, %arg5: memref<1x64xf32, #tpu.memory_space<vmem>>, %arg6: memref<576x128xf32, #tpu.memory_space<vmem>>, %arg7: memref<1x128xf32, #tpu.memory_space<vmem>>, %arg8: memref<1152x256xf32, #tpu.memory_space<vmem>>, %arg9: memref<1x256xf32, #tpu.memory_space<vmem>>, %arg10: memref<256x128xf32, #tpu.memory_space<vmem>>, %arg11: memref<1x128xf32, #tpu.memory_space<vmem>>, %arg12: memref<128x64xf32, #tpu.memory_space<vmem>>, %arg13: memref<1x64xf32, #tpu.memory_space<vmem>>, %arg14: memref<64x1xf32, #tpu.memory_space<vmem>>, %arg15: memref<1x1xf32, #tpu.memory_space<vmem>>, %arg16: memref<2x1xf32, #tpu.memory_space<vmem>>) attributes {dimension_semantics = [#tpu.dimension_semantics<parallel>], iteration_bounds = array<i64: 1>, scalar_prefetch = 0 : i64, scratch_operands = 0 : i64, tpu.core_type = #tpu.core_type<tc>, window_params = [{transform_indices = @transform_0, window_bounds = array<i64: 2, 16, 16, 1>}, {pipeline_mode = #tpu.pipeline_mode<synchronous>, transform_indices = @transform_1, window_bounds = array<i64: 9, 32>}, {pipeline_mode = #tpu.pipeline_mode<synchronous>, transform_indices = @transform_2, window_bounds = array<i64: 1, 32>}, {pipeline_mode = #tpu.pipeline_mode<synchronous>, transform_indices = @transform_3, window_bounds = array<i64: 288, 64>}, {pipeline_mode = #tpu.pipeline_mode<synchronous>, transform_indices = @transform_4, window_bounds = array<i64: 1, 64>}, {pipeline_mode = #tpu.pipeline_mode<synchronous>, transform_indices = @transform_5, window_bounds = array<i64: 576, 128>}, {pipeline_mode = #tpu.pipeline_mode<synchronous>, transform_indices = @transform_6, window_bounds = array<i64: 1, 128>}, {pipeline_mode = #tpu.pipeline_mode<synchronous>, transform_indices = @transform_7, window_bounds = array<i64: 1152, 256>}, {pipeline_mode = #tpu.pipeline_mode<synchronous>, transform_indices = @transform_8, window_bounds = array<i64: 1, 256>}, {pipeline_mode = #tpu.pipeline_mode<synchronous>, transform_indices = @transform_9, window_bounds = array<i64: 256, 128>}, {pipeline_mode = #tpu.pipeline_mode<synchronous>, transform_indices = @transform_10, window_bounds = array<i64: 1, 128>}, {pipeline_mode = #tpu.pipeline_mode<synchronous>, transform_indices = @transform_11, window_bounds = array<i64: 128, 64>}, {pipeline_mode = #tpu.pipeline_mode<synchronous>, transform_indices = @transform_12, window_bounds = array<i64: 1, 64>}, {pipeline_mode = #tpu.pipeline_mode<synchronous>, transform_indices = @transform_13, window_bounds = array<i64: 64, 1>}, {pipeline_mode = #tpu.pipeline_mode<synchronous>, transform_indices = @transform_14, window_bounds = array<i64: 1, 1>}, {transform_indices = @transform_15, window_bounds = array<i64: 2, 1>}]} {
    %c0 = arith.constant 0 : index
    %c0_0 = arith.constant 0 : index
    %c0_1 = arith.constant 0 : index
    %c0_2 = arith.constant 0 : index
    %0 = vector.load %arg1[%c0, %c0_0, %c0_1, %c0_2] : memref<2x16x16x1xf32, #tpu.memory_space<vmem>>, vector<2x16x16x1xf32>
    %c0_3 = arith.constant 0 : index
    %c0_4 = arith.constant 0 : index
    %1 = vector.load %arg2[%c0_3, %c0_4] : memref<9x32xf32, #tpu.memory_space<vmem>>, vector<9x32xf32>
    %c0_5 = arith.constant 0 : index
    %c0_6 = arith.constant 0 : index
    %2 = vector.load %arg3[%c0_5, %c0_6] : memref<1x32xf32, #tpu.memory_space<vmem>>, vector<1x32xf32>
    %cst = arith.constant 0.000000e+00 : f32
    %3 = vector.broadcast %cst : f32 to vector<2x1x16x1xf32>
    %4 = tpu.concatenate %3, %0, %3 in 1 : vector<2x1x16x1xf32>, vector<2x16x16x1xf32>, vector<2x1x16x1xf32> -> vector<2x18x16x1xf32>
    %cst_7 = arith.constant 0.000000e+00 : f32
    %5 = vector.broadcast %cst_7 : f32 to vector<2x18x1x1xf32>
    %6 = tpu.concatenate %5, %4, %5 in 2 : vector<2x18x1x1xf32>, vector<2x18x16x1xf32>, vector<2x18x1x1xf32> -> vector<2x18x18x1xf32>
    %7 = vector.extract_strided_slice %6 {offsets = [0, 0, 0, 0], sizes = [2, 16, 16, 1], strides = [1, 1, 1, 1]} : vector<2x18x18x1xf32> to vector<2x16x16x1xf32>
    %8 = vector.extract_strided_slice %6 {offsets = [0, 0, 1, 0], sizes = [2, 16, 16, 1], strides = [1, 1, 1, 1]} : vector<2x18x18x1xf32> to vector<2x16x16x1xf32>
    %9 = vector.extract_strided_slice %6 {offsets = [0, 0, 2, 0], sizes = [2, 16, 16, 1], strides = [1, 1, 1, 1]} : vector<2x18x18x1xf32> to vector<2x16x16x1xf32>
    %10 = vector.extract_strided_slice %6 {offsets = [0, 1, 0, 0], sizes = [2, 16, 16, 1], strides = [1, 1, 1, 1]} : vector<2x18x18x1xf32> to vector<2x16x16x1xf32>
    %11 = vector.extract_strided_slice %6 {offsets = [0, 1, 1, 0], sizes = [2, 16, 16, 1], strides = [1, 1, 1, 1]} : vector<2x18x18x1xf32> to vector<2x16x16x1xf32>
    %12 = vector.extract_strided_slice %6 {offsets = [0, 1, 2, 0], sizes = [2, 16, 16, 1], strides = [1, 1, 1, 1]} : vector<2x18x18x1xf32> to vector<2x16x16x1xf32>
    %13 = vector.extract_strided_slice %6 {offsets = [0, 2, 0, 0], sizes = [2, 16, 16, 1], strides = [1, 1, 1, 1]} : vector<2x18x18x1xf32> to vector<2x16x16x1xf32>
    %14 = vector.extract_strided_slice %6 {offsets = [0, 2, 1, 0], sizes = [2, 16, 16, 1], strides = [1, 1, 1, 1]} : vector<2x18x18x1xf32> to vector<2x16x16x1xf32>
    %15 = vector.extract_strided_slice %6 {offsets = [0, 2, 2, 0], sizes = [2, 16, 16, 1], strides = [1, 1, 1, 1]} : vector<2x18x18x1xf32> to vector<2x16x16x1xf32>
    %16 = tpu.concatenate %7, %8, %9, %10, %11, %12, %13, %14, %15 in 3 : vector<2x16x16x1xf32>, vector<2x16x16x1xf32>, vector<2x16x16x1xf32>, vector<2x16x16x1xf32>, vector<2x16x16x1xf32>, vector<2x16x16x1xf32>, vector<2x16x16x1xf32>, vector<2x16x16x1xf32>, vector<2x16x16x1xf32> -> vector<2x16x16x9xf32>
    %17 = vector.shape_cast %16 : vector<2x16x16x9xf32> to vector<512x9xf32>
    %cst_8 = arith.constant dense<0.000000e+00> : vector<512x32xf32>
    %18 = tpu.matmul %17, %1, %cst_8 {dimension_numbers = #tpu.dot_dimension_numbers<[1], [0], [0], [1], [0, 0, 1, 1], [], []>} : vector<512x9xf32>, vector<9x32xf32>, vector<512x32xf32> -> vector<512x32xf32>
    %19 = vector.broadcast %2 : vector<1x32xf32> to vector<512x32xf32>
    %20 = arith.addf %18, %19 : vector<512x32xf32>
    %cst_9 = arith.constant 0.000000e+00 : f32
    %21 = vector.broadcast %cst_9 : f32 to vector<512x32xf32>
    %22 = arith.maximumf %20, %21 : vector<512x32xf32>
    %23 = vector.shape_cast %22 : vector<512x32xf32> to vector<256x2x32xf32>
    %cst_10 = arith.constant dense<0xFF800000> : vector<256x32xf32>
    %24 = vector.multi_reduction <maximumf>, %23, %cst_10 [1] : vector<256x2x32xf32> to vector<256x32xf32>
    %25 = vector.shape_cast %24 : vector<256x32xf32> to vector<16x2x8x32xf32>
    %cst_11 = arith.constant dense<0xFF800000> : vector<16x8x32xf32>
    %26 = vector.multi_reduction <maximumf>, %25, %cst_11 [1] : vector<16x2x8x32xf32> to vector<16x8x32xf32>
    %27 = vector.shape_cast %26 : vector<16x8x32xf32> to vector<2x8x8x32xf32>
    %c0_12 = arith.constant 0 : index
    %c0_13 = arith.constant 0 : index
    %28 = vector.load %arg4[%c0_12, %c0_13] : memref<288x64xf32, #tpu.memory_space<vmem>>, vector<288x64xf32>
    %c0_14 = arith.constant 0 : index
    %c0_15 = arith.constant 0 : index
    %29 = vector.load %arg5[%c0_14, %c0_15] : memref<1x64xf32, #tpu.memory_space<vmem>>, vector<1x64xf32>
    %cst_16 = arith.constant 0.000000e+00 : f32
    %30 = vector.broadcast %cst_16 : f32 to vector<2x1x8x32xf32>
    %31 = tpu.concatenate %30, %27, %30 in 1 : vector<2x1x8x32xf32>, vector<2x8x8x32xf32>, vector<2x1x8x32xf32> -> vector<2x10x8x32xf32>
    %cst_17 = arith.constant 0.000000e+00 : f32
    %32 = vector.broadcast %cst_17 : f32 to vector<2x10x1x32xf32>
    %33 = tpu.concatenate %32, %31, %32 in 2 : vector<2x10x1x32xf32>, vector<2x10x8x32xf32>, vector<2x10x1x32xf32> -> vector<2x10x10x32xf32>
    %34 = vector.extract_strided_slice %33 {offsets = [0, 0, 0, 0], sizes = [2, 8, 8, 32], strides = [1, 1, 1, 1]} : vector<2x10x10x32xf32> to vector<2x8x8x32xf32>
    %35 = vector.extract_strided_slice %33 {offsets = [0, 0, 1, 0], sizes = [2, 8, 8, 32], strides = [1, 1, 1, 1]} : vector<2x10x10x32xf32> to vector<2x8x8x32xf32>
    %36 = vector.extract_strided_slice %33 {offsets = [0, 0, 2, 0], sizes = [2, 8, 8, 32], strides = [1, 1, 1, 1]} : vector<2x10x10x32xf32> to vector<2x8x8x32xf32>
    %37 = vector.extract_strided_slice %33 {offsets = [0, 1, 0, 0], sizes = [2, 8, 8, 32], strides = [1, 1, 1, 1]} : vector<2x10x10x32xf32> to vector<2x8x8x32xf32>
    %38 = vector.extract_strided_slice %33 {offsets = [0, 1, 1, 0], sizes = [2, 8, 8, 32], strides = [1, 1, 1, 1]} : vector<2x10x10x32xf32> to vector<2x8x8x32xf32>
    %39 = vector.extract_strided_slice %33 {offsets = [0, 1, 2, 0], sizes = [2, 8, 8, 32], strides = [1, 1, 1, 1]} : vector<2x10x10x32xf32> to vector<2x8x8x32xf32>
    %40 = vector.extract_strided_slice %33 {offsets = [0, 2, 0, 0], sizes = [2, 8, 8, 32], strides = [1, 1, 1, 1]} : vector<2x10x10x32xf32> to vector<2x8x8x32xf32>
    %41 = vector.extract_strided_slice %33 {offsets = [0, 2, 1, 0], sizes = [2, 8, 8, 32], strides = [1, 1, 1, 1]} : vector<2x10x10x32xf32> to vector<2x8x8x32xf32>
    %42 = vector.extract_strided_slice %33 {offsets = [0, 2, 2, 0], sizes = [2, 8, 8, 32], strides = [1, 1, 1, 1]} : vector<2x10x10x32xf32> to vector<2x8x8x32xf32>
    %43 = tpu.concatenate %34, %35, %36, %37, %38, %39, %40, %41, %42 in 3 : vector<2x8x8x32xf32>, vector<2x8x8x32xf32>, vector<2x8x8x32xf32>, vector<2x8x8x32xf32>, vector<2x8x8x32xf32>, vector<2x8x8x32xf32>, vector<2x8x8x32xf32>, vector<2x8x8x32xf32>, vector<2x8x8x32xf32> -> vector<2x8x8x288xf32>
    %44 = vector.shape_cast %43 : vector<2x8x8x288xf32> to vector<128x288xf32>
    %cst_18 = arith.constant dense<0.000000e+00> : vector<128x64xf32>
    %45 = tpu.matmul %44, %28, %cst_18 {dimension_numbers = #tpu.dot_dimension_numbers<[1], [0], [0], [1], [0, 0, 1, 1], [], []>} : vector<128x288xf32>, vector<288x64xf32>, vector<128x64xf32> -> vector<128x64xf32>
    %46 = vector.broadcast %29 : vector<1x64xf32> to vector<128x64xf32>
    %47 = arith.addf %45, %46 : vector<128x64xf32>
    %cst_19 = arith.constant 0.000000e+00 : f32
    %48 = vector.broadcast %cst_19 : f32 to vector<128x64xf32>
    %49 = arith.maximumf %47, %48 : vector<128x64xf32>
    %50 = vector.shape_cast %49 : vector<128x64xf32> to vector<64x2x64xf32>
    %cst_20 = arith.constant dense<0xFF800000> : vector<64x64xf32>
    %51 = vector.multi_reduction <maximumf>, %50, %cst_20 [1] : vector<64x2x64xf32> to vector<64x64xf32>
    %52 = vector.shape_cast %51 : vector<64x64xf32> to vector<8x2x4x64xf32>
    %cst_21 = arith.constant dense<0xFF800000> : vector<8x4x64xf32>
    %53 = vector.multi_reduction <maximumf>, %52, %cst_21 [1] : vector<8x2x4x64xf32> to vector<8x4x64xf32>
    %54 = vector.shape_cast %53 : vector<8x4x64xf32> to vector<2x4x4x64xf32>
    %c0_22 = arith.constant 0 : index
    %c0_23 = arith.constant 0 : index
    %55 = vector.load %arg6[%c0_22, %c0_23] : memref<576x128xf32, #tpu.memory_space<vmem>>, vector<576x128xf32>
    %c0_24 = arith.constant 0 : index
    %c0_25 = arith.constant 0 : index
    %56 = vector.load %arg7[%c0_24, %c0_25] : memref<1x128xf32, #tpu.memory_space<vmem>>, vector<1x128xf32>
    %cst_26 = arith.constant 0.000000e+00 : f32
    %57 = vector.broadcast %cst_26 : f32 to vector<2x1x4x64xf32>
    %58 = tpu.concatenate %57, %54, %57 in 1 : vector<2x1x4x64xf32>, vector<2x4x4x64xf32>, vector<2x1x4x64xf32> -> vector<2x6x4x64xf32>
    %cst_27 = arith.constant 0.000000e+00 : f32
    %59 = vector.broadcast %cst_27 : f32 to vector<2x6x1x64xf32>
    %60 = tpu.concatenate %59, %58, %59 in 2 : vector<2x6x1x64xf32>, vector<2x6x4x64xf32>, vector<2x6x1x64xf32> -> vector<2x6x6x64xf32>
    %61 = vector.extract_strided_slice %60 {offsets = [0, 0, 0, 0], sizes = [2, 4, 4, 64], strides = [1, 1, 1, 1]} : vector<2x6x6x64xf32> to vector<2x4x4x64xf32>
    %62 = vector.extract_strided_slice %60 {offsets = [0, 0, 1, 0], sizes = [2, 4, 4, 64], strides = [1, 1, 1, 1]} : vector<2x6x6x64xf32> to vector<2x4x4x64xf32>
    %63 = vector.extract_strided_slice %60 {offsets = [0, 0, 2, 0], sizes = [2, 4, 4, 64], strides = [1, 1, 1, 1]} : vector<2x6x6x64xf32> to vector<2x4x4x64xf32>
    %64 = vector.extract_strided_slice %60 {offsets = [0, 1, 0, 0], sizes = [2, 4, 4, 64], strides = [1, 1, 1, 1]} : vector<2x6x6x64xf32> to vector<2x4x4x64xf32>
    %65 = vector.extract_strided_slice %60 {offsets = [0, 1, 1, 0], sizes = [2, 4, 4, 64], strides = [1, 1, 1, 1]} : vector<2x6x6x64xf32> to vector<2x4x4x64xf32>
    %66 = vector.extract_strided_slice %60 {offsets = [0, 1, 2, 0], sizes = [2, 4, 4, 64], strides = [1, 1, 1, 1]} : vector<2x6x6x64xf32> to vector<2x4x4x64xf32>
    %67 = vector.extract_strided_slice %60 {offsets = [0, 2, 0, 0], sizes = [2, 4, 4, 64], strides = [1, 1, 1, 1]} : vector<2x6x6x64xf32> to vector<2x4x4x64xf32>
    %68 = vector.extract_strided_slice %60 {offsets = [0, 2, 1, 0], sizes = [2, 4, 4, 64], strides = [1, 1, 1, 1]} : vector<2x6x6x64xf32> to vector<2x4x4x64xf32>
    %69 = vector.extract_strided_slice %60 {offsets = [0, 2, 2, 0], sizes = [2, 4, 4, 64], strides = [1, 1, 1, 1]} : vector<2x6x6x64xf32> to vector<2x4x4x64xf32>
    %70 = tpu.concatenate %61, %62, %63, %64, %65, %66, %67, %68, %69 in 3 : vector<2x4x4x64xf32>, vector<2x4x4x64xf32>, vector<2x4x4x64xf32>, vector<2x4x4x64xf32>, vector<2x4x4x64xf32>, vector<2x4x4x64xf32>, vector<2x4x4x64xf32>, vector<2x4x4x64xf32>, vector<2x4x4x64xf32> -> vector<2x4x4x576xf32>
    %71 = vector.shape_cast %70 : vector<2x4x4x576xf32> to vector<32x576xf32>
    %cst_28 = arith.constant dense<0.000000e+00> : vector<32x128xf32>
    %72 = tpu.matmul %71, %55, %cst_28 {dimension_numbers = #tpu.dot_dimension_numbers<[1], [0], [0], [1], [0, 0, 1, 1], [], []>} : vector<32x576xf32>, vector<576x128xf32>, vector<32x128xf32> -> vector<32x128xf32>
    %73 = vector.broadcast %56 : vector<1x128xf32> to vector<32x128xf32>
    %74 = arith.addf %72, %73 : vector<32x128xf32>
    %cst_29 = arith.constant 0.000000e+00 : f32
    %75 = vector.broadcast %cst_29 : f32 to vector<32x128xf32>
    %76 = arith.maximumf %74, %75 : vector<32x128xf32>
    %77 = vector.shape_cast %76 : vector<32x128xf32> to vector<16x2x128xf32>
    %cst_30 = arith.constant dense<0xFF800000> : vector<16x128xf32>
    %78 = vector.multi_reduction <maximumf>, %77, %cst_30 [1] : vector<16x2x128xf32> to vector<16x128xf32>
    %79 = vector.shape_cast %78 : vector<16x128xf32> to vector<4x2x2x128xf32>
    %cst_31 = arith.constant dense<0xFF800000> : vector<4x2x128xf32>
    %80 = vector.multi_reduction <maximumf>, %79, %cst_31 [1] : vector<4x2x2x128xf32> to vector<4x2x128xf32>
    %81 = vector.shape_cast %80 : vector<4x2x128xf32> to vector<2x2x2x128xf32>
    %c0_32 = arith.constant 0 : index
    %c0_33 = arith.constant 0 : index
    %82 = vector.load %arg8[%c0_32, %c0_33] : memref<1152x256xf32, #tpu.memory_space<vmem>>, vector<1152x256xf32>
    %c0_34 = arith.constant 0 : index
    %c0_35 = arith.constant 0 : index
    %83 = vector.load %arg9[%c0_34, %c0_35] : memref<1x256xf32, #tpu.memory_space<vmem>>, vector<1x256xf32>
    %cst_36 = arith.constant 0.000000e+00 : f32
    %84 = vector.broadcast %cst_36 : f32 to vector<2x1x2x128xf32>
    %85 = tpu.concatenate %84, %81, %84 in 1 : vector<2x1x2x128xf32>, vector<2x2x2x128xf32>, vector<2x1x2x128xf32> -> vector<2x4x2x128xf32>
    %cst_37 = arith.constant 0.000000e+00 : f32
    %86 = vector.broadcast %cst_37 : f32 to vector<2x4x1x128xf32>
    %87 = tpu.concatenate %86, %85, %86 in 2 : vector<2x4x1x128xf32>, vector<2x4x2x128xf32>, vector<2x4x1x128xf32> -> vector<2x4x4x128xf32>
    %88 = vector.extract_strided_slice %87 {offsets = [0, 0, 0, 0], sizes = [2, 2, 2, 128], strides = [1, 1, 1, 1]} : vector<2x4x4x128xf32> to vector<2x2x2x128xf32>
    %89 = vector.extract_strided_slice %87 {offsets = [0, 0, 1, 0], sizes = [2, 2, 2, 128], strides = [1, 1, 1, 1]} : vector<2x4x4x128xf32> to vector<2x2x2x128xf32>
    %90 = vector.extract_strided_slice %87 {offsets = [0, 0, 2, 0], sizes = [2, 2, 2, 128], strides = [1, 1, 1, 1]} : vector<2x4x4x128xf32> to vector<2x2x2x128xf32>
    %91 = vector.extract_strided_slice %87 {offsets = [0, 1, 0, 0], sizes = [2, 2, 2, 128], strides = [1, 1, 1, 1]} : vector<2x4x4x128xf32> to vector<2x2x2x128xf32>
    %92 = vector.extract_strided_slice %87 {offsets = [0, 1, 1, 0], sizes = [2, 2, 2, 128], strides = [1, 1, 1, 1]} : vector<2x4x4x128xf32> to vector<2x2x2x128xf32>
    %93 = vector.extract_strided_slice %87 {offsets = [0, 1, 2, 0], sizes = [2, 2, 2, 128], strides = [1, 1, 1, 1]} : vector<2x4x4x128xf32> to vector<2x2x2x128xf32>
    %94 = vector.extract_strided_slice %87 {offsets = [0, 2, 0, 0], sizes = [2, 2, 2, 128], strides = [1, 1, 1, 1]} : vector<2x4x4x128xf32> to vector<2x2x2x128xf32>
    %95 = vector.extract_strided_slice %87 {offsets = [0, 2, 1, 0], sizes = [2, 2, 2, 128], strides = [1, 1, 1, 1]} : vector<2x4x4x128xf32> to vector<2x2x2x128xf32>
    %96 = vector.extract_strided_slice %87 {offsets = [0, 2, 2, 0], sizes = [2, 2, 2, 128], strides = [1, 1, 1, 1]} : vector<2x4x4x128xf32> to vector<2x2x2x128xf32>
    %97 = tpu.concatenate %88, %89, %90, %91, %92, %93, %94, %95, %96 in 3 : vector<2x2x2x128xf32>, vector<2x2x2x128xf32>, vector<2x2x2x128xf32>, vector<2x2x2x128xf32>, vector<2x2x2x128xf32>, vector<2x2x2x128xf32>, vector<2x2x2x128xf32>, vector<2x2x2x128xf32>, vector<2x2x2x128xf32> -> vector<2x2x2x1152xf32>
    %98 = vector.shape_cast %97 : vector<2x2x2x1152xf32> to vector<8x1152xf32>
    %cst_38 = arith.constant dense<0.000000e+00> : vector<8x256xf32>
    %99 = tpu.matmul %98, %82, %cst_38 {dimension_numbers = #tpu.dot_dimension_numbers<[1], [0], [0], [1], [0, 0, 1, 1], [], []>} : vector<8x1152xf32>, vector<1152x256xf32>, vector<8x256xf32> -> vector<8x256xf32>
    %100 = vector.broadcast %83 : vector<1x256xf32> to vector<8x256xf32>
    %101 = arith.addf %99, %100 : vector<8x256xf32>
    %cst_39 = arith.constant 0.000000e+00 : f32
    %102 = vector.broadcast %cst_39 : f32 to vector<8x256xf32>
    %103 = arith.maximumf %101, %102 : vector<8x256xf32>
    %104 = vector.shape_cast %103 : vector<8x256xf32> to vector<4x2x256xf32>
    %cst_40 = arith.constant dense<0xFF800000> : vector<4x256xf32>
    %105 = vector.multi_reduction <maximumf>, %104, %cst_40 [1] : vector<4x2x256xf32> to vector<4x256xf32>
    %106 = vector.shape_cast %105 : vector<4x256xf32> to vector<2x2x1x256xf32>
    %cst_41 = arith.constant dense<0xFF800000> : vector<2x1x256xf32>
    %107 = vector.multi_reduction <maximumf>, %106, %cst_41 [1] : vector<2x2x1x256xf32> to vector<2x1x256xf32>
    %108 = vector.shape_cast %107 : vector<2x1x256xf32> to vector<2x1x1x256xf32>
    %cst_42 = arith.constant dense<0.000000e+00> : vector<2x256xf32>
    %109 = vector.multi_reduction <add>, %108, %cst_42 [1, 2] : vector<2x1x1x256xf32> to vector<2x256xf32>
    %cst_43 = arith.constant 1.000000e+00 : f32
    %110 = vector.broadcast %cst_43 : f32 to vector<2x256xf32>
    %111 = arith.divf %109, %110 : vector<2x256xf32>
    %c0_44 = arith.constant 0 : index
    %c0_45 = arith.constant 0 : index
    %112 = vector.load %arg10[%c0_44, %c0_45] : memref<256x128xf32, #tpu.memory_space<vmem>>, vector<256x128xf32>
    %c0_46 = arith.constant 0 : index
    %c0_47 = arith.constant 0 : index
    %113 = vector.load %arg11[%c0_46, %c0_47] : memref<1x128xf32, #tpu.memory_space<vmem>>, vector<1x128xf32>
    %cst_48 = arith.constant dense<0.000000e+00> : vector<2x128xf32>
    %114 = tpu.matmul %111, %112, %cst_48 {dimension_numbers = #tpu.dot_dimension_numbers<[1], [0], [0], [1], [0, 0, 1, 1], [], []>} : vector<2x256xf32>, vector<256x128xf32>, vector<2x128xf32> -> vector<2x128xf32>
    %115 = vector.broadcast %113 : vector<1x128xf32> to vector<2x128xf32>
    %116 = arith.addf %114, %115 : vector<2x128xf32>
    %cst_49 = arith.constant 0.000000e+00 : f32
    %117 = vector.broadcast %cst_49 : f32 to vector<2x128xf32>
    %118 = arith.maximumf %116, %117 : vector<2x128xf32>
    %c0_50 = arith.constant 0 : index
    %c0_51 = arith.constant 0 : index
    %119 = vector.load %arg12[%c0_50, %c0_51] : memref<128x64xf32, #tpu.memory_space<vmem>>, vector<128x64xf32>
    %c0_52 = arith.constant 0 : index
    %c0_53 = arith.constant 0 : index
    %120 = vector.load %arg13[%c0_52, %c0_53] : memref<1x64xf32, #tpu.memory_space<vmem>>, vector<1x64xf32>
    %cst_54 = arith.constant dense<0.000000e+00> : vector<2x64xf32>
    %121 = tpu.matmul %118, %119, %cst_54 {dimension_numbers = #tpu.dot_dimension_numbers<[1], [0], [0], [1], [0, 0, 1, 1], [], []>} : vector<2x128xf32>, vector<128x64xf32>, vector<2x64xf32> -> vector<2x64xf32>
    %122 = vector.broadcast %120 : vector<1x64xf32> to vector<2x64xf32>
    %123 = arith.addf %121, %122 : vector<2x64xf32>
    %cst_55 = arith.constant 0.000000e+00 : f32
    %124 = vector.broadcast %cst_55 : f32 to vector<2x64xf32>
    %125 = arith.maximumf %123, %124 : vector<2x64xf32>
    %c0_56 = arith.constant 0 : index
    %c0_57 = arith.constant 0 : index
    %126 = vector.load %arg14[%c0_56, %c0_57] : memref<64x1xf32, #tpu.memory_space<vmem>>, vector<64x1xf32>
    %c0_58 = arith.constant 0 : index
    %c0_59 = arith.constant 0 : index
    %127 = vector.load %arg15[%c0_58, %c0_59] : memref<1x1xf32, #tpu.memory_space<vmem>>, vector<1x1xf32>
    %cst_60 = arith.constant dense<0.000000e+00> : vector<2x1xf32>
    %128 = tpu.matmul %125, %126, %cst_60 {dimension_numbers = #tpu.dot_dimension_numbers<[1], [0], [0], [1], [0, 0, 1, 1], [], []>} : vector<2x64xf32>, vector<64x1xf32>, vector<2x1xf32> -> vector<2x1xf32>
    %129 = vector.broadcast %127 : vector<1x1xf32> to vector<2x1xf32>
    %130 = arith.addf %128, %129 : vector<2x1xf32>
    %131 = arith.negf %130 : vector<2x1xf32>
    %132 = math.exp %131 : vector<2x1xf32>
    %cst_61 = arith.constant 1.000000e+00 : f32
    %133 = vector.broadcast %cst_61 : f32 to vector<2x1xf32>
    %134 = arith.addf %133, %132 : vector<2x1xf32>
    %135 = arith.divf %133, %134 : vector<2x1xf32>
    %cst_62 = arith.constant 1.800000e+02 : f32
    %136 = vector.broadcast %cst_62 : f32 to vector<2x1xf32>
    %137 = arith.mulf %136, %135 : vector<2x1xf32>
    %c0_63 = arith.constant 0 : index
    %c0_64 = arith.constant 0 : index
    %138 = vector.load %arg16[%c0_63, %c0_64] : memref<2x1xf32, #tpu.memory_space<vmem>>, vector<2x1xf32>
    tpu.vector_store %arg16[%c0_63, %c0_64], %137 {strides = array<i32>} : memref<2x1xf32, #tpu.memory_space<vmem>>, vector<2x1xf32>,
    return
  }
  func.func @transform_0(%arg0: i32) -> (i32, i32, i32, i32) {
    %c0_i32 = arith.constant 0 : i32
    %c0_i32_0 = arith.constant 0 : i32
    %c0_i32_1 = arith.constant 0 : i32
    %c0_i32_2 = arith.constant 0 : i32
    return %arg0, %c0_i32, %c0_i32_0, %c0_i32_1 : i32, i32, i32, i32
  }
  func.func @transform_1(%arg0: i32) -> (i32, i32) {
    %c0_i32 = arith.constant 0 : i32
    %c0_i32_0 = arith.constant 0 : i32
    %c0_i32_1 = arith.constant 0 : i32
    return %c0_i32, %c0_i32_0 : i32, i32
  }
  func.func @transform_2(%arg0: i32) -> (i32, i32) {
    %c0_i32 = arith.constant 0 : i32
    %c0_i32_0 = arith.constant 0 : i32
    %c0_i32_1 = arith.constant 0 : i32
    return %c0_i32, %c0_i32_0 : i32, i32
  }
  func.func @transform_3(%arg0: i32) -> (i32, i32) {
    %c0_i32 = arith.constant 0 : i32
    %c0_i32_0 = arith.constant 0 : i32
    %c0_i32_1 = arith.constant 0 : i32
    return %c0_i32, %c0_i32_0 : i32, i32
  }
  func.func @transform_4(%arg0: i32) -> (i32, i32) {
    %c0_i32 = arith.constant 0 : i32
    %c0_i32_0 = arith.constant 0 : i32
    %c0_i32_1 = arith.constant 0 : i32
    return %c0_i32, %c0_i32_0 : i32, i32
  }
  func.func @transform_5(%arg0: i32) -> (i32, i32) {
    %c0_i32 = arith.constant 0 : i32
    %c0_i32_0 = arith.constant 0 : i32
    %c0_i32_1 = arith.constant 0 : i32
    return %c0_i32, %c0_i32_0 : i32, i32
  }
  func.func @transform_6(%arg0: i32) -> (i32, i32) {
    %c0_i32 = arith.constant 0 : i32
    %c0_i32_0 = arith.constant 0 : i32
    %c0_i32_1 = arith.constant 0 : i32
    return %c0_i32, %c0_i32_0 : i32, i32
  }
  func.func @transform_7(%arg0: i32) -> (i32, i32) {
    %c0_i32 = arith.constant 0 : i32
    %c0_i32_0 = arith.constant 0 : i32
    %c0_i32_1 = arith.constant 0 : i32
    return %c0_i32, %c0_i32_0 : i32, i32
  }
  func.func @transform_8(%arg0: i32) -> (i32, i32) {
    %c0_i32 = arith.constant 0 : i32
    %c0_i32_0 = arith.constant 0 : i32
    %c0_i32_1 = arith.constant 0 : i32
    return %c0_i32, %c0_i32_0 : i32, i32
  }
  func.func @transform_9(%arg0: i32) -> (i32, i32) {
    %c0_i32 = arith.constant 0 : i32
    %c0_i32_0 = arith.constant 0 : i32
    %c0_i32_1 = arith.constant 0 : i32
    return %c0_i32, %c0_i32_0 : i32, i32
  }
  func.func @transform_10(%arg0: i32) -> (i32, i32) {
    %c0_i32 = arith.constant 0 : i32
    %c0_i32_0 = arith.constant 0 : i32
    %c0_i32_1 = arith.constant 0 : i32
    return %c0_i32, %c0_i32_0 : i32, i32
  }
  func.func @transform_11(%arg0: i32) -> (i32, i32) {
    %c0_i32 = arith.constant 0 : i32
    %c0_i32_0 = arith.constant 0 : i32
    %c0_i32_1 = arith.constant 0 : i32
    return %c0_i32, %c0_i32_0 : i32, i32
  }
  func.func @transform_12(%arg0: i32) -> (i32, i32) {
    %c0_i32 = arith.constant 0 : i32
    %c0_i32_0 = arith.constant 0 : i32
    %c0_i32_1 = arith.constant 0 : i32
    return %c0_i32, %c0_i32_0 : i32, i32
  }
  func.func @transform_13(%arg0: i32) -> (i32, i32) {
    %c0_i32 = arith.constant 0 : i32
    %c0_i32_0 = arith.constant 0 : i32
    %c0_i32_1 = arith.constant 0 : i32
    return %c0_i32, %c0_i32_0 : i32, i32
  }
  func.func @transform_14(%arg0: i32) -> (i32, i32) {
    %c0_i32 = arith.constant 0 : i32
    %c0_i32_0 = arith.constant 0 : i32
    %c0_i32_1 = arith.constant 0 : i32
    return %c0_i32, %c0_i32_0 : i32, i32
  }
  func.func @transform_15(%arg0: i32) -> (i32, i32) {
    %c0_i32 = arith.constant 0 : i32
    %c0_i32_0 = arith.constant 0 : i32
    return %arg0, %c0_i32 : i32, i32
  }
}

</mosaic_0001>

<llo_original>
// kernel: cnn_forward.1
$region0: #{cnn_forward.1}
  #allocation0 [shape = 'u32[]', space=smem, size = 0x4, offset = 0x4, fixed_abs, tag = 'smem constant byte address 0x4 - core index']
  #allocation1 [shape = 'u32[144,128]{1,0:T(1,128)}', space=vmem, size = 0x12000, scoped, tag = 'internal scratch']
  #allocation2 [shape = 'f32[1,1]{1,0:T(1,128)S(1)}', space=vmem, size = 0x200, scoped, tag = 'scoped memory for cnn_forward.1']
  %s0 = inlined_call_operand.vmem [shape: f32[2,16,16,1], index: 0, kind: input, shape index: {}]
  %s1 = inlined_call_operand.vmem [shape: f32[9,32], index: 1, kind: input, shape index: {}]
  %s2 = inlined_call_operand.hbm [shape: f32[1,32], index: 2, kind: input, shape index: {}]
  %s3 = inlined_call_operand.hbm [shape: f32[288,64], index: 3, kind: input, shape index: {}]
  %s4 = inlined_call_operand.hbm [shape: f32[1,64], index: 4, kind: input, shape index: {}]
  %s5 = inlined_call_operand.hbm [shape: f32[576,128], index: 5, kind: input, shape index: {}]
  %s6 = inlined_call_operand.hbm [shape: f32[1,128], index: 6, kind: input, shape index: {}]
  %s7 = inlined_call_operand.hbm [shape: f32[1152,256], index: 7, kind: input, shape index: {}]
  %s8 = inlined_call_operand.hbm [shape: f32[1,256], index: 8, kind: input, shape index: {}]
  %s9 = inlined_call_operand.hbm [shape: f32[256,128], index: 9, kind: input, shape index: {}]
  %s10 = inlined_call_operand.hbm [shape: f32[1,128], index: 10, kind: input, shape index: {}]
  %s11 = inlined_call_operand.vmem [shape: f32[128,64], index: 11, kind: input, shape index: {}]
  %s12 = inlined_call_operand.hbm [shape: f32[1,64], index: 12, kind: input, shape index: {}]
  %s13 = inlined_call_operand.vmem [shape: f32[64,1], index: 13, kind: input, shape index: {}]
  %s14 = inlined_call_operand.<no memory space> [shape: f32[1,1], index: 14, kind: input, shape index: {}]
  %s15 = inlined_call_operand.vmem [shape: f32[2,1], index: 15, kind: output, shape index: {}]
  %s16 = sld [smem:[#allocation0]]
  $region110: #{cnn_forward.1} parent=0
    _
  %s18 = ssub.s32 1, %s16
  %s19 = scalar_select 0, %s18, %s16
  %v20 = vstv %s14
  %21 = vst [vmem:[#allocation2] sm:$0x1] %v20
  $region1: #{cnn_forward.1} parent=0
    #allocation3 [shape = 'u8[512]{0}', space=vmem, size = 0x400, scoped, tag = 'input window, operand 2, single buffered']
    #allocation4 [shape = 's32[1]{0}', space=sflag, size = 0x4, scoped, tag = 'scoped memory for cnn_forward.1']
    #allocation5 [shape = 'u8[147456]{0}', space=vmem, size = 0x24000, scoped, tag = 'input window, operand 3, single buffered']
    #allocation6 [shape = 's32[1]{0}', space=sflag, size = 0x4, scoped, tag = 'scoped memory for cnn_forward.1']
    #allocation7 [shape = 'u8[512]{0}', space=vmem, size = 0x400, scoped, tag = 'input window, operand 4, single buffered']
    #allocation8 [shape = 'u8[294912]{0}', space=vmem, size = 0x48000, scoped, tag = 'input window, operand 5, single buffered']
    #allocation9 [shape = 's32[1]{0}', space=sflag, size = 0x4, scoped, tag = 'scoped memory for cnn_forward.1']
    #allocation10 [shape = 'u8[512]{0}', space=vmem, size = 0x400, scoped, tag = 'input window, operand 6, single buffered']
    #allocation11 [shape = 'u8[1179648]{0}', space=vmem, size = 0x120000, scoped, tag = 'input window, operand 7, single buffered']
    #allocation12 [shape = 's32[1]{0}', space=sflag, size = 0x4, scoped, tag = 'scoped memory for cnn_forward.1']
    #allocation13 [shape = 'u8[1024]{0}', space=vmem, size = 0x400, scoped, tag = 'input window, operand 8, single buffered']
    #allocation14 [shape = 'u8[131072]{0}', space=vmem, size = 0x20000, scoped, tag = 'input window, operand 9, single buffered']
    #allocation15 [shape = 's32[1]{0}', space=sflag, size = 0x4, scoped, tag = 'scoped memory for cnn_forward.1']
    #allocation16 [shape = 'u8[512]{0}', space=vmem, size = 0x400, scoped, tag = 'input window, operand 10, single buffered']
    #allocation17 [shape = 'u8[512]{0}', space=vmem, size = 0x400, scoped, tag = 'input window, operand 12, single buffered']
    #allocation18 [shape = 's32[1]{0}', space=sflag, size = 0x4, scoped, tag = 'scoped memory for cnn_forward.1']
    %22 = vsyncpa [#allocation4], 0
    %23 = vsyncpa [#allocation6], 0
    %24 = vsyncpa [#allocation9], 0
    %25 = vsyncpa [#allocation12], 0
    %26 = vsyncpa [#allocation15], 0
    %27 = vsyncpa [#allocation18], 0
    // Predicated region
    $region2: #{cnn_forward.1} parent=1 // pred_check
      _
    $region3: #{cnn_forward.1} parent=1 // pred_check_branch
      %29 = sbr.rel (0) target = $region5
    $region4: #{cnn_forward.1} parent=1 // pred_region
      _
    $region5: #{cnn_forward.1} parent=1 // pred_fallthru
      _
    // Predicated region
    $region6: #{cnn_forward.1} parent=1 // pred_check
      _
    $region7: #{cnn_forward.1} parent=1 // pred_check_branch
      %31 = sbr.rel (0) target = $region9
    $region8: #{cnn_forward.1} parent=1 // pred_region
      _
    $region9: #{cnn_forward.1} parent=1 // pred_fallthru
      _
    // Predicated region
    $region10: #{cnn_forward.1} parent=1 // pred_check
      _
    $region11: #{cnn_forward.1} parent=1 // pred_check_branch
      %33 = sbr.rel (0) target = $region13
    $region12: #{cnn_forward.1} parent=1 // pred_region
      %s35 = ssub.s32 16, 16
      %36 = vsyncadd [#allocation4], %s35
      %s38 = sshll.u32 [#allocation3], 4
      %s39 = int_to_ptr.vmem [resolvable:$true] %s38
      %41 = dma.hbm_to_vmem [thread:$0]  %s2, 16, %s39, [#allocation4]
    $region13: #{cnn_forward.1} parent=1 // pred_fallthru
      _
    // Predicated region
    $region14: #{cnn_forward.1} parent=1 // pred_check
      _
    $region15: #{cnn_forward.1} parent=1 // pred_check_branch
      %43 = sbr.rel (0) target = $region17
    $region16: #{cnn_forward.1} parent=1 // pred_region
      %s45 = ssub.s32 4608, 4608
      %46 = vsyncadd [#allocation6], %s45
      %s47 = sshll.u32 [#allocation5], 4
      %s48 = int_to_ptr.vmem [resolvable:$true] %s47
      %53 = dma.hbm_to_vmem [thread:$0]  %s3, 4608, %s48, [#allocation6], 128, 128, 8
    $region17: #{cnn_forward.1} parent=1 // pred_fallthru
      _
    // Predicated region
    $region18: #{cnn_forward.1} parent=1 // pred_check
      _
    $region19: #{cnn_forward.1} parent=1 // pred_check_branch
      %55 = sbr.rel (0) target = $region21
    $region20: #{cnn_forward.1} parent=1 // pred_region
      %s57 = ssub.s32 16, 16
      %58 = vsyncadd [#allocation6], %s57
      %s60 = sshll.u32 [#allocation7], 4
      %s61 = int_to_ptr.vmem [resolvable:$true] %s60
      %63 = dma.hbm_to_vmem [thread:$0]  %s4, 16, %s61, [#allocation6]
    $region21: #{cnn_forward.1} parent=1 // pred_fallthru
      _
    // Predicated region
    $region22: #{cnn_forward.1} parent=1 // pred_check
      _
    $region23: #{cnn_forward.1} parent=1 // pred_check_branch
      %65 = sbr.rel (0) target = $region25
    $region24: #{cnn_forward.1} parent=1 // pred_region
      %s67 = ssub.s32 9216, 9216
      %68 = vsyncadd [#allocation9], %s67
      %s69 = sshll.u32 [#allocation8], 4
      %s70 = int_to_ptr.vmem [resolvable:$true] %s69
      %75 = dma.hbm_to_vmem [thread:$0]  %s5, 9216, %s70, [#allocation9], 128, 128, 8
    $region25: #{cnn_forward.1} parent=1 // pred_fallthru
      _
    // Predicated region
    $region26: #{cnn_forward.1} parent=1 // pred_check
      _
    $region27: #{cnn_forward.1} parent=1 // pred_check_branch
      %77 = sbr.rel (0) target = $region29
    $region28: #{cnn_forward.1} parent=1 // pred_region
      %s79 = ssub.s32 16, 16
      %80 = vsyncadd [#allocation9], %s79
      %s82 = sshll.u32 [#allocation10], 4
      %s83 = int_to_ptr.vmem [resolvable:$true] %s82
      %85 = dma.hbm_to_vmem [thread:$0]  %s6, 16, %s83, [#allocation9]
    $region29: #{cnn_forward.1} parent=1 // pred_fallthru
      _
    // Predicated region
    $region30: #{cnn_forward.1} parent=1 // pred_check
      _
    $region31: #{cnn_forward.1} parent=1 // pred_check_branch
      %87 = sbr.rel (0) target = $region33
    $region32: #{cnn_forward.1} parent=1 // pred_region
      %s89 = ssub.s32 36864, 36864
      %90 = vsyncadd [#allocation12], %s89
      %s91 = sshll.u32 [#allocation11], 4
      %s92 = int_to_ptr.vmem [resolvable:$true] %s91
      %97 = dma.hbm_to_vmem [thread:$0]  %s7, 36864, %s92, [#allocation12], 256, 256, 16
    $region33: #{cnn_forward.1} parent=1 // pred_fallthru
      _
    // Predicated region
    $region34: #{cnn_forward.1} parent=1 // pred_check
      _
    $region35: #{cnn_forward.1} parent=1 // pred_check_branch
      %99 = sbr.rel (0) target = $region37
    $region36: #{cnn_forward.1} parent=1 // pred_region
      %s101 = ssub.s32 32, 32
      %102 = vsyncadd [#allocation12], %s101
      %s104 = sshll.u32 [#allocation13], 4
      %s105 = int_to_ptr.vmem [resolvable:$true] %s104
      %107 = dma.hbm_to_vmem [thread:$0]  %s8, 32, %s105, [#allocation12]
    $region37: #{cnn_forward.1} parent=1 // pred_fallthru
      _
    // Predicated region
    $region38: #{cnn_forward.1} parent=1 // pred_check
      _
    $region39: #{cnn_forward.1} parent=1 // pred_check_branch
      %109 = sbr.rel (0) target = $region41
    $region40: #{cnn_forward.1} parent=1 // pred_region
      %s111 = ssub.s32 4096, 4096
      %112 = vsyncadd [#allocation15], %s111
      %s113 = sshll.u32 [#allocation14], 4
      %s114 = int_to_ptr.vmem [resolvable:$true] %s113
      %119 = dma.hbm_to_vmem [thread:$0]  %s9, 4096, %s114, [#allocation15], 128, 128, 8
    $region41: #{cnn_forward.1} parent=1 // pred_fallthru
      _
    // Predicated region
    $region42: #{cnn_forward.1} parent=1 // pred_check
      _
    $region43: #{cnn_forward.1} parent=1 // pred_check_branch
      %121 = sbr.rel (0) target = $region45
    $region44: #{cnn_forward.1} parent=1 // pred_region
      %s123 = ssub.s32 16, 16
      %124 = vsyncadd [#allocation15], %s123
      %s126 = sshll.u32 [#allocation16], 4
      %s127 = int_to_ptr.vmem [resolvable:$true] %s126
      %129 = dma.hbm_to_vmem [thread:$0]  %s10, 16, %s127, [#allocation15]
    $region45: #{cnn_forward.1} parent=1 // pred_fallthru
      _
    // Predicated region
    $region46: #{cnn_forward.1} parent=1 // pred_check
      _
    $region47: #{cnn_forward.1} parent=1 // pred_check_branch
      %131 = sbr.rel (0) target = $region49
    $region48: #{cnn_forward.1} parent=1 // pred_region
      _
    $region49: #{cnn_forward.1} parent=1 // pred_fallthru
      _
    // Predicated region
    $region50: #{cnn_forward.1} parent=1 // pred_check
      _
    $region51: #{cnn_forward.1} parent=1 // pred_check_branch
      %133 = sbr.rel (0) target = $region53
    $region52: #{cnn_forward.1} parent=1 // pred_region
      %s135 = ssub.s32 16, 16
      %136 = vsyncadd [#allocation18], %s135
      %s138 = sshll.u32 [#allocation17], 4
      %s139 = int_to_ptr.vmem [resolvable:$true] %s138
      %141 = dma.hbm_to_vmem [thread:$0]  %s12, 16, %s139, [#allocation18]
    $region53: #{cnn_forward.1} parent=1 // pred_fallthru
      _
    // Predicated region
    $region54: #{cnn_forward.1} parent=1 // pred_check
      _
    $region55: #{cnn_forward.1} parent=1 // pred_check_branch
      %143 = sbr.rel (0) target = $region57
    $region56: #{cnn_forward.1} parent=1 // pred_region
      _
    $region57: #{cnn_forward.1} parent=1 // pred_fallthru
      _
    // Predicated region
    $region58: #{cnn_forward.1} parent=1 // pred_check
      _
    $region59: #{cnn_forward.1} parent=1 // pred_check_branch
      %145 = sbr.rel (0) target = $region61
    $region60: #{cnn_forward.1} parent=1 // pred_region
      _
    $region61: #{cnn_forward.1} parent=1 // pred_fallthru
      _
    // Predicated region
    $region62: #{cnn_forward.1} parent=1 // pred_check
      _
    $region63: #{cnn_forward.1} parent=1 // pred_check_branch
      %147 = sbr.rel (0) target = $region65
    $region64: #{cnn_forward.1} parent=1 // pred_region
      %148 = dma.done [#allocation4], 16
    $region65: #{cnn_forward.1} parent=1 // pred_fallthru
      _
    // Predicated region
    $region66: #{cnn_forward.1} parent=1 // pred_check
      _
    $region67: #{cnn_forward.1} parent=1 // pred_check_branch
      %150 = sbr.rel (0) target = $region69
    $region68: #{cnn_forward.1} parent=1 // pred_region
      %151 = dma.done [#allocation6], 4608
    $region69: #{cnn_forward.1} parent=1 // pred_fallthru
      _
    // Predicated region
    $region70: #{cnn_forward.1} parent=1 // pred_check
      _
    $region71: #{cnn_forward.1} parent=1 // pred_check_branch
      %153 = sbr.rel (0) target = $region73
    $region72: #{cnn_forward.1} parent=1 // pred_region
      %154 = dma.done [#allocation6], 16
    $region73: #{cnn_forward.1} parent=1 // pred_fallthru
      _
    // Predicated region
    $region74: #{cnn_forward.1} parent=1 // pred_check
      _
    $region75: #{cnn_forward.1} parent=1 // pred_check_branch
      %156 = sbr.rel (0) target = $region77
    $region76: #{cnn_forward.1} parent=1 // pred_region
      %157 = dma.done [#allocation9], 9216
    $region77: #{cnn_forward.1} parent=1 // pred_fallthru
      _
    // Predicated region
    $region78: #{cnn_forward.1} parent=1 // pred_check
      _
    $region79: #{cnn_forward.1} parent=1 // pred_check_branch
      %159 = sbr.rel (0) target = $region81
    $region80: #{cnn_forward.1} parent=1 // pred_region
      %160 = dma.done [#allocation9], 16
    $region81: #{cnn_forward.1} parent=1 // pred_fallthru
      _
    // Predicated region
    $region82: #{cnn_forward.1} parent=1 // pred_check
      _
    $region83: #{cnn_forward.1} parent=1 // pred_check_branch
      %162 = sbr.rel (0) target = $region85
    $region84: #{cnn_forward.1} parent=1 // pred_region
      %163 = dma.done [#allocation12], 36864
    $region85: #{cnn_forward.1} parent=1 // pred_fallthru
      _
    // Predicated region
    $region86: #{cnn_forward.1} parent=1 // pred_check
      _
    $region87: #{cnn_forward.1} parent=1 // pred_check_branch
      %165 = sbr.rel (0) target = $region89
    $region88: #{cnn_forward.1} parent=1 // pred_region
      %166 = dma.done [#allocation12], 32
    $region89: #{cnn_forward.1} parent=1 // pred_fallthru
      _
    // Predicated region
    $region90: #{cnn_forward.1} parent=1 // pred_check
      _
    $region91: #{cnn_forward.1} parent=1 // pred_check_branch
      %168 = sbr.rel (0) target = $region93
    $region92: #{cnn_forward.1} parent=1 // pred_region
      %169 = dma.done [#allocation15], 4096
    $region93: #{cnn_forward.1} parent=1 // pred_fallthru
      _
    // Predicated region
    $region94: #{cnn_forward.1} parent=1 // pred_check
      _
    $region95: #{cnn_forward.1} parent=1 // pred_check_branch
      %171 = sbr.rel (0) target = $region97
    $region96: #{cnn_forward.1} parent=1 // pred_region
      %172 = dma.done [#allocation15], 16
    $region97: #{cnn_forward.1} parent=1 // pred_fallthru
      _
    // Predicated region
    $region98: #{cnn_forward.1} parent=1 // pred_check
      _
    $region99: #{cnn_forward.1} parent=1 // pred_check_branch
      %174 = sbr.rel (0) target = $region101
    $region100: #{cnn_forward.1} parent=1 // pred_region
      %175 = dma.done [#allocation18], 16
    $region101: #{cnn_forward.1} parent=1 // pred_fallthru
      _
    %v176 = vld [vmem:[%s0] sm:$0xff]
    %v177 = vld [vmem:[%s0 + $0x8] sm:$0xff]
    %v178 = vld [vmem:[%s0 + $0x10] sm:$0xff]
    %v179 = vld [vmem:[%s0 + $0x18] sm:$0xff]
    %v180 = vld [vmem:[%s0 + $0x20] sm:$0xff]
    %v181 = vld [vmem:[%s0 + $0x28] sm:$0xff]
    %v182 = vld [vmem:[%s0 + $0x30] sm:$0xff]
    %v183 = vld [vmem:[%s0 + $0x38] sm:$0xff]
    %v184 = vld [vmem:[%s0 + $0x40] sm:$0xff]
    %v185 = vld [vmem:[%s0 + $0x48] sm:$0xff]
    %v186 = vld [vmem:[%s0 + $0x50] sm:$0xff]
    %v187 = vld [vmem:[%s0 + $0x58] sm:$0xff]
    %v188 = vld [vmem:[%s0 + $0x60] sm:$0xff]
    %v189 = vld [vmem:[%s0 + $0x68] sm:$0xff]
    %v190 = vld [vmem:[%s0 + $0x70] sm:$0xff]
    %v191 = vld [vmem:[%s0 + $0x78] sm:$0xff]
    %v192 = vld [vmem:[%s0 + $0x80] sm:$0xff]
    %v193 = vld [vmem:[%s0 + $0x88] sm:$0xff]
    %v194 = vld [vmem:[%s0 + $0x90] sm:$0xff]
    %v195 = vld [vmem:[%s0 + $0x98] sm:$0xff]
    %v196 = vld [vmem:[%s0 + $0xa0] sm:$0xff]
    %v197 = vld [vmem:[%s0 + $0xa8] sm:$0xff]
    %v198 = vld [vmem:[%s0 + $0xb0] sm:$0xff]
    %v199 = vld [vmem:[%s0 + $0xb8] sm:$0xff]
    %v200 = vld [vmem:[%s0 + $0xc0] sm:$0xff]
    %v201 = vld [vmem:[%s0 + $0xc8] sm:$0xff]
    %v202 = vld [vmem:[%s0 + $0xd0] sm:$0xff]
    %v203 = vld [vmem:[%s0 + $0xd8] sm:$0xff]
    %v204 = vld [vmem:[%s0 + $0xe0] sm:$0xff]
    %v205 = vld [vmem:[%s0 + $0xe8] sm:$0xff]
    %v206 = vld [vmem:[%s0 + $0xf0] sm:$0xff]
    %v207 = vld [vmem:[%s0 + $0xf8] sm:$0xff]
    %v208 = vld [vmem:[%s0 + $0x100] sm:$0xff]
    %v209 = vld [vmem:[%s0 + $0x108] sm:$0xff]
    %v210 = vld [vmem:[%s0 + $0x110] sm:$0xff]
    %v211 = vld [vmem:[%s0 + $0x118] sm:$0xff]
    %v212 = vld [vmem:[%s0 + $0x120] sm:$0xff]
    %v213 = vld [vmem:[%s0 + $0x128] sm:$0xff]
    %v214 = vld [vmem:[%s0 + $0x130] sm:$0xff]
    %v215 = vld [vmem:[%s0 + $0x138] sm:$0xff]
    %v216 = vld [vmem:[%s0 + $0x140] sm:$0xff]
    %v217 = vld [vmem:[%s0 + $0x148] sm:$0xff]
    %v218 = vld [vmem:[%s0 + $0x150] sm:$0xff]
    %v219 = vld [vmem:[%s0 + $0x158] sm:$0xff]
    %v220 = vld [vmem:[%s0 + $0x160] sm:$0xff]
    %v221 = vld [vmem:[%s0 + $0x168] sm:$0xff]
    %v222 = vld [vmem:[%s0 + $0x170] sm:$0xff]
    %v223 = vld [vmem:[%s0 + $0x178] sm:$0xff]
    %v224 = vld [vmem:[%s0 + $0x180] sm:$0xff]
    %v225 = vld [vmem:[%s0 + $0x188] sm:$0xff]
    %v226 = vld [vmem:[%s0 + $0x190] sm:$0xff]
    %v227 = vld [vmem:[%s0 + $0x198] sm:$0xff]
    %v228 = vld [vmem:[%s0 + $0x1a0] sm:$0xff]
    %v229 = vld [vmem:[%s0 + $0x1a8] sm:$0xff]
    %v230 = vld [vmem:[%s0 + $0x1b0] sm:$0xff]
    %v231 = vld [vmem:[%s0 + $0x1b8] sm:$0xff]
    %v232 = vld [vmem:[%s0 + $0x1c0] sm:$0xff]
    %v233 = vld [vmem:[%s0 + $0x1c8] sm:$0xff]
    %v234 = vld [vmem:[%s0 + $0x1d0] sm:$0xff]
    %v235 = vld [vmem:[%s0 + $0x1d8] sm:$0xff]
    %v236 = vld [vmem:[%s0 + $0x1e0] sm:$0xff]
    %v237 = vld [vmem:[%s0 + $0x1e8] sm:$0xff]
    %v238 = vld [vmem:[%s0 + $0x1f0] sm:$0xff]
    %v239 = vld [vmem:[%s0 + $0x1f8] sm:$0xff]
    %v240 = vld [vmem:[%s1] sm:$0xff]
    %v241 = vld [vmem:[%s1 + $0x8] sm:$0x1]
    %v242 = vld [vmem:[#allocation3] sm:$0x1]
    %vm308 = vcmask 1040384
    %v309 = vrot.slane 0.0, 7
    %v310 = vsel %vm308, %v309, %v309
    %v311 = vrot.slane %v176, 7
    %v312 = vrot.slane %v177, 7
    %v313 = vsel %vm308, %v311, %v312
    %v314 = vrot.slane %v178, 7
    %v315 = vrot.slane %v179, 7
    %v316 = vsel %vm308, %v314, %v315
    %v317 = vrot.slane %v180, 7
    %v318 = vrot.slane %v181, 7
    %v319 = vsel %vm308, %v317, %v318
    %v320 = vrot.slane %v182, 7
    %v321 = vrot.slane %v183, 7
    %v322 = vsel %vm308, %v320, %v321
    %v323 = vrot.slane %v184, 7
    %v324 = vrot.slane %v185, 7
    %v325 = vsel %vm308, %v323, %v324
    %v326 = vrot.slane %v186, 7
    %v327 = vrot.slane %v187, 7
    %v328 = vsel %vm308, %v326, %v327
    %v329 = vrot.slane %v188, 7
    %v330 = vrot.slane %v189, 7
    %v331 = vsel %vm308, %v329, %v330
    %v332 = vrot.slane %v190, 7
    %v333 = vrot.slane %v191, 7
    %v334 = vsel %vm308, %v332, %v333
    %v335 = vrot.slane %v192, 7
    %v336 = vrot.slane %v193, 7
    %v337 = vsel %vm308, %v335, %v336
    %v338 = vrot.slane %v194, 7
    %v339 = vrot.slane %v195, 7
    %v340 = vsel %vm308, %v338, %v339
    %v341 = vrot.slane %v196, 7
    %v342 = vrot.slane %v197, 7
    %v343 = vsel %vm308, %v341, %v342
    %v344 = vrot.slane %v198, 7
    %v345 = vrot.slane %v199, 7
    %v346 = vsel %vm308, %v344, %v345
    %v347 = vrot.slane %v200, 7
    %v348 = vrot.slane %v201, 7
    %v349 = vsel %vm308, %v347, %v348
    %v350 = vrot.slane %v202, 7
    %v351 = vrot.slane %v203, 7
    %v352 = vsel %vm308, %v350, %v351
    %v353 = vrot.slane %v204, 7
    %v354 = vrot.slane %v205, 7
    %v355 = vsel %vm308, %v353, %v354
    %v356 = vrot.slane %v206, 7
    %v357 = vrot.slane %v207, 7
    %v358 = vsel %vm308, %v356, %v357
    %v359 = vrot.slane %v208, 7
    %v360 = vrot.slane %v209, 7
    %v361 = vsel %vm308, %v359, %v360
    %v362 = vrot.slane %v210, 7
    %v363 = vrot.slane %v211, 7
    %v364 = vsel %vm308, %v362, %v363
    %v365 = vrot.slane %v212, 7
    %v366 = vrot.slane %v213, 7
    %v367 = vsel %vm308, %v365, %v366
    %v368 = vrot.slane %v214, 7
    %v369 = vrot.slane %v215, 7
    %v370 = vsel %vm308, %v368, %v369
    %v371 = vrot.slane %v216, 7
    %v372 = vrot.slane %v217, 7
    %v373 = vsel %vm308, %v371, %v372
    %v374 = vrot.slane %v218, 7
    %v375 = vrot.slane %v219, 7
    %v376 = vsel %vm308, %v374, %v375
    %v377 = vrot.slane %v220, 7
    %v378 = vrot.slane %v221, 7
    %v379 = vsel %vm308, %v377, %v378
    %v380 = vrot.slane %v222, 7
    %v381 = vrot.slane %v223, 7
    %v382 = vsel %vm308, %v380, %v381
    %v383 = vrot.slane %v224, 7
    %v384 = vrot.slane %v225, 7
    %v385 = vsel %vm308, %v383, %v384
    %v386 = vrot.slane %v226, 7
    %v387 = vrot.slane %v227, 7
    %v388 = vsel %vm308, %v386, %v387
    %v389 = vrot.slane %v228, 7
    %v390 = vrot.slane %v229, 7
    %v391 = vsel %vm308, %v389, %v390
    %v392 = vrot.slane %v230, 7
    %v393 = vrot.slane %v231, 7
    %v394 = vsel %vm308, %v392, %v393
    %v395 = vrot.slane %v232, 7
    %v396 = vrot.slane %v233, 7
    %v397 = vsel %vm308, %v395, %v396
    %v398 = vrot.slane %v234, 7
    %v399 = vrot.slane %v235, 7
    %v400 = vsel %vm308, %v398, %v399
    %v401 = vrot.slane %v236, 7
    %v402 = vrot.slane %v237, 7
    %v403 = vsel %vm308, %v401, %v402
    %v404 = vrot.slane %v238, 7
    %v405 = vrot.slane %v239, 7
    %v406 = vsel %vm308, %v404, %v405
    %v503 = vsel %vm308, 0.0, %v309
    %v504 = vsel %vm308, 0.0, %v311
    %v505 = vsel %vm308, 0.0, %v314
    %v506 = vsel %vm308, 0.0, %v317
    %v507 = vsel %vm308, 0.0, %v320
    %v508 = vsel %vm308, 0.0, %v323
    %v509 = vsel %vm308, 0.0, %v326
    %v510 = vsel %vm308, 0.0, %v329
    %v511 = vsel %vm308, 0.0, %v332
    %v512 = vsel %vm308, 0.0, %v335
    %v513 = vsel %vm308, 0.0, %v338
    %v514 = vsel %vm308, 0.0, %v341
    %v515 = vsel %vm308, 0.0, %v344
    %v516 = vsel %vm308, 0.0, %v347
    %v517 = vsel %vm308, 0.0, %v350
    %v518 = vsel %vm308, 0.0, %v353
    %v519 = vsel %vm308, 0.0, %v356
    %v520 = vsel %vm308, 0.0, %v359
    %v521 = vsel %vm308, 0.0, %v362
    %v522 = vsel %vm308, 0.0, %v365
    %v523 = vsel %vm308, 0.0, %v368
    %v524 = vsel %vm308, 0.0, %v371
    %v525 = vsel %vm308, 0.0, %v374
    %v526 = vsel %vm308, 0.0, %v377
    %v527 = vsel %vm308, 0.0, %v380
    %v528 = vsel %vm308, 0.0, %v383
    %v529 = vsel %vm308, 0.0, %v386
    %v530 = vsel %vm308, 0.0, %v389
    %v531 = vsel %vm308, 0.0, %v392
    %v532 = vsel %vm308, 0.0, %v395
    %v533 = vsel %vm308, 0.0, %v398
    %v534 = vsel %vm308, 0.0, %v401
    %v535 = vsel %vm308, 0.0, %v404
    %v536 = vsel %vm308, %v309, 0.0
    %v537 = vsel %vm308, %v312, 0.0
    %v538 = vsel %vm308, %v315, 0.0
    %v539 = vsel %vm308, %v318, 0.0
    %v540 = vsel %vm308, %v321, 0.0
    %v541 = vsel %vm308, %v324, 0.0
    %v542 = vsel %vm308, %v327, 0.0
    %v543 = vsel %vm308, %v330, 0.0
    %v544 = vsel %vm308, %v333, 0.0
    %v545 = vsel %vm308, %v336, 0.0
    %v546 = vsel %vm308, %v339, 0.0
    %v547 = vsel %vm308, %v342, 0.0
    %v548 = vsel %vm308, %v345, 0.0
    %v549 = vsel %vm308, %v348, 0.0
    %v550 = vsel %vm308, %v351, 0.0
    %v551 = vsel %vm308, %v354, 0.0
    %v552 = vsel %vm308, %v357, 0.0
    %v553 = vsel %vm308, %v360, 0.0
    %v554 = vsel %vm308, %v363, 0.0
    %v555 = vsel %vm308, %v366, 0.0
    %v556 = vsel %vm308, %v369, 0.0
    %v557 = vsel %vm308, %v372, 0.0
    %v558 = vsel %vm308, %v375, 0.0
    %v559 = vsel %vm308, %v378, 0.0
    %v560 = vsel %vm308, %v381, 0.0
    %v561 = vsel %vm308, %v384, 0.0
    %v562 = vsel %vm308, %v387, 0.0
    %v563 = vsel %vm308, %v390, 0.0
    %v564 = vsel %vm308, %v393, 0.0
    %v565 = vsel %vm308, %v396, 0.0
    %v566 = vsel %vm308, %v399, 0.0
    %v567 = vsel %vm308, %v402, 0.0
    %v568 = vsel %vm308, %v405, 0.0
    %vm631 = vcmask 1046528
    %v632 = vrot.slane %v503, 1
    %v633 = vrot.slane %v310, 1
    %v634 = vsel %vm631, %v632, %v633
    %v635 = vrot.slane %v536, 1
    %v636 = vsel %vm631, %v633, %v635
    %v637 = vrot.slane %v504, 1
    %v638 = vrot.slane %v313, 1
    %v639 = vsel %vm631, %v637, %v638
    %v640 = vrot.slane %v537, 1
    %v641 = vsel %vm631, %v638, %v640
    %v642 = vrot.slane %v505, 1
    %v643 = vrot.slane %v316, 1
    %v644 = vsel %vm631, %v642, %v643
    %v645 = vrot.slane %v538, 1
    %v646 = vsel %vm631, %v643, %v645
    %v647 = vrot.slane %v506, 1
    %v648 = vrot.slane %v319, 1
    %v649 = vsel %vm631, %v647, %v648
    %v650 = vrot.slane %v539, 1
    %v651 = vsel %vm631, %v648, %v650
    %v652 = vrot.slane %v507, 1
    %v653 = vrot.slane %v322, 1
    %v654 = vsel %vm631, %v652, %v653
    %v655 = vrot.slane %v540, 1
    %v656 = vsel %vm631, %v653, %v655
    %v657 = vrot.slane %v508, 1
    %v658 = vrot.slane %v325, 1
    %v659 = vsel %vm631, %v657, %v658
    %v660 = vrot.slane %v541, 1
    %v661 = vsel %vm631, %v658, %v660
    %v662 = vrot.slane %v509, 1
    %v663 = vrot.slane %v328, 1
    %v664 = vsel %vm631, %v662, %v663
    %v665 = vrot.slane %v542, 1
    %v666 = vsel %vm631, %v663, %v665
    %v667 = vrot.slane %v510, 1
    %v668 = vrot.slane %v331, 1
    %v669 = vsel %vm631, %v667, %v668
    %v670 = vrot.slane %v543, 1
    %v671 = vsel %vm631, %v668, %v670
    %v672 = vrot.slane %v511, 1
    %v673 = vrot.slane %v334, 1
    %v674 = vsel %vm631, %v672, %v673
    %v675 = vrot.slane %v544, 1
    %v676 = vsel %vm631, %v673, %v675
    %v677 = vrot.slane %v512, 1
    %v678 = vrot.slane %v337, 1
    %v679 = vsel %vm631, %v677, %v678
    %v680 = vrot.slane %v545, 1
    %v681 = vsel %vm631, %v678, %v680
    %v682 = vrot.slane %v513, 1
    %v683 = vrot.slane %v340, 1
    %v684 = vsel %vm631, %v682, %v683
    %v685 = vrot.slane %v546, 1
    %v686 = vsel %vm631, %v683, %v685
    %v687 = vrot.slane %v514, 1
    %v688 = vrot.slane %v343, 1
    %v689 = vsel %vm631, %v687, %v688
    %v690 = vrot.slane %v547, 1
    %v691 = vsel %vm631, %v688, %v690
    %v692 = vrot.slane %v515, 1
    %v693 = vrot.slane %v346, 1
    %v694 = vsel %vm631, %v692, %v693
    %v695 = vrot.slane %v548, 1
    %v696 = vsel %vm631, %v693, %v695
    %v697 = vrot.slane %v516, 1
    %v698 = vrot.slane %v349, 1
    %v699 = vsel %vm631, %v697, %v698
    %v700 = vrot.slane %v549, 1
    %v701 = vsel %vm631, %v698, %v700
    %v702 = vrot.slane %v517, 1
    %v703 = vrot.slane %v352, 1
    %v704 = vsel %vm631, %v702, %v703
    %v705 = vrot.slane %v550, 1
    %v706 = vsel %vm631, %v703, %v705
    %v707 = vrot.slane %v518, 1
    %v708 = vrot.slane %v355, 1
    %v709 = vsel %vm631, %v707, %v708
    %v710 = vrot.slane %v551, 1
    %v711 = vsel %vm631, %v708, %v710
    %v712 = vrot.slane %v520, 1
    %v713 = vrot.slane %v361, 1
    %v714 = vsel %vm631, %v712, %v713
    %v715 = vrot.slane %v553, 1
    %v716 = vsel %vm631, %v713, %v715
    %v717 = vrot.slane %v521, 1
    %v718 = vrot.slane %v364, 1
    %v719 = vsel %vm631, %v717, %v718
    %v720 = vrot.slane %v554, 1
    %v721 = vsel %vm631, %v718, %v720
    %v722 = vrot.slane %v522, 1
    %v723 = vrot.slane %v367, 1
    %v724 = vsel %vm631, %v722, %v723
    %v725 = vrot.slane %v555, 1
    %v726 = vsel %vm631, %v723, %v725
    %v727 = vrot.slane %v523, 1
    %v728 = vrot.slane %v370, 1
    %v729 = vsel %vm631, %v727, %v728
    %v730 = vrot.slane %v556, 1
    %v731 = vsel %vm631, %v728, %v730
    %v732 = vrot.slane %v524, 1
    %v733 = vrot.slane %v373, 1
    %v734 = vsel %vm631, %v732, %v733
    %v735 = vrot.slane %v557, 1
    %v736 = vsel %vm631, %v733, %v735
    %v737 = vrot.slane %v525, 1
    %v738 = vrot.slane %v376, 1
    %v739 = vsel %vm631, %v737, %v738
    %v740 = vrot.slane %v558, 1
    %v741 = vsel %vm631, %v738, %v740
    %v742 = vrot.slane %v526, 1
    %v743 = vrot.slane %v379, 1
    %v744 = vsel %vm631, %v742, %v743
    %v745 = vrot.slane %v559, 1
    %v746 = vsel %vm631, %v743, %v745
    %v747 = vrot.slane %v527, 1
    %v748 = vrot.slane %v382, 1
    %v749 = vsel %vm631, %v747, %v748
    %v750 = vrot.slane %v560, 1
    %v751 = vsel %vm631, %v748, %v750
    %v752 = vrot.slane %v528, 1
    %v753 = vrot.slane %v385, 1
    %v754 = vsel %vm631, %v752, %v753
    %v755 = vrot.slane %v561, 1
    %v756 = vsel %vm631, %v753, %v755
    %v757 = vrot.slane %v529, 1
    %v758 = vrot.slane %v388, 1
    %v759 = vsel %vm631, %v757, %v758
    %v760 = vrot.slane %v562, 1
    %v761 = vsel %vm631, %v758, %v760
    %v762 = vrot.slane %v530, 1
    %v763 = vrot.slane %v391, 1
    %v764 = vsel %vm631, %v762, %v763
    %v765 = vrot.slane %v563, 1
    %v766 = vsel %vm631, %v763, %v765
    %v767 = vrot.slane %v531, 1
    %v768 = vrot.slane %v394, 1
    %v769 = vsel %vm631, %v767, %v768
    %v770 = vrot.slane %v564, 1
    %v771 = vsel %vm631, %v768, %v770
    %v772 = vrot.slane %v532, 1
    %v773 = vrot.slane %v397, 1
    %v774 = vsel %vm631, %v772, %v773
    %v775 = vrot.slane %v565, 1
    %v776 = vsel %vm631, %v773, %v775
    %v777 = vrot.slane %v533, 1
    %v778 = vrot.slane %v400, 1
    %v779 = vsel %vm631, %v777, %v778
    %v780 = vrot.slane %v566, 1
    %v781 = vsel %vm631, %v778, %v780
    %v782 = vrot.slane %v534, 1
    %v783 = vrot.slane %v403, 1
    %v784 = vsel %vm631, %v782, %v783
    %v785 = vrot.slane %v567, 1
    %v786 = vsel %vm631, %v783, %v785
    %787 = vrot.lane.b32.xlu0 %v634, 1
    %v788 = vpop.permute.xlu0 %787
    %789 = vrot.lane.b32.xlu0 %v636, 1
    %v790 = vpop.permute.xlu0 %789
    %791 = vrot.lane.b32.xlu0 %v639, 1
    %v792 = vpop.permute.xlu0 %791
    %793 = vrot.lane.b32.xlu0 %v641, 1
    %v794 = vpop.permute.xlu0 %793
    %795 = vrot.lane.b32.xlu0 %v644, 1
    %v796 = vpop.permute.xlu0 %795
    %797 = vrot.lane.b32.xlu0 %v646, 1
    %v798 = vpop.permute.xlu0 %797
    %799 = vrot.lane.b32.xlu0 %v649, 1
    %v800 = vpop.permute.xlu0 %799
    %801 = vrot.lane.b32.xlu0 %v651, 1
    %v802 = vpop.permute.xlu0 %801
    %803 = vrot.lane.b32.xlu0 %v654, 1
    %v804 = vpop.permute.xlu0 %803
    %805 = vrot.lane.b32.xlu0 %v656, 1
    %v806 = vpop.permute.xlu0 %805
    %807 = vrot.lane.b32.xlu0 %v659, 1
    %v808 = vpop.permute.xlu0 %807
    %809 = vrot.lane.b32.xlu0 %v661, 1
    %v810 = vpop.permute.xlu0 %809
    %811 = vrot.lane.b32.xlu0 %v664, 1
    %v812 = vpop.permute.xlu0 %811
    %813 = vrot.lane.b32.xlu0 %v666, 1
    %v814 = vpop.permute.xlu0 %813
    %815 = vrot.lane.b32.xlu0 %v669, 1
    %v816 = vpop.permute.xlu0 %815
    %817 = vrot.lane.b32.xlu0 %v671, 1
    %v818 = vpop.permute.xlu0 %817
    %819 = vrot.lane.b32.xlu0 %v674, 1
    %v820 = vpop.permute.xlu0 %819
    %821 = vrot.lane.b32.xlu0 %v676, 1
    %v822 = vpop.permute.xlu0 %821
    %823 = vrot.lane.b32.xlu0 %v679, 1
    %v824 = vpop.permute.xlu0 %823
    %825 = vrot.lane.b32.xlu0 %v681, 1
    %v826 = vpop.permute.xlu0 %825
    %827 = vrot.lane.b32.xlu0 %v684, 1
    %v828 = vpop.permute.xlu0 %827
    %829 = vrot.lane.b32.xlu0 %v686, 1
    %v830 = vpop.permute.xlu0 %829
    %831 = vrot.lane.b32.xlu0 %v689, 1
    %v832 = vpop.permute.xlu0 %831
    %833 = vrot.lane.b32.xlu0 %v691, 1
    %v834 = vpop.permute.xlu0 %833
    %835 = vrot.lane.b32.xlu0 %v694, 1
    %v836 = vpop.permute.xlu0 %835
    %837 = vrot.lane.b32.xlu0 %v696, 1
    %v838 = vpop.permute.xlu0 %837
    %839 = vrot.lane.b32.xlu0 %v699, 1
    %v840 = vpop.permute.xlu0 %839
    %841 = vrot.lane.b32.xlu0 %v701, 1
    %v842 = vpop.permute.xlu0 %841
    %843 = vrot.lane.b32.xlu0 %v704, 1
    %v844 = vpop.permute.xlu0 %843
    %845 = vrot.lane.b32.xlu0 %v706, 1
    %v846 = vpop.permute.xlu0 %845
    %847 = vrot.lane.b32.xlu0 %v709, 1
    %v848 = vpop.permute.xlu0 %847
    %849 = vrot.lane.b32.xlu0 %v711, 1
    %v850 = vpop.permute.xlu0 %849
    %851 = vrot.lane.b32.xlu0 %v714, 1
    %v852 = vpop.permute.xlu0 %851
    %853 = vrot.lane.b32.xlu0 %v716, 1
    %v854 = vpop.permute.xlu0 %853
    %855 = vrot.lane.b32.xlu0 %v719, 1
    %v856 = vpop.permute.xlu0 %855
    %857 = vrot.lane.b32.xlu0 %v721, 1
    %v858 = vpop.permute.xlu0 %857
    %859 = vrot.lane.b32.xlu0 %v724, 1
    %v860 = vpop.permute.xlu0 %859
    %861 = vrot.lane.b32.xlu0 %v726, 1
    %v862 = vpop.permute.xlu0 %861
    %863 = vrot.lane.b32.xlu0 %v729, 1
    %v864 = vpop.permute.xlu0 %863
    %865 = vrot.lane.b32.xlu0 %v731, 1
    %v866 = vpop.permute.xlu0 %865
    %867 = vrot.lane.b32.xlu0 %v734, 1
    %v868 = vpop.permute.xlu0 %867
    %869 = vrot.lane.b32.xlu0 %v736, 1
    %v870 = vpop.permute.xlu0 %869
    %871 = vrot.lane.b32.xlu0 %v739, 1
    %v872 = vpop.permute.xlu0 %871
    %873 = vrot.lane.b32.xlu0 %v741, 1
    %v874 = vpop.permute.xlu0 %873
    %875 = vrot.lane.b32.xlu0 %v744, 1
    %v876 = vpop.permute.xlu0 %875
    %877 = vrot.lane.b32.xlu0 %v746, 1
    %v878 = vpop.permute.xlu0 %877
    %879 = vrot.lane.b32.xlu0 %v749, 1
    %v880 = vpop.permute.xlu0 %879
    %881 = vrot.lane.b32.xlu0 %v751, 1
    %v882 = vpop.permute.xlu0 %881
    %883 = vrot.lane.b32.xlu0 %v754, 1
    %v884 = vpop.permute.xlu0 %883
    %885 = vrot.lane.b32.xlu0 %v756, 1
    %v886 = vpop.permute.xlu0 %885
    %887 = vrot.lane.b32.xlu0 %v759, 1
    %v888 = vpop.permute.xlu0 %887
    %889 = vrot.lane.b32.xlu0 %v761, 1
    %v890 = vpop.permute.xlu0 %889
    %891 = vrot.lane.b32.xlu0 %v764, 1
    %v892 = vpop.permute.xlu0 %891
    %893 = vrot.lane.b32.xlu0 %v766, 1
    %v894 = vpop.permute.xlu0 %893
    %895 = vrot.lane.b32.xlu0 %v769, 1
    %v896 = vpop.permute.xlu0 %895
    %897 = vrot.lane.b32.xlu0 %v771, 1
    %v898 = vpop.permute.xlu0 %897
    %899 = vrot.lane.b32.xlu0 %v774, 1
    %v900 = vpop.permute.xlu0 %899
    %901 = vrot.lane.b32.xlu0 %v776, 1
    %v902 = vpop.permute.xlu0 %901
    %903 = vrot.lane.b32.xlu0 %v779, 1
    %v904 = vpop.permute.xlu0 %903
    %905 = vrot.lane.b32.xlu0 %v781, 1
    %v906 = vpop.permute.xlu0 %905
    %907 = vrot.lane.b32.xlu0 %v784, 1
    %v908 = vpop.permute.xlu0 %907
    %909 = vrot.lane.b32.xlu0 %v786, 1
    %v910 = vpop.permute.xlu0 %909
    %vm973 = vcmask 1045504
    %v974 = vrot.slane %v503, 2
    %v975 = vrot.slane %v310, 2
    %v976 = vsel %vm973, %v974, %v975
    %v977 = vrot.slane %v536, 2
    %v978 = vsel %vm973, %v975, %v977
    %v979 = vrot.slane %v504, 2
    %v980 = vrot.slane %v313, 2
    %v981 = vsel %vm973, %v979, %v980
    %v982 = vrot.slane %v537, 2
    %v983 = vsel %vm973, %v980, %v982
    %v984 = vrot.slane %v505, 2
    %v985 = vrot.slane %v316, 2
    %v986 = vsel %vm973, %v984, %v985
    %v987 = vrot.slane %v538, 2
    %v988 = vsel %vm973, %v985, %v987
    %v989 = vrot.slane %v506, 2
    %v990 = vrot.slane %v319, 2
    %v991 = vsel %vm973, %v989, %v990
    %v992 = vrot.slane %v539, 2
    %v993 = vsel %vm973, %v990, %v992
    %v994 = vrot.slane %v507, 2
    %v995 = vrot.slane %v322, 2
    %v996 = vsel %vm973, %v994, %v995
    %v997 = vrot.slane %v540, 2
    %v998 = vsel %vm973, %v995, %v997
    %v999 = vrot.slane %v508, 2
    %v1000 = vrot.slane %v325, 2
    %v1001 = vsel %vm973, %v999, %v1000
    %v1002 = vrot.slane %v541, 2
    %v1003 = vsel %vm973, %v1000, %v1002
    %v1004 = vrot.slane %v509, 2
    %v1005 = vrot.slane %v328, 2
    %v1006 = vsel %vm973, %v1004, %v1005
    %v1007 = vrot.slane %v542, 2
    %v1008 = vsel %vm973, %v1005, %v1007
    %v1009 = vrot.slane %v510, 2
    %v1010 = vrot.slane %v331, 2
    %v1011 = vsel %vm973, %v1009, %v1010
    %v1012 = vrot.slane %v543, 2
    %v1013 = vsel %vm973, %v1010, %v1012
    %v1014 = vrot.slane %v511, 2
    %v1015 = vrot.slane %v334, 2
    %v1016 = vsel %vm973, %v1014, %v1015
    %v1017 = vrot.slane %v544, 2
    %v1018 = vsel %vm973, %v1015, %v1017
    %v1019 = vrot.slane %v512, 2
    %v1020 = vrot.slane %v337, 2
    %v1021 = vsel %vm973, %v1019, %v1020
    %v1022 = vrot.slane %v545, 2
    %v1023 = vsel %vm973, %v1020, %v1022
    %v1024 = vrot.slane %v513, 2
    %v1025 = vrot.slane %v340, 2
    %v1026 = vsel %vm973, %v1024, %v1025
    %v1027 = vrot.slane %v546, 2
    %v1028 = vsel %vm973, %v1025, %v1027
    %v1029 = vrot.slane %v514, 2
    %v1030 = vrot.slane %v343, 2
    %v1031 = vsel %vm973, %v1029, %v1030
    %v1032 = vrot.slane %v547, 2
    %v1033 = vsel %vm973, %v1030, %v1032
    %v1034 = vrot.slane %v515, 2
    %v1035 = vrot.slane %v346, 2
    %v1036 = vsel %vm973, %v1034, %v1035
    %v1037 = vrot.slane %v548, 2
    %v1038 = vsel %vm973, %v1035, %v1037
    %v1039 = vrot.slane %v516, 2
    %v1040 = vrot.slane %v349, 2
    %v1041 = vsel %vm973, %v1039, %v1040
    %v1042 = vrot.slane %v549, 2
    %v1043 = vsel %vm973, %v1040, %v1042
    %v1044 = vrot.slane %v517, 2
    %v1045 = vrot.slane %v352, 2
    %v1046 = vsel %vm973, %v1044, %v1045
    %v1047 = vrot.slane %v550, 2
    %v1048 = vsel %vm973, %v1045, %v1047
    %v1049 = vrot.slane %v518, 2
    %v1050 = vrot.slane %v355, 2
    %v1051 = vsel %vm973, %v1049, %v1050
    %v1052 = vrot.slane %v551, 2
    %v1053 = vsel %vm973, %v1050, %v1052
    %v1054 = vrot.slane %v520, 2
    %v1055 = vrot.slane %v361, 2
    %v1056 = vsel %vm973, %v1054, %v1055
    %v1057 = vrot.slane %v553, 2
    %v1058 = vsel %vm973, %v1055, %v1057
    %v1059 = vrot.slane %v521, 2
    %v1060 = vrot.slane %v364, 2
    %v1061 = vsel %vm973, %v1059, %v1060
    %v1062 = vrot.slane %v554, 2
    %v1063 = vsel %vm973, %v1060, %v1062
    %v1064 = vrot.slane %v522, 2
    %v1065 = vrot.slane %v367, 2
    %v1066 = vsel %vm973, %v1064, %v1065
    %v1067 = vrot.slane %v555, 2
    %v1068 = vsel %vm973, %v1065, %v1067
    %v1069 = vrot.slane %v523, 2
    %v1070 = vrot.slane %v370, 2
    %v1071 = vsel %vm973, %v1069, %v1070
    %v1072 = vrot.slane %v556, 2
    %v1073 = vsel %vm973, %v1070, %v1072
    %v1074 = vrot.slane %v524, 2
    %v1075 = vrot.slane %v373, 2
    %v1076 = vsel %vm973, %v1074, %v1075
    %v1077 = vrot.slane %v557, 2
    %v1078 = vsel %vm973, %v1075, %v1077
    %v1079 = vrot.slane %v525, 2
    %v1080 = vrot.slane %v376, 2
    %v1081 = vsel %vm973, %v1079, %v1080
    %v1082 = vrot.slane %v558, 2
    %v1083 = vsel %vm973, %v1080, %v1082
    %v1084 = vrot.slane %v526, 2
    %v1085 = vrot.slane %v379, 2
    %v1086 = vsel %vm973, %v1084, %v1085
    %v1087 = vrot.slane %v559, 2
    %v1088 = vsel %vm973, %v1085, %v1087
    %v1089 = vrot.slane %v527, 2
    %v1090 = vrot.slane %v382, 2
    %v1091 = vsel %vm973, %v1089, %v1090
    %v1092 = vrot.slane %v560, 2
    %v1093 = vsel %vm973, %v1090, %v1092
    %v1094 = vrot.slane %v528, 2
    %v1095 = vrot.slane %v385, 2
    %v1096 = vsel %vm973, %v1094, %v1095
    %v1097 = vrot.slane %v561, 2
    %v1098 = vsel %vm973, %v1095, %v1097
    %v1099 = vrot.slane %v529, 2
    %v1100 = vrot.slane %v388, 2
    %v1101 = vsel %vm973, %v1099, %v1100
    %v1102 = vrot.slane %v562, 2
    %v1103 = vsel %vm973, %v1100, %v1102
    %v1104 = vrot.slane %v530, 2
    %v1105 = vrot.slane %v391, 2
    %v1106 = vsel %vm973, %v1104, %v1105
    %v1107 = vrot.slane %v563, 2
    %v1108 = vsel %vm973, %v1105, %v1107
    %v1109 = vrot.slane %v531, 2
    %v1110 = vrot.slane %v394, 2
    %v1111 = vsel %vm973, %v1109, %v1110
    %v1112 = vrot.slane %v564, 2
    %v1113 = vsel %vm973, %v1110, %v1112
    %v1114 = vrot.slane %v532, 2
    %v1115 = vrot.slane %v397, 2
    %v1116 = vsel %vm973, %v1114, %v1115
    %v1117 = vrot.slane %v565, 2
    %v1118 = vsel %vm973, %v1115, %v1117
    %v1119 = vrot.slane %v533, 2
    %v1120 = vrot.slane %v400, 2
    %v1121 = vsel %vm973, %v1119, %v1120
    %v1122 = vrot.slane %v566, 2
    %v1123 = vsel %vm973, %v1120, %v1122
    %v1124 = vrot.slane %v534, 2
    %v1125 = vrot.slane %v403, 2
    %v1126 = vsel %vm973, %v1124, %v1125
    %v1127 = vrot.slane %v567, 2
    %v1128 = vsel %vm973, %v1125, %v1127
    %1129 = vrot.lane.b32.xlu0 %v976, 2
    %v1130 = vpop.permute.xlu0 %1129
    %1131 = vrot.lane.b32.xlu0 %v978, 2
    %v1132 = vpop.permute.xlu0 %1131
    %1133 = vrot.lane.b32.xlu0 %v981, 2
    %v1134 = vpop.permute.xlu0 %1133
    %1135 = vrot.lane.b32.xlu0 %v983, 2
    %v1136 = vpop.permute.xlu0 %1135
    %1137 = vrot.lane.b32.xlu0 %v986, 2
    %v1138 = vpop.permute.xlu0 %1137
    %1139 = vrot.lane.b32.xlu0 %v988, 2
    %v1140 = vpop.permute.xlu0 %1139
    %1141 = vrot.lane.b32.xlu0 %v991, 2
    %v1142 = vpop.permute.xlu0 %1141
    %1143 = vrot.lane.b32.xlu0 %v993, 2
    %v1144 = vpop.permute.xlu0 %1143
    %1145 = vrot.lane.b32.xlu0 %v996, 2
    %v1146 = vpop.permute.xlu0 %1145
    %1147 = vrot.lane.b32.xlu0 %v998, 2
    %v1148 = vpop.permute.xlu0 %1147
    %1149 = vrot.lane.b32.xlu0 %v1001, 2
    %v1150 = vpop.permute.xlu0 %1149
    %1151 = vrot.lane.b32.xlu0 %v1003, 2
    %v1152 = vpop.permute.xlu0 %1151
    %1153 = vrot.lane.b32.xlu0 %v1006, 2
    %v1154 = vpop.permute.xlu0 %1153
    %1155 = vrot.lane.b32.xlu0 %v1008, 2
    %v1156 = vpop.permute.xlu0 %1155
    %1157 = vrot.lane.b32.xlu0 %v1011, 2
    %v1158 = vpop.permute.xlu0 %1157
    %1159 = vrot.lane.b32.xlu0 %v1013, 2
    %v1160 = vpop.permute.xlu0 %1159
    %1161 = vrot.lane.b32.xlu0 %v1016, 2
    %v1162 = vpop.permute.xlu0 %1161
    %1163 = vrot.lane.b32.xlu0 %v1018, 2
    %v1164 = vpop.permute.xlu0 %1163
    %1165 = vrot.lane.b32.xlu0 %v1021, 2
    %v1166 = vpop.permute.xlu0 %1165
    %1167 = vrot.lane.b32.xlu0 %v1023, 2
    %v1168 = vpop.permute.xlu0 %1167
    %1169 = vrot.lane.b32.xlu0 %v1026, 2
    %v1170 = vpop.permute.xlu0 %1169
    %1171 = vrot.lane.b32.xlu0 %v1028, 2
    %v1172 = vpop.permute.xlu0 %1171
    %1173 = vrot.lane.b32.xlu0 %v1031, 2
    %v1174 = vpop.permute.xlu0 %1173
    %1175 = vrot.lane.b32.xlu0 %v1033, 2
    %v1176 = vpop.permute.xlu0 %1175
    %1177 = vrot.lane.b32.xlu0 %v1036, 2
    %v1178 = vpop.permute.xlu0 %1177
    %1179 = vrot.lane.b32.xlu0 %v1038, 2
    %v1180 = vpop.permute.xlu0 %1179
    %1181 = vrot.lane.b32.xlu0 %v1041, 2
    %v1182 = vpop.permute.xlu0 %1181
    %1183 = vrot.lane.b32.xlu0 %v1043, 2
    %v1184 = vpop.permute.xlu0 %1183
    %1185 = vrot.lane.b32.xlu0 %v1046, 2
    %v1186 = vpop.permute.xlu0 %1185
    %1187 = vrot.lane.b32.xlu0 %v1048, 2
    %v1188 = vpop.permute.xlu0 %1187
    %1189 = vrot.lane.b32.xlu0 %v1051, 2
    %v1190 = vpop.permute.xlu0 %1189
    %1191 = vrot.lane.b32.xlu0 %v1053, 2
    %v1192 = vpop.permute.xlu0 %1191
    %1193 = vrot.lane.b32.xlu0 %v1056, 2
    %v1194 = vpop.permute.xlu0 %1193
    %1195 = vrot.lane.b32.xlu0 %v1058, 2
    %v1196 = vpop.permute.xlu0 %1195
    %1197 = vrot.lane.b32.xlu0 %v1061, 2
    %v1198 = vpop.permute.xlu0 %1197
    %1199 = vrot.lane.b32.xlu0 %v1063, 2
    %v1200 = vpop.permute.xlu0 %1199
    %1201 = vrot.lane.b32.xlu0 %v1066, 2
    %v1202 = vpop.permute.xlu0 %1201
    %1203 = vrot.lane.b32.xlu0 %v1068, 2
    %v1204 = vpop.permute.xlu0 %1203
    %1205 = vrot.lane.b32.xlu0 %v1071, 2
    %v1206 = vpop.permute.xlu0 %1205
    %1207 = vrot.lane.b32.xlu0 %v1073, 2
    %v1208 = vpop.permute.xlu0 %1207
    %1209 = vrot.lane.b32.xlu0 %v1076, 2
    %v1210 = vpop.permute.xlu0 %1209
    %1211 = vrot.lane.b32.xlu0 %v1078, 2
    %v1212 = vpop.permute.xlu0 %1211
    %1213 = vrot.lane.b32.xlu0 %v1081, 2
    %v1214 = vpop.permute.xlu0 %1213
    %1215 = vrot.lane.b32.xlu0 %v1083, 2
    %v1216 = vpop.permute.xlu0 %1215
    %1217 = vrot.lane.b32.xlu0 %v1086, 2
    %v1218 = vpop.permute.xlu0 %1217
    %1219 = vrot.lane.b32.xlu0 %v1088, 2
    %v1220 = vpop.permute.xlu0 %1219
    %1221 = vrot.lane.b32.xlu0 %v1091, 2
    %v1222 = vpop.permute.xlu0 %1221
    %1223 = vrot.lane.b32.xlu0 %v1093, 2
    %v1224 = vpop.permute.xlu0 %1223
    %1225 = vrot.lane.b32.xlu0 %v1096, 2
    %v1226 = vpop.permute.xlu0 %1225
    %1227 = vrot.lane.b32.xlu0 %v1098, 2
    %v1228 = vpop.permute.xlu0 %1227
    %1229 = vrot.lane.b32.xlu0 %v1101, 2
    %v1230 = vpop.permute.xlu0 %1229
    %1231 = vrot.lane.b32.xlu0 %v1103, 2
    %v1232 = vpop.permute.xlu0 %1231
    %1233 = vrot.lane.b32.xlu0 %v1106, 2
    %v1234 = vpop.permute.xlu0 %1233
    %1235 = vrot.lane.b32.xlu0 %v1108, 2
    %v1236 = vpop.permute.xlu0 %1235
    %1237 = vrot.lane.b32.xlu0 %v1111, 2
    %v1238 = vpop.permute.xlu0 %1237
    %1239 = vrot.lane.b32.xlu0 %v1113, 2
    %v1240 = vpop.permute.xlu0 %1239
    %1241 = vrot.lane.b32.xlu0 %v1116, 2
    %v1242 = vpop.permute.xlu0 %1241
    %1243 = vrot.lane.b32.xlu0 %v1118, 2
    %v1244 = vpop.permute.xlu0 %1243
    %1245 = vrot.lane.b32.xlu0 %v1121, 2
    %v1246 = vpop.permute.xlu0 %1245
    %1247 = vrot.lane.b32.xlu0 %v1123, 2
    %v1248 = vpop.permute.xlu0 %1247
    %1249 = vrot.lane.b32.xlu0 %v1126, 2
    %v1250 = vpop.permute.xlu0 %1249
    %1251 = vrot.lane.b32.xlu0 %v1128, 2
    %v1252 = vpop.permute.xlu0 %1251
    %1317 = vrot.lane.b32.xlu0 %v504, 3
    %v1318 = vpop.permute.xlu0 %1317
    %1319 = vrot.lane.b32.xlu0 %v313, 3
    %v1320 = vpop.permute.xlu0 %1319
    %1321 = vrot.lane.b32.xlu0 %v505, 3
    %v1322 = vpop.permute.xlu0 %1321
    %1323 = vrot.lane.b32.xlu0 %v316, 3
    %v1324 = vpop.permute.xlu0 %1323
    %1325 = vrot.lane.b32.xlu0 %v506, 3
    %v1326 = vpop.permute.xlu0 %1325
    %1327 = vrot.lane.b32.xlu0 %v319, 3
    %v1328 = vpop.permute.xlu0 %1327
    %1329 = vrot.lane.b32.xlu0 %v507, 3
    %v1330 = vpop.permute.xlu0 %1329
    %1331 = vrot.lane.b32.xlu0 %v322, 3
    %v1332 = vpop.permute.xlu0 %1331
    %1333 = vrot.lane.b32.xlu0 %v508, 3
    %v1334 = vpop.permute.xlu0 %1333
    %1335 = vrot.lane.b32.xlu0 %v325, 3
    %v1336 = vpop.permute.xlu0 %1335
    %1337 = vrot.lane.b32.xlu0 %v509, 3
    %v1338 = vpop.permute.xlu0 %1337
    %1339 = vrot.lane.b32.xlu0 %v328, 3
    %v1340 = vpop.permute.xlu0 %1339
    %1341 = vrot.lane.b32.xlu0 %v510, 3
    %v1342 = vpop.permute.xlu0 %1341
    %1343 = vrot.lane.b32.xlu0 %v331, 3
    %v1344 = vpop.permute.xlu0 %1343
    %1345 = vrot.lane.b32.xlu0 %v511, 3
    %v1346 = vpop.permute.xlu0 %1345
    %1347 = vrot.lane.b32.xlu0 %v334, 3
    %v1348 = vpop.permute.xlu0 %1347
    %1349 = vrot.lane.b32.xlu0 %v512, 3
    %v1350 = vpop.permute.xlu0 %1349
    %1351 = vrot.lane.b32.xlu0 %v337, 3
    %v1352 = vpop.permute.xlu0 %1351
    %1353 = vrot.lane.b32.xlu0 %v513, 3
    %v1354 = vpop.permute.xlu0 %1353
    %1355 = vrot.lane.b32.xlu0 %v340, 3
    %v1356 = vpop.permute.xlu0 %1355
    %1357 = vrot.lane.b32.xlu0 %v514, 3
    %v1358 = vpop.permute.xlu0 %1357
    %1359 = vrot.lane.b32.xlu0 %v343, 3
    %v1360 = vpop.permute.xlu0 %1359
    %1361 = vrot.lane.b32.xlu0 %v515, 3
    %v1362 = vpop.permute.xlu0 %1361
    %1363 = vrot.lane.b32.xlu0 %v346, 3
    %v1364 = vpop.permute.xlu0 %1363
    %1365 = vrot.lane.b32.xlu0 %v516, 3
    %v1366 = vpop.permute.xlu0 %1365
    %1367 = vrot.lane.b32.xlu0 %v349, 3
    %v1368 = vpop.permute.xlu0 %1367
    %1369 = vrot.lane.b32.xlu0 %v517, 3
    %v1370 = vpop.permute.xlu0 %1369
    %1371 = vrot.lane.b32.xlu0 %v352, 3
    %v1372 = vpop.permute.xlu0 %1371
    %1373 = vrot.lane.b32.xlu0 %v518, 3
    %v1374 = vpop.permute.xlu0 %1373
    %1375 = vrot.lane.b32.xlu0 %v355, 3
    %v1376 = vpop.permute.xlu0 %1375
    %1377 = vrot.lane.b32.xlu0 %v519, 3
    %v1378 = vpop.permute.xlu0 %1377
    %1379 = vrot.lane.b32.xlu0 %v358, 3
    %v1380 = vpop.permute.xlu0 %1379
    %1381 = vrot.lane.b32.xlu0 %v520, 3
    %v1382 = vpop.permute.xlu0 %1381
    %1383 = vrot.lane.b32.xlu0 %v361, 3
    %v1384 = vpop.permute.xlu0 %1383
    %1385 = vrot.lane.b32.xlu0 %v521, 3
    %v1386 = vpop.permute.xlu0 %1385
    %1387 = vrot.lane.b32.xlu0 %v364, 3
    %v1388 = vpop.permute.xlu0 %1387
    %1389 = vrot.lane.b32.xlu0 %v522, 3
    %v1390 = vpop.permute.xlu0 %1389
    %1391 = vrot.lane.b32.xlu0 %v367, 3
    %v1392 = vpop.permute.xlu0 %1391
    %1393 = vrot.lane.b32.xlu0 %v523, 3
    %v1394 = vpop.permute.xlu0 %1393
    %1395 = vrot.lane.b32.xlu0 %v370, 3
    %v1396 = vpop.permute.xlu0 %1395
    %1397 = vrot.lane.b32.xlu0 %v524, 3
    %v1398 = vpop.permute.xlu0 %1397
    %1399 = vrot.lane.b32.xlu0 %v373, 3
    %v1400 = vpop.permute.xlu0 %1399
    %1401 = vrot.lane.b32.xlu0 %v525, 3
    %v1402 = vpop.permute.xlu0 %1401
    %1403 = vrot.lane.b32.xlu0 %v376, 3
    %v1404 = vpop.permute.xlu0 %1403
    %1405 = vrot.lane.b32.xlu0 %v526, 3
    %v1406 = vpop.permute.xlu0 %1405
    %1407 = vrot.lane.b32.xlu0 %v379, 3
    %v1408 = vpop.permute.xlu0 %1407
    %1409 = vrot.lane.b32.xlu0 %v527, 3
    %v1410 = vpop.permute.xlu0 %1409
    %1411 = vrot.lane.b32.xlu0 %v382, 3
    %v1412 = vpop.permute.xlu0 %1411
    %1413 = vrot.lane.b32.xlu0 %v528, 3
    %v1414 = vpop.permute.xlu0 %1413
    %1415 = vrot.lane.b32.xlu0 %v385, 3
    %v1416 = vpop.permute.xlu0 %1415
    %1417 = vrot.lane.b32.xlu0 %v529, 3
    %v1418 = vpop.permute.xlu0 %1417
    %1419 = vrot.lane.b32.xlu0 %v388, 3
    %v1420 = vpop.permute.xlu0 %1419
    %1421 = vrot.lane.b32.xlu0 %v530, 3
    %v1422 = vpop.permute.xlu0 %1421
    %1423 = vrot.lane.b32.xlu0 %v391, 3
    %v1424 = vpop.permute.xlu0 %1423
    %1425 = vrot.lane.b32.xlu0 %v531, 3
    %v1426 = vpop.permute.xlu0 %1425
    %1427 = vrot.lane.b32.xlu0 %v394, 3
    %v1428 = vpop.permute.xlu0 %1427
    %1429 = vrot.lane.b32.xlu0 %v532, 3
    %v1430 = vpop.permute.xlu0 %1429
    %1431 = vrot.lane.b32.xlu0 %v397, 3
    %v1432 = vpop.permute.xlu0 %1431
    %1433 = vrot.lane.b32.xlu0 %v533, 3
    %v1434 = vpop.permute.xlu0 %1433
    %1435 = vrot.lane.b32.xlu0 %v400, 3
    %v1436 = vpop.permute.xlu0 %1435
    %1437 = vrot.lane.b32.xlu0 %v534, 3
    %v1438 = vpop.permute.xlu0 %1437
    %1439 = vrot.lane.b32.xlu0 %v403, 3
    %v1440 = vpop.permute.xlu0 %1439
    %1441 = vrot.lane.b32.xlu0 %v535, 3
    %v1442 = vpop.permute.xlu0 %1441
    %1443 = vrot.lane.b32.xlu0 %v406, 3
    %v1444 = vpop.permute.xlu0 %1443
    %v1511 = vrot.slane %v519, 1
    %v1512 = vrot.slane %v358, 1
    %v1513 = vsel %vm631, %v1511, %v1512
    %v1514 = vrot.slane %v552, 1
    %v1515 = vsel %vm631, %v1512, %v1514
    %v1516 = vrot.slane %v535, 1
    %v1517 = vrot.slane %v406, 1
    %v1518 = vsel %vm631, %v1516, %v1517
    %v1519 = vrot.slane %v568, 1
    %v1520 = vsel %vm631, %v1517, %v1519
    %1521 = vrot.lane.b32.xlu0 %v639, 4
    %v1522 = vpop.permute.xlu0 %1521
    %1523 = vrot.lane.b32.xlu0 %v641, 4
    %v1524 = vpop.permute.xlu0 %1523
    %1525 = vrot.lane.b32.xlu0 %v644, 4
    %v1526 = vpop.permute.xlu0 %1525
    %1527 = vrot.lane.b32.xlu0 %v646, 4
    %v1528 = vpop.permute.xlu0 %1527
    %1529 = vrot.lane.b32.xlu0 %v649, 4
    %v1530 = vpop.permute.xlu0 %1529
    %1531 = vrot.lane.b32.xlu0 %v651, 4
    %v1532 = vpop.permute.xlu0 %1531
    %1533 = vrot.lane.b32.xlu0 %v654, 4
    %v1534 = vpop.permute.xlu0 %1533
    %1535 = vrot.lane.b32.xlu0 %v656, 4
    %v1536 = vpop.permute.xlu0 %1535
    %1537 = vrot.lane.b32.xlu0 %v659, 4
    %v1538 = vpop.permute.xlu0 %1537
    %1539 = vrot.lane.b32.xlu0 %v661, 4
    %v1540 = vpop.permute.xlu0 %1539
    %1541 = vrot.lane.b32.xlu0 %v664, 4
    %v1542 = vpop.permute.xlu0 %1541
    %1543 = vrot.lane.b32.xlu0 %v666, 4
    %v1544 = vpop.permute.xlu0 %1543
    %1545 = vrot.lane.b32.xlu0 %v669, 4
    %v1546 = vpop.permute.xlu0 %1545
    %1547 = vrot.lane.b32.xlu0 %v671, 4
    %v1548 = vpop.permute.xlu0 %1547
    %1549 = vrot.lane.b32.xlu0 %v674, 4
    %v1550 = vpop.permute.xlu0 %1549
    %1551 = vrot.lane.b32.xlu0 %v676, 4
    %v1552 = vpop.permute.xlu0 %1551
    %1553 = vrot.lane.b32.xlu0 %v679, 4
    %v1554 = vpop.permute.xlu0 %1553
    %1555 = vrot.lane.b32.xlu0 %v681, 4
    %v1556 = vpop.permute.xlu0 %1555
    %1557 = vrot.lane.b32.xlu0 %v684, 4
    %v1558 = vpop.permute.xlu0 %1557
    %1559 = vrot.lane.b32.xlu0 %v686, 4
    %v1560 = vpop.permute.xlu0 %1559
    %1561 = vrot.lane.b32.xlu0 %v689, 4
    %v1562 = vpop.permute.xlu0 %1561
    %1563 = vrot.lane.b32.xlu0 %v691, 4
    %v1564 = vpop.permute.xlu0 %1563
    %1565 = vrot.lane.b32.xlu0 %v694, 4
    %v1566 = vpop.permute.xlu0 %1565
    %1567 = vrot.lane.b32.xlu0 %v696, 4
    %v1568 = vpop.permute.xlu0 %1567
    %1569 = vrot.lane.b32.xlu0 %v699, 4
    %v1570 = vpop.permute.xlu0 %1569
    %1571 = vrot.lane.b32.xlu0 %v701, 4
    %v1572 = vpop.permute.xlu0 %1571
    %1573 = vrot.lane.b32.xlu0 %v704, 4
    %v1574 = vpop.permute.xlu0 %1573
    %1575 = vrot.lane.b32.xlu0 %v706, 4
    %v1576 = vpop.permute.xlu0 %1575
    %1577 = vrot.lane.b32.xlu0 %v709, 4
    %v1578 = vpop.permute.xlu0 %1577
    %1579 = vrot.lane.b32.xlu0 %v711, 4
    %v1580 = vpop.permute.xlu0 %1579
    %1581 = vrot.lane.b32.xlu0 %v1513, 4
    %v1582 = vpop.permute.xlu0 %1581
    %1583 = vrot.lane.b32.xlu0 %v1515, 4
    %v1584 = vpop.permute.xlu0 %1583
    %1585 = vrot.lane.b32.xlu0 %v714, 4
    %v1586 = vpop.permute.xlu0 %1585
    %1587 = vrot.lane.b32.xlu0 %v716, 4
    %v1588 = vpop.permute.xlu0 %1587
    %1589 = vrot.lane.b32.xlu0 %v719, 4
    %v1590 = vpop.permute.xlu0 %1589
    %1591 = vrot.lane.b32.xlu0 %v721, 4
    %v1592 = vpop.permute.xlu0 %1591
    %1593 = vrot.lane.b32.xlu0 %v724, 4
    %v1594 = vpop.permute.xlu0 %1593
    %1595 = vrot.lane.b32.xlu0 %v726, 4
    %v1596 = vpop.permute.xlu0 %1595
    %1597 = vrot.lane.b32.xlu0 %v729, 4
    %v1598 = vpop.permute.xlu0 %1597
    %1599 = vrot.lane.b32.xlu0 %v731, 4
    %v1600 = vpop.permute.xlu0 %1599
    %1601 = vrot.lane.b32.xlu0 %v734, 4
    %v1602 = vpop.permute.xlu0 %1601
    %1603 = vrot.lane.b32.xlu0 %v736, 4
    %v1604 = vpop.permute.xlu0 %1603
    %1605 = vrot.lane.b32.xlu0 %v739, 4
    %v1606 = vpop.permute.xlu0 %1605
    %1607 = vrot.lane.b32.xlu0 %v741, 4
    %v1608 = vpop.permute.xlu0 %1607
    %1609 = vrot.lane.b32.xlu0 %v744, 4
    %v1610 = vpop.permute.xlu0 %1609
    %1611 = vrot.lane.b32.xlu0 %v746, 4
    %v1612 = vpop.permute.xlu0 %1611
    %1613 = vrot.lane.b32.xlu0 %v749, 4
    %v1614 = vpop.permute.xlu0 %1613
    %1615 = vrot.lane.b32.xlu0 %v751, 4
    %v1616 = vpop.permute.xlu0 %1615
    %1617 = vrot.lane.b32.xlu0 %v754, 4
    %v1618 = vpop.permute.xlu0 %1617
    %1619 = vrot.lane.b32.xlu0 %v756, 4
    %v1620 = vpop.permute.xlu0 %1619
    %1621 = vrot.lane.b32.xlu0 %v759, 4
    %v1622 = vpop.permute.xlu0 %1621
    %1623 = vrot.lane.b32.xlu0 %v761, 4
    %v1624 = vpop.permute.xlu0 %1623
    %1625 = vrot.lane.b32.xlu0 %v764, 4
    %v1626 = vpop.permute.xlu0 %1625
    %1627 = vrot.lane.b32.xlu0 %v766, 4
    %v1628 = vpop.permute.xlu0 %1627
    %1629 = vrot.lane.b32.xlu0 %v769, 4
    %v1630 = vpop.permute.xlu0 %1629
    %1631 = vrot.lane.b32.xlu0 %v771, 4
    %v1632 = vpop.permute.xlu0 %1631
    %1633 = vrot.lane.b32.xlu0 %v774, 4
    %v1634 = vpop.permute.xlu0 %1633
    %1635 = vrot.lane.b32.xlu0 %v776, 4
    %v1636 = vpop.permute.xlu0 %1635
    %1637 = vrot.lane.b32.xlu0 %v779, 4
    %v1638 = vpop.permute.xlu0 %1637
    %1639 = vrot.lane.b32.xlu0 %v781, 4
    %v1640 = vpop.permute.xlu0 %1639
    %1641 = vrot.lane.b32.xlu0 %v784, 4
    %v1642 = vpop.permute.xlu0 %1641
    %1643 = vrot.lane.b32.xlu0 %v786, 4
    %v1644 = vpop.permute.xlu0 %1643
    %1645 = vrot.lane.b32.xlu0 %v1518, 4
    %v1646 = vpop.permute.xlu0 %1645
    %1647 = vrot.lane.b32.xlu0 %v1520, 4
    %v1648 = vpop.permute.xlu0 %1647
    %v1713 = vrot.slane %v519, 2
    %v1714 = vrot.slane %v358, 2
    %v1715 = vsel %vm973, %v1713, %v1714
    %v1716 = vrot.slane %v552, 2
    %v1717 = vsel %vm973, %v1714, %v1716
    %v1718 = vrot.slane %v535, 2
    %v1719 = vrot.slane %v406, 2
    %v1720 = vsel %vm973, %v1718, %v1719
    %v1721 = vrot.slane %v568, 2
    %v1722 = vsel %vm973, %v1719, %v1721
    %1723 = vrot.lane.b32.xlu0 %v981, 5
    %v1724 = vpop.permute.xlu0 %1723
    %1725 = vrot.lane.b32.xlu0 %v983, 5
    %v1726 = vpop.permute.xlu0 %1725
    %1727 = vrot.lane.b32.xlu0 %v986, 5
    %v1728 = vpop.permute.xlu0 %1727
    %1729 = vrot.lane.b32.xlu0 %v988, 5
    %v1730 = vpop.permute.xlu0 %1729
    %1731 = vrot.lane.b32.xlu0 %v991, 5
    %v1732 = vpop.permute.xlu0 %1731
    %1733 = vrot.lane.b32.xlu0 %v993, 5
    %v1734 = vpop.permute.xlu0 %1733
    %1735 = vrot.lane.b32.xlu0 %v996, 5
    %v1736 = vpop.permute.xlu0 %1735
    %1737 = vrot.lane.b32.xlu0 %v998, 5
    %v1738 = vpop.permute.xlu0 %1737
    %1739 = vrot.lane.b32.xlu0 %v1001, 5
    %v1740 = vpop.permute.xlu0 %1739
    %1741 = vrot.lane.b32.xlu0 %v1003, 5
    %v1742 = vpop.permute.xlu0 %1741
    %1743 = vrot.lane.b32.xlu0 %v1006, 5
    %v1744 = vpop.permute.xlu0 %1743
    %1745 = vrot.lane.b32.xlu0 %v1008, 5
    %v1746 = vpop.permute.xlu0 %1745
    %1747 = vrot.lane.b32.xlu0 %v1011, 5
    %v1748 = vpop.permute.xlu0 %1747
    %1749 = vrot.lane.b32.xlu0 %v1013, 5
    %v1750 = vpop.permute.xlu0 %1749
    %1751 = vrot.lane.b32.xlu0 %v1016, 5
    %v1752 = vpop.permute.xlu0 %1751
    %1753 = vrot.lane.b32.xlu0 %v1018, 5
    %v1754 = vpop.permute.xlu0 %1753
    %1755 = vrot.lane.b32.xlu0 %v1021, 5
    %v1756 = vpop.permute.xlu0 %1755
    %1757 = vrot.lane.b32.xlu0 %v1023, 5
    %v1758 = vpop.permute.xlu0 %1757
    %1759 = vrot.lane.b32.xlu0 %v1026, 5
    %v1760 = vpop.permute.xlu0 %1759
    %1761 = vrot.lane.b32.xlu0 %v1028, 5
    %v1762 = vpop.permute.xlu0 %1761
    %1763 = vrot.lane.b32.xlu0 %v1031, 5
    %v1764 = vpop.permute.xlu0 %1763
    %1765 = vrot.lane.b32.xlu0 %v1033, 5
    %v1766 = vpop.permute.xlu0 %1765
    %1767 = vrot.lane.b32.xlu0 %v1036, 5
    %v1768 = vpop.permute.xlu0 %1767
    %1769 = vrot.lane.b32.xlu0 %v1038, 5
    %v1770 = vpop.permute.xlu0 %1769
    %1771 = vrot.lane.b32.xlu0 %v1041, 5
    %v1772 = vpop.permute.xlu0 %1771
    %1773 = vrot.lane.b32.xlu0 %v1043, 5
    %v1774 = vpop.permute.xlu0 %1773
    %1775 = vrot.lane.b32.xlu0 %v1046, 5
    %v1776 = vpop.permute.xlu0 %1775
    %1777 = vrot.lane.b32.xlu0 %v1048, 5
    %v1778 = vpop.permute.xlu0 %1777
    %1779 = vrot.lane.b32.xlu0 %v1051, 5
    %v1780 = vpop.permute.xlu0 %1779
    %1781 = vrot.lane.b32.xlu0 %v1053, 5
    %v1782 = vpop.permute.xlu0 %1781
    %1783 = vrot.lane.b32.xlu0 %v1715, 5
    %v1784 = vpop.permute.xlu0 %1783
    %1785 = vrot.lane.b32.xlu0 %v1717, 5
    %v1786 = vpop.permute.xlu0 %1785
    %1787 = vrot.lane.b32.xlu0 %v1056, 5
    %v1788 = vpop.permute.xlu0 %1787
    %1789 = vrot.lane.b32.xlu0 %v1058, 5
    %v1790 = vpop.permute.xlu0 %1789
    %1791 = vrot.lane.b32.xlu0 %v1061, 5
    %v1792 = vpop.permute.xlu0 %1791
    %1793 = vrot.lane.b32.xlu0 %v1063, 5
    %v1794 = vpop.permute.xlu0 %1793
    %1795 = vrot.lane.b32.xlu0 %v1066, 5
    %v1796 = vpop.permute.xlu0 %1795
    %1797 = vrot.lane.b32.xlu0 %v1068, 5
    %v1798 = vpop.permute.xlu0 %1797
    %1799 = vrot.lane.b32.xlu0 %v1071, 5
    %v1800 = vpop.permute.xlu0 %1799
    %1801 = vrot.lane.b32.xlu0 %v1073, 5
    %v1802 = vpop.permute.xlu0 %1801
    %1803 = vrot.lane.b32.xlu0 %v1076, 5
    %v1804 = vpop.permute.xlu0 %1803
    %1805 = vrot.lane.b32.xlu0 %v1078, 5
    %v1806 = vpop.permute.xlu0 %1805
    %1807 = vrot.lane.b32.xlu0 %v1081, 5
    %v1808 = vpop.permute.xlu0 %1807
    %1809 = vrot.lane.b32.xlu0 %v1083, 5
    %v1810 = vpop.permute.xlu0 %1809
    %1811 = vrot.lane.b32.xlu0 %v1086, 5
    %v1812 = vpop.permute.xlu0 %1811
    %1813 = vrot.lane.b32.xlu0 %v1088, 5
    %v1814 = vpop.permute.xlu0 %1813
    %1815 = vrot.lane.b32.xlu0 %v1091, 5
    %v1816 = vpop.permute.xlu0 %1815
    %1817 = vrot.lane.b32.xlu0 %v1093, 5
    %v1818 = vpop.permute.xlu0 %1817
    %1819 = vrot.lane.b32.xlu0 %v1096, 5
    %v1820 = vpop.permute.xlu0 %1819
    %1821 = vrot.lane.b32.xlu0 %v1098, 5
    %v1822 = vpop.permute.xlu0 %1821
    %1823 = vrot.lane.b32.xlu0 %v1101, 5
    %v1824 = vpop.permute.xlu0 %1823
    %1825 = vrot.lane.b32.xlu0 %v1103, 5
    %v1826 = vpop.permute.xlu0 %1825
    %1827 = vrot.lane.b32.xlu0 %v1106, 5
    %v1828 = vpop.permute.xlu0 %1827
    %1829 = vrot.lane.b32.xlu0 %v1108, 5
    %v1830 = vpop.permute.xlu0 %1829
    %1831 = vrot.lane.b32.xlu0 %v1111, 5
    %v1832 = vpop.permute.xlu0 %1831
    %1833 = vrot.lane.b32.xlu0 %v1113, 5
    %v1834 = vpop.permute.xlu0 %1833
    %1835 = vrot.lane.b32.xlu0 %v1116, 5
    %v1836 = vpop.permute.xlu0 %1835
    %1837 = vrot.lane.b32.xlu0 %v1118, 5
    %v1838 = vpop.permute.xlu0 %1837
    %1839 = vrot.lane.b32.xlu0 %v1121, 5
    %v1840 = vpop.permute.xlu0 %1839
    %1841 = vrot.lane.b32.xlu0 %v1123, 5
    %v1842 = vpop.permute.xlu0 %1841
    %1843 = vrot.lane.b32.xlu0 %v1126, 5
    %v1844 = vpop.permute.xlu0 %1843
    %1845 = vrot.lane.b32.xlu0 %v1128, 5
    %v1846 = vpop.permute.xlu0 %1845
    %1847 = vrot.lane.b32.xlu0 %v1720, 5
    %v1848 = vpop.permute.xlu0 %1847
    %1849 = vrot.lane.b32.xlu0 %v1722, 5
    %v1850 = vpop.permute.xlu0 %1849
    %1915 = vrot.lane.b32.xlu0 %v505, 6
    %v1916 = vpop.permute.xlu0 %1915
    %1917 = vrot.lane.b32.xlu0 %v316, 6
    %v1918 = vpop.permute.xlu0 %1917
    %1919 = vrot.lane.b32.xlu0 %v506, 6
    %v1920 = vpop.permute.xlu0 %1919
    %1921 = vrot.lane.b32.xlu0 %v319, 6
    %v1922 = vpop.permute.xlu0 %1921
    %1923 = vrot.lane.b32.xlu0 %v507, 6
    %v1924 = vpop.permute.xlu0 %1923
    %1925 = vrot.lane.b32.xlu0 %v322, 6
    %v1926 = vpop.permute.xlu0 %1925
    %1927 = vrot.lane.b32.xlu0 %v508, 6
    %v1928 = vpop.permute.xlu0 %1927
    %1929 = vrot.lane.b32.xlu0 %v325, 6
    %v1930 = vpop.permute.xlu0 %1929
    %1931 = vrot.lane.b32.xlu0 %v509, 6
    %v1932 = vpop.permute.xlu0 %1931
    %1933 = vrot.lane.b32.xlu0 %v328, 6
    %v1934 = vpop.permute.xlu0 %1933
    %1935 = vrot.lane.b32.xlu0 %v510, 6
    %v1936 = vpop.permute.xlu0 %1935
    %1937 = vrot.lane.b32.xlu0 %v331, 6
    %v1938 = vpop.permute.xlu0 %1937
    %1939 = vrot.lane.b32.xlu0 %v511, 6
    %v1940 = vpop.permute.xlu0 %1939
    %1941 = vrot.lane.b32.xlu0 %v334, 6
    %v1942 = vpop.permute.xlu0 %1941
    %1943 = vrot.lane.b32.xlu0 %v512, 6
    %v1944 = vpop.permute.xlu0 %1943
    %1945 = vrot.lane.b32.xlu0 %v337, 6
    %v1946 = vpop.permute.xlu0 %1945
    %1947 = vrot.lane.b32.xlu0 %v513, 6
    %v1948 = vpop.permute.xlu0 %1947
    %1949 = vrot.lane.b32.xlu0 %v340, 6
    %v1950 = vpop.permute.xlu0 %1949
    %1951 = vrot.lane.b32.xlu0 %v514, 6
    %v1952 = vpop.permute.xlu0 %1951
    %1953 = vrot.lane.b32.xlu0 %v343, 6
    %v1954 = vpop.permute.xlu0 %1953
    %1955 = vrot.lane.b32.xlu0 %v515, 6
    %v1956 = vpop.permute.xlu0 %1955
    %1957 = vrot.lane.b32.xlu0 %v346, 6
    %v1958 = vpop.permute.xlu0 %1957
    %1959 = vrot.lane.b32.xlu0 %v516, 6
    %v1960 = vpop.permute.xlu0 %1959
    %1961 = vrot.lane.b32.xlu0 %v349, 6
    %v1962 = vpop.permute.xlu0 %1961
    %1963 = vrot.lane.b32.xlu0 %v517, 6
    %v1964 = vpop.permute.xlu0 %1963
    %1965 = vrot.lane.b32.xlu0 %v352, 6
    %v1966 = vpop.permute.xlu0 %1965
    %1967 = vrot.lane.b32.xlu0 %v518, 6
    %v1968 = vpop.permute.xlu0 %1967
    %1969 = vrot.lane.b32.xlu0 %v355, 6
    %v1970 = vpop.permute.xlu0 %1969
    %1971 = vrot.lane.b32.xlu0 %v519, 6
    %v1972 = vpop.permute.xlu0 %1971
    %1973 = vrot.lane.b32.xlu0 %v358, 6
    %v1974 = vpop.permute.xlu0 %1973
    %1975 = vrot.lane.b32.xlu0 %v503, 6
    %v1976 = vpop.permute.xlu0 %1975
    %1977 = vrot.lane.b32.xlu0 %v310, 6
    %v1978 = vpop.permute.xlu0 %1977
    %1979 = vrot.lane.b32.xlu0 %v521, 6
    %v1980 = vpop.permute.xlu0 %1979
    %1981 = vrot.lane.b32.xlu0 %v364, 6
    %v1982 = vpop.permute.xlu0 %1981
    %1983 = vrot.lane.b32.xlu0 %v522, 6
    %v1984 = vpop.permute.xlu0 %1983
    %1985 = vrot.lane.b32.xlu0 %v367, 6
    %v1986 = vpop.permute.xlu0 %1985
    %1987 = vrot.lane.b32.xlu0 %v523, 6
    %v1988 = vpop.permute.xlu0 %1987
    %1989 = vrot.lane.b32.xlu0 %v370, 6
    %v1990 = vpop.permute.xlu0 %1989
    %1991 = vrot.lane.b32.xlu0 %v524, 6
    %v1992 = vpop.permute.xlu0 %1991
    %1993 = vrot.lane.b32.xlu0 %v373, 6
    %v1994 = vpop.permute.xlu0 %1993
    %1995 = vrot.lane.b32.xlu0 %v525, 6
    %v1996 = vpop.permute.xlu0 %1995
    %1997 = vrot.lane.b32.xlu0 %v376, 6
    %v1998 = vpop.permute.xlu0 %1997
    %1999 = vrot.lane.b32.xlu0 %v526, 6
    %v2000 = vpop.permute.xlu0 %1999
    %2001 = vrot.lane.b32.xlu0 %v379, 6
    %v2002 = vpop.permute.xlu0 %2001
    %2003 = vrot.lane.b32.xlu0 %v527, 6
    %v2004 = vpop.permute.xlu0 %2003
    %2005 = vrot.lane.b32.xlu0 %v382, 6
    %v2006 = vpop.permute.xlu0 %2005
    %2007 = vrot.lane.b32.xlu0 %v528, 6
    %v2008 = vpop.permute.xlu0 %2007
    %2009 = vrot.lane.b32.xlu0 %v385, 6
    %v2010 = vpop.permute.xlu0 %2009
    %2011 = vrot.lane.b32.xlu0 %v529, 6
    %v2012 = vpop.permute.xlu0 %2011
    %2013 = vrot.lane.b32.xlu0 %v388, 6
    %v2014 = vpop.permute.xlu0 %2013
    %2015 = vrot.lane.b32.xlu0 %v530, 6
    %v2016 = vpop.permute.xlu0 %2015
    %2017 = vrot.lane.b32.xlu0 %v391, 6
    %v2018 = vpop.permute.xlu0 %2017
    %2019 = vrot.lane.b32.xlu0 %v531, 6
    %v2020 = vpop.permute.xlu0 %2019
    %2021 = vrot.lane.b32.xlu0 %v394, 6
    %v2022 = vpop.permute.xlu0 %2021
    %2023 = vrot.lane.b32.xlu0 %v532, 6
    %v2024 = vpop.permute.xlu0 %2023
    %2025 = vrot.lane.b32.xlu0 %v397, 6
    %v2026 = vpop.permute.xlu0 %2025
    %2027 = vrot.lane.b32.xlu0 %v533, 6
    %v2028 = vpop.permute.xlu0 %2027
    %2029 = vrot.lane.b32.xlu0 %v400, 6
    %v2030 = vpop.permute.xlu0 %2029
    %2031 = vrot.lane.b32.xlu0 %v534, 6
    %v2032 = vpop.permute.xlu0 %2031
    %2033 = vrot.lane.b32.xlu0 %v403, 6
    %v2034 = vpop.permute.xlu0 %2033
    %2035 = vrot.lane.b32.xlu0 %v535, 6
    %v2036 = vpop.permute.xlu0 %2035
    %2037 = vrot.lane.b32.xlu0 %v406, 6
    %v2038 = vpop.permute.xlu0 %2037
    %2101 = vrot.lane.b32.xlu0 %v644, 7
    %v2102 = vpop.permute.xlu0 %2101
    %2103 = vrot.lane.b32.xlu0 %v646, 7
    %v2104 = vpop.permute.xlu0 %2103
    %2105 = vrot.lane.b32.xlu0 %v649, 7
    %v2106 = vpop.permute.xlu0 %2105
    %2107 = vrot.lane.b32.xlu0 %v651, 7
    %v2108 = vpop.permute.xlu0 %2107
    %2109 = vrot.lane.b32.xlu0 %v654, 7
    %v2110 = vpop.permute.xlu0 %2109
    %2111 = vrot.lane.b32.xlu0 %v656, 7
    %v2112 = vpop.permute.xlu0 %2111
    %2113 = vrot.lane.b32.xlu0 %v659, 7
    %v2114 = vpop.permute.xlu0 %2113
    %2115 = vrot.lane.b32.xlu0 %v661, 7
    %v2116 = vpop.permute.xlu0 %2115
    %2117 = vrot.lane.b32.xlu0 %v664, 7
    %v2118 = vpop.permute.xlu0 %2117
    %2119 = vrot.lane.b32.xlu0 %v666, 7
    %v2120 = vpop.permute.xlu0 %2119
    %2121 = vrot.lane.b32.xlu0 %v669, 7
    %v2122 = vpop.permute.xlu0 %2121
    %2123 = vrot.lane.b32.xlu0 %v671, 7
    %v2124 = vpop.permute.xlu0 %2123
    %2125 = vrot.lane.b32.xlu0 %v674, 7
    %v2126 = vpop.permute.xlu0 %2125
    %2127 = vrot.lane.b32.xlu0 %v676, 7
    %v2128 = vpop.permute.xlu0 %2127
    %2129 = vrot.lane.b32.xlu0 %v679, 7
    %v2130 = vpop.permute.xlu0 %2129
    %2131 = vrot.lane.b32.xlu0 %v681, 7
    %v2132 = vpop.permute.xlu0 %2131
    %2133 = vrot.lane.b32.xlu0 %v684, 7
    %v2134 = vpop.permute.xlu0 %2133
    %2135 = vrot.lane.b32.xlu0 %v686, 7
    %v2136 = vpop.permute.xlu0 %2135
    %2137 = vrot.lane.b32.xlu0 %v689, 7
    %v2138 = vpop.permute.xlu0 %2137
    %2139 = vrot.lane.b32.xlu0 %v691, 7
    %v2140 = vpop.permute.xlu0 %2139
    %2141 = vrot.lane.b32.xlu0 %v694, 7
    %v2142 = vpop.permute.xlu0 %2141
    %2143 = vrot.lane.b32.xlu0 %v696, 7
    %v2144 = vpop.permute.xlu0 %2143
    %2145 = vrot.lane.b32.xlu0 %v699, 7
    %v2146 = vpop.permute.xlu0 %2145
    %2147 = vrot.lane.b32.xlu0 %v701, 7
    %v2148 = vpop.permute.xlu0 %2147
    %2149 = vrot.lane.b32.xlu0 %v704, 7
    %v2150 = vpop.permute.xlu0 %2149
    %2151 = vrot.lane.b32.xlu0 %v706, 7
    %v2152 = vpop.permute.xlu0 %2151
    %2153 = vrot.lane.b32.xlu0 %v709, 7
    %v2154 = vpop.permute.xlu0 %2153
    %2155 = vrot.lane.b32.xlu0 %v711, 7
    %v2156 = vpop.permute.xlu0 %2155
    %2157 = vrot.lane.b32.xlu0 %v1513, 7
    %v2158 = vpop.permute.xlu0 %2157
    %2159 = vrot.lane.b32.xlu0 %v1515, 7
    %v2160 = vpop.permute.xlu0 %2159
    %2161 = vrot.lane.b32.xlu0 %v634, 7
    %v2162 = vpop.permute.xlu0 %2161
    %2163 = vrot.lane.b32.xlu0 %v636, 7
    %v2164 = vpop.permute.xlu0 %2163
    %2165 = vrot.lane.b32.xlu0 %v719, 7
    %v2166 = vpop.permute.xlu0 %2165
    %2167 = vrot.lane.b32.xlu0 %v721, 7
    %v2168 = vpop.permute.xlu0 %2167
    %2169 = vrot.lane.b32.xlu0 %v724, 7
    %v2170 = vpop.permute.xlu0 %2169
    %2171 = vrot.lane.b32.xlu0 %v726, 7
    %v2172 = vpop.permute.xlu0 %2171
    %2173 = vrot.lane.b32.xlu0 %v729, 7
    %v2174 = vpop.permute.xlu0 %2173
    %2175 = vrot.lane.b32.xlu0 %v731, 7
    %v2176 = vpop.permute.xlu0 %2175
    %2177 = vrot.lane.b32.xlu0 %v734, 7
    %v2178 = vpop.permute.xlu0 %2177
    %2179 = vrot.lane.b32.xlu0 %v736, 7
    %v2180 = vpop.permute.xlu0 %2179
    %2181 = vrot.lane.b32.xlu0 %v739, 7
    %v2182 = vpop.permute.xlu0 %2181
    %2183 = vrot.lane.b32.xlu0 %v741, 7
    %v2184 = vpop.permute.xlu0 %2183
    %2185 = vrot.lane.b32.xlu0 %v744, 7
    %v2186 = vpop.permute.xlu0 %2185
    %2187 = vrot.lane.b32.xlu0 %v746, 7
    %v2188 = vpop.permute.xlu0 %2187
    %2189 = vrot.lane.b32.xlu0 %v749, 7
    %v2190 = vpop.permute.xlu0 %2189
    %2191 = vrot.lane.b32.xlu0 %v751, 7
    %v2192 = vpop.permute.xlu0 %2191
    %2193 = vrot.lane.b32.xlu0 %v754, 7
    %v2194 = vpop.permute.xlu0 %2193
    %2195 = vrot.lane.b32.xlu0 %v756, 7
    %v2196 = vpop.permute.xlu0 %2195
    %2197 = vrot.lane.b32.xlu0 %v759, 7
    %v2198 = vpop.permute.xlu0 %2197
    %2199 = vrot.lane.b32.xlu0 %v761, 7
    %v2200 = vpop.permute.xlu0 %2199
    %2201 = vrot.lane.b32.xlu0 %v764, 7
    %v2202 = vpop.permute.xlu0 %2201
    %2203 = vrot.lane.b32.xlu0 %v766, 7
    %v2204 = vpop.permute.xlu0 %2203
    %2205 = vrot.lane.b32.xlu0 %v769, 7
    %v2206 = vpop.permute.xlu0 %2205
    %2207 = vrot.lane.b32.xlu0 %v771, 7
    %v2208 = vpop.permute.xlu0 %2207
    %2209 = vrot.lane.b32.xlu0 %v774, 7
    %v2210 = vpop.permute.xlu0 %2209
    %2211 = vrot.lane.b32.xlu0 %v776, 7
    %v2212 = vpop.permute.xlu0 %2211
    %2213 = vrot.lane.b32.xlu0 %v779, 7
    %v2214 = vpop.permute.xlu0 %2213
    %2215 = vrot.lane.b32.xlu0 %v781, 7
    %v2216 = vpop.permute.xlu0 %2215
    %2217 = vrot.lane.b32.xlu0 %v784, 7
    %v2218 = vpop.permute.xlu0 %2217
    %2219 = vrot.lane.b32.xlu0 %v786, 7
    %v2220 = vpop.permute.xlu0 %2219
    %2221 = vrot.lane.b32.xlu0 %v1518, 7
    %v2222 = vpop.permute.xlu0 %2221
    %2223 = vrot.lane.b32.xlu0 %v1520, 7
    %v2224 = vpop.permute.xlu0 %2223
    %2287 = vrot.lane.b32.xlu0 %v986, 8
    %v2288 = vpop.permute.xlu0 %2287
    %2289 = vrot.lane.b32.xlu0 %v988, 8
    %v2290 = vpop.permute.xlu0 %2289
    %2291 = vrot.lane.b32.xlu0 %v991, 8
    %v2292 = vpop.permute.xlu0 %2291
    %2293 = vrot.lane.b32.xlu0 %v993, 8
    %v2294 = vpop.permute.xlu0 %2293
    %2295 = vrot.lane.b32.xlu0 %v996, 8
    %v2296 = vpop.permute.xlu0 %2295
    %2297 = vrot.lane.b32.xlu0 %v998, 8
    %v2298 = vpop.permute.xlu0 %2297
    %2299 = vrot.lane.b32.xlu0 %v1001, 8
    %v2300 = vpop.permute.xlu0 %2299
    %2301 = vrot.lane.b32.xlu0 %v1003, 8
    %v2302 = vpop.permute.xlu0 %2301
    %2303 = vrot.lane.b32.xlu0 %v1006, 8
    %v2304 = vpop.permute.xlu0 %2303
    %2305 = vrot.lane.b32.xlu0 %v1008, 8
    %v2306 = vpop.permute.xlu0 %2305
    %2307 = vrot.lane.b32.xlu0 %v1011, 8
    %v2308 = vpop.permute.xlu0 %2307
    %2309 = vrot.lane.b32.xlu0 %v1013, 8
    %v2310 = vpop.permute.xlu0 %2309
    %2311 = vrot.lane.b32.xlu0 %v1016, 8
    %v2312 = vpop.permute.xlu0 %2311
    %2313 = vrot.lane.b32.xlu0 %v1018, 8
    %v2314 = vpop.permute.xlu0 %2313
    %2315 = vrot.lane.b32.xlu0 %v1021, 8
    %v2316 = vpop.permute.xlu0 %2315
    %2317 = vrot.lane.b32.xlu0 %v1023, 8
    %v2318 = vpop.permute.xlu0 %2317
    %2319 = vrot.lane.b32.xlu0 %v1026, 8
    %v2320 = vpop.permute.xlu0 %2319
    %2321 = vrot.lane.b32.xlu0 %v1028, 8
    %v2322 = vpop.permute.xlu0 %2321
    %2323 = vrot.lane.b32.xlu0 %v1031, 8
    %v2324 = vpop.permute.xlu0 %2323
    %2325 = vrot.lane.b32.xlu0 %v1033, 8
    %v2326 = vpop.permute.xlu0 %2325
    %2327 = vrot.lane.b32.xlu0 %v1036, 8
    %v2328 = vpop.permute.xlu0 %2327
    %2329 = vrot.lane.b32.xlu0 %v1038, 8
    %v2330 = vpop.permute.xlu0 %2329
    %2331 = vrot.lane.b32.xlu0 %v1041, 8
    %v2332 = vpop.permute.xlu0 %2331
    %2333 = vrot.lane.b32.xlu0 %v1043, 8
    %v2334 = vpop.permute.xlu0 %2333
    %2335 = vrot.lane.b32.xlu0 %v1046, 8
    %v2336 = vpop.permute.xlu0 %2335
    %2337 = vrot.lane.b32.xlu0 %v1048, 8
    %v2338 = vpop.permute.xlu0 %2337
    %2339 = vrot.lane.b32.xlu0 %v1051, 8
    %v2340 = vpop.permute.xlu0 %2339
    %2341 = vrot.lane.b32.xlu0 %v1053, 8
    %v2342 = vpop.permute.xlu0 %2341
    %2343 = vrot.lane.b32.xlu0 %v1715, 8
    %v2344 = vpop.permute.xlu0 %2343
    %2345 = vrot.lane.b32.xlu0 %v1717, 8
    %v2346 = vpop.permute.xlu0 %2345
    %2347 = vrot.lane.b32.xlu0 %v976, 8
    %v2348 = vpop.permute.xlu0 %2347
    %2349 = vrot.lane.b32.xlu0 %v978, 8
    %v2350 = vpop.permute.xlu0 %2349
    %2351 = vrot.lane.b32.xlu0 %v1061, 8
    %v2352 = vpop.permute.xlu0 %2351
    %2353 = vrot.lane.b32.xlu0 %v1063, 8
    %v2354 = vpop.permute.xlu0 %2353
    %2355 = vrot.lane.b32.xlu0 %v1066, 8
    %v2356 = vpop.permute.xlu0 %2355
    %2357 = vrot.lane.b32.xlu0 %v1068, 8
    %v2358 = vpop.permute.xlu0 %2357
    %2359 = vrot.lane.b32.xlu0 %v1071, 8
    %v2360 = vpop.permute.xlu0 %2359
    %2361 = vrot.lane.b32.xlu0 %v1073, 8
    %v2362 = vpop.permute.xlu0 %2361
    %2363 = vrot.lane.b32.xlu0 %v1076, 8
    %v2364 = vpop.permute.xlu0 %2363
    %2365 = vrot.lane.b32.xlu0 %v1078, 8
    %v2366 = vpop.permute.xlu0 %2365
    %2367 = vrot.lane.b32.xlu0 %v1081, 8
    %v2368 = vpop.permute.xlu0 %2367
    %2369 = vrot.lane.b32.xlu0 %v1083, 8
    %v2370 = vpop.permute.xlu0 %2369
    %2371 = vrot.lane.b32.xlu0 %v1086, 8
    %v2372 = vpop.permute.xlu0 %2371
    %2373 = vrot.lane.b32.xlu0 %v1088, 8
    %v2374 = vpop.permute.xlu0 %2373
    %2375 = vrot.lane.b32.xlu0 %v1091, 8
    %v2376 = vpop.permute.xlu0 %2375
    %2377 = vrot.lane.b32.xlu0 %v1093, 8
    %v2378 = vpop.permute.xlu0 %2377
    %2379 = vrot.lane.b32.xlu0 %v1096, 8
    %v2380 = vpop.permute.xlu0 %2379
    %2381 = vrot.lane.b32.xlu0 %v1098, 8
    %v2382 = vpop.permute.xlu0 %2381
    %2383 = vrot.lane.b32.xlu0 %v1101, 8
    %v2384 = vpop.permute.xlu0 %2383
    %2385 = vrot.lane.b32.xlu0 %v1103, 8
    %v2386 = vpop.permute.xlu0 %2385
    %2387 = vrot.lane.b32.xlu0 %v1106, 8
    %v2388 = vpop.permute.xlu0 %2387
    %2389 = vrot.lane.b32.xlu0 %v1108, 8
    %v2390 = vpop.permute.xlu0 %2389
    %2391 = vrot.lane.b32.xlu0 %v1111, 8
    %v2392 = vpop.permute.xlu0 %2391
    %2393 = vrot.lane.b32.xlu0 %v1113, 8
    %v2394 = vpop.permute.xlu0 %2393
    %2395 = vrot.lane.b32.xlu0 %v1116, 8
    %v2396 = vpop.permute.xlu0 %2395
    %2397 = vrot.lane.b32.xlu0 %v1118, 8
    %v2398 = vpop.permute.xlu0 %2397
    %2399 = vrot.lane.b32.xlu0 %v1121, 8
    %v2400 = vpop.permute.xlu0 %2399
    %2401 = vrot.lane.b32.xlu0 %v1123, 8
    %v2402 = vpop.permute.xlu0 %2401
    %2403 = vrot.lane.b32.xlu0 %v1126, 8
    %v2404 = vpop.permute.xlu0 %2403
    %2405 = vrot.lane.b32.xlu0 %v1128, 8
    %v2406 = vpop.permute.xlu0 %2405
    %2407 = vrot.lane.b32.xlu0 %v1720, 8
    %v2408 = vpop.permute.xlu0 %2407
    %2409 = vrot.lane.b32.xlu0 %v1722, 8
    %v2410 = vpop.permute.xlu0 %2409
    %vm2473 = vcmask 7168
    %v2474 = vsel %vm2473, %v503, %v788
    %v2475 = vsel %vm2473, %v310, %v790
    %v2476 = vsel %vm2473, %v504, %v792
    %v2477 = vsel %vm2473, %v313, %v794
    %v2478 = vsel %vm2473, %v505, %v796
    %v2479 = vsel %vm2473, %v316, %v798
    %v2480 = vsel %vm2473, %v506, %v800
    %v2481 = vsel %vm2473, %v319, %v802
    %v2482 = vsel %vm2473, %v507, %v804
    %v2483 = vsel %vm2473, %v322, %v806
    %v2484 = vsel %vm2473, %v508, %v808
    %v2485 = vsel %vm2473, %v325, %v810
    %v2486 = vsel %vm2473, %v509, %v812
    %v2487 = vsel %vm2473, %v328, %v814
    %v2488 = vsel %vm2473, %v510, %v816
    %v2489 = vsel %vm2473, %v331, %v818
    %v2490 = vsel %vm2473, %v511, %v820
    %v2491 = vsel %vm2473, %v334, %v822
    %v2492 = vsel %vm2473, %v512, %v824
    %v2493 = vsel %vm2473, %v337, %v826
    %v2494 = vsel %vm2473, %v513, %v828
    %v2495 = vsel %vm2473, %v340, %v830
    %v2496 = vsel %vm2473, %v514, %v832
    %v2497 = vsel %vm2473, %v343, %v834
    %v2498 = vsel %vm2473, %v515, %v836
    %v2499 = vsel %vm2473, %v346, %v838
    %v2500 = vsel %vm2473, %v516, %v840
    %v2501 = vsel %vm2473, %v349, %v842
    %v2502 = vsel %vm2473, %v517, %v844
    %v2503 = vsel %vm2473, %v352, %v846
    %v2504 = vsel %vm2473, %v518, %v848
    %v2505 = vsel %vm2473, %v355, %v850
    %v2506 = vsel %vm2473, %v520, %v852
    %v2507 = vsel %vm2473, %v361, %v854
    %v2508 = vsel %vm2473, %v521, %v856
    %v2509 = vsel %vm2473, %v364, %v858
    %v2510 = vsel %vm2473, %v522, %v860
    %v2511 = vsel %vm2473, %v367, %v862
    %v2512 = vsel %vm2473, %v523, %v864
    %v2513 = vsel %vm2473, %v370, %v866
    %v2514 = vsel %vm2473, %v524, %v868
    %v2515 = vsel %vm2473, %v373, %v870
    %v2516 = vsel %vm2473, %v525, %v872
    %v2517 = vsel %vm2473, %v376, %v874
    %v2518 = vsel %vm2473, %v526, %v876
    %v2519 = vsel %vm2473, %v379, %v878
    %v2520 = vsel %vm2473, %v527, %v880
    %v2521 = vsel %vm2473, %v382, %v882
    %v2522 = vsel %vm2473, %v528, %v884
    %v2523 = vsel %vm2473, %v385, %v886
    %v2524 = vsel %vm2473, %v529, %v888
    %v2525 = vsel %vm2473, %v388, %v890
    %v2526 = vsel %vm2473, %v530, %v892
    %v2527 = vsel %vm2473, %v391, %v894
    %v2528 = vsel %vm2473, %v531, %v896
    %v2529 = vsel %vm2473, %v394, %v898
    %v2530 = vsel %vm2473, %v532, %v900
    %v2531 = vsel %vm2473, %v397, %v902
    %v2532 = vsel %vm2473, %v533, %v904
    %v2533 = vsel %vm2473, %v400, %v906
    %v2534 = vsel %vm2473, %v534, %v908
    %v2535 = vsel %vm2473, %v403, %v910
    %vm2536 = vcmask 15360
    %v2537 = vsel %vm2536, %v2474, %v1130
    %v2538 = vsel %vm2536, %v2475, %v1132
    %v2539 = vsel %vm2536, %v2476, %v1134
    %v2540 = vsel %vm2536, %v2477, %v1136
    %v2541 = vsel %vm2536, %v2478, %v1138
    %v2542 = vsel %vm2536, %v2479, %v1140
    %v2543 = vsel %vm2536, %v2480, %v1142
    %v2544 = vsel %vm2536, %v2481, %v1144
    %v2545 = vsel %vm2536, %v2482, %v1146
    %v2546 = vsel %vm2536, %v2483, %v1148
    %v2547 = vsel %vm2536, %v2484, %v1150
    %v2548 = vsel %vm2536, %v2485, %v1152
    %v2549 = vsel %vm2536, %v2486, %v1154
    %v2550 = vsel %vm2536, %v2487, %v1156
    %v2551 = vsel %vm2536, %v2488, %v1158
    %v2552 = vsel %vm2536, %v2489, %v1160
    %v2553 = vsel %vm2536, %v2490, %v1162
    %v2554 = vsel %vm2536, %v2491, %v1164
    %v2555 = vsel %vm2536, %v2492, %v1166
    %v2556 = vsel %vm2536, %v2493, %v1168
    %v2557 = vsel %vm2536, %v2494, %v1170
    %v2558 = vsel %vm2536, %v2495, %v1172
    %v2559 = vsel %vm2536, %v2496, %v1174
    %v2560 = vsel %vm2536, %v2497, %v1176
    %v2561 = vsel %vm2536, %v2498, %v1178
    %v2562 = vsel %vm2536, %v2499, %v1180
    %v2563 = vsel %vm2536, %v2500, %v1182
    %v2564 = vsel %vm2536, %v2501, %v1184
    %v2565 = vsel %vm2536, %v2502, %v1186
    %v2566 = vsel %vm2536, %v2503, %v1188
    %v2567 = vsel %vm2536, %v2504, %v1190
    %v2568 = vsel %vm2536, %v2505, %v1192
    %v2569 = vsel %vm2536, %v2506, %v1194
    %v2570 = vsel %vm2536, %v2507, %v1196
    %v2571 = vsel %vm2536, %v2508, %v1198
    %v2572 = vsel %vm2536, %v2509, %v1200
    %v2573 = vsel %vm2536, %v2510, %v1202
    %v2574 = vsel %vm2536, %v2511, %v1204
    %v2575 = vsel %vm2536, %v2512, %v1206
    %v2576 = vsel %vm2536, %v2513, %v1208
    %v2577 = vsel %vm2536, %v2514, %v1210
    %v2578 = vsel %vm2536, %v2515, %v1212
    %v2579 = vsel %vm2536, %v2516, %v1214
    %v2580 = vsel %vm2536, %v2517, %v1216
    %v2581 = vsel %vm2536, %v2518, %v1218
    %v2582 = vsel %vm2536, %v2519, %v1220
    %v2583 = vsel %vm2536, %v2520, %v1222
    %v2584 = vsel %vm2536, %v2521, %v1224
    %v2585 = vsel %vm2536, %v2522, %v1226
    %v2586 = vsel %vm2536, %v2523, %v1228
    %v2587 = vsel %vm2536, %v2524, %v1230
    %v2588 = vsel %vm2536, %v2525, %v1232
    %v2589 = vsel %vm2536, %v2526, %v1234
    %v2590 = vsel %vm2536, %v2527, %v1236
    %v2591 = vsel %vm2536, %v2528, %v1238
    %v2592 = vsel %vm2536, %v2529, %v1240
    %v2593 = vsel %vm2536, %v2530, %v1242
    %v2594 = vsel %vm2536, %v2531, %v1244
    %v2595 = vsel %vm2536, %v2532, %v1246
    %v2596 = vsel %vm2536, %v2533, %v1248
    %v2597 = vsel %vm2536, %v2534, %v1250
    %v2598 = vsel %vm2536, %v2535, %v1252
    %vm2599 = vcmask 23552
    %v2600 = vsel %vm2599, %v2537, %v1318
    %v2601 = vsel %vm2599, %v2538, %v1320
    %v2602 = vsel %vm2599, %v2539, %v1322
    %v2603 = vsel %vm2599, %v2540, %v1324
    %v2604 = vsel %vm2599, %v2541, %v1326
    %v2605 = vsel %vm2599, %v2542, %v1328
    %v2606 = vsel %vm2599, %v2543, %v1330
    %v2607 = vsel %vm2599, %v2544, %v1332
    %v2608 = vsel %vm2599, %v2545, %v1334
    %v2609 = vsel %vm2599, %v2546, %v1336
    %v2610 = vsel %vm2599, %v2547, %v1338
    %v2611 = vsel %vm2599, %v2548, %v1340
    %v2612 = vsel %vm2599, %v2549, %v1342
    %v2613 = vsel %vm2599, %v2550, %v1344
    %v2614 = vsel %vm2599, %v2551, %v1346
    %v2615 = vsel %vm2599, %v2552, %v1348
    %v2616 = vsel %vm2599, %v2553, %v1350
    %v2617 = vsel %vm2599, %v2554, %v1352
    %v2618 = vsel %vm2599, %v2555, %v1354
    %v2619 = vsel %vm2599, %v2556, %v1356
    %v2620 = vsel %vm2599, %v2557, %v1358
    %v2621 = vsel %vm2599, %v2558, %v1360
    %v2622 = vsel %vm2599, %v2559, %v1362
    %v2623 = vsel %vm2599, %v2560, %v1364
    %v2624 = vsel %vm2599, %v2561, %v1366
    %v2625 = vsel %vm2599, %v2562, %v1368
    %v2626 = vsel %vm2599, %v2563, %v1370
    %v2627 = vsel %vm2599, %v2564, %v1372
    %v2628 = vsel %vm2599, %v2565, %v1374
    %v2629 = vsel %vm2599, %v2566, %v1376
    %v2630 = vsel %vm2599, %v2567, %v1378
    %v2631 = vsel %vm2599, %v2568, %v1380
    %v2632 = vsel %vm2599, %v2537, %v1382
    %v2633 = vsel %vm2599, %v2538, %v1384
    %v2634 = vsel %vm2599, %v2569, %v1386
    %v2635 = vsel %vm2599, %v2570, %v1388
    %v2636 = vsel %vm2599, %v2571, %v1390
    %v2637 = vsel %vm2599, %v2572, %v1392
    %v2638 = vsel %vm2599, %v2573, %v1394
    %v2639 = vsel %vm2599, %v2574, %v1396
    %v2640 = vsel %vm2599, %v2575, %v1398
    %v2641 = vsel %vm2599, %v2576, %v1400
    %v2642 = vsel %vm2599, %v2577, %v1402
    %v2643 = vsel %vm2599, %v2578, %v1404
    %v2644 = vsel %vm2599, %v2579, %v1406
    %v2645 = vsel %vm2599, %v2580, %v1408
    %v2646 = vsel %vm2599, %v2581, %v1410
    %v2647 = vsel %vm2599, %v2582, %v1412
    %v2648 = vsel %vm2599, %v2583, %v1414
    %v2649 = vsel %vm2599, %v2584, %v1416
    %v2650 = vsel %vm2599, %v2585, %v1418
    %v2651 = vsel %vm2599, %v2586, %v1420
    %v2652 = vsel %vm2599, %v2587, %v1422
    %v2653 = vsel %vm2599, %v2588, %v1424
    %v2654 = vsel %vm2599, %v2589, %v1426
    %v2655 = vsel %vm2599, %v2590, %v1428
    %v2656 = vsel %vm2599, %v2591, %v1430
    %v2657 = vsel %vm2599, %v2592, %v1432
    %v2658 = vsel %vm2599, %v2593, %v1434
    %v2659 = vsel %vm2599, %v2594, %v1436
    %v2660 = vsel %vm2599, %v2595, %v1438
    %v2661 = vsel %vm2599, %v2596, %v1440
    %v2662 = vsel %vm2599, %v2597, %v1442
    %v2663 = vsel %vm2599, %v2598, %v1444
    %vm2664 = vcmask 31744
    %v2665 = vsel %vm2664, %v2600, %v1522
    %v2666 = vsel %vm2664, %v2601, %v1524
    %v2667 = vsel %vm2664, %v2602, %v1526
    %v2668 = vsel %vm2664, %v2603, %v1528
    %v2669 = vsel %vm2664, %v2604, %v1530
    %v2670 = vsel %vm2664, %v2605, %v1532
    %v2671 = vsel %vm2664, %v2606, %v1534
    %v2672 = vsel %vm2664, %v2607, %v1536
    %v2673 = vsel %vm2664, %v2608, %v1538
    %v2674 = vsel %vm2664, %v2609, %v1540
    %v2675 = vsel %vm2664, %v2610, %v1542
    %v2676 = vsel %vm2664, %v2611, %v1544
    %v2677 = vsel %vm2664, %v2612, %v1546
    %v2678 = vsel %vm2664, %v2613, %v1548
    %v2679 = vsel %vm2664, %v2614, %v1550
    %v2680 = vsel %vm2664, %v2615, %v1552
    %v2681 = vsel %vm2664, %v2616, %v1554
    %v2682 = vsel %vm2664, %v2617, %v1556
    %v2683 = vsel %vm2664, %v2618, %v1558
    %v2684 = vsel %vm2664, %v2619, %v1560
    %v2685 = vsel %vm2664, %v2620, %v1562
    %v2686 = vsel %vm2664, %v2621, %v1564
    %v2687 = vsel %vm2664, %v2622, %v1566
    %v2688 = vsel %vm2664, %v2623, %v1568
    %v2689 = vsel %vm2664, %v2624, %v1570
    %v2690 = vsel %vm2664, %v2625, %v1572
    %v2691 = vsel %vm2664, %v2626, %v1574
    %v2692 = vsel %vm2664, %v2627, %v1576
    %v2693 = vsel %vm2664, %v2628, %v1578
    %v2694 = vsel %vm2664, %v2629, %v1580
    %v2695 = vsel %vm2664, %v2630, %v1582
    %v2696 = vsel %vm2664, %v2631, %v1584
    %v2697 = vsel %vm2664, %v2632, %v1586
    %v2698 = vsel %vm2664, %v2633, %v1588
    %v2699 = vsel %vm2664, %v2634, %v1590
    %v2700 = vsel %vm2664, %v2635, %v1592
    %v2701 = vsel %vm2664, %v2636, %v1594
    %v2702 = vsel %vm2664, %v2637, %v1596
    %v2703 = vsel %vm2664, %v2638, %v1598
    %v2704 = vsel %vm2664, %v2639, %v1600
    %v2705 = vsel %vm2664, %v2640, %v1602
    %v2706 = vsel %vm2664, %v2641, %v1604
    %v2707 = vsel %vm2664, %v2642, %v1606
    %v2708 = vsel %vm2664, %v2643, %v1608
    %v2709 = vsel %vm2664, %v2644, %v1610
    %v2710 = vsel %vm2664, %v2645, %v1612
    %v2711 = vsel %vm2664, %v2646, %v1614
    %v2712 = vsel %vm2664, %v2647, %v1616
    %v2713 = vsel %vm2664, %v2648, %v1618
    %v2714 = vsel %vm2664, %v2649, %v1620
    %v2715 = vsel %vm2664, %v2650, %v1622
    %v2716 = vsel %vm2664, %v2651, %v1624
    %v2717 = vsel %vm2664, %v2652, %v1626
    %v2718 = vsel %vm2664, %v2653, %v1628
    %v2719 = vsel %vm2664, %v2654, %v1630
    %v2720 = vsel %vm2664, %v2655, %v1632
    %v2721 = vsel %vm2664, %v2656, %v1634
    %v2722 = vsel %vm2664, %v2657, %v1636
    %v2723 = vsel %vm2664, %v2658, %v1638
    %v2724 = vsel %vm2664, %v2659, %v1640
    %v2725 = vsel %vm2664, %v2660, %v1642
    %v2726 = vsel %vm2664, %v2661, %v1644
    %v2727 = vsel %vm2664, %v2662, %v1646
    %v2728 = vsel %vm2664, %v2663, %v1648
    %vm2729 = vcmask 39936
    %v2730 = vsel %vm2729, %v2665, %v1724
    %v2731 = vsel %vm2729, %v2666, %v1726
    %v2732 = vsel %vm2729, %v2667, %v1728
    %v2733 = vsel %vm2729, %v2668, %v1730
    %v2734 = vsel %vm2729, %v2669, %v1732
    %v2735 = vsel %vm2729, %v2670, %v1734
    %v2736 = vsel %vm2729, %v2671, %v1736
    %v2737 = vsel %vm2729, %v2672, %v1738
    %v2738 = vsel %vm2729, %v2673, %v1740
    %v2739 = vsel %vm2729, %v2674, %v1742
    %v2740 = vsel %vm2729, %v2675, %v1744
    %v2741 = vsel %vm2729, %v2676, %v1746
    %v2742 = vsel %vm2729, %v2677, %v1748
    %v2743 = vsel %vm2729, %v2678, %v1750
    %v2744 = vsel %vm2729, %v2679, %v1752
    %v2745 = vsel %vm2729, %v2680, %v1754
    %v2746 = vsel %vm2729, %v2681, %v1756
    %v2747 = vsel %vm2729, %v2682, %v1758
    %v2748 = vsel %vm2729, %v2683, %v1760
    %v2749 = vsel %vm2729, %v2684, %v1762
    %v2750 = vsel %vm2729, %v2685, %v1764
    %v2751 = vsel %vm2729, %v2686, %v1766
    %v2752 = vsel %vm2729, %v2687, %v1768
    %v2753 = vsel %vm2729, %v2688, %v1770
    %v2754 = vsel %vm2729, %v2689, %v1772
    %v2755 = vsel %vm2729, %v2690, %v1774
    %v2756 = vsel %vm2729, %v2691, %v1776
    %v2757 = vsel %vm2729, %v2692, %v1778
    %v2758 = vsel %vm2729, %v2693, %v1780
    %v2759 = vsel %vm2729, %v2694, %v1782
    %v2760 = vsel %vm2729, %v2695, %v1784
    %v2761 = vsel %vm2729, %v2696, %v1786
    %v2762 = vsel %vm2729, %v2697, %v1788
    %v2763 = vsel %vm2729, %v2698, %v1790
    %v2764 = vsel %vm2729, %v2699, %v1792
    %v2765 = vsel %vm2729, %v2700, %v1794
    %v2766 = vsel %vm2729, %v2701, %v1796
    %v2767 = vsel %vm2729, %v2702, %v1798
    %v2768 = vsel %vm2729, %v2703, %v1800
    %v2769 = vsel %vm2729, %v2704, %v1802
    %v2770 = vsel %vm2729, %v2705, %v1804
    %v2771 = vsel %vm2729, %v2706, %v1806
    %v2772 = vsel %vm2729, %v2707, %v1808
    %v2773 = vsel %vm2729, %v2708, %v1810
    %v2774 = vsel %vm2729, %v2709, %v1812
    %v2775 = vsel %vm2729, %v2710, %v1814
    %v2776 = vsel %vm2729, %v2711, %v1816
    %v2777 = vsel %vm2729, %v2712, %v1818
    %v2778 = vsel %vm2729, %v2713, %v1820
    %v2779 = vsel %vm2729, %v2714, %v1822
    %v2780 = vsel %vm2729, %v2715, %v1824
    %v2781 = vsel %vm2729, %v2716, %v1826
    %v2782 = vsel %vm2729, %v2717, %v1828
    %v2783 = vsel %vm2729, %v2718, %v1830
    %v2784 = vsel %vm2729, %v2719, %v1832
    %v2785 = vsel %vm2729, %v2720, %v1834
    %v2786 = vsel %vm2729, %v2721, %v1836
    %v2787 = vsel %vm2729, %v2722, %v1838
    %v2788 = vsel %vm2729, %v2723, %v1840
    %v2789 = vsel %vm2729, %v2724, %v1842
    %v2790 = vsel %vm2729, %v2725, %v1844
    %v2791 = vsel %vm2729, %v2726, %v1846
    %v2792 = vsel %vm2729, %v2727, %v1848
    %v2793 = vsel %vm2729, %v2728, %v1850
    %vm2794 = vcmask 48128
    %v2795 = vsel %vm2794, %v2730, %v1916
    %v2796 = vsel %vm2794, %v2731, %v1918
    %v2797 = vsel %vm2794, %v2732, %v1920
    %v2798 = vsel %vm2794, %v2733, %v1922
    %v2799 = vsel %vm2794, %v2734, %v1924
    %v2800 = vsel %vm2794, %v2735, %v1926
    %v2801 = vsel %vm2794, %v2736, %v1928
    %v2802 = vsel %vm2794, %v2737, %v1930
    %v2803 = vsel %vm2794, %v2738, %v1932
    %v2804 = vsel %vm2794, %v2739, %v1934
    %v2805 = vsel %vm2794, %v2740, %v1936
    %v2806 = vsel %vm2794, %v2741, %v1938
    %v2807 = vsel %vm2794, %v2742, %v1940
    %v2808 = vsel %vm2794, %v2743, %v1942
    %v2809 = vsel %vm2794, %v2744, %v1944
    %v2810 = vsel %vm2794, %v2745, %v1946
    %v2811 = vsel %vm2794, %v2746, %v1948
    %v2812 = vsel %vm2794, %v2747, %v1950
    %v2813 = vsel %vm2794, %v2748, %v1952
    %v2814 = vsel %vm2794, %v2749, %v1954
    %v2815 = vsel %vm2794, %v2750, %v1956
    %v2816 = vsel %vm2794, %v2751, %v1958
    %v2817 = vsel %vm2794, %v2752, %v1960
    %v2818 = vsel %vm2794, %v2753, %v1962
    %v2819 = vsel %vm2794, %v2754, %v1964
    %v2820 = vsel %vm2794, %v2755, %v1966
    %v2821 = vsel %vm2794, %v2756, %v1968
    %v2822 = vsel %vm2794, %v2757, %v1970
    %v2823 = vsel %vm2794, %v2758, %v1972
    %v2824 = vsel %vm2794, %v2759, %v1974
    %v2825 = vsel %vm2794, %v2760, %v1976
    %v2826 = vsel %vm2794, %v2761, %v1978
    %v2827 = vsel %vm2794, %v2762, %v1980
    %v2828 = vsel %vm2794, %v2763, %v1982
    %v2829 = vsel %vm2794, %v2764, %v1984
    %v2830 = vsel %vm2794, %v2765, %v1986
    %v2831 = vsel %vm2794, %v2766, %v1988
    %v2832 = vsel %vm2794, %v2767, %v1990
    %v2833 = vsel %vm2794, %v2768, %v1992
    %v2834 = vsel %vm2794, %v2769, %v1994
    %v2835 = vsel %vm2794, %v2770, %v1996
    %v2836 = vsel %vm2794, %v2771, %v1998
    %v2837 = vsel %vm2794, %v2772, %v2000
    %v2838 = vsel %vm2794, %v2773, %v2002
    %v2839 = vsel %vm2794, %v2774, %v2004
    %v2840 = vsel %vm2794, %v2775, %v2006
    %v2841 = vsel %vm2794, %v2776, %v2008
    %v2842 = vsel %vm2794, %v2777, %v2010
    %v2843 = vsel %vm2794, %v2778, %v2012
    %v2844 = vsel %vm2794, %v2779, %v2014
    %v2845 = vsel %vm2794, %v2780, %v2016
    %v2846 = vsel %vm2794, %v2781, %v2018
    %v2847 = vsel %vm2794, %v2782, %v2020
    %v2848 = vsel %vm2794, %v2783, %v2022
    %v2849 = vsel %vm2794, %v2784, %v2024
    %v2850 = vsel %vm2794, %v2785, %v2026
    %v2851 = vsel %vm2794, %v2786, %v2028
    %v2852 = vsel %vm2794, %v2787, %v2030
    %v2853 = vsel %vm2794, %v2788, %v2032
    %v2854 = vsel %vm2794, %v2789, %v2034
    %v2855 = vsel %vm2794, %v2790, %v2036
    %v2856 = vsel %vm2794, %v2791, %v2038
    %v2857 = vsel %vm2794, %v2792, %v1976
    %v2858 = vsel %vm2794, %v2793, %v1978
    %vm2859 = vcmask 56320
    %v2860 = vsel %vm2859, %v2795, %v2102
    %v2861 = vsel %vm2859, %v2796, %v2104
    %v2862 = vsel %vm2859, %v2797, %v2106
    %v2863 = vsel %vm2859, %v2798, %v2108
    %v2864 = vsel %vm2859, %v2799, %v2110
    %v2865 = vsel %vm2859, %v2800, %v2112
    %v2866 = vsel %vm2859, %v2801, %v2114
    %v2867 = vsel %vm2859, %v2802, %v2116
    %v2868 = vsel %vm2859, %v2803, %v2118
    %v2869 = vsel %vm2859, %v2804, %v2120
    %v2870 = vsel %vm2859, %v2805, %v2122
    %v2871 = vsel %vm2859, %v2806, %v2124
    %v2872 = vsel %vm2859, %v2807, %v2126
    %v2873 = vsel %vm2859, %v2808, %v2128
    %v2874 = vsel %vm2859, %v2809, %v2130
    %v2875 = vsel %vm2859, %v2810, %v2132
    %v2876 = vsel %vm2859, %v2811, %v2134
    %v2877 = vsel %vm2859, %v2812, %v2136
    %v2878 = vsel %vm2859, %v2813, %v2138
    %v2879 = vsel %vm2859, %v2814, %v2140
    %v2880 = vsel %vm2859, %v2815, %v2142
    %v2881 = vsel %vm2859, %v2816, %v2144
    %v2882 = vsel %vm2859, %v2817, %v2146
    %v2883 = vsel %vm2859, %v2818, %v2148
    %v2884 = vsel %vm2859, %v2819, %v2150
    %v2885 = vsel %vm2859, %v2820, %v2152
    %v2886 = vsel %vm2859, %v2821, %v2154
    %v2887 = vsel %vm2859, %v2822, %v2156
    %v2888 = vsel %vm2859, %v2823, %v2158
    %v2889 = vsel %vm2859, %v2824, %v2160
    %v2890 = vsel %vm2859, %v2825, %v2162
    %v2891 = vsel %vm2859, %v2826, %v2164
    %v2892 = vsel %vm2859, %v2827, %v2166
    %v2893 = vsel %vm2859, %v2828, %v2168
    %v2894 = vsel %vm2859, %v2829, %v2170
    %v2895 = vsel %vm2859, %v2830, %v2172
    %v2896 = vsel %vm2859, %v2831, %v2174
    %v2897 = vsel %vm2859, %v2832, %v2176
    %v2898 = vsel %vm2859, %v2833, %v2178
    %v2899 = vsel %vm2859, %v2834, %v2180
    %v2900 = vsel %vm2859, %v2835, %v2182
    %v2901 = vsel %vm2859, %v2836, %v2184
    %v2902 = vsel %vm2859, %v2837, %v2186
    %v2903 = vsel %vm2859, %v2838, %v2188
    %v2904 = vsel %vm2859, %v2839, %v2190
    %v2905 = vsel %vm2859, %v2840, %v2192
    %v2906 = vsel %vm2859, %v2841, %v2194
    %v2907 = vsel %vm2859, %v2842, %v2196
    %v2908 = vsel %vm2859, %v2843, %v2198
    %v2909 = vsel %vm2859, %v2844, %v2200
    %v2910 = vsel %vm2859, %v2845, %v2202
    %v2911 = vsel %vm2859, %v2846, %v2204
    %v2912 = vsel %vm2859, %v2847, %v2206
    %v2913 = vsel %vm2859, %v2848, %v2208
    %v2914 = vsel %vm2859, %v2849, %v2210
    %v2915 = vsel %vm2859, %v2850, %v2212
    %v2916 = vsel %vm2859, %v2851, %v2214
    %v2917 = vsel %vm2859, %v2852, %v2216
    %v2918 = vsel %vm2859, %v2853, %v2218
    %v2919 = vsel %vm2859, %v2854, %v2220
    %v2920 = vsel %vm2859, %v2855, %v2222
    %v2921 = vsel %vm2859, %v2856, %v2224
    %v2922 = vsel %vm2859, %v2857, %v2162
    %v2923 = vsel %vm2859, %v2858, %v2164
    %vm2924 = vcmask 64512
    %v2925 = vsel %vm2924, %v2860, %v2288
    %v2926 = vsel %vm2924, %v2861, %v2290
    %v2927 = vsel %vm2924, %v2862, %v2292
    %v2928 = vsel %vm2924, %v2863, %v2294
    %v2929 = vsel %vm2924, %v2864, %v2296
    %v2930 = vsel %vm2924, %v2865, %v2298
    %v2931 = vsel %vm2924, %v2866, %v2300
    %v2932 = vsel %vm2924, %v2867, %v2302
    %v2933 = vsel %vm2924, %v2868, %v2304
    %v2934 = vsel %vm2924, %v2869, %v2306
    %v2935 = vsel %vm2924, %v2870, %v2308
    %v2936 = vsel %vm2924, %v2871, %v2310
    %v2937 = vsel %vm2924, %v2872, %v2312
    %v2938 = vsel %vm2924, %v2873, %v2314
    %v2939 = vsel %vm2924, %v2874, %v2316
    %v2940 = vsel %vm2924, %v2875, %v2318
    %v2941 = vsel %vm2924, %v2876, %v2320
    %v2942 = vsel %vm2924, %v2877, %v2322
    %v2943 = vsel %vm2924, %v2878, %v2324
    %v2944 = vsel %vm2924, %v2879, %v2326
    %v2945 = vsel %vm2924, %v2880, %v2328
    %v2946 = vsel %vm2924, %v2881, %v2330
    %v2947 = vsel %vm2924, %v2882, %v2332
    %v2948 = vsel %vm2924, %v2883, %v2334
    %v2949 = vsel %vm2924, %v2884, %v2336
    %v2950 = vsel %vm2924, %v2885, %v2338
    %v2951 = vsel %vm2924, %v2886, %v2340
    %v2952 = vsel %vm2924, %v2887, %v2342
    %v2953 = vsel %vm2924, %v2888, %v2344
    %v2954 = vsel %vm2924, %v2889, %v2346
    %v2955 = vsel %vm2924, %v2890, %v2348
    %v2956 = vsel %vm2924, %v2891, %v2350
    %v2957 = vsel %vm2924, %v2892, %v2352
    %v2958 = vsel %vm2924, %v2893, %v2354
    %v2959 = vsel %vm2924, %v2894, %v2356
    %v2960 = vsel %vm2924, %v2895, %v2358
    %v2961 = vsel %vm2924, %v2896, %v2360
    %v2962 = vsel %vm2924, %v2897, %v2362
    %v2963 = vsel %vm2924, %v2898, %v2364
    %v2964 = vsel %vm2924, %v2899, %v2366
    %v2965 = vsel %vm2924, %v2900, %v2368
    %v2966 = vsel %vm2924, %v2901, %v2370
    %v2967 = vsel %vm2924, %v2902, %v2372
    %v2968 = vsel %vm2924, %v2903, %v2374
    %v2969 = vsel %vm2924, %v2904, %v2376
    %v2970 = vsel %vm2924, %v2905, %v2378
    %v2971 = vsel %vm2924, %v2906, %v2380
    %v2972 = vsel %vm2924, %v2907, %v2382
    %v2973 = vsel %vm2924, %v2908, %v2384
    %v2974 = vsel %vm2924, %v2909, %v2386
    %v2975 = vsel %vm2924, %v2910, %v2388
    %v2976 = vsel %vm2924, %v2911, %v2390
    %v2977 = vsel %vm2924, %v2912, %v2392
    %v2978 = vsel %vm2924, %v2913, %v2394
    %v2979 = vsel %vm2924, %v2914, %v2396
    %v2980 = vsel %vm2924, %v2915, %v2398
    %v2981 = vsel %vm2924, %v2916, %v2400
    %v2982 = vsel %vm2924, %v2917, %v2402
    %v2983 = vsel %vm2924, %v2918, %v2404
    %v2984 = vsel %vm2924, %v2919, %v2406
    %v2985 = vsel %vm2924, %v2920, %v2408
    %v2986 = vsel %vm2924, %v2921, %v2410
    %v2987 = vsel %vm2924, %v2922, %v2348
    %v2988 = vsel %vm2924, %v2923, %v2350
    %v2990 = vlaneseq
    %v2991 = vshrl.u32 %v2990, 7
    %v2992 = vsub.s32 0, %v2991
    %v2993 = vrot.slane %v242, %v2992
    %vm2995 = vcmask 72704
    %v2997 = vsel %vm2995, %v2925, 0
    %v3000 = vsel %vm2995, %v2926, 0
    %v3003 = vsel %vm2995, %v2927, 0
    %v3006 = vsel %vm2995, %v2928, 0
    %v3009 = vsel %vm2995, %v2929, 0
    %v3012 = vsel %vm2995, %v2930, 0
    %v3015 = vsel %vm2995, %v2931, 0
    %v3018 = vsel %vm2995, %v2932, 0
    %v3021 = vsel %vm2995, %v2933, 0
    %v3024 = vsel %vm2995, %v2934, 0
    %v3027 = vsel %vm2995, %v2935, 0
    %v3030 = vsel %vm2995, %v2936, 0
    %v3033 = vsel %vm2995, %v2937, 0
    %v3036 = vsel %vm2995, %v2938, 0
    %v3039 = vsel %vm2995, %v2939, 0
    %v3042 = vsel %vm2995, %v2940, 0
    %v3045 = vsel %vm2995, %v2941, 0
    %v3048 = vsel %vm2995, %v2942, 0
    %v3051 = vsel %vm2995, %v2943, 0
    %v3054 = vsel %vm2995, %v2944, 0
    %v3057 = vsel %vm2995, %v2945, 0
    %v3060 = vsel %vm2995, %v2946, 0
    %v3063 = vsel %vm2995, %v2947, 0
    %v3066 = vsel %vm2995, %v2948, 0
    %v3069 = vsel %vm2995, %v2949, 0
    %v3072 = vsel %vm2995, %v2950, 0
    %v3075 = vsel %vm2995, %v2951, 0
    %v3078 = vsel %vm2995, %v2952, 0
    %v3081 = vsel %vm2995, %v2953, 0
    %v3084 = vsel %vm2995, %v2954, 0
    %v3087 = vsel %vm2995, %v2955, 0
    %v3090 = vsel %vm2995, %v2956, 0
    %v3093 = vsel %vm2995, %v2957, 0
    %v3096 = vsel %vm2995, %v2958, 0
    %v3099 = vsel %vm2995, %v2959, 0
    %v3102 = vsel %vm2995, %v2960, 0
    %v3105 = vsel %vm2995, %v2961, 0
    %v3108 = vsel %vm2995, %v2962, 0
    %v3111 = vsel %vm2995, %v2963, 0
    %v3114 = vsel %vm2995, %v2964, 0
    %v3117 = vsel %vm2995, %v2965, 0
    %v3120 = vsel %vm2995, %v2966, 0
    %v3123 = vsel %vm2995, %v2967, 0
    %v3126 = vsel %vm2995, %v2968, 0
    %v3129 = vsel %vm2995, %v2969, 0
    %v3132 = vsel %vm2995, %v2970, 0
    %v3135 = vsel %vm2995, %v2971, 0
    %v3138 = vsel %vm2995, %v2972, 0
    %v3141 = vsel %vm2995, %v2973, 0
    %v3144 = vsel %vm2995, %v2974, 0
    %v3147 = vsel %vm2995, %v2975, 0
    %v3150 = vsel %vm2995, %v2976, 0
    %v3153 = vsel %vm2995, %v2977, 0
    %v3156 = vsel %vm2995, %v2978, 0
    %v3159 = vsel %vm2995, %v2979, 0
    %v3162 = vsel %vm2995, %v2980, 0
    %v3165 = vsel %vm2995, %v2981, 0
    %v3168 = vsel %vm2995, %v2982, 0
    %v3171 = vsel %vm2995, %v2983, 0
    %v3174 = vsel %vm2995, %v2984, 0
    %v3177 = vsel %vm2995, %v2985, 0
    %v3180 = vsel %vm2995, %v2986, 0
    %v3183 = vsel %vm2995, %v2987, 0
    %v3186 = vsel %vm2995, %v2988, 0
    %v3189 = vsel %vm308, %v241, 0
    %3191 = vmatprep.subr.mxu0 0.0
    %3192 = vmatpush1.msra.mxu0 %v240
    %3193 = vmatprep.subr.mxu0 0.0
    %3194 = vmatpush1.msra.mxu0 %v3189
    %3195 = vmatprep.subr.mxu0 0.0
    %3196 = vmatpush1.msra.mxu0 0.0
    %3197 = vmatprep.subr.mxu0 0.0
    %3198 = vmatpush1.msra.mxu0 0.0
    %3199 = vmatprep.subr.mxu0 0.0
    %3200 = vmatpush1.msra.mxu0 0.0
    %3201 = vmatprep.subr.mxu0 0.0
    %3202 = vmatpush1.msra.mxu0 0.0
    %3203 = vmatprep.subr.mxu0 0.0
    %3204 = vmatpush1.msra.mxu0 0.0
    %3205 = vmatprep.subr.mxu0 0.0
    %3206 = vmatpush1.msra.mxu0 0.0
    %3207 = vmatprep.subr.mxu0 0.0
    %3208 = vmatpush1.msra.mxu0 0.0
    %3209 = vmatprep.subr.mxu0 0.0
    %3210 = vmatpush1.msra.mxu0 0.0
    %3211 = vmatprep.subr.mxu0 0.0
    %3212 = vmatpush1.msra.mxu0 0.0
    %3213 = vmatprep.subr.mxu0 0.0
    %3214 = vmatpush1.msra.mxu0 0.0
    %3215 = vmatprep.subr.mxu0 0.0
    %3216 = vmatpush1.msra.mxu0 0.0
    %3217 = vmatprep.subr.mxu0 0.0
    %3218 = vmatpush1.msra.mxu0 0.0
    %3219 = vmatprep.subr.mxu0 0.0
    %3220 = vmatpush1.msra.mxu0 0.0
    %3221 = vmatprep.subr.mxu0 0.0
    %3222 = vmatpush1.msra.mxu0 0.0
    %3223 = vmatprep.subr.mxu0 0.0
    %3224 = vmatpush1.msra.mxu0 0.0
    %3225 = vmatprep.subr.mxu0 0.0
    %3226 = vmatpush1.msra.mxu0 0.0
    %3227 = vmatprep.subr.mxu0 0.0
    %3228 = vmatpush1.msra.mxu0 0.0
    %3229 = vmatprep.subr.mxu0 0.0
    %3230 = vmatpush1.msra.mxu0 0.0
    %3231 = vmatprep.subr.mxu0 0.0
    %3232 = vmatpush1.msra.mxu0 0.0
    %3233 = vmatprep.subr.mxu0 0.0
    %3234 = vmatpush1.msra.mxu0 0.0
    %3235 = vmatprep.subr.mxu0 0.0
    %3236 = vmatpush1.msra.mxu0 0.0
    %3237 = vmatprep.subr.mxu0 0.0
    %3238 = vmatpush1.msra.mxu0 0.0
    %3239 = vmatprep.subr.mxu0 0.0
    %3240 = vmatpush1.msra.mxu0 0.0
    %3241 = vmatprep.subr.mxu0 0.0
    %3242 = vmatpush1.msra.mxu0 0.0
    %3243 = vmatprep.subr.mxu0 0.0
    %3244 = vmatpush1.msra.mxu0 0.0
    %3245 = vmatprep.subr.mxu0 0.0
    %3246 = vmatpush1.msra.mxu0 0.0
    %3247 = vmatprep.subr.mxu0 0.0
    %3248 = vmatpush1.msra.mxu0 0.0
    %3249 = vmatprep.subr.mxu0 0.0
    %3250 = vmatpush1.msra.mxu0 0.0
    %3251 = vmatprep.subr.mxu0 0.0
    %3252 = vmatpush1.msra.mxu0 0.0
    %3253 = vmatprep.subr.mxu0 0.0
    %3254 = vmatpush1.msra.mxu0 0.0
    %3255 = vmatprep.mubr.f32.mxu0 0.0
    %3256 = vmatmul.mubr.f32.gmra.mrb[0].mxu0 %v2997
    %v3257 = vpop.f32.mrb[0].mxu0
    %v3258 = vadd.f32 %v2993, %v3257
    %v3259 = vpop.f32.mrb[0].mxu0
    %3260 = vmatprep.mubr.f32.mxu0 0.0
    %3261 = vmatmul.mubr.f32.gmra.mrb[0].mxu0 %v3000
    %v3262 = vpop.f32.mrb[0].mxu0
    %v3263 = vadd.f32 %v2993, %v3262
    %v3264 = vpop.f32.mrb[0].mxu0
    %3265 = vmatprep.mubr.f32.mxu0 0.0
    %3266 = vmatmul.mubr.f32.gmra.mrb[0].mxu0 %v3003
    %v3267 = vpop.f32.mrb[0].mxu0
    %v3268 = vadd.f32 %v2993, %v3267
    %v3269 = vpop.f32.mrb[0].mxu0
    %3270 = vmatprep.mubr.f32.mxu0 0.0
    %3271 = vmatmul.mubr.f32.gmra.mrb[0].mxu0 %v3006
    %v3272 = vpop.f32.mrb[0].mxu0
    %v3273 = vadd.f32 %v2993, %v3272
    %v3274 = vpop.f32.mrb[0].mxu0
    %3275 = vmatprep.mubr.f32.mxu0 0.0
    %3276 = vmatmul.mubr.f32.gmra.mrb[0].mxu0 %v3009
    %v3277 = vpop.f32.mrb[0].mxu0
    %v3278 = vadd.f32 %v2993, %v3277
    %v3279 = vpop.f32.mrb[0].mxu0
    %3280 = vmatprep.mubr.f32.mxu0 0.0
    %3281 = vmatmul.mubr.f32.gmra.mrb[0].mxu0 %v3012
    %v3282 = vpop.f32.mrb[0].mxu0
    %v3283 = vadd.f32 %v2993, %v3282
    %v3284 = vpop.f32.mrb[0].mxu0
    %3285 = vmatprep.mubr.f32.mxu0 0.0
    %3286 = vmatmul.mubr.f32.gmra.mrb[0].mxu0 %v3015
    %v3287 = vpop.f32.mrb[0].mxu0
    %v3288 = vadd.f32 %v2993, %v3287
    %v3289 = vpop.f32.mrb[0].mxu0
    %3290 = vmatprep.mubr.f32.mxu0 0.0
    %3291 = vmatmul.mubr.f32.gmra.mrb[0].mxu0 %v3018
    %v3292 = vpop.f32.mrb[0].mxu0
    %v3293 = vadd.f32 %v2993, %v3292
    %v3294 = vpop.f32.mrb[0].mxu0
    %3295 = vmatprep.mubr.f32.mxu0 0.0
    %3296 = vmatmul.mubr.f32.gmra.mrb[0].mxu0 %v3021
    %v3297 = vpop.f32.mrb[0].mxu0
    %v3298 = vadd.f32 %v2993, %v3297
    %v3299 = vpop.f32.mrb[0].mxu0
    %3300 = vmatprep.mubr.f32.mxu0 0.0
    %3301 = vmatmul.mubr.f32.gmra.mrb[0].mxu0 %v3024
    %v3302 = vpop.f32.mrb[0].mxu0
    %v3303 = vadd.f32 %v2993, %v3302
    %v3304 = vpop.f32.mrb[0].mxu0
    %3305 = vmatprep.mubr.f32.mxu0 0.0
    %3306 = vmatmul.mubr.f32.gmra.mrb[0].mxu0 %v3027
    %v3307 = vpop.f32.mrb[0].mxu0
    %v3308 = vadd.f32 %v2993, %v3307
    %v3309 = vpop.f32.mrb[0].mxu0
    %3310 = vmatprep.mubr.f32.mxu0 0.0
    %3311 = vmatmul.mubr.f32.gmra.mrb[0].mxu0 %v3030
    %v3312 = vpop.f32.mrb[0].mxu0
    %v3313 = vadd.f32 %v2993, %v3312
    %v3314 = vpop.f32.mrb[0].mxu0
    %3315 = vmatprep.mubr.f32.mxu0 0.0
    %3316 = vmatmul.mubr.f32.gmra.mrb[0].mxu0 %v3033
    %v3317 = vpop.f32.mrb[0].mxu0
    %v3318 = vadd.f32 %v2993, %v3317
    %v3319 = vpop.f32.mrb[0].mxu0
    %3320 = vmatprep.mubr.f32.mxu0 0.0
    %3321 = vmatmul.mubr.f32.gmra.mrb[0].mxu0 %v3036
    %v3322 = vpop.f32.mrb[0].mxu0
    %v3323 = vadd.f32 %v2993, %v3322
    %v3324 = vpop.f32.mrb[0].mxu0
    %3325 = vmatprep.mubr.f32.mxu0 0.0
    %3326 = vmatmul.mubr.f32.gmra.mrb[0].mxu0 %v3039
    %v3327 = vpop.f32.mrb[0].mxu0
    %v3328 = vadd.f32 %v2993, %v3327
    %v3329 = vpop.f32.mrb[0].mxu0
    %3330 = vmatprep.mubr.f32.mxu0 0.0
    %3331 = vmatmul.mubr.f32.gmra.mrb[0].mxu0 %v3042
    %v3332 = vpop.f32.mrb[0].mxu0
    %v3333 = vadd.f32 %v2993, %v3332
    %v3334 = vpop.f32.mrb[0].mxu0
    %3335 = vmatprep.mubr.f32.mxu0 0.0
    %3336 = vmatmul.mubr.f32.gmra.mrb[0].mxu0 %v3045
    %v3337 = vpop.f32.mrb[0].mxu0
    %v3338 = vadd.f32 %v2993, %v3337
    %v3339 = vpop.f32.mrb[0].mxu0
    %3340 = vmatprep.mubr.f32.mxu0 0.0
    %3341 = vmatmul.mubr.f32.gmra.mrb[0].mxu0 %v3048
    %v3342 = vpop.f32.mrb[0].mxu0
    %v3343 = vadd.f32 %v2993, %v3342
    %v3344 = vpop.f32.mrb[0].mxu0
    %3345 = vmatprep.mubr.f32.mxu0 0.0
    %3346 = vmatmul.mubr.f32.gmra.mrb[0].mxu0 %v3051
    %v3347 = vpop.f32.mrb[0].mxu0
    %v3348 = vadd.f32 %v2993, %v3347
    %v3349 = vpop.f32.mrb[0].mxu0
    %3350 = vmatprep.mubr.f32.mxu0 0.0
    %3351 = vmatmul.mubr.f32.gmra.mrb[0].mxu0 %v3054
    %v3352 = vpop.f32.mrb[0].mxu0
    %v3353 = vadd.f32 %v2993, %v3352
    %v3354 = vpop.f32.mrb[0].mxu0
    %3355 = vmatprep.mubr.f32.mxu0 0.0
    %3356 = vmatmul.mubr.f32.gmra.mrb[0].mxu0 %v3057
    %v3357 = vpop.f32.mrb[0].mxu0
    %v3358 = vadd.f32 %v2993, %v3357
    %v3359 = vpop.f32.mrb[0].mxu0
    %3360 = vmatprep.mubr.f32.mxu0 0.0
    %3361 = vmatmul.mubr.f32.gmra.mrb[0].mxu0 %v3060
    %v3362 = vpop.f32.mrb[0].mxu0
    %v3363 = vadd.f32 %v2993, %v3362
    %v3364 = vpop.f32.mrb[0].mxu0
    %3365 = vmatprep.mubr.f32.mxu0 0.0
    %3366 = vmatmul.mubr.f32.gmra.mrb[0].mxu0 %v3063
    %v3367 = vpop.f32.mrb[0].mxu0
    %v3368 = vadd.f32 %v2993, %v3367
    %v3369 = vpop.f32.mrb[0].mxu0
    %3370 = vmatprep.mubr.f32.mxu0 0.0
    %3371 = vmatmul.mubr.f32.gmra.mrb[0].mxu0 %v3066
    %v3372 = vpop.f32.mrb[0].mxu0
    %v3373 = vadd.f32 %v2993, %v3372
    %v3374 = vpop.f32.mrb[0].mxu0
    %3375 = vmatprep.mubr.f32.mxu0 0.0
    %3376 = vmatmul.mubr.f32.gmra.mrb[0].mxu0 %v3069
    %v3377 = vpop.f32.mrb[0].mxu0
    %v3378 = vadd.f32 %v2993, %v3377
    %v3379 = vpop.f32.mrb[0].mxu0
    %3380 = vmatprep.mubr.f32.mxu0 0.0
    %3381 = vmatmul.mubr.f32.gmra.mrb[0].mxu0 %v3072
    %v3382 = vpop.f32.mrb[0].mxu0
    %v3383 = vadd.f32 %v2993, %v3382
    %v3384 = vpop.f32.mrb[0].mxu0
    %3385 = vmatprep.mubr.f32.mxu0 0.0
    %3386 = vmatmul.mubr.f32.gmra.mrb[0].mxu0 %v3075
    %v3387 = vpop.f32.mrb[0].mxu0
    %v3388 = vadd.f32 %v2993, %v3387
    %v3389 = vpop.f32.mrb[0].mxu0
    %3390 = vmatprep.mubr.f32.mxu0 0.0
    %3391 = vmatmul.mubr.f32.gmra.mrb[0].mxu0 %v3078
    %v3392 = vpop.f32.mrb[0].mxu0
    %v3393 = vadd.f32 %v2993, %v3392
    %v3394 = vpop.f32.mrb[0].mxu0
    %3395 = vmatprep.mubr.f32.mxu0 0.0
    %3396 = vmatmul.mubr.f32.gmra.mrb[0].mxu0 %v3081
    %v3397 = vpop.f32.mrb[0].mxu0
    %v3398 = vadd.f32 %v2993, %v3397
    %v3399 = vpop.f32.mrb[0].mxu0
    %3400 = vmatprep.mubr.f32.mxu0 0.0
    %3401 = vmatmul.mubr.f32.gmra.mrb[0].mxu0 %v3084
    %v3402 = vpop.f32.mrb[0].mxu0
    %v3403 = vadd.f32 %v2993, %v3402
    %v3404 = vpop.f32.mrb[0].mxu0
    %3405 = vmatprep.mubr.f32.mxu0 0.0
    %3406 = vmatmul.mubr.f32.gmra.mrb[0].mxu0 %v3087
    %v3407 = vpop.f32.mrb[0].mxu0
    %v3408 = vadd.f32 %v2993, %v3407
    %v3409 = vpop.f32.mrb[0].mxu0
    %3410 = vmatprep.mubr.f32.mxu0 0.0
    %3411 = vmatmul.mubr.f32.gmra.mrb[0].mxu0 %v3090
    %v3412 = vpop.f32.mrb[0].mxu0
    %v3413 = vadd.f32 %v2993, %v3412
    %v3414 = vpop.f32.mrb[0].mxu0
    %3415 = vmatprep.mubr.f32.mxu0 0.0
    %3416 = vmatmul.mubr.f32.gmra.mrb[0].mxu0 %v3093
    %v3417 = vpop.f32.mrb[0].mxu0
    %v3418 = vadd.f32 %v2993, %v3417
    %v3419 = vpop.f32.mrb[0].mxu0
    %3420 = vmatprep.mubr.f32.mxu0 0.0
    %3421 = vmatmul.mubr.f32.gmra.mrb[0].mxu0 %v3096
    %v3422 = vpop.f32.mrb[0].mxu0
    %v3423 = vadd.f32 %v2993, %v3422
    %v3424 = vpop.f32.mrb[0].mxu0
    %3425 = vmatprep.mubr.f32.mxu0 0.0
    %3426 = vmatmul.mubr.f32.gmra.mrb[0].mxu0 %v3099
    %v3427 = vpop.f32.mrb[0].mxu0
    %v3428 = vadd.f32 %v2993, %v3427
    %v3429 = vpop.f32.mrb[0].mxu0
    %3430 = vmatprep.mubr.f32.mxu0 0.0
    %3431 = vmatmul.mubr.f32.gmra.mrb[0].mxu0 %v3102
    %v3432 = vpop.f32.mrb[0].mxu0
    %v3433 = vadd.f32 %v2993, %v3432
    %v3434 = vpop.f32.mrb[0].mxu0
    %3435 = vmatprep.mubr.f32.mxu0 0.0
    %3436 = vmatmul.mubr.f32.gmra.mrb[0].mxu0 %v3105
    %v3437 = vpop.f32.mrb[0].mxu0
    %v3438 = vadd.f32 %v2993, %v3437
    %v3439 = vpop.f32.mrb[0].mxu0
    %3440 = vmatprep.mubr.f32.mxu0 0.0
    %3441 = vmatmul.mubr.f32.gmra.mrb[0].mxu0 %v3108
    %v3442 = vpop.f32.mrb[0].mxu0
    %v3443 = vadd.f32 %v2993, %v3442
    %v3444 = vpop.f32.mrb[0].mxu0
    %3445 = vmatprep.mubr.f32.mxu0 0.0
    %3446 = vmatmul.mubr.f32.gmra.mrb[0].mxu0 %v3111
    %v3447 = vpop.f32.mrb[0].mxu0
    %v3448 = vadd.f32 %v2993, %v3447
    %v3449 = vpop.f32.mrb[0].mxu0
    %3450 = vmatprep.mubr.f32.mxu0 0.0
    %3451 = vmatmul.mubr.f32.gmra.mrb[0].mxu0 %v3114
    %v3452 = vpop.f32.mrb[0].mxu0
    %v3453 = vadd.f32 %v2993, %v3452
    %v3454 = vpop.f32.mrb[0].mxu0
    %3455 = vmatprep.mubr.f32.mxu0 0.0
    %3456 = vmatmul.mubr.f32.gmra.mrb[0].mxu0 %v3117
    %v3457 = vpop.f32.mrb[0].mxu0
    %v3458 = vadd.f32 %v2993, %v3457
    %v3459 = vpop.f32.mrb[0].mxu0
    %3460 = vmatprep.mubr.f32.mxu0 0.0
    %3461 = vmatmul.mubr.f32.gmra.mrb[0].mxu0 %v3120
    %v3462 = vpop.f32.mrb[0].mxu0
    %v3463 = vadd.f32 %v2993, %v3462
    %v3464 = vpop.f32.mrb[0].mxu0
    %3465 = vmatprep.mubr.f32.mxu0 0.0
    %3466 = vmatmul.mubr.f32.gmra.mrb[0].mxu0 %v3123
    %v3467 = vpop.f32.mrb[0].mxu0
    %v3468 = vadd.f32 %v2993, %v3467
    %v3469 = vpop.f32.mrb[0].mxu0
    %3470 = vmatprep.mubr.f32.mxu0 0.0
    %3471 = vmatmul.mubr.f32.gmra.mrb[0].mxu0 %v3126
    %v3472 = vpop.f32.mrb[0].mxu0
    %v3473 = vadd.f32 %v2993, %v3472
    %v3474 = vpop.f32.mrb[0].mxu0
    %3475 = vmatprep.mubr.f32.mxu0 0.0
    %3476 = vmatmul.mubr.f32.gmra.mrb[0].mxu0 %v3129
    %v3477 = vpop.f32.mrb[0].mxu0
    %v3478 = vadd.f32 %v2993, %v3477
    %v3479 = vpop.f32.mrb[0].mxu0
    %3480 = vmatprep.mubr.f32.mxu0 0.0
    %3481 = vmatmul.mubr.f32.gmra.mrb[0].mxu0 %v3132
    %v3482 = vpop.f32.mrb[0].mxu0
    %v3483 = vadd.f32 %v2993, %v3482
    %v3484 = vpop.f32.mrb[0].mxu0
    %3485 = vmatprep.mubr.f32.mxu0 0.0
    %3486 = vmatmul.mubr.f32.gmra.mrb[0].mxu0 %v3135
    %v3487 = vpop.f32.mrb[0].mxu0
    %v3488 = vadd.f32 %v2993, %v3487
    %v3489 = vpop.f32.mrb[0].mxu0
    %3490 = vmatprep.mubr.f32.mxu0 0.0
    %3491 = vmatmul.mubr.f32.gmra.mrb[0].mxu0 %v3138
    %v3492 = vpop.f32.mrb[0].mxu0
    %v3493 = vadd.f32 %v2993, %v3492
    %v3494 = vpop.f32.mrb[0].mxu0
    %3495 = vmatprep.mubr.f32.mxu0 0.0
    %3496 = vmatmul.mubr.f32.gmra.mrb[0].mxu0 %v3141
    %v3497 = vpop.f32.mrb[0].mxu0
    %v3498 = vadd.f32 %v2993, %v3497
    %v3499 = vpop.f32.mrb[0].mxu0
    %3500 = vmatprep.mubr.f32.mxu0 0.0
    %3501 = vmatmul.mubr.f32.gmra.mrb[0].mxu0 %v3144
    %v3502 = vpop.f32.mrb[0].mxu0
    %v3503 = vadd.f32 %v2993, %v3502
    %v3504 = vpop.f32.mrb[0].mxu0
    %3505 = vmatprep.mubr.f32.mxu0 0.0
    %3506 = vmatmul.mubr.f32.gmra.mrb[0].mxu0 %v3147
    %v3507 = vpop.f32.mrb[0].mxu0
    %v3508 = vadd.f32 %v2993, %v3507
    %v3509 = vpop.f32.mrb[0].mxu0
    %3510 = vmatprep.mubr.f32.mxu0 0.0
    %3511 = vmatmul.mubr.f32.gmra.mrb[0].mxu0 %v3150
    %v3512 = vpop.f32.mrb[0].mxu0
    %v3513 = vadd.f32 %v2993, %v3512
    %v3514 = vpop.f32.mrb[0].mxu0
    %3515 = vmatprep.mubr.f32.mxu0 0.0
    %3516 = vmatmul.mubr.f32.gmra.mrb[0].mxu0 %v3153
    %v3517 = vpop.f32.mrb[0].mxu0
    %v3518 = vadd.f32 %v2993, %v3517
    %v3519 = vpop.f32.mrb[0].mxu0
    %3520 = vmatprep.mubr.f32.mxu0 0.0
    %3521 = vmatmul.mubr.f32.gmra.mrb[0].mxu0 %v3156
    %v3522 = vpop.f32.mrb[0].mxu0
    %v3523 = vadd.f32 %v2993, %v3522
    %v3524 = vpop.f32.mrb[0].mxu0
    %3525 = vmatprep.mubr.f32.mxu0 0.0
    %3526 = vmatmul.mubr.f32.gmra.mrb[0].mxu0 %v3159
    %v3527 = vpop.f32.mrb[0].mxu0
    %v3528 = vadd.f32 %v2993, %v3527
    %v3529 = vpop.f32.mrb[0].mxu0
    %3530 = vmatprep.mubr.f32.mxu0 0.0
    %3531 = vmatmul.mubr.f32.gmra.mrb[0].mxu0 %v3162
    %v3532 = vpop.f32.mrb[0].mxu0
    %v3533 = vadd.f32 %v2993, %v3532
    %v3534 = vpop.f32.mrb[0].mxu0
    %3535 = vmatprep.mubr.f32.mxu0 0.0
    %3536 = vmatmul.mubr.f32.gmra.mrb[0].mxu0 %v3165
    %v3537 = vpop.f32.mrb[0].mxu0
    %v3538 = vadd.f32 %v2993, %v3537
    %v3539 = vpop.f32.mrb[0].mxu0
    %3540 = vmatprep.mubr.f32.mxu0 0.0
    %3541 = vmatmul.mubr.f32.gmra.mrb[0].mxu0 %v3168
    %v3542 = vpop.f32.mrb[0].mxu0
    %v3543 = vadd.f32 %v2993, %v3542
    %v3544 = vpop.f32.mrb[0].mxu0
    %3545 = vmatprep.mubr.f32.mxu0 0.0
    %3546 = vmatmul.mubr.f32.gmra.mrb[0].mxu0 %v3171
    %v3547 = vpop.f32.mrb[0].mxu0
    %v3548 = vadd.f32 %v2993, %v3547
    %v3549 = vpop.f32.mrb[0].mxu0
    %3550 = vmatprep.mubr.f32.mxu0 0.0
    %3551 = vmatmul.mubr.f32.gmra.mrb[0].mxu0 %v3174
    %v3552 = vpop.f32.mrb[0].mxu0
    %v3553 = vadd.f32 %v2993, %v3552
    %v3554 = vpop.f32.mrb[0].mxu0
    %3555 = vmatprep.mubr.f32.mxu0 0.0
    %3556 = vmatmul.mubr.f32.gmra.mrb[0].mxu0 %v3177
    %v3557 = vpop.f32.mrb[0].mxu0
    %v3558 = vadd.f32 %v2993, %v3557
    %v3559 = vpop.f32.mrb[0].mxu0
    %3560 = vmatprep.mubr.f32.mxu0 0.0
    %3561 = vmatmul.mubr.f32.gmra.mrb[0].mxu0 %v3180
    %v3562 = vpop.f32.mrb[0].mxu0
    %v3563 = vadd.f32 %v2993, %v3562
    %v3564 = vpop.f32.mrb[0].mxu0
    %3565 = vmatprep.mubr.f32.mxu0 0.0
    %3566 = vmatmul.mubr.f32.gmra.mrb[0].mxu0 %v3183
    %v3567 = vpop.f32.mrb[0].mxu0
    %v3568 = vadd.f32 %v2993, %v3567
    %v3569 = vpop.f32.mrb[0].mxu0
    %3570 = vmatprep.mubr.f32.mxu0 0.0
    %3571 = vmatmul.mubr.f32.gmra.mrb[0].mxu0 %v3186
    %v3572 = vpop.f32.mrb[0].mxu0
    %v3573 = vadd.f32 %v2993, %v3572
    %v3574 = vpop.f32.mrb[0].mxu0
    %3575 = vdwg.mxu0
    %v3576 = vmax.f32 %v3258, 0.0
    %v3577 = vmax.f32 %v3263, 0.0
    %v3578 = vmax.f32 %v3268, 0.0
    %v3579 = vmax.f32 %v3273, 0.0
    %v3580 = vmax.f32 %v3278, 0.0
    %v3581 = vmax.f32 %v3283, 0.0
    %v3582 = vmax.f32 %v3288, 0.0
    %v3583 = vmax.f32 %v3293, 0.0
    %v3584 = vmax.f32 %v3298, 0.0
    %v3585 = vmax.f32 %v3303, 0.0
    %v3586 = vmax.f32 %v3308, 0.0
    %v3587 = vmax.f32 %v3313, 0.0
    %v3588 = vmax.f32 %v3318, 0.0
    %v3589 = vmax.f32 %v3323, 0.0
    %v3590 = vmax.f32 %v3328, 0.0
    %v3591 = vmax.f32 %v3333, 0.0
    %v3592 = vmax.f32 %v3338, 0.0
    %v3593 = vmax.f32 %v3343, 0.0
    %v3594 = vmax.f32 %v3348, 0.0
    %v3595 = vmax.f32 %v3353, 0.0
    %v3596 = vmax.f32 %v3358, 0.0
    %v3597 = vmax.f32 %v3363, 0.0
    %v3598 = vmax.f32 %v3368, 0.0
    %v3599 = vmax.f32 %v3373, 0.0
    %v3600 = vmax.f32 %v3378, 0.0
    %v3601 = vmax.f32 %v3383, 0.0
    %v3602 = vmax.f32 %v3388, 0.0
    %v3603 = vmax.f32 %v3393, 0.0
    %v3604 = vmax.f32 %v3398, 0.0
    %v3605 = vmax.f32 %v3403, 0.0
    %v3606 = vmax.f32 %v3408, 0.0
    %v3607 = vmax.f32 %v3413, 0.0
    %v3608 = vmax.f32 %v3418, 0.0
    %v3609 = vmax.f32 %v3423, 0.0
    %v3610 = vmax.f32 %v3428, 0.0
    %v3611 = vmax.f32 %v3433, 0.0
    %v3612 = vmax.f32 %v3438, 0.0
    %v3613 = vmax.f32 %v3443, 0.0
    %v3614 = vmax.f32 %v3448, 0.0
    %v3615 = vmax.f32 %v3453, 0.0
    %v3616 = vmax.f32 %v3458, 0.0
    %v3617 = vmax.f32 %v3463, 0.0
    %v3618 = vmax.f32 %v3468, 0.0
    %v3619 = vmax.f32 %v3473, 0.0
    %v3620 = vmax.f32 %v3478, 0.0
    %v3621 = vmax.f32 %v3483, 0.0
    %v3622 = vmax.f32 %v3488, 0.0
    %v3623 = vmax.f32 %v3493, 0.0
    %v3624 = vmax.f32 %v3498, 0.0
    %v3625 = vmax.f32 %v3503, 0.0
    %v3626 = vmax.f32 %v3508, 0.0
    %v3627 = vmax.f32 %v3513, 0.0
    %v3628 = vmax.f32 %v3518, 0.0
    %v3629 = vmax.f32 %v3523, 0.0
    %v3630 = vmax.f32 %v3528, 0.0
    %v3631 = vmax.f32 %v3533, 0.0
    %v3632 = vmax.f32 %v3538, 0.0
    %v3633 = vmax.f32 %v3543, 0.0
    %v3634 = vmax.f32 %v3548, 0.0
    %v3635 = vmax.f32 %v3553, 0.0
    %v3636 = vmax.f32 %v3558, 0.0
    %v3637 = vmax.f32 %v3563, 0.0
    %v3638 = vmax.f32 %v3568, 0.0
    %v3639 = vmax.f32 %v3573, 0.0
    %v3704 = vcombine.high %v3576, %v3576
    %v3706 = vunpack.c.l.s4 1983009808
    %v3707 = vunpack.c.0.s8 %v3706
    %v3708 = vlaneseq
    %v3709 = vshrl.u32 %v3708, 7
    %v3710 = vsub.s32 %v3707, %v3709
    %v3711 = vrot.slane %v3576, %v3710
    %v3713 = vunpack.c.l.s4 1983009808
    %v3714 = vunpack.c.0.s8 %v3713
    %v3715 = vlaneseq
    %v3716 = vshrl.u32 %v3715, 7
    %v3717 = vsub.s32 %v3714, %v3716
    %v3718 = vrot.slane %v3704, %v3717
    %v3719 = vcombine.high %v3711, %v3711
    %v3720 = vcombine.high %v3718, %v3718
    %v3721 = vcombine.high %v3577, %v3577
    %v3723 = vunpack.c.l.s4 1983009808
    %v3724 = vunpack.c.0.s8 %v3723
    %v3725 = vlaneseq
    %v3726 = vshrl.u32 %v3725, 7
    %v3727 = vsub.s32 %v3724, %v3726
    %v3728 = vrot.slane %v3577, %v3727
    %v3730 = vunpack.c.l.s4 1983009808
    %v3731 = vunpack.c.0.s8 %v3730
    %v3732 = vlaneseq
    %v3733 = vshrl.u32 %v3732, 7
    %v3734 = vsub.s32 %v3731, %v3733
    %v3735 = vrot.slane %v3721, %v3734
    %v3736 = vcombine.high %v3728, %v3728
    %v3737 = vcombine.high %v3735, %v3735
    %v3738 = vcombine.high %v3578, %v3578
    %v3740 = vunpack.c.l.s4 1983009808
    %v3741 = vunpack.c.0.s8 %v3740
    %v3742 = vlaneseq
    %v3743 = vshrl.u32 %v3742, 7
    %v3744 = vsub.s32 %v3741, %v3743
    %v3745 = vrot.slane %v3578, %v3744
    %v3747 = vunpack.c.l.s4 1983009808
    %v3748 = vunpack.c.0.s8 %v3747
    %v3749 = vlaneseq
    %v3750 = vshrl.u32 %v3749, 7
    %v3751 = vsub.s32 %v3748, %v3750
    %v3752 = vrot.slane %v3738, %v3751
    %v3753 = vcombine.high %v3745, %v3745
    %v3754 = vcombine.high %v3752, %v3752
    %v3755 = vcombine.high %v3579, %v3579
    %v3757 = vunpack.c.l.s4 1983009808
    %v3758 = vunpack.c.0.s8 %v3757
    %v3759 = vlaneseq
    %v3760 = vshrl.u32 %v3759, 7
    %v3761 = vsub.s32 %v3758, %v3760
    %v3762 = vrot.slane %v3579, %v3761
    %v3764 = vunpack.c.l.s4 1983009808
    %v3765 = vunpack.c.0.s8 %v3764
    %v3766 = vlaneseq
    %v3767 = vshrl.u32 %v3766, 7
    %v3768 = vsub.s32 %v3765, %v3767
    %v3769 = vrot.slane %v3755, %v3768
    %v3770 = vcombine.high %v3762, %v3762
    %v3771 = vcombine.high %v3769, %v3769
    %v3772 = vcombine.high %v3580, %v3580
    %v3774 = vunpack.c.l.s4 1983009808
    %v3775 = vunpack.c.0.s8 %v3774
    %v3776 = vlaneseq
    %v3777 = vshrl.u32 %v3776, 7
    %v3778 = vsub.s32 %v3775, %v3777
    %v3779 = vrot.slane %v3580, %v3778
    %v3781 = vunpack.c.l.s4 1983009808
    %v3782 = vunpack.c.0.s8 %v3781
    %v3783 = vlaneseq
    %v3784 = vshrl.u32 %v3783, 7
    %v3785 = vsub.s32 %v3782, %v3784
    %v3786 = vrot.slane %v3772, %v3785
    %v3787 = vcombine.high %v3779, %v3779
    %v3788 = vcombine.high %v3786, %v3786
    %v3789 = vcombine.high %v3581, %v3581
    %v3791 = vunpack.c.l.s4 1983009808
    %v3792 = vunpack.c.0.s8 %v3791
    %v3793 = vlaneseq
    %v3794 = vshrl.u32 %v3793, 7
    %v3795 = vsub.s32 %v3792, %v3794
    %v3796 = vrot.slane %v3581, %v3795
    %v3798 = vunpack.c.l.s4 1983009808
    %v3799 = vunpack.c.0.s8 %v3798
    %v3800 = vlaneseq
    %v3801 = vshrl.u32 %v3800, 7
    %v3802 = vsub.s32 %v3799, %v3801
    %v3803 = vrot.slane %v3789, %v3802
    %v3804 = vcombine.high %v3796, %v3796
    %v3805 = vcombine.high %v3803, %v3803
    %v3806 = vcombine.high %v3582, %v3582
    %v3808 = vunpack.c.l.s4 1983009808
    %v3809 = vunpack.c.0.s8 %v3808
    %v3810 = vlaneseq
    %v3811 = vshrl.u32 %v3810, 7
    %v3812 = vsub.s32 %v3809, %v3811
    %v3813 = vrot.slane %v3582, %v3812
    %v3815 = vunpack.c.l.s4 1983009808
    %v3816 = vunpack.c.0.s8 %v3815
    %v3817 = vlaneseq
    %v3818 = vshrl.u32 %v3817, 7
    %v3819 = vsub.s32 %v3816, %v3818
    %v3820 = vrot.slane %v3806, %v3819
    %v3821 = vcombine.high %v3813, %v3813
    %v3822 = vcombine.high %v3820, %v3820
    %v3823 = vcombine.high %v3583, %v3583
    %v3825 = vunpack.c.l.s4 1983009808
    %v3826 = vunpack.c.0.s8 %v3825
    %v3827 = vlaneseq
    %v3828 = vshrl.u32 %v3827, 7
    %v3829 = vsub.s32 %v3826, %v3828
    %v3830 = vrot.slane %v3583, %v3829
    %v3832 = vunpack.c.l.s4 1983009808
    %v3833 = vunpack.c.0.s8 %v3832
    %v3834 = vlaneseq
    %v3835 = vshrl.u32 %v3834, 7
    %v3836 = vsub.s32 %v3833, %v3835
    %v3837 = vrot.slane %v3823, %v3836
    %v3838 = vcombine.high %v3830, %v3830
    %v3839 = vcombine.high %v3837, %v3837
    %v3840 = vcombine.high %v3584, %v3584
    %v3842 = vunpack.c.l.s4 1983009808
    %v3843 = vunpack.c.0.s8 %v3842
    %v3844 = vlaneseq
    %v3845 = vshrl.u32 %v3844, 7
    %v3846 = vsub.s32 %v3843, %v3845
    %v3847 = vrot.slane %v3584, %v3846
    %v3849 = vunpack.c.l.s4 1983009808
    %v3850 = vunpack.c.0.s8 %v3849
    %v3851 = vlaneseq
    %v3852 = vshrl.u32 %v3851, 7
    %v3853 = vsub.s32 %v3850, %v3852
    %v3854 = vrot.slane %v3840, %v3853
    %v3855 = vcombine.high %v3847, %v3847
    %v3856 = vcombine.high %v3854, %v3854
    %v3857 = vcombine.high %v3585, %v3585
    %v3859 = vunpack.c.l.s4 1983009808
    %v3860 = vunpack.c.0.s8 %v3859
    %v3861 = vlaneseq
    %v3862 = vshrl.u32 %v3861, 7
    %v3863 = vsub.s32 %v3860, %v3862
    %v3864 = vrot.slane %v3585, %v3863
    %v3866 = vunpack.c.l.s4 1983009808
    %v3867 = vunpack.c.0.s8 %v3866
    %v3868 = vlaneseq
    %v3869 = vshrl.u32 %v3868, 7
    %v3870 = vsub.s32 %v3867, %v3869
    %v3871 = vrot.slane %v3857, %v3870
    %v3872 = vcombine.high %v3864, %v3864
    %v3873 = vcombine.high %v3871, %v3871
    %v3874 = vcombine.high %v3586, %v3586
    %v3876 = vunpack.c.l.s4 1983009808
    %v3877 = vunpack.c.0.s8 %v3876
    %v3878 = vlaneseq
    %v3879 = vshrl.u32 %v3878, 7
    %v3880 = vsub.s32 %v3877, %v3879
    %v3881 = vrot.slane %v3586, %v3880
    %v3883 = vunpack.c.l.s4 1983009808
    %v3884 = vunpack.c.0.s8 %v3883
    %v3885 = vlaneseq
    %v3886 = vshrl.u32 %v3885, 7
    %v3887 = vsub.s32 %v3884, %v3886
    %v3888 = vrot.slane %v3874, %v3887
    %v3889 = vcombine.high %v3881, %v3881
    %v3890 = vcombine.high %v3888, %v3888
    %v3891 = vcombine.high %v3587, %v3587
    %v3893 = vunpack.c.l.s4 1983009808
    %v3894 = vunpack.c.0.s8 %v3893
    %v3895 = vlaneseq
    %v3896 = vshrl.u32 %v3895, 7
    %v3897 = vsub.s32 %v3894, %v3896
    %v3898 = vrot.slane %v3587, %v3897
    %v3900 = vunpack.c.l.s4 1983009808
    %v3901 = vunpack.c.0.s8 %v3900
    %v3902 = vlaneseq
    %v3903 = vshrl.u32 %v3902, 7
    %v3904 = vsub.s32 %v3901, %v3903
    %v3905 = vrot.slane %v3891, %v3904
    %v3906 = vcombine.high %v3898, %v3898
    %v3907 = vcombine.high %v3905, %v3905
    %v3908 = vcombine.high %v3588, %v3588
    %v3910 = vunpack.c.l.s4 1983009808
    %v3911 = vunpack.c.0.s8 %v3910
    %v3912 = vlaneseq
    %v3913 = vshrl.u32 %v3912, 7
    %v3914 = vsub.s32 %v3911, %v3913
    %v3915 = vrot.slane %v3588, %v3914
    %v3917 = vunpack.c.l.s4 1983009808
    %v3918 = vunpack.c.0.s8 %v3917
    %v3919 = vlaneseq
    %v3920 = vshrl.u32 %v3919, 7
    %v3921 = vsub.s32 %v3918, %v3920
    %v3922 = vrot.slane %v3908, %v3921
    %v3923 = vcombine.high %v3915, %v3915
    %v3924 = vcombine.high %v3922, %v3922
    %v3925 = vcombine.high %v3589, %v3589
    %v3927 = vunpack.c.l.s4 1983009808
    %v3928 = vunpack.c.0.s8 %v3927
    %v3929 = vlaneseq
    %v3930 = vshrl.u32 %v3929, 7
    %v3931 = vsub.s32 %v3928, %v3930
    %v3932 = vrot.slane %v3589, %v3931
    %v3934 = vunpack.c.l.s4 1983009808
    %v3935 = vunpack.c.0.s8 %v3934
    %v3936 = vlaneseq
    %v3937 = vshrl.u32 %v3936, 7
    %v3938 = vsub.s32 %v3935, %v3937
    %v3939 = vrot.slane %v3925, %v3938
    %v3940 = vcombine.high %v3932, %v3932
    %v3941 = vcombine.high %v3939, %v3939
    %v3942 = vcombine.high %v3590, %v3590
    %v3944 = vunpack.c.l.s4 1983009808
    %v3945 = vunpack.c.0.s8 %v3944
    %v3946 = vlaneseq
    %v3947 = vshrl.u32 %v3946, 7
    %v3948 = vsub.s32 %v3945, %v3947
    %v3949 = vrot.slane %v3590, %v3948
    %v3951 = vunpack.c.l.s4 1983009808
    %v3952 = vunpack.c.0.s8 %v3951
    %v3953 = vlaneseq
    %v3954 = vshrl.u32 %v3953, 7
    %v3955 = vsub.s32 %v3952, %v3954
    %v3956 = vrot.slane %v3942, %v3955
    %v3957 = vcombine.high %v3949, %v3949
    %v3958 = vcombine.high %v3956, %v3956
    %v3959 = vcombine.high %v3591, %v3591
    %v3961 = vunpack.c.l.s4 1983009808
    %v3962 = vunpack.c.0.s8 %v3961
    %v3963 = vlaneseq
    %v3964 = vshrl.u32 %v3963, 7
    %v3965 = vsub.s32 %v3962, %v3964
    %v3966 = vrot.slane %v3591, %v3965
    %v3968 = vunpack.c.l.s4 1983009808
    %v3969 = vunpack.c.0.s8 %v3968
    %v3970 = vlaneseq
    %v3971 = vshrl.u32 %v3970, 7
    %v3972 = vsub.s32 %v3969, %v3971
    %v3973 = vrot.slane %v3959, %v3972
    %v3974 = vcombine.high %v3966, %v3966
    %v3975 = vcombine.high %v3973, %v3973
    %v3976 = vcombine.high %v3592, %v3592
    %v3978 = vunpack.c.l.s4 1983009808
    %v3979 = vunpack.c.0.s8 %v3978
    %v3980 = vlaneseq
    %v3981 = vshrl.u32 %v3980, 7
    %v3982 = vsub.s32 %v3979, %v3981
    %v3983 = vrot.slane %v3592, %v3982
    %v3985 = vunpack.c.l.s4 1983009808
    %v3986 = vunpack.c.0.s8 %v3985
    %v3987 = vlaneseq
    %v3988 = vshrl.u32 %v3987, 7
    %v3989 = vsub.s32 %v3986, %v3988
    %v3990 = vrot.slane %v3976, %v3989
    %v3991 = vcombine.high %v3983, %v3983
    %v3992 = vcombine.high %v3990, %v3990
    %v3993 = vcombine.high %v3593, %v3593
    %v3995 = vunpack.c.l.s4 1983009808
    %v3996 = vunpack.c.0.s8 %v3995
    %v3997 = vlaneseq
    %v3998 = vshrl.u32 %v3997, 7
    %v3999 = vsub.s32 %v3996, %v3998
    %v4000 = vrot.slane %v3593, %v3999
    %v4002 = vunpack.c.l.s4 1983009808
    %v4003 = vunpack.c.0.s8 %v4002
    %v4004 = vlaneseq
    %v4005 = vshrl.u32 %v4004, 7
    %v4006 = vsub.s32 %v4003, %v4005
    %v4007 = vrot.slane %v3993, %v4006
    %v4008 = vcombine.high %v4000, %v4000
    %v4009 = vcombine.high %v4007, %v4007
    %v4010 = vcombine.high %v3594, %v3594
    %v4012 = vunpack.c.l.s4 1983009808
    %v4013 = vunpack.c.0.s8 %v4012
    %v4014 = vlaneseq
    %v4015 = vshrl.u32 %v4014, 7
    %v4016 = vsub.s32 %v4013, %v4015
    %v4017 = vrot.slane %v3594, %v4016
    %v4019 = vunpack.c.l.s4 1983009808
    %v4020 = vunpack.c.0.s8 %v4019
    %v4021 = vlaneseq
    %v4022 = vshrl.u32 %v4021, 7
    %v4023 = vsub.s32 %v4020, %v4022
    %v4024 = vrot.slane %v4010, %v4023
    %v4025 = vcombine.high %v4017, %v4017
    %v4026 = vcombine.high %v4024, %v4024
    %v4027 = vcombine.high %v3595, %v3595
    %v4029 = vunpack.c.l.s4 1983009808
    %v4030 = vunpack.c.0.s8 %v4029
    %v4031 = vlaneseq
    %v4032 = vshrl.u32 %v4031, 7
    %v4033 = vsub.s32 %v4030, %v4032
    %v4034 = vrot.slane %v3595, %v4033
    %v4036 = vunpack.c.l.s4 1983009808
    %v4037 = vunpack.c.0.s8 %v4036
    %v4038 = vlaneseq
    %v4039 = vshrl.u32 %v4038, 7
    %v4040 = vsub.s32 %v4037, %v4039
    %v4041 = vrot.slane %v4027, %v4040
    %v4042 = vcombine.high %v4034, %v4034
    %v4043 = vcombine.high %v4041, %v4041
    %v4044 = vcombine.high %v3596, %v3596
    %v4046 = vunpack.c.l.s4 1983009808
    %v4047 = vunpack.c.0.s8 %v4046
    %v4048 = vlaneseq
    %v4049 = vshrl.u32 %v4048, 7
    %v4050 = vsub.s32 %v4047, %v4049
    %v4051 = vrot.slane %v3596, %v4050
    %v4053 = vunpack.c.l.s4 1983009808
    %v4054 = vunpack.c.0.s8 %v4053
    %v4055 = vlaneseq
    %v4056 = vshrl.u32 %v4055, 7
    %v4057 = vsub.s32 %v4054, %v4056
    %v4058 = vrot.slane %v4044, %v4057
    %v4059 = vcombine.high %v4051, %v4051
    %v4060 = vcombine.high %v4058, %v4058
    %v4061 = vcombine.high %v3597, %v3597
    %v4063 = vunpack.c.l.s4 1983009808
    %v4064 = vunpack.c.0.s8 %v4063
    %v4065 = vlaneseq
    %v4066 = vshrl.u32 %v4065, 7
    %v4067 = vsub.s32 %v4064, %v4066
    %v4068 = vrot.slane %v3597, %v4067
    %v4070 = vunpack.c.l.s4 1983009808
    %v4071 = vunpack.c.0.s8 %v4070
    %v4072 = vlaneseq
    %v4073 = vshrl.u32 %v4072, 7
    %v4074 = vsub.s32 %v4071, %v4073
    %v4075 = vrot.slane %v4061, %v4074
    %v4076 = vcombine.high %v4068, %v4068
    %v4077 = vcombine.high %v4075, %v4075
    %v4078 = vcombine.high %v3598, %v3598
    %v4080 = vunpack.c.l.s4 1983009808
    %v4081 = vunpack.c.0.s8 %v4080
    %v4082 = vlaneseq
    %v4083 = vshrl.u32 %v4082, 7
    %v4084 = vsub.s32 %v4081, %v4083
    %v4085 = vrot.slane %v3598, %v4084
    %v4087 = vunpack.c.l.s4 1983009808
    %v4088 = vunpack.c.0.s8 %v4087
    %v4089 = vlaneseq
    %v4090 = vshrl.u32 %v4089, 7
    %v4091 = vsub.s32 %v4088, %v4090
    %v4092 = vrot.slane %v4078, %v4091
    %v4093 = vcombine.high %v4085, %v4085
    %v4094 = vcombine.high %v4092, %v4092
    %v4095 = vcombine.high %v3599, %v3599
    %v4097 = vunpack.c.l.s4 1983009808
    %v4098 = vunpack.c.0.s8 %v4097
    %v4099 = vlaneseq
    %v4100 = vshrl.u32 %v4099, 7
    %v4101 = vsub.s32 %v4098, %v4100
    %v4102 = vrot.slane %v3599, %v4101
    %v4104 = vunpack.c.l.s4 1983009808
    %v4105 = vunpack.c.0.s8 %v4104
    %v4106 = vlaneseq
    %v4107 = vshrl.u32 %v4106, 7
    %v4108 = vsub.s32 %v4105, %v4107
    %v4109 = vrot.slane %v4095, %v4108
    %v4110 = vcombine.high %v4102, %v4102
    %v4111 = vcombine.high %v4109, %v4109
    %v4112 = vcombine.high %v3600, %v3600
    %v4114 = vunpack.c.l.s4 1983009808
    %v4115 = vunpack.c.0.s8 %v4114
    %v4116 = vlaneseq
    %v4117 = vshrl.u32 %v4116, 7
    %v4118 = vsub.s32 %v4115, %v4117
    %v4119 = vrot.slane %v3600, %v4118
    %v4121 = vunpack.c.l.s4 1983009808
    %v4122 = vunpack.c.0.s8 %v4121
    %v4123 = vlaneseq
    %v4124 = vshrl.u32 %v4123, 7
    %v4125 = vsub.s32 %v4122, %v4124
    %v4126 = vrot.slane %v4112, %v4125
    %v4127 = vcombine.high %v4119, %v4119
    %v4128 = vcombine.high %v4126, %v4126
    %v4129 = vcombine.high %v3601, %v3601
    %v4131 = vunpack.c.l.s4 1983009808
    %v4132 = vunpack.c.0.s8 %v4131
    %v4133 = vlaneseq
    %v4134 = vshrl.u32 %v4133, 7
    %v4135 = vsub.s32 %v4132, %v4134
    %v4136 = vrot.slane %v3601, %v4135
    %v4138 = vunpack.c.l.s4 1983009808
    %v4139 = vunpack.c.0.s8 %v4138
    %v4140 = vlaneseq
    %v4141 = vshrl.u32 %v4140, 7
    %v4142 = vsub.s32 %v4139, %v4141
    %v4143 = vrot.slane %v4129, %v4142
    %v4144 = vcombine.high %v4136, %v4136
    %v4145 = vcombine.high %v4143, %v4143
    %v4146 = vcombine.high %v3602, %v3602
    %v4148 = vunpack.c.l.s4 1983009808
    %v4149 = vunpack.c.0.s8 %v4148
    %v4150 = vlaneseq
    %v4151 = vshrl.u32 %v4150, 7
    %v4152 = vsub.s32 %v4149, %v4151
    %v4153 = vrot.slane %v3602, %v4152
    %v4155 = vunpack.c.l.s4 1983009808
    %v4156 = vunpack.c.0.s8 %v4155
    %v4157 = vlaneseq
    %v4158 = vshrl.u32 %v4157, 7
    %v4159 = vsub.s32 %v4156, %v4158
    %v4160 = vrot.slane %v4146, %v4159
    %v4161 = vcombine.high %v4153, %v4153
    %v4162 = vcombine.high %v4160, %v4160
    %v4163 = vcombine.high %v3603, %v3603
    %v4165 = vunpack.c.l.s4 1983009808
    %v4166 = vunpack.c.0.s8 %v4165
    %v4167 = vlaneseq
    %v4168 = vshrl.u32 %v4167, 7
    %v4169 = vsub.s32 %v4166, %v4168
    %v4170 = vrot.slane %v3603, %v4169
    %v4172 = vunpack.c.l.s4 1983009808
    %v4173 = vunpack.c.0.s8 %v4172
    %v4174 = vlaneseq
    %v4175 = vshrl.u32 %v4174, 7
    %v4176 = vsub.s32 %v4173, %v4175
    %v4177 = vrot.slane %v4163, %v4176
    %v4178 = vcombine.high %v4170, %v4170
    %v4179 = vcombine.high %v4177, %v4177
    %v4180 = vcombine.high %v3604, %v3604
    %v4182 = vunpack.c.l.s4 1983009808
    %v4183 = vunpack.c.0.s8 %v4182
    %v4184 = vlaneseq
    %v4185 = vshrl.u32 %v4184, 7
    %v4186 = vsub.s32 %v4183, %v4185
    %v4187 = vrot.slane %v3604, %v4186
    %v4189 = vunpack.c.l.s4 1983009808
    %v4190 = vunpack.c.0.s8 %v4189
    %v4191 = vlaneseq
    %v4192 = vshrl.u32 %v4191, 7
    %v4193 = vsub.s32 %v4190, %v4192
    %v4194 = vrot.slane %v4180, %v4193
    %v4195 = vcombine.high %v4187, %v4187
    %v4196 = vcombine.high %v4194, %v4194
    %v4197 = vcombine.high %v3605, %v3605
    %v4199 = vunpack.c.l.s4 1983009808
    %v4200 = vunpack.c.0.s8 %v4199
    %v4201 = vlaneseq
    %v4202 = vshrl.u32 %v4201, 7
    %v4203 = vsub.s32 %v4200, %v4202
    %v4204 = vrot.slane %v3605, %v4203
    %v4206 = vunpack.c.l.s4 1983009808
    %v4207 = vunpack.c.0.s8 %v4206
    %v4208 = vlaneseq
    %v4209 = vshrl.u32 %v4208, 7
    %v4210 = vsub.s32 %v4207, %v4209
    %v4211 = vrot.slane %v4197, %v4210
    %v4212 = vcombine.high %v4204, %v4204
    %v4213 = vcombine.high %v4211, %v4211
    %v4214 = vcombine.high %v3606, %v3606
    %v4216 = vunpack.c.l.s4 1983009808
    %v4217 = vunpack.c.0.s8 %v4216
    %v4218 = vlaneseq
    %v4219 = vshrl.u32 %v4218, 7
    %v4220 = vsub.s32 %v4217, %v4219
    %v4221 = vrot.slane %v3606, %v4220
    %v4223 = vunpack.c.l.s4 1983009808
    %v4224 = vunpack.c.0.s8 %v4223
    %v4225 = vlaneseq
    %v4226 = vshrl.u32 %v4225, 7
    %v4227 = vsub.s32 %v4224, %v4226
    %v4228 = vrot.slane %v4214, %v4227
    %v4229 = vcombine.high %v4221, %v4221
    %v4230 = vcombine.high %v4228, %v4228
    %v4231 = vcombine.high %v3607, %v3607
    %v4233 = vunpack.c.l.s4 1983009808
    %v4234 = vunpack.c.0.s8 %v4233
    %v4235 = vlaneseq
    %v4236 = vshrl.u32 %v4235, 7
    %v4237 = vsub.s32 %v4234, %v4236
    %v4238 = vrot.slane %v3607, %v4237
    %v4240 = vunpack.c.l.s4 1983009808
    %v4241 = vunpack.c.0.s8 %v4240
    %v4242 = vlaneseq
    %v4243 = vshrl.u32 %v4242, 7
    %v4244 = vsub.s32 %v4241, %v4243
    %v4245 = vrot.slane %v4231, %v4244
    %v4246 = vcombine.high %v4238, %v4238
    %v4247 = vcombine.high %v4245, %v4245
    %v4248 = vcombine.high %v3608, %v3608
    %v4250 = vunpack.c.l.s4 1983009808
    %v4251 = vunpack.c.0.s8 %v4250
    %v4252 = vlaneseq
    %v4253 = vshrl.u32 %v4252, 7
    %v4254 = vsub.s32 %v4251, %v4253
    %v4255 = vrot.slane %v3608, %v4254
    %v4257 = vunpack.c.l.s4 1983009808
    %v4258 = vunpack.c.0.s8 %v4257
    %v4259 = vlaneseq
    %v4260 = vshrl.u32 %v4259, 7
    %v4261 = vsub.s32 %v4258, %v4260
    %v4262 = vrot.slane %v4248, %v4261
    %v4263 = vcombine.high %v4255, %v4255
    %v4264 = vcombine.high %v4262, %v4262
    %v4265 = vcombine.high %v3609, %v3609
    %v4267 = vunpack.c.l.s4 1983009808
    %v4268 = vunpack.c.0.s8 %v4267
    %v4269 = vlaneseq
    %v4270 = vshrl.u32 %v4269, 7
    %v4271 = vsub.s32 %v4268, %v4270
    %v4272 = vrot.slane %v3609, %v4271
    %v4274 = vunpack.c.l.s4 1983009808
    %v4275 = vunpack.c.0.s8 %v4274
    %v4276 = vlaneseq
    %v4277 = vshrl.u32 %v4276, 7
    %v4278 = vsub.s32 %v4275, %v4277
    %v4279 = vrot.slane %v4265, %v4278
    %v4280 = vcombine.high %v4272, %v4272
    %v4281 = vcombine.high %v4279, %v4279
    %v4282 = vcombine.high %v3610, %v3610
    %v4284 = vunpack.c.l.s4 1983009808
    %v4285 = vunpack.c.0.s8 %v4284
    %v4286 = vlaneseq
    %v4287 = vshrl.u32 %v4286, 7
    %v4288 = vsub.s32 %v4285, %v4287
    %v4289 = vrot.slane %v3610, %v4288
    %v4291 = vunpack.c.l.s4 1983009808
    %v4292 = vunpack.c.0.s8 %v4291
    %v4293 = vlaneseq
    %v4294 = vshrl.u32 %v4293, 7
    %v4295 = vsub.s32 %v4292, %v4294
    %v4296 = vrot.slane %v4282, %v4295
    %v4297 = vcombine.high %v4289, %v4289
    %v4298 = vcombine.high %v4296, %v4296
    %v4299 = vcombine.high %v3611, %v3611
    %v4301 = vunpack.c.l.s4 1983009808
    %v4302 = vunpack.c.0.s8 %v4301
    %v4303 = vlaneseq
    %v4304 = vshrl.u32 %v4303, 7
    %v4305 = vsub.s32 %v4302, %v4304
    %v4306 = vrot.slane %v3611, %v4305
    %v4308 = vunpack.c.l.s4 1983009808
    %v4309 = vunpack.c.0.s8 %v4308
    %v4310 = vlaneseq
    %v4311 = vshrl.u32 %v4310, 7
    %v4312 = vsub.s32 %v4309, %v4311
    %v4313 = vrot.slane %v4299, %v4312
    %v4314 = vcombine.high %v4306, %v4306
    %v4315 = vcombine.high %v4313, %v4313
    %v4316 = vcombine.high %v3612, %v3612
    %v4318 = vunpack.c.l.s4 1983009808
    %v4319 = vunpack.c.0.s8 %v4318
    %v4320 = vlaneseq
    %v4321 = vshrl.u32 %v4320, 7
    %v4322 = vsub.s32 %v4319, %v4321
    %v4323 = vrot.slane %v3612, %v4322
    %v4325 = vunpack.c.l.s4 1983009808
    %v4326 = vunpack.c.0.s8 %v4325
    %v4327 = vlaneseq
    %v4328 = vshrl.u32 %v4327, 7
    %v4329 = vsub.s32 %v4326, %v4328
    %v4330 = vrot.slane %v4316, %v4329
    %v4331 = vcombine.high %v4323, %v4323
    %v4332 = vcombine.high %v4330, %v4330
    %v4333 = vcombine.high %v3613, %v3613
    %v4335 = vunpack.c.l.s4 1983009808
    %v4336 = vunpack.c.0.s8 %v4335
    %v4337 = vlaneseq
    %v4338 = vshrl.u32 %v4337, 7
    %v4339 = vsub.s32 %v4336, %v4338
    %v4340 = vrot.slane %v3613, %v4339
    %v4342 = vunpack.c.l.s4 1983009808
    %v4343 = vunpack.c.0.s8 %v4342
    %v4344 = vlaneseq
    %v4345 = vshrl.u32 %v4344, 7
    %v4346 = vsub.s32 %v4343, %v4345
    %v4347 = vrot.slane %v4333, %v4346
    %v4348 = vcombine.high %v4340, %v4340
    %v4349 = vcombine.high %v4347, %v4347
    %v4350 = vcombine.high %v3614, %v3614
    %v4352 = vunpack.c.l.s4 1983009808
    %v4353 = vunpack.c.0.s8 %v4352
    %v4354 = vlaneseq
    %v4355 = vshrl.u32 %v4354, 7
    %v4356 = vsub.s32 %v4353, %v4355
    %v4357 = vrot.slane %v3614, %v4356
    %v4359 = vunpack.c.l.s4 1983009808
    %v4360 = vunpack.c.0.s8 %v4359
    %v4361 = vlaneseq
    %v4362 = vshrl.u32 %v4361, 7
    %v4363 = vsub.s32 %v4360, %v4362
    %v4364 = vrot.slane %v4350, %v4363
    %v4365 = vcombine.high %v4357, %v4357
    %v4366 = vcombine.high %v4364, %v4364
    %v4367 = vcombine.high %v3615, %v3615
    %v4369 = vunpack.c.l.s4 1983009808
    %v4370 = vunpack.c.0.s8 %v4369
    %v4371 = vlaneseq
    %v4372 = vshrl.u32 %v4371, 7
    %v4373 = vsub.s32 %v4370, %v4372
    %v4374 = vrot.slane %v3615, %v4373
    %v4376 = vunpack.c.l.s4 1983009808
    %v4377 = vunpack.c.0.s8 %v4376
    %v4378 = vlaneseq
    %v4379 = vshrl.u32 %v4378, 7
    %v4380 = vsub.s32 %v4377, %v4379
    %v4381 = vrot.slane %v4367, %v4380
    %v4382 = vcombine.high %v4374, %v4374
    %v4383 = vcombine.high %v4381, %v4381
    %v4384 = vcombine.high %v3616, %v3616
    %v4386 = vunpack.c.l.s4 1983009808
    %v4387 = vunpack.c.0.s8 %v4386
    %v4388 = vlaneseq
    %v4389 = vshrl.u32 %v4388, 7
    %v4390 = vsub.s32 %v4387, %v4389
    %v4391 = vrot.slane %v3616, %v4390
    %v4393 = vunpack.c.l.s4 1983009808
    %v4394 = vunpack.c.0.s8 %v4393
    %v4395 = vlaneseq
    %v4396 = vshrl.u32 %v4395, 7
    %v4397 = vsub.s32 %v4394, %v4396
    %v4398 = vrot.slane %v4384, %v4397
    %v4399 = vcombine.high %v4391, %v4391
    %v4400 = vcombine.high %v4398, %v4398
    %v4401 = vcombine.high %v3617, %v3617
    %v4403 = vunpack.c.l.s4 1983009808
    %v4404 = vunpack.c.0.s8 %v4403
    %v4405 = vlaneseq
    %v4406 = vshrl.u32 %v4405, 7
    %v4407 = vsub.s32 %v4404, %v4406
    %v4408 = vrot.slane %v3617, %v4407
    %v4410 = vunpack.c.l.s4 1983009808
    %v4411 = vunpack.c.0.s8 %v4410
    %v4412 = vlaneseq
    %v4413 = vshrl.u32 %v4412, 7
    %v4414 = vsub.s32 %v4411, %v4413
    %v4415 = vrot.slane %v4401, %v4414
    %v4416 = vcombine.high %v4408, %v4408
    %v4417 = vcombine.high %v4415, %v4415
    %v4418 = vcombine.high %v3618, %v3618
    %v4420 = vunpack.c.l.s4 1983009808
    %v4421 = vunpack.c.0.s8 %v4420
    %v4422 = vlaneseq
    %v4423 = vshrl.u32 %v4422, 7
    %v4424 = vsub.s32 %v4421, %v4423
    %v4425 = vrot.slane %v3618, %v4424
    %v4427 = vunpack.c.l.s4 1983009808
    %v4428 = vunpack.c.0.s8 %v4427
    %v4429 = vlaneseq
    %v4430 = vshrl.u32 %v4429, 7
    %v4431 = vsub.s32 %v4428, %v4430
    %v4432 = vrot.slane %v4418, %v4431
    %v4433 = vcombine.high %v4425, %v4425
    %v4434 = vcombine.high %v4432, %v4432
    %v4435 = vcombine.high %v3619, %v3619
    %v4437 = vunpack.c.l.s4 1983009808
    %v4438 = vunpack.c.0.s8 %v4437
    %v4439 = vlaneseq
    %v4440 = vshrl.u32 %v4439, 7
    %v4441 = vsub.s32 %v4438, %v4440
    %v4442 = vrot.slane %v3619, %v4441
    %v4444 = vunpack.c.l.s4 1983009808
    %v4445 = vunpack.c.0.s8 %v4444
    %v4446 = vlaneseq
    %v4447 = vshrl.u32 %v4446, 7
    %v4448 = vsub.s32 %v4445, %v4447
    %v4449 = vrot.slane %v4435, %v4448
    %v4450 = vcombine.high %v4442, %v4442
    %v4451 = vcombine.high %v4449, %v4449
    %v4452 = vcombine.high %v3620, %v3620
    %v4454 = vunpack.c.l.s4 1983009808
    %v4455 = vunpack.c.0.s8 %v4454
    %v4456 = vlaneseq
    %v4457 = vshrl.u32 %v4456, 7
    %v4458 = vsub.s32 %v4455, %v4457
    %v4459 = vrot.slane %v3620, %v4458
    %v4461 = vunpack.c.l.s4 1983009808
    %v4462 = vunpack.c.0.s8 %v4461
    %v4463 = vlaneseq
    %v4464 = vshrl.u32 %v4463, 7
    %v4465 = vsub.s32 %v4462, %v4464
    %v4466 = vrot.slane %v4452, %v4465
    %v4467 = vcombine.high %v4459, %v4459
    %v4468 = vcombine.high %v4466, %v4466
    %v4469 = vcombine.high %v3621, %v3621
    %v4471 = vunpack.c.l.s4 1983009808
    %v4472 = vunpack.c.0.s8 %v4471
    %v4473 = vlaneseq
    %v4474 = vshrl.u32 %v4473, 7
    %v4475 = vsub.s32 %v4472, %v4474
    %v4476 = vrot.slane %v3621, %v4475
    %v4478 = vunpack.c.l.s4 1983009808
    %v4479 = vunpack.c.0.s8 %v4478
    %v4480 = vlaneseq
    %v4481 = vshrl.u32 %v4480, 7
    %v4482 = vsub.s32 %v4479, %v4481
    %v4483 = vrot.slane %v4469, %v4482
    %v4484 = vcombine.high %v4476, %v4476
    %v4485 = vcombine.high %v4483, %v4483
    %v4486 = vcombine.high %v3622, %v3622
    %v4488 = vunpack.c.l.s4 1983009808
    %v4489 = vunpack.c.0.s8 %v4488
    %v4490 = vlaneseq
    %v4491 = vshrl.u32 %v4490, 7
    %v4492 = vsub.s32 %v4489, %v4491
    %v4493 = vrot.slane %v3622, %v4492
    %v4495 = vunpack.c.l.s4 1983009808
    %v4496 = vunpack.c.0.s8 %v4495
    %v4497 = vlaneseq
    %v4498 = vshrl.u32 %v4497, 7
    %v4499 = vsub.s32 %v4496, %v4498
    %v4500 = vrot.slane %v4486, %v4499
    %v4501 = vcombine.high %v4493, %v4493
    %v4502 = vcombine.high %v4500, %v4500
    %v4503 = vcombine.high %v3623, %v3623
    %v4505 = vunpack.c.l.s4 1983009808
    %v4506 = vunpack.c.0.s8 %v4505
    %v4507 = vlaneseq
    %v4508 = vshrl.u32 %v4507, 7
    %v4509 = vsub.s32 %v4506, %v4508
    %v4510 = vrot.slane %v3623, %v4509
    %v4512 = vunpack.c.l.s4 1983009808
    %v4513 = vunpack.c.0.s8 %v4512
    %v4514 = vlaneseq
    %v4515 = vshrl.u32 %v4514, 7
    %v4516 = vsub.s32 %v4513, %v4515
    %v4517 = vrot.slane %v4503, %v4516
    %v4518 = vcombine.high %v4510, %v4510
    %v4519 = vcombine.high %v4517, %v4517
    %v4520 = vcombine.high %v3624, %v3624
    %v4522 = vunpack.c.l.s4 1983009808
    %v4523 = vunpack.c.0.s8 %v4522
    %v4524 = vlaneseq
    %v4525 = vshrl.u32 %v4524, 7
    %v4526 = vsub.s32 %v4523, %v4525
    %v4527 = vrot.slane %v3624, %v4526
    %v4529 = vunpack.c.l.s4 1983009808
    %v4530 = vunpack.c.0.s8 %v4529
    %v4531 = vlaneseq
    %v4532 = vshrl.u32 %v4531, 7
    %v4533 = vsub.s32 %v4530, %v4532
    %v4534 = vrot.slane %v4520, %v4533
    %v4535 = vcombine.high %v4527, %v4527
    %v4536 = vcombine.high %v4534, %v4534
    %v4537 = vcombine.high %v3625, %v3625
    %v4539 = vunpack.c.l.s4 1983009808
    %v4540 = vunpack.c.0.s8 %v4539
    %v4541 = vlaneseq
    %v4542 = vshrl.u32 %v4541, 7
    %v4543 = vsub.s32 %v4540, %v4542
    %v4544 = vrot.slane %v3625, %v4543
    %v4546 = vunpack.c.l.s4 1983009808
    %v4547 = vunpack.c.0.s8 %v4546
    %v4548 = vlaneseq
    %v4549 = vshrl.u32 %v4548, 7
    %v4550 = vsub.s32 %v4547, %v4549
    %v4551 = vrot.slane %v4537, %v4550
    %v4552 = vcombine.high %v4544, %v4544
    %v4553 = vcombine.high %v4551, %v4551
    %v4554 = vcombine.high %v3626, %v3626
    %v4556 = vunpack.c.l.s4 1983009808
    %v4557 = vunpack.c.0.s8 %v4556
    %v4558 = vlaneseq
    %v4559 = vshrl.u32 %v4558, 7
    %v4560 = vsub.s32 %v4557, %v4559
    %v4561 = vrot.slane %v3626, %v4560
    %v4563 = vunpack.c.l.s4 1983009808
    %v4564 = vunpack.c.0.s8 %v4563
    %v4565 = vlaneseq
    %v4566 = vshrl.u32 %v4565, 7
    %v4567 = vsub.s32 %v4564, %v4566
    %v4568 = vrot.slane %v4554, %v4567
    %v4569 = vcombine.high %v4561, %v4561
    %v4570 = vcombine.high %v4568, %v4568
    %v4571 = vcombine.high %v3627, %v3627
    %v4573 = vunpack.c.l.s4 1983009808
    %v4574 = vunpack.c.0.s8 %v4573
    %v4575 = vlaneseq
    %v4576 = vshrl.u32 %v4575, 7
    %v4577 = vsub.s32 %v4574, %v4576
    %v4578 = vrot.slane %v3627, %v4577
    %v4580 = vunpack.c.l.s4 1983009808
    %v4581 = vunpack.c.0.s8 %v4580
    %v4582 = vlaneseq
    %v4583 = vshrl.u32 %v4582, 7
    %v4584 = vsub.s32 %v4581, %v4583
    %v4585 = vrot.slane %v4571, %v4584
    %v4586 = vcombine.high %v4578, %v4578
    %v4587 = vcombine.high %v4585, %v4585
    %v4588 = vcombine.high %v3628, %v3628
    %v4590 = vunpack.c.l.s4 1983009808
    %v4591 = vunpack.c.0.s8 %v4590
    %v4592 = vlaneseq
    %v4593 = vshrl.u32 %v4592, 7
    %v4594 = vsub.s32 %v4591, %v4593
    %v4595 = vrot.slane %v3628, %v4594
    %v4597 = vunpack.c.l.s4 1983009808
    %v4598 = vunpack.c.0.s8 %v4597
    %v4599 = vlaneseq
    %v4600 = vshrl.u32 %v4599, 7
    %v4601 = vsub.s32 %v4598, %v4600
    %v4602 = vrot.slane %v4588, %v4601
    %v4603 = vcombine.high %v4595, %v4595
    %v4604 = vcombine.high %v4602, %v4602
    %v4605 = vcombine.high %v3629, %v3629
    %v4607 = vunpack.c.l.s4 1983009808
    %v4608 = vunpack.c.0.s8 %v4607
    %v4609 = vlaneseq
    %v4610 = vshrl.u32 %v4609, 7
    %v4611 = vsub.s32 %v4608, %v4610
    %v4612 = vrot.slane %v3629, %v4611
    %v4614 = vunpack.c.l.s4 1983009808
    %v4615 = vunpack.c.0.s8 %v4614
    %v4616 = vlaneseq
    %v4617 = vshrl.u32 %v4616, 7
    %v4618 = vsub.s32 %v4615, %v4617
    %v4619 = vrot.slane %v4605, %v4618
    %v4620 = vcombine.high %v4612, %v4612
    %v4621 = vcombine.high %v4619, %v4619
    %v4622 = vcombine.high %v3630, %v3630
    %v4624 = vunpack.c.l.s4 1983009808
    %v4625 = vunpack.c.0.s8 %v4624
    %v4626 = vlaneseq
    %v4627 = vshrl.u32 %v4626, 7
    %v4628 = vsub.s32 %v4625, %v4627
    %v4629 = vrot.slane %v3630, %v4628
    %v4631 = vunpack.c.l.s4 1983009808
    %v4632 = vunpack.c.0.s8 %v4631
    %v4633 = vlaneseq
    %v4634 = vshrl.u32 %v4633, 7
    %v4635 = vsub.s32 %v4632, %v4634
    %v4636 = vrot.slane %v4622, %v4635
    %v4637 = vcombine.high %v4629, %v4629
    %v4638 = vcombine.high %v4636, %v4636
    %v4639 = vcombine.high %v3631, %v3631
    %v4641 = vunpack.c.l.s4 1983009808
    %v4642 = vunpack.c.0.s8 %v4641
    %v4643 = vlaneseq
    %v4644 = vshrl.u32 %v4643, 7
    %v4645 = vsub.s32 %v4642, %v4644
    %v4646 = vrot.slane %v3631, %v4645
    %v4648 = vunpack.c.l.s4 1983009808
    %v4649 = vunpack.c.0.s8 %v4648
    %v4650 = vlaneseq
    %v4651 = vshrl.u32 %v4650, 7
    %v4652 = vsub.s32 %v4649, %v4651
    %v4653 = vrot.slane %v4639, %v4652
    %v4654 = vcombine.high %v4646, %v4646
    %v4655 = vcombine.high %v4653, %v4653
    %v4656 = vcombine.high %v3632, %v3632
    %v4658 = vunpack.c.l.s4 1983009808
    %v4659 = vunpack.c.0.s8 %v4658
    %v4660 = vlaneseq
    %v4661 = vshrl.u32 %v4660, 7
    %v4662 = vsub.s32 %v4659, %v4661
    %v4663 = vrot.slane %v3632, %v4662
    %v4665 = vunpack.c.l.s4 1983009808
    %v4666 = vunpack.c.0.s8 %v4665
    %v4667 = vlaneseq
    %v4668 = vshrl.u32 %v4667, 7
    %v4669 = vsub.s32 %v4666, %v4668
    %v4670 = vrot.slane %v4656, %v4669
    %v4671 = vcombine.high %v4663, %v4663
    %v4672 = vcombine.high %v4670, %v4670
    %v4673 = vcombine.high %v3633, %v3633
    %v4675 = vunpack.c.l.s4 1983009808
    %v4676 = vunpack.c.0.s8 %v4675
    %v4677 = vlaneseq
    %v4678 = vshrl.u32 %v4677, 7
    %v4679 = vsub.s32 %v4676, %v4678
    %v4680 = vrot.slane %v3633, %v4679
    %v4682 = vunpack.c.l.s4 1983009808
    %v4683 = vunpack.c.0.s8 %v4682
    %v4684 = vlaneseq
    %v4685 = vshrl.u32 %v4684, 7
    %v4686 = vsub.s32 %v4683, %v4685
    %v4687 = vrot.slane %v4673, %v4686
    %v4688 = vcombine.high %v4680, %v4680
    %v4689 = vcombine.high %v4687, %v4687
    %v4690 = vcombine.high %v3634, %v3634
    %v4692 = vunpack.c.l.s4 1983009808
    %v4693 = vunpack.c.0.s8 %v4692
    %v4694 = vlaneseq
    %v4695 = vshrl.u32 %v4694, 7
    %v4696 = vsub.s32 %v4693, %v4695
    %v4697 = vrot.slane %v3634, %v4696
    %v4699 = vunpack.c.l.s4 1983009808
    %v4700 = vunpack.c.0.s8 %v4699
    %v4701 = vlaneseq
    %v4702 = vshrl.u32 %v4701, 7
    %v4703 = vsub.s32 %v4700, %v4702
    %v4704 = vrot.slane %v4690, %v4703
    %v4705 = vcombine.high %v4697, %v4697
    %v4706 = vcombine.high %v4704, %v4704
    %v4707 = vcombine.high %v3635, %v3635
    %v4709 = vunpack.c.l.s4 1983009808
    %v4710 = vunpack.c.0.s8 %v4709
    %v4711 = vlaneseq
    %v4712 = vshrl.u32 %v4711, 7
    %v4713 = vsub.s32 %v4710, %v4712
    %v4714 = vrot.slane %v3635, %v4713
    %v4716 = vunpack.c.l.s4 1983009808
    %v4717 = vunpack.c.0.s8 %v4716
    %v4718 = vlaneseq
    %v4719 = vshrl.u32 %v4718, 7
    %v4720 = vsub.s32 %v4717, %v4719
    %v4721 = vrot.slane %v4707, %v4720
    %v4722 = vcombine.high %v4714, %v4714
    %v4723 = vcombine.high %v4721, %v4721
    %v4724 = vcombine.high %v3636, %v3636
    %v4726 = vunpack.c.l.s4 1983009808
    %v4727 = vunpack.c.0.s8 %v4726
    %v4728 = vlaneseq
    %v4729 = vshrl.u32 %v4728, 7
    %v4730 = vsub.s32 %v4727, %v4729
    %v4731 = vrot.slane %v3636, %v4730
    %v4733 = vunpack.c.l.s4 1983009808
    %v4734 = vunpack.c.0.s8 %v4733
    %v4735 = vlaneseq
    %v4736 = vshrl.u32 %v4735, 7
    %v4737 = vsub.s32 %v4734, %v4736
    %v4738 = vrot.slane %v4724, %v4737
    %v4739 = vcombine.high %v4731, %v4731
    %v4740 = vcombine.high %v4738, %v4738
    %v4741 = vcombine.high %v3637, %v3637
    %v4743 = vunpack.c.l.s4 1983009808
    %v4744 = vunpack.c.0.s8 %v4743
    %v4745 = vlaneseq
    %v4746 = vshrl.u32 %v4745, 7
    %v4747 = vsub.s32 %v4744, %v4746
    %v4748 = vrot.slane %v3637, %v4747
    %v4750 = vunpack.c.l.s4 1983009808
    %v4751 = vunpack.c.0.s8 %v4750
    %v4752 = vlaneseq
    %v4753 = vshrl.u32 %v4752, 7
    %v4754 = vsub.s32 %v4751, %v4753
    %v4755 = vrot.slane %v4741, %v4754
    %v4756 = vcombine.high %v4748, %v4748
    %v4757 = vcombine.high %v4755, %v4755
    %v4758 = vcombine.high %v3638, %v3638
    %v4760 = vunpack.c.l.s4 1983009808
    %v4761 = vunpack.c.0.s8 %v4760
    %v4762 = vlaneseq
    %v4763 = vshrl.u32 %v4762, 7
    %v4764 = vsub.s32 %v4761, %v4763
    %v4765 = vrot.slane %v3638, %v4764
    %v4767 = vunpack.c.l.s4 1983009808
    %v4768 = vunpack.c.0.s8 %v4767
    %v4769 = vlaneseq
    %v4770 = vshrl.u32 %v4769, 7
    %v4771 = vsub.s32 %v4768, %v4770
    %v4772 = vrot.slane %v4758, %v4771
    %v4773 = vcombine.high %v4765, %v4765
    %v4774 = vcombine.high %v4772, %v4772
    %v4775 = vcombine.high %v3639, %v3639
    %v4777 = vunpack.c.l.s4 1983009808
    %v4778 = vunpack.c.0.s8 %v4777
    %v4779 = vlaneseq
    %v4780 = vshrl.u32 %v4779, 7
    %v4781 = vsub.s32 %v4778, %v4780
    %v4782 = vrot.slane %v3639, %v4781
    %v4784 = vunpack.c.l.s4 1983009808
    %v4785 = vunpack.c.0.s8 %v4784
    %v4786 = vlaneseq
    %v4787 = vshrl.u32 %v4786, 7
    %v4788 = vsub.s32 %v4785, %v4787
    %v4789 = vrot.slane %v4775, %v4788
    %v4790 = vcombine.high %v4782, %v4782
    %v4791 = vcombine.high %v4789, %v4789
    %vm5048 = vcmask 254976
    %v5049 = vsel %vm5048, %v3711, -inf
    %v5050 = vrot.slane %v5049, 4
    %v5051 = vmax.f32 %v5049, %v5050
    %v5052 = vrot.slane %v5051, 2
    %v5053 = vmax.f32 %v5051, %v5052
    %v5054 = vrot.slane %v5053, 1
    %v5055 = vmax.f32 %v5053, %v5054
    %v5056 = vsel %vm5048, %v3719, -inf
    %v5057 = vrot.slane %v5056, 4
    %v5058 = vmax.f32 %v5056, %v5057
    %v5059 = vrot.slane %v5058, 2
    %v5060 = vmax.f32 %v5058, %v5059
    %v5061 = vrot.slane %v5060, 1
    %v5062 = vmax.f32 %v5060, %v5061
    %v5063 = vsel %vm5048, %v3718, -inf
    %v5064 = vrot.slane %v5063, 4
    %v5065 = vmax.f32 %v5063, %v5064
    %v5066 = vrot.slane %v5065, 2
    %v5067 = vmax.f32 %v5065, %v5066
    %v5068 = vrot.slane %v5067, 1
    %v5069 = vmax.f32 %v5067, %v5068
    %v5070 = vsel %vm5048, %v3720, -inf
    %v5071 = vrot.slane %v5070, 4
    %v5072 = vmax.f32 %v5070, %v5071
    %v5073 = vrot.slane %v5072, 2
    %v5074 = vmax.f32 %v5072, %v5073
    %v5075 = vrot.slane %v5074, 1
    %v5076 = vmax.f32 %v5074, %v5075
    %v5077 = vsel %vm5048, %v3728, -inf
    %v5078 = vrot.slane %v5077, 4
    %v5079 = vmax.f32 %v5077, %v5078
    %v5080 = vrot.slane %v5079, 2
    %v5081 = vmax.f32 %v5079, %v5080
    %v5082 = vrot.slane %v5081, 1
    %v5083 = vmax.f32 %v5081, %v5082
    %v5084 = vsel %vm5048, %v3736, -inf
    %v5085 = vrot.slane %v5084, 4
    %v5086 = vmax.f32 %v5084, %v5085
    %v5087 = vrot.slane %v5086, 2
    %v5088 = vmax.f32 %v5086, %v5087
    %v5089 = vrot.slane %v5088, 1
    %v5090 = vmax.f32 %v5088, %v5089
    %v5091 = vsel %vm5048, %v3735, -inf
    %v5092 = vrot.slane %v5091, 4
    %v5093 = vmax.f32 %v5091, %v5092
    %v5094 = vrot.slane %v5093, 2
    %v5095 = vmax.f32 %v5093, %v5094
    %v5096 = vrot.slane %v5095, 1
    %v5097 = vmax.f32 %v5095, %v5096
    %v5098 = vsel %vm5048, %v3737, -inf
    %v5099 = vrot.slane %v5098, 4
    %v5100 = vmax.f32 %v5098, %v5099
    %v5101 = vrot.slane %v5100, 2
    %v5102 = vmax.f32 %v5100, %v5101
    %v5103 = vrot.slane %v5102, 1
    %v5104 = vmax.f32 %v5102, %v5103
    %v5105 = vsel %vm5048, %v3745, -inf
    %v5106 = vrot.slane %v5105, 4
    %v5107 = vmax.f32 %v5105, %v5106
    %v5108 = vrot.slane %v5107, 2
    %v5109 = vmax.f32 %v5107, %v5108
    %v5110 = vrot.slane %v5109, 1
    %v5111 = vmax.f32 %v5109, %v5110
    %v5112 = vsel %vm5048, %v3753, -inf
    %v5113 = vrot.slane %v5112, 4
    %v5114 = vmax.f32 %v5112, %v5113
    %v5115 = vrot.slane %v5114, 2
    %v5116 = vmax.f32 %v5114, %v5115
    %v5117 = vrot.slane %v5116, 1
    %v5118 = vmax.f32 %v5116, %v5117
    %v5119 = vsel %vm5048, %v3752, -inf
    %v5120 = vrot.slane %v5119, 4
    %v5121 = vmax.f32 %v5119, %v5120
    %v5122 = vrot.slane %v5121, 2
    %v5123 = vmax.f32 %v5121, %v5122
    %v5124 = vrot.slane %v5123, 1
    %v5125 = vmax.f32 %v5123, %v5124
    %v5126 = vsel %vm5048, %v3754, -inf
    %v5127 = vrot.slane %v5126, 4
    %v5128 = vmax.f32 %v5126, %v5127
    %v5129 = vrot.slane %v5128, 2
    %v5130 = vmax.f32 %v5128, %v5129
    %v5131 = vrot.slane %v5130, 1
    %v5132 = vmax.f32 %v5130, %v5131
    %v5133 = vsel %vm5048, %v3762, -inf
    %v5134 = vrot.slane %v5133, 4
    %v5135 = vmax.f32 %v5133, %v5134
    %v5136 = vrot.slane %v5135, 2
    %v5137 = vmax.f32 %v5135, %v5136
    %v5138 = vrot.slane %v5137, 1
    %v5139 = vmax.f32 %v5137, %v5138
    %v5140 = vsel %vm5048, %v3770, -inf
    %v5141 = vrot.slane %v5140, 4
    %v5142 = vmax.f32 %v5140, %v5141
    %v5143 = vrot.slane %v5142, 2
    %v5144 = vmax.f32 %v5142, %v5143
    %v5145 = vrot.slane %v5144, 1
    %v5146 = vmax.f32 %v5144, %v5145
    %v5147 = vsel %vm5048, %v3769, -inf
    %v5148 = vrot.slane %v5147, 4
    %v5149 = vmax.f32 %v5147, %v5148
    %v5150 = vrot.slane %v5149, 2
    %v5151 = vmax.f32 %v5149, %v5150
    %v5152 = vrot.slane %v5151, 1
    %v5153 = vmax.f32 %v5151, %v5152
    %v5154 = vsel %vm5048, %v3771, -inf
    %v5155 = vrot.slane %v5154, 4
    %v5156 = vmax.f32 %v5154, %v5155
    %v5157 = vrot.slane %v5156, 2
    %v5158 = vmax.f32 %v5156, %v5157
    %v5159 = vrot.slane %v5158, 1
    %v5160 = vmax.f32 %v5158, %v5159
    %v5161 = vsel %vm5048, %v3779, -inf
    %v5162 = vrot.slane %v5161, 4
    %v5163 = vmax.f32 %v5161, %v5162
    %v5164 = vrot.slane %v5163, 2
    %v5165 = vmax.f32 %v5163, %v5164
    %v5166 = vrot.slane %v5165, 1
    %v5167 = vmax.f32 %v5165, %v5166
    %v5168 = vsel %vm5048, %v3787, -inf
    %v5169 = vrot.slane %v5168, 4
    %v5170 = vmax.f32 %v5168, %v5169
    %v5171 = vrot.slane %v5170, 2
    %v5172 = vmax.f32 %v5170, %v5171
    %v5173 = vrot.slane %v5172, 1
    %v5174 = vmax.f32 %v5172, %v5173
    %v5175 = vsel %vm5048, %v3786, -inf
    %v5176 = vrot.slane %v5175, 4
    %v5177 = vmax.f32 %v5175, %v5176
    %v5178 = vrot.slane %v5177, 2
    %v5179 = vmax.f32 %v5177, %v5178
    %v5180 = vrot.slane %v5179, 1
    %v5181 = vmax.f32 %v5179, %v5180
    %v5182 = vsel %vm5048, %v3788, -inf
    %v5183 = vrot.slane %v5182, 4
    %v5184 = vmax.f32 %v5182, %v5183
    %v5185 = vrot.slane %v5184, 2
    %v5186 = vmax.f32 %v5184, %v5185
    %v5187 = vrot.slane %v5186, 1
    %v5188 = vmax.f32 %v5186, %v5187
    %v5189 = vsel %vm5048, %v3796, -inf
    %v5190 = vrot.slane %v5189, 4
    %v5191 = vmax.f32 %v5189, %v5190
    %v5192 = vrot.slane %v5191, 2
    %v5193 = vmax.f32 %v5191, %v5192
    %v5194 = vrot.slane %v5193, 1
    %v5195 = vmax.f32 %v5193, %v5194
    %v5196 = vsel %vm5048, %v3804, -inf
    %v5197 = vrot.slane %v5196, 4
    %v5198 = vmax.f32 %v5196, %v5197
    %v5199 = vrot.slane %v5198, 2
    %v5200 = vmax.f32 %v5198, %v5199
    %v5201 = vrot.slane %v5200, 1
    %v5202 = vmax.f32 %v5200, %v5201
    %v5203 = vsel %vm5048, %v3803, -inf
    %v5204 = vrot.slane %v5203, 4
    %v5205 = vmax.f32 %v5203, %v5204
    %v5206 = vrot.slane %v5205, 2
    %v5207 = vmax.f32 %v5205, %v5206
    %v5208 = vrot.slane %v5207, 1
    %v5209 = vmax.f32 %v5207, %v5208
    %v5210 = vsel %vm5048, %v3805, -inf
    %v5211 = vrot.slane %v5210, 4
    %v5212 = vmax.f32 %v5210, %v5211
    %v5213 = vrot.slane %v5212, 2
    %v5214 = vmax.f32 %v5212, %v5213
    %v5215 = vrot.slane %v5214, 1
    %v5216 = vmax.f32 %v5214, %v5215
    %v5217 = vsel %vm5048, %v3813, -inf
    %v5218 = vrot.slane %v5217, 4
    %v5219 = vmax.f32 %v5217, %v5218
    %v5220 = vrot.slane %v5219, 2
    %v5221 = vmax.f32 %v5219, %v5220
    %v5222 = vrot.slane %v5221, 1
    %v5223 = vmax.f32 %v5221, %v5222
    %v5224 = vsel %vm5048, %v3821, -inf
    %v5225 = vrot.slane %v5224, 4
    %v5226 = vmax.f32 %v5224, %v5225
    %v5227 = vrot.slane %v5226, 2
    %v5228 = vmax.f32 %v5226, %v5227
    %v5229 = vrot.slane %v5228, 1
    %v5230 = vmax.f32 %v5228, %v5229
    %v5231 = vsel %vm5048, %v3820, -inf
    %v5232 = vrot.slane %v5231, 4
    %v5233 = vmax.f32 %v5231, %v5232
    %v5234 = vrot.slane %v5233, 2
    %v5235 = vmax.f32 %v5233, %v5234
    %v5236 = vrot.slane %v5235, 1
    %v5237 = vmax.f32 %v5235, %v5236
    %v5238 = vsel %vm5048, %v3822, -inf
    %v5239 = vrot.slane %v5238, 4
    %v5240 = vmax.f32 %v5238, %v5239
    %v5241 = vrot.slane %v5240, 2
    %v5242 = vmax.f32 %v5240, %v5241
    %v5243 = vrot.slane %v5242, 1
    %v5244 = vmax.f32 %v5242, %v5243
    %v5245 = vsel %vm5048, %v3830, -inf
    %v5246 = vrot.slane %v5245, 4
    %v5247 = vmax.f32 %v5245, %v5246
    %v5248 = vrot.slane %v5247, 2
    %v5249 = vmax.f32 %v5247, %v5248
    %v5250 = vrot.slane %v5249, 1
    %v5251 = vmax.f32 %v5249, %v5250
    %v5252 = vsel %vm5048, %v3838, -inf
    %v5253 = vrot.slane %v5252, 4
    %v5254 = vmax.f32 %v5252, %v5253
    %v5255 = vrot.slane %v5254, 2
    %v5256 = vmax.f32 %v5254, %v5255
    %v5257 = vrot.slane %v5256, 1
    %v5258 = vmax.f32 %v5256, %v5257
    %v5259 = vsel %vm5048, %v3837, -inf
    %v5260 = vrot.slane %v5259, 4
    %v5261 = vmax.f32 %v5259, %v5260
    %v5262 = vrot.slane %v5261, 2
    %v5263 = vmax.f32 %v5261, %v5262
    %v5264 = vrot.slane %v5263, 1
    %v5265 = vmax.f32 %v5263, %v5264
    %v5266 = vsel %vm5048, %v3839, -inf
    %v5267 = vrot.slane %v5266, 4
    %v5268 = vmax.f32 %v5266, %v5267
    %v5269 = vrot.slane %v5268, 2
    %v5270 = vmax.f32 %v5268, %v5269
    %v5271 = vrot.slane %v5270, 1
    %v5272 = vmax.f32 %v5270, %v5271
    %v5273 = vsel %vm5048, %v3847, -inf
    %v5274 = vrot.slane %v5273, 4
    %v5275 = vmax.f32 %v5273, %v5274
    %v5276 = vrot.slane %v5275, 2
    %v5277 = vmax.f32 %v5275, %v5276
    %v5278 = vrot.slane %v5277, 1
    %v5279 = vmax.f32 %v5277, %v5278
    %v5280 = vsel %vm5048, %v3855, -inf
    %v5281 = vrot.slane %v5280, 4
    %v5282 = vmax.f32 %v5280, %v5281
    %v5283 = vrot.slane %v5282, 2
    %v5284 = vmax.f32 %v5282, %v5283
    %v5285 = vrot.slane %v5284, 1
    %v5286 = vmax.f32 %v5284, %v5285
    %v5287 = vsel %vm5048, %v3854, -inf
    %v5288 = vrot.slane %v5287, 4
    %v5289 = vmax.f32 %v5287, %v5288
    %v5290 = vrot.slane %v5289, 2
    %v5291 = vmax.f32 %v5289, %v5290
    %v5292 = vrot.slane %v5291, 1
    %v5293 = vmax.f32 %v5291, %v5292
    %v5294 = vsel %vm5048, %v3856, -inf
    %v5295 = vrot.slane %v5294, 4
    %v5296 = vmax.f32 %v5294, %v5295
    %v5297 = vrot.slane %v5296, 2
    %v5298 = vmax.f32 %v5296, %v5297
    %v5299 = vrot.slane %v5298, 1
    %v5300 = vmax.f32 %v5298, %v5299
    %v5301 = vsel %vm5048, %v3864, -inf
    %v5302 = vrot.slane %v5301, 4
    %v5303 = vmax.f32 %v5301, %v5302
    %v5304 = vrot.slane %v5303, 2
    %v5305 = vmax.f32 %v5303, %v5304
    %v5306 = vrot.slane %v5305, 1
    %v5307 = vmax.f32 %v5305, %v5306
    %v5308 = vsel %vm5048, %v3872, -inf
    %v5309 = vrot.slane %v5308, 4
    %v5310 = vmax.f32 %v5308, %v5309
    %v5311 = vrot.slane %v5310, 2
    %v5312 = vmax.f32 %v5310, %v5311
    %v5313 = vrot.slane %v5312, 1
    %v5314 = vmax.f32 %v5312, %v5313
    %v5315 = vsel %vm5048, %v3871, -inf
    %v5316 = vrot.slane %v5315, 4
    %v5317 = vmax.f32 %v5315, %v5316
    %v5318 = vrot.slane %v5317, 2
    %v5319 = vmax.f32 %v5317, %v5318
    %v5320 = vrot.slane %v5319, 1
    %v5321 = vmax.f32 %v5319, %v5320
    %v5322 = vsel %vm5048, %v3873, -inf
    %v5323 = vrot.slane %v5322, 4
    %v5324 = vmax.f32 %v5322, %v5323
    %v5325 = vrot.slane %v5324, 2
    %v5326 = vmax.f32 %v5324, %v5325
    %v5327 = vrot.slane %v5326, 1
    %v5328 = vmax.f32 %v5326, %v5327
    %v5329 = vsel %vm5048, %v3881, -inf
    %v5330 = vrot.slane %v5329, 4
    %v5331 = vmax.f32 %v5329, %v5330
    %v5332 = vrot.slane %v5331, 2
    %v5333 = vmax.f32 %v5331, %v5332
    %v5334 = vrot.slane %v5333, 1
    %v5335 = vmax.f32 %v5333, %v5334
    %v5336 = vsel %vm5048, %v3889, -inf
    %v5337 = vrot.slane %v5336, 4
    %v5338 = vmax.f32 %v5336, %v5337
    %v5339 = vrot.slane %v5338, 2
    %v5340 = vmax.f32 %v5338, %v5339
    %v5341 = vrot.slane %v5340, 1
    %v5342 = vmax.f32 %v5340, %v5341
    %v5343 = vsel %vm5048, %v3888, -inf
    %v5344 = vrot.slane %v5343, 4
    %v5345 = vmax.f32 %v5343, %v5344
    %v5346 = vrot.slane %v5345, 2
    %v5347 = vmax.f32 %v5345, %v5346
    %v5348 = vrot.slane %v5347, 1
    %v5349 = vmax.f32 %v5347, %v5348
    %v5350 = vsel %vm5048, %v3890, -inf
    %v5351 = vrot.slane %v5350, 4
    %v5352 = vmax.f32 %v5350, %v5351
    %v5353 = vrot.slane %v5352, 2
    %v5354 = vmax.f32 %v5352, %v5353
    %v5355 = vrot.slane %v5354, 1
    %v5356 = vmax.f32 %v5354, %v5355
    %v5357 = vsel %vm5048, %v3898, -inf
    %v5358 = vrot.slane %v5357, 4
    %v5359 = vmax.f32 %v5357, %v5358
    %v5360 = vrot.slane %v5359, 2
    %v5361 = vmax.f32 %v5359, %v5360
    %v5362 = vrot.slane %v5361, 1
    %v5363 = vmax.f32 %v5361, %v5362
    %v5364 = vsel %vm5048, %v3906, -inf
    %v5365 = vrot.slane %v5364, 4
    %v5366 = vmax.f32 %v5364, %v5365
    %v5367 = vrot.slane %v5366, 2
    %v5368 = vmax.f32 %v5366, %v5367
    %v5369 = vrot.slane %v5368, 1
    %v5370 = vmax.f32 %v5368, %v5369
    %v5371 = vsel %vm5048, %v3905, -inf
    %v5372 = vrot.slane %v5371, 4
    %v5373 = vmax.f32 %v5371, %v5372
    %v5374 = vrot.slane %v5373, 2
    %v5375 = vmax.f32 %v5373, %v5374
    %v5376 = vrot.slane %v5375, 1
    %v5377 = vmax.f32 %v5375, %v5376
    %v5378 = vsel %vm5048, %v3907, -inf
    %v5379 = vrot.slane %v5378, 4
    %v5380 = vmax.f32 %v5378, %v5379
    %v5381 = vrot.slane %v5380, 2
    %v5382 = vmax.f32 %v5380, %v5381
    %v5383 = vrot.slane %v5382, 1
    %v5384 = vmax.f32 %v5382, %v5383
    %v5385 = vsel %vm5048, %v3915, -inf
    %v5386 = vrot.slane %v5385, 4
    %v5387 = vmax.f32 %v5385, %v5386
    %v5388 = vrot.slane %v5387, 2
    %v5389 = vmax.f32 %v5387, %v5388
    %v5390 = vrot.slane %v5389, 1
    %v5391 = vmax.f32 %v5389, %v5390
    %v5392 = vsel %vm5048, %v3923, -inf
    %v5393 = vrot.slane %v5392, 4
    %v5394 = vmax.f32 %v5392, %v5393
    %v5395 = vrot.slane %v5394, 2
    %v5396 = vmax.f32 %v5394, %v5395
    %v5397 = vrot.slane %v5396, 1
    %v5398 = vmax.f32 %v5396, %v5397
    %v5399 = vsel %vm5048, %v3922, -inf
    %v5400 = vrot.slane %v5399, 4
    %v5401 = vmax.f32 %v5399, %v5400
    %v5402 = vrot.slane %v5401, 2
    %v5403 = vmax.f32 %v5401, %v5402
    %v5404 = vrot.slane %v5403, 1
    %v5405 = vmax.f32 %v5403, %v5404
    %v5406 = vsel %vm5048, %v3924, -inf
    %v5407 = vrot.slane %v5406, 4
    %v5408 = vmax.f32 %v5406, %v5407
    %v5409 = vrot.slane %v5408, 2
    %v5410 = vmax.f32 %v5408, %v5409
    %v5411 = vrot.slane %v5410, 1
    %v5412 = vmax.f32 %v5410, %v5411
    %v5413 = vsel %vm5048, %v3932, -inf
    %v5414 = vrot.slane %v5413, 4
    %v5415 = vmax.f32 %v5413, %v5414
    %v5416 = vrot.slane %v5415, 2
    %v5417 = vmax.f32 %v5415, %v5416
    %v5418 = vrot.slane %v5417, 1
    %v5419 = vmax.f32 %v5417, %v5418
    %v5420 = vsel %vm5048, %v3940, -inf
    %v5421 = vrot.slane %v5420, 4
    %v5422 = vmax.f32 %v5420, %v5421
    %v5423 = vrot.slane %v5422, 2
    %v5424 = vmax.f32 %v5422, %v5423
    %v5425 = vrot.slane %v5424, 1
    %v5426 = vmax.f32 %v5424, %v5425
    %v5427 = vsel %vm5048, %v3939, -inf
    %v5428 = vrot.slane %v5427, 4
    %v5429 = vmax.f32 %v5427, %v5428
    %v5430 = vrot.slane %v5429, 2
    %v5431 = vmax.f32 %v5429, %v5430
    %v5432 = vrot.slane %v5431, 1
    %v5433 = vmax.f32 %v5431, %v5432
    %v5434 = vsel %vm5048, %v3941, -inf
    %v5435 = vrot.slane %v5434, 4
    %v5436 = vmax.f32 %v5434, %v5435
    %v5437 = vrot.slane %v5436, 2
    %v5438 = vmax.f32 %v5436, %v5437
    %v5439 = vrot.slane %v5438, 1
    %v5440 = vmax.f32 %v5438, %v5439
    %v5441 = vsel %vm5048, %v3949, -inf
    %v5442 = vrot.slane %v5441, 4
    %v5443 = vmax.f32 %v5441, %v5442
    %v5444 = vrot.slane %v5443, 2
    %v5445 = vmax.f32 %v5443, %v5444
    %v5446 = vrot.slane %v5445, 1
    %v5447 = vmax.f32 %v5445, %v5446
    %v5448 = vsel %vm5048, %v3957, -inf
    %v5449 = vrot.slane %v5448, 4
    %v5450 = vmax.f32 %v5448, %v5449
    %v5451 = vrot.slane %v5450, 2
    %v5452 = vmax.f32 %v5450, %v5451
    %v5453 = vrot.slane %v5452, 1
    %v5454 = vmax.f32 %v5452, %v5453
    %v5455 = vsel %vm5048, %v3956, -inf
    %v5456 = vrot.slane %v5455, 4
    %v5457 = vmax.f32 %v5455, %v5456
    %v5458 = vrot.slane %v5457, 2
    %v5459 = vmax.f32 %v5457, %v5458
    %v5460 = vrot.slane %v5459, 1
    %v5461 = vmax.f32 %v5459, %v5460
    %v5462 = vsel %vm5048, %v3958, -inf
    %v5463 = vrot.slane %v5462, 4
    %v5464 = vmax.f32 %v5462, %v5463
    %v5465 = vrot.slane %v5464, 2
    %v5466 = vmax.f32 %v5464, %v5465
    %v5467 = vrot.slane %v5466, 1
    %v5468 = vmax.f32 %v5466, %v5467
    %v5469 = vsel %vm5048, %v3966, -inf
    %v5470 = vrot.slane %v5469, 4
    %v5471 = vmax.f32 %v5469, %v5470
    %v5472 = vrot.slane %v5471, 2
    %v5473 = vmax.f32 %v5471, %v5472
    %v5474 = vrot.slane %v5473, 1
    %v5475 = vmax.f32 %v5473, %v5474
    %v5476 = vsel %vm5048, %v3974, -inf
    %v5477 = vrot.slane %v5476, 4
    %v5478 = vmax.f32 %v5476, %v5477
    %v5479 = vrot.slane %v5478, 2
    %v5480 = vmax.f32 %v5478, %v5479
    %v5481 = vrot.slane %v5480, 1
    %v5482 = vmax.f32 %v5480, %v5481
    %v5483 = vsel %vm5048, %v3973, -inf
    %v5484 = vrot.slane %v5483, 4
    %v5485 = vmax.f32 %v5483, %v5484
    %v5486 = vrot.slane %v5485, 2
    %v5487 = vmax.f32 %v5485, %v5486
    %v5488 = vrot.slane %v5487, 1
    %v5489 = vmax.f32 %v5487, %v5488
    %v5490 = vsel %vm5048, %v3975, -inf
    %v5491 = vrot.slane %v5490, 4
    %v5492 = vmax.f32 %v5490, %v5491
    %v5493 = vrot.slane %v5492, 2
    %v5494 = vmax.f32 %v5492, %v5493
    %v5495 = vrot.slane %v5494, 1
    %v5496 = vmax.f32 %v5494, %v5495
    %v5497 = vsel %vm5048, %v3983, -inf
    %v5498 = vrot.slane %v5497, 4
    %v5499 = vmax.f32 %v5497, %v5498
    %v5500 = vrot.slane %v5499, 2
    %v5501 = vmax.f32 %v5499, %v5500
    %v5502 = vrot.slane %v5501, 1
    %v5503 = vmax.f32 %v5501, %v5502
    %v5504 = vsel %vm5048, %v3991, -inf
    %v5505 = vrot.slane %v5504, 4
    %v5506 = vmax.f32 %v5504, %v5505
    %v5507 = vrot.slane %v5506, 2
    %v5508 = vmax.f32 %v5506, %v5507
    %v5509 = vrot.slane %v5508, 1
    %v5510 = vmax.f32 %v5508, %v5509
    %v5511 = vsel %vm5048, %v3990, -inf
    %v5512 = vrot.slane %v5511, 4
    %v5513 = vmax.f32 %v5511, %v5512
    %v5514 = vrot.slane %v5513, 2
    %v5515 = vmax.f32 %v5513, %v5514
    %v5516 = vrot.slane %v5515, 1
    %v5517 = vmax.f32 %v5515, %v5516
    %v5518 = vsel %vm5048, %v3992, -inf
    %v5519 = vrot.slane %v5518, 4
    %v5520 = vmax.f32 %v5518, %v5519
    %v5521 = vrot.slane %v5520, 2
    %v5522 = vmax.f32 %v5520, %v5521
    %v5523 = vrot.slane %v5522, 1
    %v5524 = vmax.f32 %v5522, %v5523
    %v5525 = vsel %vm5048, %v4000, -inf
    %v5526 = vrot.slane %v5525, 4
    %v5527 = vmax.f32 %v5525, %v5526
    %v5528 = vrot.slane %v5527, 2
    %v5529 = vmax.f32 %v5527, %v5528
    %v5530 = vrot.slane %v5529, 1
    %v5531 = vmax.f32 %v5529, %v5530
    %v5532 = vsel %vm5048, %v4008, -inf
    %v5533 = vrot.slane %v5532, 4
    %v5534 = vmax.f32 %v5532, %v5533
    %v5535 = vrot.slane %v5534, 2
    %v5536 = vmax.f32 %v5534, %v5535
    %v5537 = vrot.slane %v5536, 1
    %v5538 = vmax.f32 %v5536, %v5537
    %v5539 = vsel %vm5048, %v4007, -inf
    %v5540 = vrot.slane %v5539, 4
    %v5541 = vmax.f32 %v5539, %v5540
    %v5542 = vrot.slane %v5541, 2
    %v5543 = vmax.f32 %v5541, %v5542
    %v5544 = vrot.slane %v5543, 1
    %v5545 = vmax.f32 %v5543, %v5544
    %v5546 = vsel %vm5048, %v4009, -inf
    %v5547 = vrot.slane %v5546, 4
    %v5548 = vmax.f32 %v5546, %v5547
    %v5549 = vrot.slane %v5548, 2
    %v5550 = vmax.f32 %v5548, %v5549
    %v5551 = vrot.slane %v5550, 1
    %v5552 = vmax.f32 %v5550, %v5551
    %v5553 = vsel %vm5048, %v4017, -inf
    %v5554 = vrot.slane %v5553, 4
    %v5555 = vmax.f32 %v5553, %v5554
    %v5556 = vrot.slane %v5555, 2
    %v5557 = vmax.f32 %v5555, %v5556
    %v5558 = vrot.slane %v5557, 1
    %v5559 = vmax.f32 %v5557, %v5558
    %v5560 = vsel %vm5048, %v4025, -inf
    %v5561 = vrot.slane %v5560, 4
    %v5562 = vmax.f32 %v5560, %v5561
    %v5563 = vrot.slane %v5562, 2
    %v5564 = vmax.f32 %v5562, %v5563
    %v5565 = vrot.slane %v5564, 1
    %v5566 = vmax.f32 %v5564, %v5565
    %v5567 = vsel %vm5048, %v4024, -inf
    %v5568 = vrot.slane %v5567, 4
    %v5569 = vmax.f32 %v5567, %v5568
    %v5570 = vrot.slane %v5569, 2
    %v5571 = vmax.f32 %v5569, %v5570
    %v5572 = vrot.slane %v5571, 1
    %v5573 = vmax.f32 %v5571, %v5572
    %v5574 = vsel %vm5048, %v4026, -inf
    %v5575 = vrot.slane %v5574, 4
    %v5576 = vmax.f32 %v5574, %v5575
    %v5577 = vrot.slane %v5576, 2
    %v5578 = vmax.f32 %v5576, %v5577
    %v5579 = vrot.slane %v5578, 1
    %v5580 = vmax.f32 %v5578, %v5579
    %v5581 = vsel %vm5048, %v4034, -inf
    %v5582 = vrot.slane %v5581, 4
    %v5583 = vmax.f32 %v5581, %v5582
    %v5584 = vrot.slane %v5583, 2
    %v5585 = vmax.f32 %v5583, %v5584
    %v5586 = vrot.slane %v5585, 1
    %v5587 = vmax.f32 %v5585, %v5586
    %v5588 = vsel %vm5048, %v4042, -inf
    %v5589 = vrot.slane %v5588, 4
    %v5590 = vmax.f32 %v5588, %v5589
    %v5591 = vrot.slane %v5590, 2
    %v5592 = vmax.f32 %v5590, %v5591
    %v5593 = vrot.slane %v5592, 1
    %v5594 = vmax.f32 %v5592, %v5593
    %v5595 = vsel %vm5048, %v4041, -inf
    %v5596 = vrot.slane %v5595, 4
    %v5597 = vmax.f32 %v5595, %v5596
    %v5598 = vrot.slane %v5597, 2
    %v5599 = vmax.f32 %v5597, %v5598
    %v5600 = vrot.slane %v5599, 1
    %v5601 = vmax.f32 %v5599, %v5600
    %v5602 = vsel %vm5048, %v4043, -inf
    %v5603 = vrot.slane %v5602, 4
    %v5604 = vmax.f32 %v5602, %v5603
    %v5605 = vrot.slane %v5604, 2
    %v5606 = vmax.f32 %v5604, %v5605
    %v5607 = vrot.slane %v5606, 1
    %v5608 = vmax.f32 %v5606, %v5607
    %v5609 = vsel %vm5048, %v4051, -inf
    %v5610 = vrot.slane %v5609, 4
    %v5611 = vmax.f32 %v5609, %v5610
    %v5612 = vrot.slane %v5611, 2
    %v5613 = vmax.f32 %v5611, %v5612
    %v5614 = vrot.slane %v5613, 1
    %v5615 = vmax.f32 %v5613, %v5614
    %v5616 = vsel %vm5048, %v4059, -inf
    %v5617 = vrot.slane %v5616, 4
    %v5618 = vmax.f32 %v5616, %v5617
    %v5619 = vrot.slane %v5618, 2
    %v5620 = vmax.f32 %v5618, %v5619
    %v5621 = vrot.slane %v5620, 1
    %v5622 = vmax.f32 %v5620, %v5621
    %v5623 = vsel %vm5048, %v4058, -inf
    %v5624 = vrot.slane %v5623, 4
    %v5625 = vmax.f32 %v5623, %v5624
    %v5626 = vrot.slane %v5625, 2
    %v5627 = vmax.f32 %v5625, %v5626
    %v5628 = vrot.slane %v5627, 1
    %v5629 = vmax.f32 %v5627, %v5628
    %v5630 = vsel %vm5048, %v4060, -inf
    %v5631 = vrot.slane %v5630, 4
    %v5632 = vmax.f32 %v5630, %v5631
    %v5633 = vrot.slane %v5632, 2
    %v5634 = vmax.f32 %v5632, %v5633
    %v5635 = vrot.slane %v5634, 1
    %v5636 = vmax.f32 %v5634, %v5635
    %v5637 = vsel %vm5048, %v4068, -inf
    %v5638 = vrot.slane %v5637, 4
    %v5639 = vmax.f32 %v5637, %v5638
    %v5640 = vrot.slane %v5639, 2
    %v5641 = vmax.f32 %v5639, %v5640
    %v5642 = vrot.slane %v5641, 1
    %v5643 = vmax.f32 %v5641, %v5642
    %v5644 = vsel %vm5048, %v4076, -inf
    %v5645 = vrot.slane %v5644, 4
    %v5646 = vmax.f32 %v5644, %v5645
    %v5647 = vrot.slane %v5646, 2
    %v5648 = vmax.f32 %v5646, %v5647
    %v5649 = vrot.slane %v5648, 1
    %v5650 = vmax.f32 %v5648, %v5649
    %v5651 = vsel %vm5048, %v4075, -inf
    %v5652 = vrot.slane %v5651, 4
    %v5653 = vmax.f32 %v5651, %v5652
    %v5654 = vrot.slane %v5653, 2
    %v5655 = vmax.f32 %v5653, %v5654
    %v5656 = vrot.slane %v5655, 1
    %v5657 = vmax.f32 %v5655, %v5656
    %v5658 = vsel %vm5048, %v4077, -inf
    %v5659 = vrot.slane %v5658, 4
    %v5660 = vmax.f32 %v5658, %v5659
    %v5661 = vrot.slane %v5660, 2
    %v5662 = vmax.f32 %v5660, %v5661
    %v5663 = vrot.slane %v5662, 1
    %v5664 = vmax.f32 %v5662, %v5663
    %v5665 = vsel %vm5048, %v4085, -inf
    %v5666 = vrot.slane %v5665, 4
    %v5667 = vmax.f32 %v5665, %v5666
    %v5668 = vrot.slane %v5667, 2
    %v5669 = vmax.f32 %v5667, %v5668
    %v5670 = vrot.slane %v5669, 1
    %v5671 = vmax.f32 %v5669, %v5670
    %v5672 = vsel %vm5048, %v4093, -inf
    %v5673 = vrot.slane %v5672, 4
    %v5674 = vmax.f32 %v5672, %v5673
    %v5675 = vrot.slane %v5674, 2
    %v5676 = vmax.f32 %v5674, %v5675
    %v5677 = vrot.slane %v5676, 1
    %v5678 = vmax.f32 %v5676, %v5677
    %v5679 = vsel %vm5048, %v4092, -inf
    %v5680 = vrot.slane %v5679, 4
    %v5681 = vmax.f32 %v5679, %v5680
    %v5682 = vrot.slane %v5681, 2
    %v5683 = vmax.f32 %v5681, %v5682
    %v5684 = vrot.slane %v5683, 1
    %v5685 = vmax.f32 %v5683, %v5684
    %v5686 = vsel %vm5048, %v4094, -inf
    %v5687 = vrot.slane %v5686, 4
    %v5688 = vmax.f32 %v5686, %v5687
    %v5689 = vrot.slane %v5688, 2
    %v5690 = vmax.f32 %v5688, %v5689
    %v5691 = vrot.slane %v5690, 1
    %v5692 = vmax.f32 %v5690, %v5691
    %v5693 = vsel %vm5048, %v4102, -inf
    %v5694 = vrot.slane %v5693, 4
    %v5695 = vmax.f32 %v5693, %v5694
    %v5696 = vrot.slane %v5695, 2
    %v5697 = vmax.f32 %v5695, %v5696
    %v5698 = vrot.slane %v5697, 1
    %v5699 = vmax.f32 %v5697, %v5698
    %v5700 = vsel %vm5048, %v4110, -inf
    %v5701 = vrot.slane %v5700, 4
    %v5702 = vmax.f32 %v5700, %v5701
    %v5703 = vrot.slane %v5702, 2
    %v5704 = vmax.f32 %v5702, %v5703
    %v5705 = vrot.slane %v5704, 1
    %v5706 = vmax.f32 %v5704, %v5705
    %v5707 = vsel %vm5048, %v4109, -inf
    %v5708 = vrot.slane %v5707, 4
    %v5709 = vmax.f32 %v5707, %v5708
    %v5710 = vrot.slane %v5709, 2
    %v5711 = vmax.f32 %v5709, %v5710
    %v5712 = vrot.slane %v5711, 1
    %v5713 = vmax.f32 %v5711, %v5712
    %v5714 = vsel %vm5048, %v4111, -inf
    %v5715 = vrot.slane %v5714, 4
    %v5716 = vmax.f32 %v5714, %v5715
    %v5717 = vrot.slane %v5716, 2
    %v5718 = vmax.f32 %v5716, %v5717
    %v5719 = vrot.slane %v5718, 1
    %v5720 = vmax.f32 %v5718, %v5719
    %v5721 = vsel %vm5048, %v4119, -inf
    %v5722 = vrot.slane %v5721, 4
    %v5723 = vmax.f32 %v5721, %v5722
    %v5724 = vrot.slane %v5723, 2
    %v5725 = vmax.f32 %v5723, %v5724
    %v5726 = vrot.slane %v5725, 1
    %v5727 = vmax.f32 %v5725, %v5726
    %v5728 = vsel %vm5048, %v4127, -inf
    %v5729 = vrot.slane %v5728, 4
    %v5730 = vmax.f32 %v5728, %v5729
    %v5731 = vrot.slane %v5730, 2
    %v5732 = vmax.f32 %v5730, %v5731
    %v5733 = vrot.slane %v5732, 1
    %v5734 = vmax.f32 %v5732, %v5733
    %v5735 = vsel %vm5048, %v4126, -inf
    %v5736 = vrot.slane %v5735, 4
    %v5737 = vmax.f32 %v5735, %v5736
    %v5738 = vrot.slane %v5737, 2
    %v5739 = vmax.f32 %v5737, %v5738
    %v5740 = vrot.slane %v5739, 1
    %v5741 = vmax.f32 %v5739, %v5740
    %v5742 = vsel %vm5048, %v4128, -inf
    %v5743 = vrot.slane %v5742, 4
    %v5744 = vmax.f32 %v5742, %v5743
    %v5745 = vrot.slane %v5744, 2
    %v5746 = vmax.f32 %v5744, %v5745
    %v5747 = vrot.slane %v5746, 1
    %v5748 = vmax.f32 %v5746, %v5747
    %v5749 = vsel %vm5048, %v4136, -inf
    %v5750 = vrot.slane %v5749, 4
    %v5751 = vmax.f32 %v5749, %v5750
    %v5752 = vrot.slane %v5751, 2
    %v5753 = vmax.f32 %v5751, %v5752
    %v5754 = vrot.slane %v5753, 1
    %v5755 = vmax.f32 %v5753, %v5754
    %v5756 = vsel %vm5048, %v4144, -inf
    %v5757 = vrot.slane %v5756, 4
    %v5758 = vmax.f32 %v5756, %v5757
    %v5759 = vrot.slane %v5758, 2
    %v5760 = vmax.f32 %v5758, %v5759
    %v5761 = vrot.slane %v5760, 1
    %v5762 = vmax.f32 %v5760, %v5761
    %v5763 = vsel %vm5048, %v4143, -inf
    %v5764 = vrot.slane %v5763, 4
    %v5765 = vmax.f32 %v5763, %v5764
    %v5766 = vrot.slane %v5765, 2
    %v5767 = vmax.f32 %v5765, %v5766
    %v5768 = vrot.slane %v5767, 1
    %v5769 = vmax.f32 %v5767, %v5768
    %v5770 = vsel %vm5048, %v4145, -inf
    %v5771 = vrot.slane %v5770, 4
    %v5772 = vmax.f32 %v5770, %v5771
    %v5773 = vrot.slane %v5772, 2
    %v5774 = vmax.f32 %v5772, %v5773
    %v5775 = vrot.slane %v5774, 1
    %v5776 = vmax.f32 %v5774, %v5775
    %v5777 = vsel %vm5048, %v4153, -inf
    %v5778 = vrot.slane %v5777, 4
    %v5779 = vmax.f32 %v5777, %v5778
    %v5780 = vrot.slane %v5779, 2
    %v5781 = vmax.f32 %v5779, %v5780
    %v5782 = vrot.slane %v5781, 1
    %v5783 = vmax.f32 %v5781, %v5782
    %v5784 = vsel %vm5048, %v4161, -inf
    %v5785 = vrot.slane %v5784, 4
    %v5786 = vmax.f32 %v5784, %v5785
    %v5787 = vrot.slane %v5786, 2
    %v5788 = vmax.f32 %v5786, %v5787
    %v5789 = vrot.slane %v5788, 1
    %v5790 = vmax.f32 %v5788, %v5789
    %v5791 = vsel %vm5048, %v4160, -inf
    %v5792 = vrot.slane %v5791, 4
    %v5793 = vmax.f32 %v5791, %v5792
    %v5794 = vrot.slane %v5793, 2
    %v5795 = vmax.f32 %v5793, %v5794
    %v5796 = vrot.slane %v5795, 1
    %v5797 = vmax.f32 %v5795, %v5796
    %v5798 = vsel %vm5048, %v4162, -inf
    %v5799 = vrot.slane %v5798, 4
    %v5800 = vmax.f32 %v5798, %v5799
    %v5801 = vrot.slane %v5800, 2
    %v5802 = vmax.f32 %v5800, %v5801
    %v5803 = vrot.slane %v5802, 1
    %v5804 = vmax.f32 %v5802, %v5803
    %v5805 = vsel %vm5048, %v4170, -inf
    %v5806 = vrot.slane %v5805, 4
    %v5807 = vmax.f32 %v5805, %v5806
    %v5808 = vrot.slane %v5807, 2
    %v5809 = vmax.f32 %v5807, %v5808
    %v5810 = vrot.slane %v5809, 1
    %v5811 = vmax.f32 %v5809, %v5810
    %v5812 = vsel %vm5048, %v4178, -inf
    %v5813 = vrot.slane %v5812, 4
    %v5814 = vmax.f32 %v5812, %v5813
    %v5815 = vrot.slane %v5814, 2
    %v5816 = vmax.f32 %v5814, %v5815
    %v5817 = vrot.slane %v5816, 1
    %v5818 = vmax.f32 %v5816, %v5817
    %v5819 = vsel %vm5048, %v4177, -inf
    %v5820 = vrot.slane %v5819, 4
    %v5821 = vmax.f32 %v5819, %v5820
    %v5822 = vrot.slane %v5821, 2
    %v5823 = vmax.f32 %v5821, %v5822
    %v5824 = vrot.slane %v5823, 1
    %v5825 = vmax.f32 %v5823, %v5824
    %v5826 = vsel %vm5048, %v4179, -inf
    %v5827 = vrot.slane %v5826, 4
    %v5828 = vmax.f32 %v5826, %v5827
    %v5829 = vrot.slane %v5828, 2
    %v5830 = vmax.f32 %v5828, %v5829
    %v5831 = vrot.slane %v5830, 1
    %v5832 = vmax.f32 %v5830, %v5831
    %v5833 = vsel %vm5048, %v4187, -inf
    %v5834 = vrot.slane %v5833, 4
    %v5835 = vmax.f32 %v5833, %v5834
    %v5836 = vrot.slane %v5835, 2
    %v5837 = vmax.f32 %v5835, %v5836
    %v5838 = vrot.slane %v5837, 1
    %v5839 = vmax.f32 %v5837, %v5838
    %v5840 = vsel %vm5048, %v4195, -inf
    %v5841 = vrot.slane %v5840, 4
    %v5842 = vmax.f32 %v5840, %v5841
    %v5843 = vrot.slane %v5842, 2
    %v5844 = vmax.f32 %v5842, %v5843
    %v5845 = vrot.slane %v5844, 1
    %v5846 = vmax.f32 %v5844, %v5845
    %v5847 = vsel %vm5048, %v4194, -inf
    %v5848 = vrot.slane %v5847, 4
    %v5849 = vmax.f32 %v5847, %v5848
    %v5850 = vrot.slane %v5849, 2
    %v5851 = vmax.f32 %v5849, %v5850
    %v5852 = vrot.slane %v5851, 1
    %v5853 = vmax.f32 %v5851, %v5852
    %v5854 = vsel %vm5048, %v4196, -inf
    %v5855 = vrot.slane %v5854, 4
    %v5856 = vmax.f32 %v5854, %v5855
    %v5857 = vrot.slane %v5856, 2
    %v5858 = vmax.f32 %v5856, %v5857
    %v5859 = vrot.slane %v5858, 1
    %v5860 = vmax.f32 %v5858, %v5859
    %v5861 = vsel %vm5048, %v4204, -inf
    %v5862 = vrot.slane %v5861, 4
    %v5863 = vmax.f32 %v5861, %v5862
    %v5864 = vrot.slane %v5863, 2
    %v5865 = vmax.f32 %v5863, %v5864
    %v5866 = vrot.slane %v5865, 1
    %v5867 = vmax.f32 %v5865, %v5866
    %v5868 = vsel %vm5048, %v4212, -inf
    %v5869 = vrot.slane %v5868, 4
    %v5870 = vmax.f32 %v5868, %v5869
    %v5871 = vrot.slane %v5870, 2
    %v5872 = vmax.f32 %v5870, %v5871
    %v5873 = vrot.slane %v5872, 1
    %v5874 = vmax.f32 %v5872, %v5873
    %v5875 = vsel %vm5048, %v4211, -inf
    %v5876 = vrot.slane %v5875, 4
    %v5877 = vmax.f32 %v5875, %v5876
    %v5878 = vrot.slane %v5877, 2
    %v5879 = vmax.f32 %v5877, %v5878
    %v5880 = vrot.slane %v5879, 1
    %v5881 = vmax.f32 %v5879, %v5880
    %v5882 = vsel %vm5048, %v4213, -inf
    %v5883 = vrot.slane %v5882, 4
    %v5884 = vmax.f32 %v5882, %v5883
    %v5885 = vrot.slane %v5884, 2
    %v5886 = vmax.f32 %v5884, %v5885
    %v5887 = vrot.slane %v5886, 1
    %v5888 = vmax.f32 %v5886, %v5887
    %v5889 = vsel %vm5048, %v4221, -inf
    %v5890 = vrot.slane %v5889, 4
    %v5891 = vmax.f32 %v5889, %v5890
    %v5892 = vrot.slane %v5891, 2
    %v5893 = vmax.f32 %v5891, %v5892
    %v5894 = vrot.slane %v5893, 1
    %v5895 = vmax.f32 %v5893, %v5894
    %v5896 = vsel %vm5048, %v4229, -inf
    %v5897 = vrot.slane %v5896, 4
    %v5898 = vmax.f32 %v5896, %v5897
    %v5899 = vrot.slane %v5898, 2
    %v5900 = vmax.f32 %v5898, %v5899
    %v5901 = vrot.slane %v5900, 1
    %v5902 = vmax.f32 %v5900, %v5901
    %v5903 = vsel %vm5048, %v4228, -inf
    %v5904 = vrot.slane %v5903, 4
    %v5905 = vmax.f32 %v5903, %v5904
    %v5906 = vrot.slane %v5905, 2
    %v5907 = vmax.f32 %v5905, %v5906
    %v5908 = vrot.slane %v5907, 1
    %v5909 = vmax.f32 %v5907, %v5908
    %v5910 = vsel %vm5048, %v4230, -inf
    %v5911 = vrot.slane %v5910, 4
    %v5912 = vmax.f32 %v5910, %v5911
    %v5913 = vrot.slane %v5912, 2
    %v5914 = vmax.f32 %v5912, %v5913
    %v5915 = vrot.slane %v5914, 1
    %v5916 = vmax.f32 %v5914, %v5915
    %v5917 = vsel %vm5048, %v4238, -inf
    %v5918 = vrot.slane %v5917, 4
    %v5919 = vmax.f32 %v5917, %v5918
    %v5920 = vrot.slane %v5919, 2
    %v5921 = vmax.f32 %v5919, %v5920
    %v5922 = vrot.slane %v5921, 1
    %v5923 = vmax.f32 %v5921, %v5922
    %v5924 = vsel %vm5048, %v4246, -inf
    %v5925 = vrot.slane %v5924, 4
    %v5926 = vmax.f32 %v5924, %v5925
    %v5927 = vrot.slane %v5926, 2
    %v5928 = vmax.f32 %v5926, %v5927
    %v5929 = vrot.slane %v5928, 1
    %v5930 = vmax.f32 %v5928, %v5929
    %v5931 = vsel %vm5048, %v4245, -inf
    %v5932 = vrot.slane %v5931, 4
    %v5933 = vmax.f32 %v5931, %v5932
    %v5934 = vrot.slane %v5933, 2
    %v5935 = vmax.f32 %v5933, %v5934
    %v5936 = vrot.slane %v5935, 1
    %v5937 = vmax.f32 %v5935, %v5936
    %v5938 = vsel %vm5048, %v4247, -inf
    %v5939 = vrot.slane %v5938, 4
    %v5940 = vmax.f32 %v5938, %v5939
    %v5941 = vrot.slane %v5940, 2
    %v5942 = vmax.f32 %v5940, %v5941
    %v5943 = vrot.slane %v5942, 1
    %v5944 = vmax.f32 %v5942, %v5943
    %v5945 = vsel %vm5048, %v4255, -inf
    %v5946 = vrot.slane %v5945, 4
    %v5947 = vmax.f32 %v5945, %v5946
    %v5948 = vrot.slane %v5947, 2
    %v5949 = vmax.f32 %v5947, %v5948
    %v5950 = vrot.slane %v5949, 1
    %v5951 = vmax.f32 %v5949, %v5950
    %v5952 = vsel %vm5048, %v4263, -inf
    %v5953 = vrot.slane %v5952, 4
    %v5954 = vmax.f32 %v5952, %v5953
    %v5955 = vrot.slane %v5954, 2
    %v5956 = vmax.f32 %v5954, %v5955
    %v5957 = vrot.slane %v5956, 1
    %v5958 = vmax.f32 %v5956, %v5957
    %v5959 = vsel %vm5048, %v4262, -inf
    %v5960 = vrot.slane %v5959, 4
    %v5961 = vmax.f32 %v5959, %v5960
    %v5962 = vrot.slane %v5961, 2
    %v5963 = vmax.f32 %v5961, %v5962
    %v5964 = vrot.slane %v5963, 1
    %v5965 = vmax.f32 %v5963, %v5964
    %v5966 = vsel %vm5048, %v4264, -inf
    %v5967 = vrot.slane %v5966, 4
    %v5968 = vmax.f32 %v5966, %v5967
    %v5969 = vrot.slane %v5968, 2
    %v5970 = vmax.f32 %v5968, %v5969
    %v5971 = vrot.slane %v5970, 1
    %v5972 = vmax.f32 %v5970, %v5971
    %v5973 = vsel %vm5048, %v4272, -inf
    %v5974 = vrot.slane %v5973, 4
    %v5975 = vmax.f32 %v5973, %v5974
    %v5976 = vrot.slane %v5975, 2
    %v5977 = vmax.f32 %v5975, %v5976
    %v5978 = vrot.slane %v5977, 1
    %v5979 = vmax.f32 %v5977, %v5978
    %v5980 = vsel %vm5048, %v4280, -inf
    %v5981 = vrot.slane %v5980, 4
    %v5982 = vmax.f32 %v5980, %v5981
    %v5983 = vrot.slane %v5982, 2
    %v5984 = vmax.f32 %v5982, %v5983
    %v5985 = vrot.slane %v5984, 1
    %v5986 = vmax.f32 %v5984, %v5985
    %v5987 = vsel %vm5048, %v4279, -inf
    %v5988 = vrot.slane %v5987, 4
    %v5989 = vmax.f32 %v5987, %v5988
    %v5990 = vrot.slane %v5989, 2
    %v5991 = vmax.f32 %v5989, %v5990
    %v5992 = vrot.slane %v5991, 1
    %v5993 = vmax.f32 %v5991, %v5992
    %v5994 = vsel %vm5048, %v4281, -inf
    %v5995 = vrot.slane %v5994, 4
    %v5996 = vmax.f32 %v5994, %v5995
    %v5997 = vrot.slane %v5996, 2
    %v5998 = vmax.f32 %v5996, %v5997
    %v5999 = vrot.slane %v5998, 1
    %v6000 = vmax.f32 %v5998, %v5999
    %v6001 = vsel %vm5048, %v4289, -inf
    %v6002 = vrot.slane %v6001, 4
    %v6003 = vmax.f32 %v6001, %v6002
    %v6004 = vrot.slane %v6003, 2
    %v6005 = vmax.f32 %v6003, %v6004
    %v6006 = vrot.slane %v6005, 1
    %v6007 = vmax.f32 %v6005, %v6006
    %v6008 = vsel %vm5048, %v4297, -inf
    %v6009 = vrot.slane %v6008, 4
    %v6010 = vmax.f32 %v6008, %v6009
    %v6011 = vrot.slane %v6010, 2
    %v6012 = vmax.f32 %v6010, %v6011
    %v6013 = vrot.slane %v6012, 1
    %v6014 = vmax.f32 %v6012, %v6013
    %v6015 = vsel %vm5048, %v4296, -inf
    %v6016 = vrot.slane %v6015, 4
    %v6017 = vmax.f32 %v6015, %v6016
    %v6018 = vrot.slane %v6017, 2
    %v6019 = vmax.f32 %v6017, %v6018
    %v6020 = vrot.slane %v6019, 1
    %v6021 = vmax.f32 %v6019, %v6020
    %v6022 = vsel %vm5048, %v4298, -inf
    %v6023 = vrot.slane %v6022, 4
    %v6024 = vmax.f32 %v6022, %v6023
    %v6025 = vrot.slane %v6024, 2
    %v6026 = vmax.f32 %v6024, %v6025
    %v6027 = vrot.slane %v6026, 1
    %v6028 = vmax.f32 %v6026, %v6027
    %v6029 = vsel %vm5048, %v4306, -inf
    %v6030 = vrot.slane %v6029, 4
    %v6031 = vmax.f32 %v6029, %v6030
    %v6032 = vrot.slane %v6031, 2
    %v6033 = vmax.f32 %v6031, %v6032
    %v6034 = vrot.slane %v6033, 1
    %v6035 = vmax.f32 %v6033, %v6034
    %v6036 = vsel %vm5048, %v4314, -inf
    %v6037 = vrot.slane %v6036, 4
    %v6038 = vmax.f32 %v6036, %v6037
    %v6039 = vrot.slane %v6038, 2
    %v6040 = vmax.f32 %v6038, %v6039
    %v6041 = vrot.slane %v6040, 1
    %v6042 = vmax.f32 %v6040, %v6041
    %v6043 = vsel %vm5048, %v4313, -inf
    %v6044 = vrot.slane %v6043, 4
    %v6045 = vmax.f32 %v6043, %v6044
    %v6046 = vrot.slane %v6045, 2
    %v6047 = vmax.f32 %v6045, %v6046
    %v6048 = vrot.slane %v6047, 1
    %v6049 = vmax.f32 %v6047, %v6048
    %v6050 = vsel %vm5048, %v4315, -inf
    %v6051 = vrot.slane %v6050, 4
    %v6052 = vmax.f32 %v6050, %v6051
    %v6053 = vrot.slane %v6052, 2
    %v6054 = vmax.f32 %v6052, %v6053
    %v6055 = vrot.slane %v6054, 1
    %v6056 = vmax.f32 %v6054, %v6055
    %v6057 = vsel %vm5048, %v4323, -inf
    %v6058 = vrot.slane %v6057, 4
    %v6059 = vmax.f32 %v6057, %v6058
    %v6060 = vrot.slane %v6059, 2
    %v6061 = vmax.f32 %v6059, %v6060
    %v6062 = vrot.slane %v6061, 1
    %v6063 = vmax.f32 %v6061, %v6062
    %v6064 = vsel %vm5048, %v4331, -inf
    %v6065 = vrot.slane %v6064, 4
    %v6066 = vmax.f32 %v6064, %v6065
    %v6067 = vrot.slane %v6066, 2
    %v6068 = vmax.f32 %v6066, %v6067
    %v6069 = vrot.slane %v6068, 1
    %v6070 = vmax.f32 %v6068, %v6069
    %v6071 = vsel %vm5048, %v4330, -inf
    %v6072 = vrot.slane %v6071, 4
    %v6073 = vmax.f32 %v6071, %v6072
    %v6074 = vrot.slane %v6073, 2
    %v6075 = vmax.f32 %v6073, %v6074
    %v6076 = vrot.slane %v6075, 1
    %v6077 = vmax.f32 %v6075, %v6076
    %v6078 = vsel %vm5048, %v4332, -inf
    %v6079 = vrot.slane %v6078, 4
    %v6080 = vmax.f32 %v6078, %v6079
    %v6081 = vrot.slane %v6080, 2
    %v6082 = vmax.f32 %v6080, %v6081
    %v6083 = vrot.slane %v6082, 1
    %v6084 = vmax.f32 %v6082, %v6083
    %v6085 = vsel %vm5048, %v4340, -inf
    %v6086 = vrot.slane %v6085, 4
    %v6087 = vmax.f32 %v6085, %v6086
    %v6088 = vrot.slane %v6087, 2
    %v6089 = vmax.f32 %v6087, %v6088
    %v6090 = vrot.slane %v6089, 1
    %v6091 = vmax.f32 %v6089, %v6090
    %v6092 = vsel %vm5048, %v4348, -inf
    %v6093 = vrot.slane %v6092, 4
    %v6094 = vmax.f32 %v6092, %v6093
    %v6095 = vrot.slane %v6094, 2
    %v6096 = vmax.f32 %v6094, %v6095
    %v6097 = vrot.slane %v6096, 1
    %v6098 = vmax.f32 %v6096, %v6097
    %v6099 = vsel %vm5048, %v4347, -inf
    %v6100 = vrot.slane %v6099, 4
    %v6101 = vmax.f32 %v6099, %v6100
    %v6102 = vrot.slane %v6101, 2
    %v6103 = vmax.f32 %v6101, %v6102
    %v6104 = vrot.slane %v6103, 1
    %v6105 = vmax.f32 %v6103, %v6104
    %v6106 = vsel %vm5048, %v4349, -inf
    %v6107 = vrot.slane %v6106, 4
    %v6108 = vmax.f32 %v6106, %v6107
    %v6109 = vrot.slane %v6108, 2
    %v6110 = vmax.f32 %v6108, %v6109
    %v6111 = vrot.slane %v6110, 1
    %v6112 = vmax.f32 %v6110, %v6111
    %v6113 = vsel %vm5048, %v4357, -inf
    %v6114 = vrot.slane %v6113, 4
    %v6115 = vmax.f32 %v6113, %v6114
    %v6116 = vrot.slane %v6115, 2
    %v6117 = vmax.f32 %v6115, %v6116
    %v6118 = vrot.slane %v6117, 1
    %v6119 = vmax.f32 %v6117, %v6118
    %v6120 = vsel %vm5048, %v4365, -inf
    %v6121 = vrot.slane %v6120, 4
    %v6122 = vmax.f32 %v6120, %v6121
    %v6123 = vrot.slane %v6122, 2
    %v6124 = vmax.f32 %v6122, %v6123
    %v6125 = vrot.slane %v6124, 1
    %v6126 = vmax.f32 %v6124, %v6125
    %v6127 = vsel %vm5048, %v4364, -inf
    %v6128 = vrot.slane %v6127, 4
    %v6129 = vmax.f32 %v6127, %v6128
    %v6130 = vrot.slane %v6129, 2
    %v6131 = vmax.f32 %v6129, %v6130
    %v6132 = vrot.slane %v6131, 1
    %v6133 = vmax.f32 %v6131, %v6132
    %v6134 = vsel %vm5048, %v4366, -inf
    %v6135 = vrot.slane %v6134, 4
    %v6136 = vmax.f32 %v6134, %v6135
    %v6137 = vrot.slane %v6136, 2
    %v6138 = vmax.f32 %v6136, %v6137
    %v6139 = vrot.slane %v6138, 1
    %v6140 = vmax.f32 %v6138, %v6139
    %v6141 = vsel %vm5048, %v4374, -inf
    %v6142 = vrot.slane %v6141, 4
    %v6143 = vmax.f32 %v6141, %v6142
    %v6144 = vrot.slane %v6143, 2
    %v6145 = vmax.f32 %v6143, %v6144
    %v6146 = vrot.slane %v6145, 1
    %v6147 = vmax.f32 %v6145, %v6146
    %v6148 = vsel %vm5048, %v4382, -inf
    %v6149 = vrot.slane %v6148, 4
    %v6150 = vmax.f32 %v6148, %v6149
    %v6151 = vrot.slane %v6150, 2
    %v6152 = vmax.f32 %v6150, %v6151
    %v6153 = vrot.slane %v6152, 1
    %v6154 = vmax.f32 %v6152, %v6153
    %v6155 = vsel %vm5048, %v4381, -inf
    %v6156 = vrot.slane %v6155, 4
    %v6157 = vmax.f32 %v6155, %v6156
    %v6158 = vrot.slane %v6157, 2
    %v6159 = vmax.f32 %v6157, %v6158
    %v6160 = vrot.slane %v6159, 1
    %v6161 = vmax.f32 %v6159, %v6160
    %v6162 = vsel %vm5048, %v4383, -inf
    %v6163 = vrot.slane %v6162, 4
    %v6164 = vmax.f32 %v6162, %v6163
    %v6165 = vrot.slane %v6164, 2
    %v6166 = vmax.f32 %v6164, %v6165
    %v6167 = vrot.slane %v6166, 1
    %v6168 = vmax.f32 %v6166, %v6167
    %v6169 = vsel %vm5048, %v4391, -inf
    %v6170 = vrot.slane %v6169, 4
    %v6171 = vmax.f32 %v6169, %v6170
    %v6172 = vrot.slane %v6171, 2
    %v6173 = vmax.f32 %v6171, %v6172
    %v6174 = vrot.slane %v6173, 1
    %v6175 = vmax.f32 %v6173, %v6174
    %v6176 = vsel %vm5048, %v4399, -inf
    %v6177 = vrot.slane %v6176, 4
    %v6178 = vmax.f32 %v6176, %v6177
    %v6179 = vrot.slane %v6178, 2
    %v6180 = vmax.f32 %v6178, %v6179
    %v6181 = vrot.slane %v6180, 1
    %v6182 = vmax.f32 %v6180, %v6181
    %v6183 = vsel %vm5048, %v4398, -inf
    %v6184 = vrot.slane %v6183, 4
    %v6185 = vmax.f32 %v6183, %v6184
    %v6186 = vrot.slane %v6185, 2
    %v6187 = vmax.f32 %v6185, %v6186
    %v6188 = vrot.slane %v6187, 1
    %v6189 = vmax.f32 %v6187, %v6188
    %v6190 = vsel %vm5048, %v4400, -inf
    %v6191 = vrot.slane %v6190, 4
    %v6192 = vmax.f32 %v6190, %v6191
    %v6193 = vrot.slane %v6192, 2
    %v6194 = vmax.f32 %v6192, %v6193
    %v6195 = vrot.slane %v6194, 1
    %v6196 = vmax.f32 %v6194, %v6195
    %v6197 = vsel %vm5048, %v4408, -inf
    %v6198 = vrot.slane %v6197, 4
    %v6199 = vmax.f32 %v6197, %v6198
    %v6200 = vrot.slane %v6199, 2
    %v6201 = vmax.f32 %v6199, %v6200
    %v6202 = vrot.slane %v6201, 1
    %v6203 = vmax.f32 %v6201, %v6202
    %v6204 = vsel %vm5048, %v4416, -inf
    %v6205 = vrot.slane %v6204, 4
    %v6206 = vmax.f32 %v6204, %v6205
    %v6207 = vrot.slane %v6206, 2
    %v6208 = vmax.f32 %v6206, %v6207
    %v6209 = vrot.slane %v6208, 1
    %v6210 = vmax.f32 %v6208, %v6209
    %v6211 = vsel %vm5048, %v4415, -inf
    %v6212 = vrot.slane %v6211, 4
    %v6213 = vmax.f32 %v6211, %v6212
    %v6214 = vrot.slane %v6213, 2
    %v6215 = vmax.f32 %v6213, %v6214
    %v6216 = vrot.slane %v6215, 1
    %v6217 = vmax.f32 %v6215, %v6216
    %v6218 = vsel %vm5048, %v4417, -inf
    %v6219 = vrot.slane %v6218, 4
    %v6220 = vmax.f32 %v6218, %v6219
    %v6221 = vrot.slane %v6220, 2
    %v6222 = vmax.f32 %v6220, %v6221
    %v6223 = vrot.slane %v6222, 1
    %v6224 = vmax.f32 %v6222, %v6223
    %v6225 = vsel %vm5048, %v4425, -inf
    %v6226 = vrot.slane %v6225, 4
    %v6227 = vmax.f32 %v6225, %v6226
    %v6228 = vrot.slane %v6227, 2
    %v6229 = vmax.f32 %v6227, %v6228
    %v6230 = vrot.slane %v6229, 1
    %v6231 = vmax.f32 %v6229, %v6230
    %v6232 = vsel %vm5048, %v4433, -inf
    %v6233 = vrot.slane %v6232, 4
    %v6234 = vmax.f32 %v6232, %v6233
    %v6235 = vrot.slane %v6234, 2
    %v6236 = vmax.f32 %v6234, %v6235
    %v6237 = vrot.slane %v6236, 1
    %v6238 = vmax.f32 %v6236, %v6237
    %v6239 = vsel %vm5048, %v4432, -inf
    %v6240 = vrot.slane %v6239, 4
    %v6241 = vmax.f32 %v6239, %v6240
    %v6242 = vrot.slane %v6241, 2
    %v6243 = vmax.f32 %v6241, %v6242
    %v6244 = vrot.slane %v6243, 1
    %v6245 = vmax.f32 %v6243, %v6244
    %v6246 = vsel %vm5048, %v4434, -inf
    %v6247 = vrot.slane %v6246, 4
    %v6248 = vmax.f32 %v6246, %v6247
    %v6249 = vrot.slane %v6248, 2
    %v6250 = vmax.f32 %v6248, %v6249
    %v6251 = vrot.slane %v6250, 1
    %v6252 = vmax.f32 %v6250, %v6251
    %v6253 = vsel %vm5048, %v4442, -inf
    %v6254 = vrot.slane %v6253, 4
    %v6255 = vmax.f32 %v6253, %v6254
    %v6256 = vrot.slane %v6255, 2
    %v6257 = vmax.f32 %v6255, %v6256
    %v6258 = vrot.slane %v6257, 1
    %v6259 = vmax.f32 %v6257, %v6258
    %v6260 = vsel %vm5048, %v4450, -inf
    %v6261 = vrot.slane %v6260, 4
    %v6262 = vmax.f32 %v6260, %v6261
    %v6263 = vrot.slane %v6262, 2
    %v6264 = vmax.f32 %v6262, %v6263
    %v6265 = vrot.slane %v6264, 1
    %v6266 = vmax.f32 %v6264, %v6265
    %v6267 = vsel %vm5048, %v4449, -inf
    %v6268 = vrot.slane %v6267, 4
    %v6269 = vmax.f32 %v6267, %v6268
    %v6270 = vrot.slane %v6269, 2
    %v6271 = vmax.f32 %v6269, %v6270
    %v6272 = vrot.slane %v6271, 1
    %v6273 = vmax.f32 %v6271, %v6272
    %v6274 = vsel %vm5048, %v4451, -inf
    %v6275 = vrot.slane %v6274, 4
    %v6276 = vmax.f32 %v6274, %v6275
    %v6277 = vrot.slane %v6276, 2
    %v6278 = vmax.f32 %v6276, %v6277
    %v6279 = vrot.slane %v6278, 1
    %v6280 = vmax.f32 %v6278, %v6279
    %v6281 = vsel %vm5048, %v4459, -inf
    %v6282 = vrot.slane %v6281, 4
    %v6283 = vmax.f32 %v6281, %v6282
    %v6284 = vrot.slane %v6283, 2
    %v6285 = vmax.f32 %v6283, %v6284
    %v6286 = vrot.slane %v6285, 1
    %v6287 = vmax.f32 %v6285, %v6286
    %v6288 = vsel %vm5048, %v4467, -inf
    %v6289 = vrot.slane %v6288, 4
    %v6290 = vmax.f32 %v6288, %v6289
    %v6291 = vrot.slane %v6290, 2
    %v6292 = vmax.f32 %v6290, %v6291
    %v6293 = vrot.slane %v6292, 1
    %v6294 = vmax.f32 %v6292, %v6293
    %v6295 = vsel %vm5048, %v4466, -inf
    %v6296 = vrot.slane %v6295, 4
    %v6297 = vmax.f32 %v6295, %v6296
    %v6298 = vrot.slane %v6297, 2
    %v6299 = vmax.f32 %v6297, %v6298
    %v6300 = vrot.slane %v6299, 1
    %v6301 = vmax.f32 %v6299, %v6300
    %v6302 = vsel %vm5048, %v4468, -inf
    %v6303 = vrot.slane %v6302, 4
    %v6304 = vmax.f32 %v6302, %v6303
    %v6305 = vrot.slane %v6304, 2
    %v6306 = vmax.f32 %v6304, %v6305
    %v6307 = vrot.slane %v6306, 1
    %v6308 = vmax.f32 %v6306, %v6307
    %v6309 = vsel %vm5048, %v4476, -inf
    %v6310 = vrot.slane %v6309, 4
    %v6311 = vmax.f32 %v6309, %v6310
    %v6312 = vrot.slane %v6311, 2
    %v6313 = vmax.f32 %v6311, %v6312
    %v6314 = vrot.slane %v6313, 1
    %v6315 = vmax.f32 %v6313, %v6314
    %v6316 = vsel %vm5048, %v4484, -inf
    %v6317 = vrot.slane %v6316, 4
    %v6318 = vmax.f32 %v6316, %v6317
    %v6319 = vrot.slane %v6318, 2
    %v6320 = vmax.f32 %v6318, %v6319
    %v6321 = vrot.slane %v6320, 1
    %v6322 = vmax.f32 %v6320, %v6321
    %v6323 = vsel %vm5048, %v4483, -inf
    %v6324 = vrot.slane %v6323, 4
    %v6325 = vmax.f32 %v6323, %v6324
    %v6326 = vrot.slane %v6325, 2
    %v6327 = vmax.f32 %v6325, %v6326
    %v6328 = vrot.slane %v6327, 1
    %v6329 = vmax.f32 %v6327, %v6328
    %v6330 = vsel %vm5048, %v4485, -inf
    %v6331 = vrot.slane %v6330, 4
    %v6332 = vmax.f32 %v6330, %v6331
    %v6333 = vrot.slane %v6332, 2
    %v6334 = vmax.f32 %v6332, %v6333
    %v6335 = vrot.slane %v6334, 1
    %v6336 = vmax.f32 %v6334, %v6335
    %v6337 = vsel %vm5048, %v4493, -inf
    %v6338 = vrot.slane %v6337, 4
    %v6339 = vmax.f32 %v6337, %v6338
    %v6340 = vrot.slane %v6339, 2
    %v6341 = vmax.f32 %v6339, %v6340
    %v6342 = vrot.slane %v6341, 1
    %v6343 = vmax.f32 %v6341, %v6342
    %v6344 = vsel %vm5048, %v4501, -inf
    %v6345 = vrot.slane %v6344, 4
    %v6346 = vmax.f32 %v6344, %v6345
    %v6347 = vrot.slane %v6346, 2
    %v6348 = vmax.f32 %v6346, %v6347
    %v6349 = vrot.slane %v6348, 1
    %v6350 = vmax.f32 %v6348, %v6349
    %v6351 = vsel %vm5048, %v4500, -inf
    %v6352 = vrot.slane %v6351, 4
    %v6353 = vmax.f32 %v6351, %v6352
    %v6354 = vrot.slane %v6353, 2
    %v6355 = vmax.f32 %v6353, %v6354
    %v6356 = vrot.slane %v6355, 1
    %v6357 = vmax.f32 %v6355, %v6356
    %v6358 = vsel %vm5048, %v4502, -inf
    %v6359 = vrot.slane %v6358, 4
    %v6360 = vmax.f32 %v6358, %v6359
    %v6361 = vrot.slane %v6360, 2
    %v6362 = vmax.f32 %v6360, %v6361
    %v6363 = vrot.slane %v6362, 1
    %v6364 = vmax.f32 %v6362, %v6363
    %v6365 = vsel %vm5048, %v4510, -inf
    %v6366 = vrot.slane %v6365, 4
    %v6367 = vmax.f32 %v6365, %v6366
    %v6368 = vrot.slane %v6367, 2
    %v6369 = vmax.f32 %v6367, %v6368
    %v6370 = vrot.slane %v6369, 1
    %v6371 = vmax.f32 %v6369, %v6370
    %v6372 = vsel %vm5048, %v4518, -inf
    %v6373 = vrot.slane %v6372, 4
    %v6374 = vmax.f32 %v6372, %v6373
    %v6375 = vrot.slane %v6374, 2
    %v6376 = vmax.f32 %v6374, %v6375
    %v6377 = vrot.slane %v6376, 1
    %v6378 = vmax.f32 %v6376, %v6377
    %v6379 = vsel %vm5048, %v4517, -inf
    %v6380 = vrot.slane %v6379, 4
    %v6381 = vmax.f32 %v6379, %v6380
    %v6382 = vrot.slane %v6381, 2
    %v6383 = vmax.f32 %v6381, %v6382
    %v6384 = vrot.slane %v6383, 1
    %v6385 = vmax.f32 %v6383, %v6384
    %v6386 = vsel %vm5048, %v4519, -inf
    %v6387 = vrot.slane %v6386, 4
    %v6388 = vmax.f32 %v6386, %v6387
    %v6389 = vrot.slane %v6388, 2
    %v6390 = vmax.f32 %v6388, %v6389
    %v6391 = vrot.slane %v6390, 1
    %v6392 = vmax.f32 %v6390, %v6391
    %v6393 = vsel %vm5048, %v4527, -inf
    %v6394 = vrot.slane %v6393, 4
    %v6395 = vmax.f32 %v6393, %v6394
    %v6396 = vrot.slane %v6395, 2
    %v6397 = vmax.f32 %v6395, %v6396
    %v6398 = vrot.slane %v6397, 1
    %v6399 = vmax.f32 %v6397, %v6398
    %v6400 = vsel %vm5048, %v4535, -inf
    %v6401 = vrot.slane %v6400, 4
    %v6402 = vmax.f32 %v6400, %v6401
    %v6403 = vrot.slane %v6402, 2
    %v6404 = vmax.f32 %v6402, %v6403
    %v6405 = vrot.slane %v6404, 1
    %v6406 = vmax.f32 %v6404, %v6405
    %v6407 = vsel %vm5048, %v4534, -inf
    %v6408 = vrot.slane %v6407, 4
    %v6409 = vmax.f32 %v6407, %v6408
    %v6410 = vrot.slane %v6409, 2
    %v6411 = vmax.f32 %v6409, %v6410
    %v6412 = vrot.slane %v6411, 1
    %v6413 = vmax.f32 %v6411, %v6412
    %v6414 = vsel %vm5048, %v4536, -inf
    %v6415 = vrot.slane %v6414, 4
    %v6416 = vmax.f32 %v6414, %v6415
    %v6417 = vrot.slane %v6416, 2
    %v6418 = vmax.f32 %v6416, %v6417
    %v6419 = vrot.slane %v6418, 1
    %v6420 = vmax.f32 %v6418, %v6419
    %v6421 = vsel %vm5048, %v4544, -inf
    %v6422 = vrot.slane %v6421, 4
    %v6423 = vmax.f32 %v6421, %v6422
    %v6424 = vrot.slane %v6423, 2
    %v6425 = vmax.f32 %v6423, %v6424
    %v6426 = vrot.slane %v6425, 1
    %v6427 = vmax.f32 %v6425, %v6426
    %v6428 = vsel %vm5048, %v4552, -inf
    %v6429 = vrot.slane %v6428, 4
    %v6430 = vmax.f32 %v6428, %v6429
    %v6431 = vrot.slane %v6430, 2
    %v6432 = vmax.f32 %v6430, %v6431
    %v6433 = vrot.slane %v6432, 1
    %v6434 = vmax.f32 %v6432, %v6433
    %v6435 = vsel %vm5048, %v4551, -inf
    %v6436 = vrot.slane %v6435, 4
    %v6437 = vmax.f32 %v6435, %v6436
    %v6438 = vrot.slane %v6437, 2
    %v6439 = vmax.f32 %v6437, %v6438
    %v6440 = vrot.slane %v6439, 1
    %v6441 = vmax.f32 %v6439, %v6440
    %v6442 = vsel %vm5048, %v4553, -inf
    %v6443 = vrot.slane %v6442, 4
    %v6444 = vmax.f32 %v6442, %v6443
    %v6445 = vrot.slane %v6444, 2
    %v6446 = vmax.f32 %v6444, %v6445
    %v6447 = vrot.slane %v6446, 1
    %v6448 = vmax.f32 %v6446, %v6447
    %v6449 = vsel %vm5048, %v4561, -inf
    %v6450 = vrot.slane %v6449, 4
    %v6451 = vmax.f32 %v6449, %v6450
    %v6452 = vrot.slane %v6451, 2
    %v6453 = vmax.f32 %v6451, %v6452
    %v6454 = vrot.slane %v6453, 1
    %v6455 = vmax.f32 %v6453, %v6454
    %v6456 = vsel %vm5048, %v4569, -inf
    %v6457 = vrot.slane %v6456, 4
    %v6458 = vmax.f32 %v6456, %v6457
    %v6459 = vrot.slane %v6458, 2
    %v6460 = vmax.f32 %v6458, %v6459
    %v6461 = vrot.slane %v6460, 1
    %v6462 = vmax.f32 %v6460, %v6461
    %v6463 = vsel %vm5048, %v4568, -inf
    %v6464 = vrot.slane %v6463, 4
    %v6465 = vmax.f32 %v6463, %v6464
    %v6466 = vrot.slane %v6465, 2
    %v6467 = vmax.f32 %v6465, %v6466
    %v6468 = vrot.slane %v6467, 1
    %v6469 = vmax.f32 %v6467, %v6468
    %v6470 = vsel %vm5048, %v4570, -inf
    %v6471 = vrot.slane %v6470, 4
    %v6472 = vmax.f32 %v6470, %v6471
    %v6473 = vrot.slane %v6472, 2
    %v6474 = vmax.f32 %v6472, %v6473
    %v6475 = vrot.slane %v6474, 1
    %v6476 = vmax.f32 %v6474, %v6475
    %v6477 = vsel %vm5048, %v4578, -inf
    %v6478 = vrot.slane %v6477, 4
    %v6479 = vmax.f32 %v6477, %v6478
    %v6480 = vrot.slane %v6479, 2
    %v6481 = vmax.f32 %v6479, %v6480
    %v6482 = vrot.slane %v6481, 1
    %v6483 = vmax.f32 %v6481, %v6482
    %v6484 = vsel %vm5048, %v4586, -inf
    %v6485 = vrot.slane %v6484, 4
    %v6486 = vmax.f32 %v6484, %v6485
    %v6487 = vrot.slane %v6486, 2
    %v6488 = vmax.f32 %v6486, %v6487
    %v6489 = vrot.slane %v6488, 1
    %v6490 = vmax.f32 %v6488, %v6489
    %v6491 = vsel %vm5048, %v4585, -inf
    %v6492 = vrot.slane %v6491, 4
    %v6493 = vmax.f32 %v6491, %v6492
    %v6494 = vrot.slane %v6493, 2
    %v6495 = vmax.f32 %v6493, %v6494
    %v6496 = vrot.slane %v6495, 1
    %v6497 = vmax.f32 %v6495, %v6496
    %v6498 = vsel %vm5048, %v4587, -inf
    %v6499 = vrot.slane %v6498, 4
    %v6500 = vmax.f32 %v6498, %v6499
    %v6501 = vrot.slane %v6500, 2
    %v6502 = vmax.f32 %v6500, %v6501
    %v6503 = vrot.slane %v6502, 1
    %v6504 = vmax.f32 %v6502, %v6503
    %v6505 = vsel %vm5048, %v4595, -inf
    %v6506 = vrot.slane %v6505, 4
    %v6507 = vmax.f32 %v6505, %v6506
    %v6508 = vrot.slane %v6507, 2
    %v6509 = vmax.f32 %v6507, %v6508
    %v6510 = vrot.slane %v6509, 1
    %v6511 = vmax.f32 %v6509, %v6510
    %v6512 = vsel %vm5048, %v4603, -inf
    %v6513 = vrot.slane %v6512, 4
    %v6514 = vmax.f32 %v6512, %v6513
    %v6515 = vrot.slane %v6514, 2
    %v6516 = vmax.f32 %v6514, %v6515
    %v6517 = vrot.slane %v6516, 1
    %v6518 = vmax.f32 %v6516, %v6517
    %v6519 = vsel %vm5048, %v4602, -inf
    %v6520 = vrot.slane %v6519, 4
    %v6521 = vmax.f32 %v6519, %v6520
    %v6522 = vrot.slane %v6521, 2
    %v6523 = vmax.f32 %v6521, %v6522
    %v6524 = vrot.slane %v6523, 1
    %v6525 = vmax.f32 %v6523, %v6524
    %v6526 = vsel %vm5048, %v4604, -inf
    %v6527 = vrot.slane %v6526, 4
    %v6528 = vmax.f32 %v6526, %v6527
    %v6529 = vrot.slane %v6528, 2
    %v6530 = vmax.f32 %v6528, %v6529
    %v6531 = vrot.slane %v6530, 1
    %v6532 = vmax.f32 %v6530, %v6531
    %v6533 = vsel %vm5048, %v4612, -inf
    %v6534 = vrot.slane %v6533, 4
    %v6535 = vmax.f32 %v6533, %v6534
    %v6536 = vrot.slane %v6535, 2
    %v6537 = vmax.f32 %v6535, %v6536
    %v6538 = vrot.slane %v6537, 1
    %v6539 = vmax.f32 %v6537, %v6538
    %v6540 = vsel %vm5048, %v4620, -inf
    %v6541 = vrot.slane %v6540, 4
    %v6542 = vmax.f32 %v6540, %v6541
    %v6543 = vrot.slane %v6542, 2
    %v6544 = vmax.f32 %v6542, %v6543
    %v6545 = vrot.slane %v6544, 1
    %v6546 = vmax.f32 %v6544, %v6545
    %v6547 = vsel %vm5048, %v4619, -inf
    %v6548 = vrot.slane %v6547, 4
    %v6549 = vmax.f32 %v6547, %v6548
    %v6550 = vrot.slane %v6549, 2
    %v6551 = vmax.f32 %v6549, %v6550
    %v6552 = vrot.slane %v6551, 1
    %v6553 = vmax.f32 %v6551, %v6552
    %v6554 = vsel %vm5048, %v4621, -inf
    %v6555 = vrot.slane %v6554, 4
    %v6556 = vmax.f32 %v6554, %v6555
    %v6557 = vrot.slane %v6556, 2
    %v6558 = vmax.f32 %v6556, %v6557
    %v6559 = vrot.slane %v6558, 1
    %v6560 = vmax.f32 %v6558, %v6559
    %v6561 = vsel %vm5048, %v4629, -inf
    %v6562 = vrot.slane %v6561, 4
    %v6563 = vmax.f32 %v6561, %v6562
    %v6564 = vrot.slane %v6563, 2
    %v6565 = vmax.f32 %v6563, %v6564
    %v6566 = vrot.slane %v6565, 1
    %v6567 = vmax.f32 %v6565, %v6566
    %v6568 = vsel %vm5048, %v4637, -inf
    %v6569 = vrot.slane %v6568, 4
    %v6570 = vmax.f32 %v6568, %v6569
    %v6571 = vrot.slane %v6570, 2
    %v6572 = vmax.f32 %v6570, %v6571
    %v6573 = vrot.slane %v6572, 1
    %v6574 = vmax.f32 %v6572, %v6573
    %v6575 = vsel %vm5048, %v4636, -inf
    %v6576 = vrot.slane %v6575, 4
    %v6577 = vmax.f32 %v6575, %v6576
    %v6578 = vrot.slane %v6577, 2
    %v6579 = vmax.f32 %v6577, %v6578
    %v6580 = vrot.slane %v6579, 1
    %v6581 = vmax.f32 %v6579, %v6580
    %v6582 = vsel %vm5048, %v4638, -inf
    %v6583 = vrot.slane %v6582, 4
    %v6584 = vmax.f32 %v6582, %v6583
    %v6585 = vrot.slane %v6584, 2
    %v6586 = vmax.f32 %v6584, %v6585
    %v6587 = vrot.slane %v6586, 1
    %v6588 = vmax.f32 %v6586, %v6587
    %v6589 = vsel %vm5048, %v4646, -inf
    %v6590 = vrot.slane %v6589, 4
    %v6591 = vmax.f32 %v6589, %v6590
    %v6592 = vrot.slane %v6591, 2
    %v6593 = vmax.f32 %v6591, %v6592
    %v6594 = vrot.slane %v6593, 1
    %v6595 = vmax.f32 %v6593, %v6594
    %v6596 = vsel %vm5048, %v4654, -inf
    %v6597 = vrot.slane %v6596, 4
    %v6598 = vmax.f32 %v6596, %v6597
    %v6599 = vrot.slane %v6598, 2
    %v6600 = vmax.f32 %v6598, %v6599
    %v6601 = vrot.slane %v6600, 1
    %v6602 = vmax.f32 %v6600, %v6601
    %v6603 = vsel %vm5048, %v4653, -inf
    %v6604 = vrot.slane %v6603, 4
    %v6605 = vmax.f32 %v6603, %v6604
    %v6606 = vrot.slane %v6605, 2
    %v6607 = vmax.f32 %v6605, %v6606
    %v6608 = vrot.slane %v6607, 1
    %v6609 = vmax.f32 %v6607, %v6608
    %v6610 = vsel %vm5048, %v4655, -inf
    %v6611 = vrot.slane %v6610, 4
    %v6612 = vmax.f32 %v6610, %v6611
    %v6613 = vrot.slane %v6612, 2
    %v6614 = vmax.f32 %v6612, %v6613
    %v6615 = vrot.slane %v6614, 1
    %v6616 = vmax.f32 %v6614, %v6615
    %v6617 = vsel %vm5048, %v4663, -inf
    %v6618 = vrot.slane %v6617, 4
    %v6619 = vmax.f32 %v6617, %v6618
    %v6620 = vrot.slane %v6619, 2
    %v6621 = vmax.f32 %v6619, %v6620
    %v6622 = vrot.slane %v6621, 1
    %v6623 = vmax.f32 %v6621, %v6622
    %v6624 = vsel %vm5048, %v4671, -inf
    %v6625 = vrot.slane %v6624, 4
    %v6626 = vmax.f32 %v6624, %v6625
    %v6627 = vrot.slane %v6626, 2
    %v6628 = vmax.f32 %v6626, %v6627
    %v6629 = vrot.slane %v6628, 1
    %v6630 = vmax.f32 %v6628, %v6629
    %v6631 = vsel %vm5048, %v4670, -inf
    %v6632 = vrot.slane %v6631, 4
    %v6633 = vmax.f32 %v6631, %v6632
    %v6634 = vrot.slane %v6633, 2
    %v6635 = vmax.f32 %v6633, %v6634
    %v6636 = vrot.slane %v6635, 1
    %v6637 = vmax.f32 %v6635, %v6636
    %v6638 = vsel %vm5048, %v4672, -inf
    %v6639 = vrot.slane %v6638, 4
    %v6640 = vmax.f32 %v6638, %v6639
    %v6641 = vrot.slane %v6640, 2
    %v6642 = vmax.f32 %v6640, %v6641
    %v6643 = vrot.slane %v6642, 1
    %v6644 = vmax.f32 %v6642, %v6643
    %v6645 = vsel %vm5048, %v4680, -inf
    %v6646 = vrot.slane %v6645, 4
    %v6647 = vmax.f32 %v6645, %v6646
    %v6648 = vrot.slane %v6647, 2
    %v6649 = vmax.f32 %v6647, %v6648
    %v6650 = vrot.slane %v6649, 1
    %v6651 = vmax.f32 %v6649, %v6650
    %v6652 = vsel %vm5048, %v4688, -inf
    %v6653 = vrot.slane %v6652, 4
    %v6654 = vmax.f32 %v6652, %v6653
    %v6655 = vrot.slane %v6654, 2
    %v6656 = vmax.f32 %v6654, %v6655
    %v6657 = vrot.slane %v6656, 1
    %v6658 = vmax.f32 %v6656, %v6657
    %v6659 = vsel %vm5048, %v4687, -inf
    %v6660 = vrot.slane %v6659, 4
    %v6661 = vmax.f32 %v6659, %v6660
    %v6662 = vrot.slane %v6661, 2
    %v6663 = vmax.f32 %v6661, %v6662
    %v6664 = vrot.slane %v6663, 1
    %v6665 = vmax.f32 %v6663, %v6664
    %v6666 = vsel %vm5048, %v4689, -inf
    %v6667 = vrot.slane %v6666, 4
    %v6668 = vmax.f32 %v6666, %v6667
    %v6669 = vrot.slane %v6668, 2
    %v6670 = vmax.f32 %v6668, %v6669
    %v6671 = vrot.slane %v6670, 1
    %v6672 = vmax.f32 %v6670, %v6671
    %v6673 = vsel %vm5048, %v4697, -inf
    %v6674 = vrot.slane %v6673, 4
    %v6675 = vmax.f32 %v6673, %v6674
    %v6676 = vrot.slane %v6675, 2
    %v6677 = vmax.f32 %v6675, %v6676
    %v6678 = vrot.slane %v6677, 1
    %v6679 = vmax.f32 %v6677, %v6678
    %v6680 = vsel %vm5048, %v4705, -inf
    %v6681 = vrot.slane %v6680, 4
    %v6682 = vmax.f32 %v6680, %v6681
    %v6683 = vrot.slane %v6682, 2
    %v6684 = vmax.f32 %v6682, %v6683
    %v6685 = vrot.slane %v6684, 1
    %v6686 = vmax.f32 %v6684, %v6685
    %v6687 = vsel %vm5048, %v4704, -inf
    %v6688 = vrot.slane %v6687, 4
    %v6689 = vmax.f32 %v6687, %v6688
    %v6690 = vrot.slane %v6689, 2
    %v6691 = vmax.f32 %v6689, %v6690
    %v6692 = vrot.slane %v6691, 1
    %v6693 = vmax.f32 %v6691, %v6692
    %v6694 = vsel %vm5048, %v4706, -inf
    %v6695 = vrot.slane %v6694, 4
    %v6696 = vmax.f32 %v6694, %v6695
    %v6697 = vrot.slane %v6696, 2
    %v6698 = vmax.f32 %v6696, %v6697
    %v6699 = vrot.slane %v6698, 1
    %v6700 = vmax.f32 %v6698, %v6699
    %v6701 = vsel %vm5048, %v4714, -inf
    %v6702 = vrot.slane %v6701, 4
    %v6703 = vmax.f32 %v6701, %v6702
    %v6704 = vrot.slane %v6703, 2
    %v6705 = vmax.f32 %v6703, %v6704
    %v6706 = vrot.slane %v6705, 1
    %v6707 = vmax.f32 %v6705, %v6706
    %v6708 = vsel %vm5048, %v4722, -inf
    %v6709 = vrot.slane %v6708, 4
    %v6710 = vmax.f32 %v6708, %v6709
    %v6711 = vrot.slane %v6710, 2
    %v6712 = vmax.f32 %v6710, %v6711
    %v6713 = vrot.slane %v6712, 1
    %v6714 = vmax.f32 %v6712, %v6713
    %v6715 = vsel %vm5048, %v4721, -inf
    %v6716 = vrot.slane %v6715, 4
    %v6717 = vmax.f32 %v6715, %v6716
    %v6718 = vrot.slane %v6717, 2
    %v6719 = vmax.f32 %v6717, %v6718
    %v6720 = vrot.slane %v6719, 1
    %v6721 = vmax.f32 %v6719, %v6720
    %v6722 = vsel %vm5048, %v4723, -inf
    %v6723 = vrot.slane %v6722, 4
    %v6724 = vmax.f32 %v6722, %v6723
    %v6725 = vrot.slane %v6724, 2
    %v6726 = vmax.f32 %v6724, %v6725
    %v6727 = vrot.slane %v6726, 1
    %v6728 = vmax.f32 %v6726, %v6727
    %v6729 = vsel %vm5048, %v4731, -inf
    %v6730 = vrot.slane %v6729, 4
    %v6731 = vmax.f32 %v6729, %v6730
    %v6732 = vrot.slane %v6731, 2
    %v6733 = vmax.f32 %v6731, %v6732
    %v6734 = vrot.slane %v6733, 1
    %v6735 = vmax.f32 %v6733, %v6734
    %v6736 = vsel %vm5048, %v4739, -inf
    %v6737 = vrot.slane %v6736, 4
    %v6738 = vmax.f32 %v6736, %v6737
    %v6739 = vrot.slane %v6738, 2
    %v6740 = vmax.f32 %v6738, %v6739
    %v6741 = vrot.slane %v6740, 1
    %v6742 = vmax.f32 %v6740, %v6741
    %v6743 = vsel %vm5048, %v4738, -inf
    %v6744 = vrot.slane %v6743, 4
    %v6745 = vmax.f32 %v6743, %v6744
    %v6746 = vrot.slane %v6745, 2
    %v6747 = vmax.f32 %v6745, %v6746
    %v6748 = vrot.slane %v6747, 1
    %v6749 = vmax.f32 %v6747, %v6748
    %v6750 = vsel %vm5048, %v4740, -inf
    %v6751 = vrot.slane %v6750, 4
    %v6752 = vmax.f32 %v6750, %v6751
    %v6753 = vrot.slane %v6752, 2
    %v6754 = vmax.f32 %v6752, %v6753
    %v6755 = vrot.slane %v6754, 1
    %v6756 = vmax.f32 %v6754, %v6755
    %v6757 = vsel %vm5048, %v4748, -inf
    %v6758 = vrot.slane %v6757, 4
    %v6759 = vmax.f32 %v6757, %v6758
    %v6760 = vrot.slane %v6759, 2
    %v6761 = vmax.f32 %v6759, %v6760
    %v6762 = vrot.slane %v6761, 1
    %v6763 = vmax.f32 %v6761, %v6762
    %v6764 = vsel %vm5048, %v4756, -inf
    %v6765 = vrot.slane %v6764, 4
    %v6766 = vmax.f32 %v6764, %v6765
    %v6767 = vrot.slane %v6766, 2
    %v6768 = vmax.f32 %v6766, %v6767
    %v6769 = vrot.slane %v6768, 1
    %v6770 = vmax.f32 %v6768, %v6769
    %v6771 = vsel %vm5048, %v4755, -inf
    %v6772 = vrot.slane %v6771, 4
    %v6773 = vmax.f32 %v6771, %v6772
    %v6774 = vrot.slane %v6773, 2
    %v6775 = vmax.f32 %v6773, %v6774
    %v6776 = vrot.slane %v6775, 1
    %v6777 = vmax.f32 %v6775, %v6776
    %v6778 = vsel %vm5048, %v4757, -inf
    %v6779 = vrot.slane %v6778, 4
    %v6780 = vmax.f32 %v6778, %v6779
    %v6781 = vrot.slane %v6780, 2
    %v6782 = vmax.f32 %v6780, %v6781
    %v6783 = vrot.slane %v6782, 1
    %v6784 = vmax.f32 %v6782, %v6783
    %v6785 = vsel %vm5048, %v4765, -inf
    %v6786 = vrot.slane %v6785, 4
    %v6787 = vmax.f32 %v6785, %v6786
    %v6788 = vrot.slane %v6787, 2
    %v6789 = vmax.f32 %v6787, %v6788
    %v6790 = vrot.slane %v6789, 1
    %v6791 = vmax.f32 %v6789, %v6790
    %v6792 = vsel %vm5048, %v4773, -inf
    %v6793 = vrot.slane %v6792, 4
    %v6794 = vmax.f32 %v6792, %v6793
    %v6795 = vrot.slane %v6794, 2
    %v6796 = vmax.f32 %v6794, %v6795
    %v6797 = vrot.slane %v6796, 1
    %v6798 = vmax.f32 %v6796, %v6797
    %v6799 = vsel %vm5048, %v4772, -inf
    %v6800 = vrot.slane %v6799, 4
    %v6801 = vmax.f32 %v6799, %v6800
    %v6802 = vrot.slane %v6801, 2
    %v6803 = vmax.f32 %v6801, %v6802
    %v6804 = vrot.slane %v6803, 1
    %v6805 = vmax.f32 %v6803, %v6804
    %v6806 = vsel %vm5048, %v4774, -inf
    %v6807 = vrot.slane %v6806, 4
    %v6808 = vmax.f32 %v6806, %v6807
    %v6809 = vrot.slane %v6808, 2
    %v6810 = vmax.f32 %v6808, %v6809
    %v6811 = vrot.slane %v6810, 1
    %v6812 = vmax.f32 %v6810, %v6811
    %v6813 = vsel %vm5048, %v4782, -inf
    %v6814 = vrot.slane %v6813, 4
    %v6815 = vmax.f32 %v6813, %v6814
    %v6816 = vrot.slane %v6815, 2
    %v6817 = vmax.f32 %v6815, %v6816
    %v6818 = vrot.slane %v6817, 1
    %v6819 = vmax.f32 %v6817, %v6818
    %v6820 = vsel %vm5048, %v4790, -inf
    %v6821 = vrot.slane %v6820, 4
    %v6822 = vmax.f32 %v6820, %v6821
    %v6823 = vrot.slane %v6822, 2
    %v6824 = vmax.f32 %v6822, %v6823
    %v6825 = vrot.slane %v6824, 1
    %v6826 = vmax.f32 %v6824, %v6825
    %v6827 = vsel %vm5048, %v4789, -inf
    %v6828 = vrot.slane %v6827, 4
    %v6829 = vmax.f32 %v6827, %v6828
    %v6830 = vrot.slane %v6829, 2
    %v6831 = vmax.f32 %v6829, %v6830
    %v6832 = vrot.slane %v6831, 1
    %v6833 = vmax.f32 %v6831, %v6832
    %v6834 = vsel %vm5048, %v4791, -inf
    %v6835 = vrot.slane %v6834, 4
    %v6836 = vmax.f32 %v6834, %v6835
    %v6837 = vrot.slane %v6836, 2
    %v6838 = vmax.f32 %v6836, %v6837
    %v6839 = vrot.slane %v6838, 1
    %v6840 = vmax.f32 %v6838, %v6839
    %vm6841 = vcmask 261120
    %v6842 = vsel %vm6841, %v5055, -inf
    %v6843 = vsel %vm6841, %v5111, -inf
    %v6844 = vmax.f32 %v6842, %v6843
    %v6845 = vsel %vm6841, %v5062, -inf
    %v6846 = vsel %vm6841, %v5118, -inf
    %v6847 = vmax.f32 %v6845, %v6846
    %v6848 = vsel %vm6841, %v5069, -inf
    %v6849 = vsel %vm6841, %v5125, -inf
    %v6850 = vmax.f32 %v6848, %v6849
    %v6851 = vsel %vm6841, %v5076, -inf
    %v6852 = vsel %vm6841, %v5132, -inf
    %v6853 = vmax.f32 %v6851, %v6852
    %v6854 = vsel %vm6841, %v5083, -inf
    %v6855 = vsel %vm6841, %v5139, -inf
    %v6856 = vmax.f32 %v6854, %v6855
    %v6857 = vsel %vm6841, %v5090, -inf
    %v6858 = vsel %vm6841, %v5146, -inf
    %v6859 = vmax.f32 %v6857, %v6858
    %v6860 = vsel %vm6841, %v5097, -inf
    %v6861 = vsel %vm6841, %v5153, -inf
    %v6862 = vmax.f32 %v6860, %v6861
    %v6863 = vsel %vm6841, %v5104, -inf
    %v6864 = vsel %vm6841, %v5160, -inf
    %v6865 = vmax.f32 %v6863, %v6864
    %v6866 = vsel %vm6841, %v5167, -inf
    %v6867 = vsel %vm6841, %v5223, -inf
    %v6868 = vmax.f32 %v6866, %v6867
    %v6869 = vsel %vm6841, %v5174, -inf
    %v6870 = vsel %vm6841, %v5230, -inf
    %v6871 = vmax.f32 %v6869, %v6870
    %v6872 = vsel %vm6841, %v5181, -inf
    %v6873 = vsel %vm6841, %v5237, -inf
    %v6874 = vmax.f32 %v6872, %v6873
    %v6875 = vsel %vm6841, %v5188, -inf
    %v6876 = vsel %vm6841, %v5244, -inf
    %v6877 = vmax.f32 %v6875, %v6876
    %v6878 = vsel %vm6841, %v5195, -inf
    %v6879 = vsel %vm6841, %v5251, -inf
    %v6880 = vmax.f32 %v6878, %v6879
    %v6881 = vsel %vm6841, %v5202, -inf
    %v6882 = vsel %vm6841, %v5258, -inf
    %v6883 = vmax.f32 %v6881, %v6882
    %v6884 = vsel %vm6841, %v5209, -inf
    %v6885 = vsel %vm6841, %v5265, -inf
    %v6886 = vmax.f32 %v6884, %v6885
    %v6887 = vsel %vm6841, %v5216, -inf
    %v6888 = vsel %vm6841, %v5272, -inf
    %v6889 = vmax.f32 %v6887, %v6888
    %v6890 = vsel %vm6841, %v5279, -inf
    %v6891 = vsel %vm6841, %v5335, -inf
    %v6892 = vmax.f32 %v6890, %v6891
    %v6893 = vsel %vm6841, %v5286, -inf
    %v6894 = vsel %vm6841, %v5342, -inf
    %v6895 = vmax.f32 %v6893, %v6894
    %v6896 = vsel %vm6841, %v5293, -inf
    %v6897 = vsel %vm6841, %v5349, -inf
    %v6898 = vmax.f32 %v6896, %v6897
    %v6899 = vsel %vm6841, %v5300, -inf
    %v6900 = vsel %vm6841, %v5356, -inf
    %v6901 = vmax.f32 %v6899, %v6900
    %v6902 = vsel %vm6841, %v5307, -inf
    %v6903 = vsel %vm6841, %v5363, -inf
    %v6904 = vmax.f32 %v6902, %v6903
    %v6905 = vsel %vm6841, %v5314, -inf
    %v6906 = vsel %vm6841, %v5370, -inf
    %v6907 = vmax.f32 %v6905, %v6906
    %v6908 = vsel %vm6841, %v5321, -inf
    %v6909 = vsel %vm6841, %v5377, -inf
    %v6910 = vmax.f32 %v6908, %v6909
    %v6911 = vsel %vm6841, %v5328, -inf
    %v6912 = vsel %vm6841, %v5384, -inf
    %v6913 = vmax.f32 %v6911, %v6912
    %v6914 = vsel %vm6841, %v5391, -inf
    %v6915 = vsel %vm6841, %v5447, -inf
    %v6916 = vmax.f32 %v6914, %v6915
    %v6917 = vsel %vm6841, %v5398, -inf
    %v6918 = vsel %vm6841, %v5454, -inf
    %v6919 = vmax.f32 %v6917, %v6918
    %v6920 = vsel %vm6841, %v5405, -inf
    %v6921 = vsel %vm6841, %v5461, -inf
    %v6922 = vmax.f32 %v6920, %v6921
    %v6923 = vsel %vm6841, %v5412, -inf
    %v6924 = vsel %vm6841, %v5468, -inf
    %v6925 = vmax.f32 %v6923, %v6924
    %v6926 = vsel %vm6841, %v5419, -inf
    %v6927 = vsel %vm6841, %v5475, -inf
    %v6928 = vmax.f32 %v6926, %v6927
    %v6929 = vsel %vm6841, %v5426, -inf
    %v6930 = vsel %vm6841, %v5482, -inf
    %v6931 = vmax.f32 %v6929, %v6930
    %v6932 = vsel %vm6841, %v5433, -inf
    %v6933 = vsel %vm6841, %v5489, -inf
    %v6934 = vmax.f32 %v6932, %v6933
    %v6935 = vsel %vm6841, %v5440, -inf
    %v6936 = vsel %vm6841, %v5496, -inf
    %v6937 = vmax.f32 %v6935, %v6936
    %v6938 = vsel %vm6841, %v5503, -inf
    %v6939 = vsel %vm6841, %v5559, -inf
    %v6940 = vmax.f32 %v6938, %v6939
    %v6941 = vsel %vm6841, %v5510, -inf
    %v6942 = vsel %vm6841, %v5566, -inf
    %v6943 = vmax.f32 %v6941, %v6942
    %v6944 = vsel %vm6841, %v5517, -inf
    %v6945 = vsel %vm6841, %v5573, -inf
    %v6946 = vmax.f32 %v6944, %v6945
    %v6947 = vsel %vm6841, %v5524, -inf
    %v6948 = vsel %vm6841, %v5580, -inf
    %v6949 = vmax.f32 %v6947, %v6948
    %v6950 = vsel %vm6841, %v5531, -inf
    %v6951 = vsel %vm6841, %v5587, -inf
    %v6952 = vmax.f32 %v6950, %v6951
    %v6953 = vsel %vm6841, %v5538, -inf
    %v6954 = vsel %vm6841, %v5594, -inf
    %v6955 = vmax.f32 %v6953, %v6954
    %v6956 = vsel %vm6841, %v5545, -inf
    %v6957 = vsel %vm6841, %v5601, -inf
    %v6958 = vmax.f32 %v6956, %v6957
    %v6959 = vsel %vm6841, %v5552, -inf
    %v6960 = vsel %vm6841, %v5608, -inf
    %v6961 = vmax.f32 %v6959, %v6960
    %v6962 = vsel %vm6841, %v5615, -inf
    %v6963 = vsel %vm6841, %v5671, -inf
    %v6964 = vmax.f32 %v6962, %v6963
    %v6965 = vsel %vm6841, %v5622, -inf
    %v6966 = vsel %vm6841, %v5678, -inf
    %v6967 = vmax.f32 %v6965, %v6966
    %v6968 = vsel %vm6841, %v5629, -inf
    %v6969 = vsel %vm6841, %v5685, -inf
    %v6970 = vmax.f32 %v6968, %v6969
    %v6971 = vsel %vm6841, %v5636, -inf
    %v6972 = vsel %vm6841, %v5692, -inf
    %v6973 = vmax.f32 %v6971, %v6972
    %v6974 = vsel %vm6841, %v5643, -inf
    %v6975 = vsel %vm6841, %v5699, -inf
    %v6976 = vmax.f32 %v6974, %v6975
    %v6977 = vsel %vm6841, %v5650, -inf
    %v6978 = vsel %vm6841, %v5706, -inf
    %v6979 = vmax.f32 %v6977, %v6978
    %v6980 = vsel %vm6841, %v5657, -inf
    %v6981 = vsel %vm6841, %v5713, -inf
    %v6982 = vmax.f32 %v6980, %v6981
    %v6983 = vsel %vm6841, %v5664, -inf
    %v6984 = vsel %vm6841, %v5720, -inf
    %v6985 = vmax.f32 %v6983, %v6984
    %v6986 = vsel %vm6841, %v5727, -inf
    %v6987 = vsel %vm6841, %v5783, -inf
    %v6988 = vmax.f32 %v6986, %v6987
    %v6989 = vsel %vm6841, %v5734, -inf
    %v6990 = vsel %vm6841, %v5790, -inf
    %v6991 = vmax.f32 %v6989, %v6990
    %v6992 = vsel %vm6841, %v5741, -inf
    %v6993 = vsel %vm6841, %v5797, -inf
    %v6994 = vmax.f32 %v6992, %v6993
    %v6995 = vsel %vm6841, %v5748, -inf
    %v6996 = vsel %vm6841, %v5804, -inf
    %v6997 = vmax.f32 %v6995, %v6996
    %v6998 = vsel %vm6841, %v5755, -inf
    %v6999 = vsel %vm6841, %v5811, -inf
    %v7000 = vmax.f32 %v6998, %v6999
    %v7001 = vsel %vm6841, %v5762, -inf
    %v7002 = vsel %vm6841, %v5818, -inf
    %v7003 = vmax.f32 %v7001, %v7002
    %v7004 = vsel %vm6841, %v5769, -inf
    %v7005 = vsel %vm6841, %v5825, -inf
    %v7006 = vmax.f32 %v7004, %v7005
    %v7007 = vsel %vm6841, %v5776, -inf
    %v7008 = vsel %vm6841, %v5832, -inf
    %v7009 = vmax.f32 %v7007, %v7008
    %v7010 = vsel %vm6841, %v5839, -inf
    %v7011 = vsel %vm6841, %v5895, -inf
    %v7012 = vmax.f32 %v7010, %v7011
    %v7013 = vsel %vm6841, %v5846, -inf
    %v7014 = vsel %vm6841, %v5902, -inf
    %v7015 = vmax.f32 %v7013, %v7014
    %v7016 = vsel %vm6841, %v5853, -inf
    %v7017 = vsel %vm6841, %v5909, -inf
    %v7018 = vmax.f32 %v7016, %v7017
    %v7019 = vsel %vm6841, %v5860, -inf
    %v7020 = vsel %vm6841, %v5916, -inf
    %v7021 = vmax.f32 %v7019, %v7020
    %v7022 = vsel %vm6841, %v5867, -inf
    %v7023 = vsel %vm6841, %v5923, -inf
    %v7024 = vmax.f32 %v7022, %v7023
    %v7025 = vsel %vm6841, %v5874, -inf
    %v7026 = vsel %vm6841, %v5930, -inf
    %v7027 = vmax.f32 %v7025, %v7026
    %v7028 = vsel %vm6841, %v5881, -inf
    %v7029 = vsel %vm6841, %v5937, -inf
    %v7030 = vmax.f32 %v7028, %v7029
    %v7031 = vsel %vm6841, %v5888, -inf
    %v7032 = vsel %vm6841, %v5944, -inf
    %v7033 = vmax.f32 %v7031, %v7032
    %v7034 = vsel %vm6841, %v5951, -inf
    %v7035 = vsel %vm6841, %v6007, -inf
    %v7036 = vmax.f32 %v7034, %v7035
    %v7037 = vsel %vm6841, %v5958, -inf
    %v7038 = vsel %vm6841, %v6014, -inf
    %v7039 = vmax.f32 %v7037, %v7038
    %v7040 = vsel %vm6841, %v5965, -inf
    %v7041 = vsel %vm6841, %v6021, -inf
    %v7042 = vmax.f32 %v7040, %v7041
    %v7043 = vsel %vm6841, %v5972, -inf
    %v7044 = vsel %vm6841, %v6028, -inf
    %v7045 = vmax.f32 %v7043, %v7044
    %v7046 = vsel %vm6841, %v5979, -inf
    %v7047 = vsel %vm6841, %v6035, -inf
    %v7048 = vmax.f32 %v7046, %v7047
    %v7049 = vsel %vm6841, %v5986, -inf
    %v7050 = vsel %vm6841, %v6042, -inf
    %v7051 = vmax.f32 %v7049, %v7050
    %v7052 = vsel %vm6841, %v5993, -inf
    %v7053 = vsel %vm6841, %v6049, -inf
    %v7054 = vmax.f32 %v7052, %v7053
    %v7055 = vsel %vm6841, %v6000, -inf
    %v7056 = vsel %vm6841, %v6056, -inf
    %v7057 = vmax.f32 %v7055, %v7056
    %v7058 = vsel %vm6841, %v6063, -inf
    %v7059 = vsel %vm6841, %v6119, -inf
    %v7060 = vmax.f32 %v7058, %v7059
    %v7061 = vsel %vm6841, %v6070, -inf
    %v7062 = vsel %vm6841, %v6126, -inf
    %v7063 = vmax.f32 %v7061, %v7062
    %v7064 = vsel %vm6841, %v6077, -inf
    %v7065 = vsel %vm6841, %v6133, -inf
    %v7066 = vmax.f32 %v7064, %v7065
    %v7067 = vsel %vm6841, %v6084, -inf
    %v7068 = vsel %vm6841, %v6140, -inf
    %v7069 = vmax.f32 %v7067, %v7068
    %v7070 = vsel %vm6841, %v6091, -inf
    %v7071 = vsel %vm6841, %v6147, -inf
    %v7072 = vmax.f32 %v7070, %v7071
    %v7073 = vsel %vm6841, %v6098, -inf
    %v7074 = vsel %vm6841, %v6154, -inf
    %v7075 = vmax.f32 %v7073, %v7074
    %v7076 = vsel %vm6841, %v6105, -inf
    %v7077 = vsel %vm6841, %v6161, -inf
    %v7078 = vmax.f32 %v7076, %v7077
    %v7079 = vsel %vm6841, %v6112, -inf
    %v7080 = vsel %vm6841, %v6168, -inf
    %v7081 = vmax.f32 %v7079, %v7080
    %v7082 = vsel %vm6841, %v6175, -inf
    %v7083 = vsel %vm6841, %v6231, -inf
    %v7084 = vmax.f32 %v7082, %v7083
    %v7085 = vsel %vm6841, %v6182, -inf
    %v7086 = vsel %vm6841, %v6238, -inf
    %v7087 = vmax.f32 %v7085, %v7086
    %v7088 = vsel %vm6841, %v6189, -inf
    %v7089 = vsel %vm6841, %v6245, -inf
    %v7090 = vmax.f32 %v7088, %v7089
    %v7091 = vsel %vm6841, %v6196, -inf
    %v7092 = vsel %vm6841, %v6252, -inf
    %v7093 = vmax.f32 %v7091, %v7092
    %v7094 = vsel %vm6841, %v6203, -inf
    %v7095 = vsel %vm6841, %v6259, -inf
    %v7096 = vmax.f32 %v7094, %v7095
    %v7097 = vsel %vm6841, %v6210, -inf
    %v7098 = vsel %vm6841, %v6266, -inf
    %v7099 = vmax.f32 %v7097, %v7098
    %v7100 = vsel %vm6841, %v6217, -inf
    %v7101 = vsel %vm6841, %v6273, -inf
    %v7102 = vmax.f32 %v7100, %v7101
    %v7103 = vsel %vm6841, %v6224, -inf
    %v7104 = vsel %vm6841, %v6280, -inf
    %v7105 = vmax.f32 %v7103, %v7104
    %v7106 = vsel %vm6841, %v6287, -inf
    %v7107 = vsel %vm6841, %v6343, -inf
    %v7108 = vmax.f32 %v7106, %v7107
    %v7109 = vsel %vm6841, %v6294, -inf
    %v7110 = vsel %vm6841, %v6350, -inf
    %v7111 = vmax.f32 %v7109, %v7110
    %v7112 = vsel %vm6841, %v6301, -inf
    %v7113 = vsel %vm6841, %v6357, -inf
    %v7114 = vmax.f32 %v7112, %v7113
    %v7115 = vsel %vm6841, %v6308, -inf
    %v7116 = vsel %vm6841, %v6364, -inf
    %v7117 = vmax.f32 %v7115, %v7116
    %v7118 = vsel %vm6841, %v6315, -inf
    %v7119 = vsel %vm6841, %v6371, -inf
    %v7120 = vmax.f32 %v7118, %v7119
    %v7121 = vsel %vm6841, %v6322, -inf
    %v7122 = vsel %vm6841, %v6378, -inf
    %v7123 = vmax.f32 %v7121, %v7122
    %v7124 = vsel %vm6841, %v6329, -inf
    %v7125 = vsel %vm6841, %v6385, -inf
    %v7126 = vmax.f32 %v7124, %v7125
    %v7127 = vsel %vm6841, %v6336, -inf
    %v7128 = vsel %vm6841, %v6392, -inf
    %v7129 = vmax.f32 %v7127, %v7128
    %v7130 = vsel %vm6841, %v6399, -inf
    %v7131 = vsel %vm6841, %v6455, -inf
    %v7132 = vmax.f32 %v7130, %v7131
    %v7133 = vsel %vm6841, %v6406, -inf
    %v7134 = vsel %vm6841, %v6462, -inf
    %v7135 = vmax.f32 %v7133, %v7134
    %v7136 = vsel %vm6841, %v6413, -inf
    %v7137 = vsel %vm6841, %v6469, -inf
    %v7138 = vmax.f32 %v7136, %v7137
    %v7139 = vsel %vm6841, %v6420, -inf
    %v7140 = vsel %vm6841, %v6476, -inf
    %v7141 = vmax.f32 %v7139, %v7140
    %v7142 = vsel %vm6841, %v6427, -inf
    %v7143 = vsel %vm6841, %v6483, -inf
    %v7144 = vmax.f32 %v7142, %v7143
    %v7145 = vsel %vm6841, %v6434, -inf
    %v7146 = vsel %vm6841, %v6490, -inf
    %v7147 = vmax.f32 %v7145, %v7146
    %v7148 = vsel %vm6841, %v6441, -inf
    %v7149 = vsel %vm6841, %v6497, -inf
    %v7150 = vmax.f32 %v7148, %v7149
    %v7151 = vsel %vm6841, %v6448, -inf
    %v7152 = vsel %vm6841, %v6504, -inf
    %v7153 = vmax.f32 %v7151, %v7152
    %v7154 = vsel %vm6841, %v6511, -inf
    %v7155 = vsel %vm6841, %v6567, -inf
    %v7156 = vmax.f32 %v7154, %v7155
    %v7157 = vsel %vm6841, %v6518, -inf
    %v7158 = vsel %vm6841, %v6574, -inf
    %v7159 = vmax.f32 %v7157, %v7158
    %v7160 = vsel %vm6841, %v6525, -inf
    %v7161 = vsel %vm6841, %v6581, -inf
    %v7162 = vmax.f32 %v7160, %v7161
    %v7163 = vsel %vm6841, %v6532, -inf
    %v7164 = vsel %vm6841, %v6588, -inf
    %v7165 = vmax.f32 %v7163, %v7164
    %v7166 = vsel %vm6841, %v6539, -inf
    %v7167 = vsel %vm6841, %v6595, -inf
    %v7168 = vmax.f32 %v7166, %v7167
    %v7169 = vsel %vm6841, %v6546, -inf
    %v7170 = vsel %vm6841, %v6602, -inf
    %v7171 = vmax.f32 %v7169, %v7170
    %v7172 = vsel %vm6841, %v6553, -inf
    %v7173 = vsel %vm6841, %v6609, -inf
    %v7174 = vmax.f32 %v7172, %v7173
    %v7175 = vsel %vm6841, %v6560, -inf
    %v7176 = vsel %vm6841, %v6616, -inf
    %v7177 = vmax.f32 %v7175, %v7176
    %v7178 = vsel %vm6841, %v6623, -inf
    %v7179 = vsel %vm6841, %v6679, -inf
    %v7180 = vmax.f32 %v7178, %v7179
    %v7181 = vsel %vm6841, %v6630, -inf
    %v7182 = vsel %vm6841, %v6686, -inf
    %v7183 = vmax.f32 %v7181, %v7182
    %v7184 = vsel %vm6841, %v6637, -inf
    %v7185 = vsel %vm6841, %v6693, -inf
    %v7186 = vmax.f32 %v7184, %v7185
    %v7187 = vsel %vm6841, %v6644, -inf
    %v7188 = vsel %vm6841, %v6700, -inf
    %v7189 = vmax.f32 %v7187, %v7188
    %v7190 = vsel %vm6841, %v6651, -inf
    %v7191 = vsel %vm6841, %v6707, -inf
    %v7192 = vmax.f32 %v7190, %v7191
    %v7193 = vsel %vm6841, %v6658, -inf
    %v7194 = vsel %vm6841, %v6714, -inf
    %v7195 = vmax.f32 %v7193, %v7194
    %v7196 = vsel %vm6841, %v6665, -inf
    %v7197 = vsel %vm6841, %v6721, -inf
    %v7198 = vmax.f32 %v7196, %v7197
    %v7199 = vsel %vm6841, %v6672, -inf
    %v7200 = vsel %vm6841, %v6728, -inf
    %v7201 = vmax.f32 %v7199, %v7200
    %v7202 = vsel %vm6841, %v6735, -inf
    %v7203 = vsel %vm6841, %v6791, -inf
    %v7204 = vmax.f32 %v7202, %v7203
    %v7205 = vsel %vm6841, %v6742, -inf
    %v7206 = vsel %vm6841, %v6798, -inf
    %v7207 = vmax.f32 %v7205, %v7206
    %v7208 = vsel %vm6841, %v6749, -inf
    %v7209 = vsel %vm6841, %v6805, -inf
    %v7210 = vmax.f32 %v7208, %v7209
    %v7211 = vsel %vm6841, %v6756, -inf
    %v7212 = vsel %vm6841, %v6812, -inf
    %v7213 = vmax.f32 %v7211, %v7212
    %v7214 = vsel %vm6841, %v6763, -inf
    %v7215 = vsel %vm6841, %v6819, -inf
    %v7216 = vmax.f32 %v7214, %v7215
    %v7217 = vsel %vm6841, %v6770, -inf
    %v7218 = vsel %vm6841, %v6826, -inf
    %v7219 = vmax.f32 %v7217, %v7218
    %v7220 = vsel %vm6841, %v6777, -inf
    %v7221 = vsel %vm6841, %v6833, -inf
    %v7222 = vmax.f32 %v7220, %v7221
    %v7223 = vsel %vm6841, %v6784, -inf
    %v7224 = vsel %vm6841, %v6840, -inf
    %v7225 = vmax.f32 %v7223, %v7224
    %v7226 = vld [vmem:[#allocation5] sm:$0xff]
    %v7227 = vld [vmem:[#allocation5 + $0x8] sm:$0xff]
    %v7228 = vld [vmem:[#allocation5 + $0x10] sm:$0xff]
    %v7229 = vld [vmem:[#allocation5 + $0x18] sm:$0xff]
    %v7230 = vld [vmem:[#allocation5 + $0x20] sm:$0xff]
    %v7231 = vld [vmem:[#allocation5 + $0x28] sm:$0xff]
    %v7232 = vld [vmem:[#allocation5 + $0x30] sm:$0xff]
    %v7233 = vld [vmem:[#allocation5 + $0x38] sm:$0xff]
    %v7234 = vld [vmem:[#allocation5 + $0x40] sm:$0xff]
    %v7235 = vld [vmem:[#allocation5 + $0x48] sm:$0xff]
    %v7236 = vld [vmem:[#allocation5 + $0x50] sm:$0xff]
    %v7237 = vld [vmem:[#allocation5 + $0x58] sm:$0xff]
    %v7238 = vld [vmem:[#allocation5 + $0x60] sm:$0xff]
    %v7239 = vld [vmem:[#allocation5 + $0x68] sm:$0xff]
    %v7240 = vld [vmem:[#allocation5 + $0x70] sm:$0xff]
    %v7241 = vld [vmem:[#allocation5 + $0x78] sm:$0xff]
    %v7242 = vld [vmem:[#allocation5 + $0x80] sm:$0xff]
    %v7243 = vld [vmem:[#allocation5 + $0x88] sm:$0xff]
    %v7244 = vld [vmem:[#allocation5 + $0x90] sm:$0xff]
    %v7245 = vld [vmem:[#allocation5 + $0x98] sm:$0xff]
    %v7246 = vld [vmem:[#allocation5 + $0xa0] sm:$0xff]
    %v7247 = vld [vmem:[#allocation5 + $0xa8] sm:$0xff]
    %v7248 = vld [vmem:[#allocation5 + $0xb0] sm:$0xff]
    %v7249 = vld [vmem:[#allocation5 + $0xb8] sm:$0xff]
    %v7250 = vld [vmem:[#allocation5 + $0xc0] sm:$0xff]
    %v7251 = vld [vmem:[#allocation5 + $0xc8] sm:$0xff]
    %v7252 = vld [vmem:[#allocation5 + $0xd0] sm:$0xff]
    %v7253 = vld [vmem:[#allocation5 + $0xd8] sm:$0xff]
    %v7254 = vld [vmem:[#allocation5 + $0xe0] sm:$0xff]
    %v7255 = vld [vmem:[#allocation5 + $0xe8] sm:$0xff]
    %v7256 = vld [vmem:[#allocation5 + $0xf0] sm:$0xff]
    %v7257 = vld [vmem:[#allocation5 + $0xf8] sm:$0xff]
    %v7258 = vld [vmem:[#allocation5 + $0x100] sm:$0xff]
    %v7259 = vld [vmem:[#allocation5 + $0x108] sm:$0xff]
    %v7260 = vld [vmem:[#allocation5 + $0x110] sm:$0xff]
    %v7261 = vld [vmem:[#allocation5 + $0x118] sm:$0xff]
    %v7262 = vld [vmem:[#allocation7] sm:$0x1]
    %vm7391 = vcmask 1041409
    %v7392 = vsel %vm7391, %v6847, %v6844
    %vm7393 = vcmask 1042434
    %v7394 = vsel %vm7393, %v6850, %v7392
    %vm7395 = vcmask 1043459
    %v7396 = vsel %vm7395, %v6853, %v7394
    %vm7397 = vcmask 1044484
    %v7398 = vsel %vm7397, %v6856, %v7396
    %vm7399 = vcmask 1045509
    %v7400 = vsel %vm7399, %v6859, %v7398
    %vm7401 = vcmask 1046534
    %v7402 = vsel %vm7401, %v6862, %v7400
    %vm7403 = vcmask 1047559
    %v7404 = vsel %vm7403, %v6865, %v7402
    %v7405 = vsel %vm7391, %v6871, %v6868
    %v7406 = vsel %vm7393, %v6874, %v7405
    %v7407 = vsel %vm7395, %v6877, %v7406
    %v7408 = vsel %vm7397, %v6880, %v7407
    %v7409 = vsel %vm7399, %v6883, %v7408
    %v7410 = vsel %vm7401, %v6886, %v7409
    %v7411 = vsel %vm7403, %v6889, %v7410
    %v7412 = vsel %vm7391, %v6895, %v6892
    %v7413 = vsel %vm7393, %v6898, %v7412
    %v7414 = vsel %vm7395, %v6901, %v7413
    %v7415 = vsel %vm7397, %v6904, %v7414
    %v7416 = vsel %vm7399, %v6907, %v7415
    %v7417 = vsel %vm7401, %v6910, %v7416
    %v7418 = vsel %vm7403, %v6913, %v7417
    %v7419 = vsel %vm7391, %v6919, %v6916
    %v7420 = vsel %vm7393, %v6922, %v7419
    %v7421 = vsel %vm7395, %v6925, %v7420
    %v7422 = vsel %vm7397, %v6928, %v7421
    %v7423 = vsel %vm7399, %v6931, %v7422
    %v7424 = vsel %vm7401, %v6934, %v7423
    %v7425 = vsel %vm7403, %v6937, %v7424
    %v7426 = vsel %vm7391, %v6943, %v6940
    %v7427 = vsel %vm7393, %v6946, %v7426
    %v7428 = vsel %vm7395, %v6949, %v7427
    %v7429 = vsel %vm7397, %v6952, %v7428
    %v7430 = vsel %vm7399, %v6955, %v7429
    %v7431 = vsel %vm7401, %v6958, %v7430
    %v7432 = vsel %vm7403, %v6961, %v7431
    %v7433 = vsel %vm7391, %v6967, %v6964
    %v7434 = vsel %vm7393, %v6970, %v7433
    %v7435 = vsel %vm7395, %v6973, %v7434
    %v7436 = vsel %vm7397, %v6976, %v7435
    %v7437 = vsel %vm7399, %v6979, %v7436
    %v7438 = vsel %vm7401, %v6982, %v7437
    %v7439 = vsel %vm7403, %v6985, %v7438
    %v7440 = vsel %vm7391, %v6991, %v6988
    %v7441 = vsel %vm7393, %v6994, %v7440
    %v7442 = vsel %vm7395, %v6997, %v7441
    %v7443 = vsel %vm7397, %v7000, %v7442
    %v7444 = vsel %vm7399, %v7003, %v7443
    %v7445 = vsel %vm7401, %v7006, %v7444
    %v7446 = vsel %vm7403, %v7009, %v7445
    %v7447 = vsel %vm7391, %v7015, %v7012
    %v7448 = vsel %vm7393, %v7018, %v7447
    %v7449 = vsel %vm7395, %v7021, %v7448
    %v7450 = vsel %vm7397, %v7024, %v7449
    %v7451 = vsel %vm7399, %v7027, %v7450
    %v7452 = vsel %vm7401, %v7030, %v7451
    %v7453 = vsel %vm7403, %v7033, %v7452
    %v7454 = vsel %vm7391, %v7039, %v7036
    %v7455 = vsel %vm7393, %v7042, %v7454
    %v7456 = vsel %vm7395, %v7045, %v7455
    %v7457 = vsel %vm7397, %v7048, %v7456
    %v7458 = vsel %vm7399, %v7051, %v7457
    %v7459 = vsel %vm7401, %v7054, %v7458
    %v7460 = vsel %vm7403, %v7057, %v7459
    %v7461 = vsel %vm7391, %v7063, %v7060
    %v7462 = vsel %vm7393, %v7066, %v7461
    %v7463 = vsel %vm7395, %v7069, %v7462
    %v7464 = vsel %vm7397, %v7072, %v7463
    %v7465 = vsel %vm7399, %v7075, %v7464
    %v7466 = vsel %vm7401, %v7078, %v7465
    %v7467 = vsel %vm7403, %v7081, %v7466
    %v7468 = vsel %vm7391, %v7087, %v7084
    %v7469 = vsel %vm7393, %v7090, %v7468
    %v7470 = vsel %vm7395, %v7093, %v7469
    %v7471 = vsel %vm7397, %v7096, %v7470
    %v7472 = vsel %vm7399, %v7099, %v7471
    %v7473 = vsel %vm7401, %v7102, %v7472
    %v7474 = vsel %vm7403, %v7105, %v7473
    %v7475 = vsel %vm7391, %v7111, %v7108
    %v7476 = vsel %vm7393, %v7114, %v7475
    %v7477 = vsel %vm7395, %v7117, %v7476
    %v7478 = vsel %vm7397, %v7120, %v7477
    %v7479 = vsel %vm7399, %v7123, %v7478
    %v7480 = vsel %vm7401, %v7126, %v7479
    %v7481 = vsel %vm7403, %v7129, %v7480
    %v7482 = vsel %vm7391, %v7135, %v7132
    %v7483 = vsel %vm7393, %v7138, %v7482
    %v7484 = vsel %vm7395, %v7141, %v7483
    %v7485 = vsel %vm7397, %v7144, %v7484
    %v7486 = vsel %vm7399, %v7147, %v7485
    %v7487 = vsel %vm7401, %v7150, %v7486
    %v7488 = vsel %vm7403, %v7153, %v7487
    %v7489 = vsel %vm7391, %v7159, %v7156
    %v7490 = vsel %vm7393, %v7162, %v7489
    %v7491 = vsel %vm7395, %v7165, %v7490
    %v7492 = vsel %vm7397, %v7168, %v7491
    %v7493 = vsel %vm7399, %v7171, %v7492
    %v7494 = vsel %vm7401, %v7174, %v7493
    %v7495 = vsel %vm7403, %v7177, %v7494
    %v7496 = vsel %vm7391, %v7183, %v7180
    %v7497 = vsel %vm7393, %v7186, %v7496
    %v7498 = vsel %vm7395, %v7189, %v7497
    %v7499 = vsel %vm7397, %v7192, %v7498
    %v7500 = vsel %vm7399, %v7195, %v7499
    %v7501 = vsel %vm7401, %v7198, %v7500
    %v7502 = vsel %vm7403, %v7201, %v7501
    %v7503 = vsel %vm7391, %v7207, %v7204
    %v7504 = vsel %vm7393, %v7210, %v7503
    %v7505 = vsel %vm7395, %v7213, %v7504
    %v7506 = vsel %vm7397, %v7216, %v7505
    %v7507 = vsel %vm7399, %v7219, %v7506
    %v7508 = vsel %vm7401, %v7222, %v7507
    %v7509 = vsel %vm7403, %v7225, %v7508
    %v7510 = vrot.slane %v7404, 7
    %v7511 = vrot.slane %v7411, 7
    %v7512 = vrot.slane %v7418, 7
    %v7513 = vrot.slane %v7425, 7
    %v7514 = vrot.slane %v7432, 7
    %v7515 = vrot.slane %v7439, 7
    %v7516 = vrot.slane %v7446, 7
    %v7517 = vrot.slane %v7453, 7
    %v7518 = vrot.slane %v7460, 7
    %v7519 = vrot.slane %v7467, 7
    %v7520 = vrot.slane %v7474, 7
    %v7521 = vrot.slane %v7481, 7
    %v7522 = vrot.slane %v7488, 7
    %v7523 = vrot.slane %v7495, 7
    %v7524 = vrot.slane %v7502, 7
    %v7525 = vrot.slane %v7509, 7
    %v7542 = vsel %vm308, 0.0, %v7510
    %v7543 = vsel %vm308, 0.0, %v7511
    %v7544 = vsel %vm308, 0.0, %v7512
    %v7545 = vsel %vm308, 0.0, %v7513
    %v7546 = vsel %vm308, 0.0, %v7514
    %v7547 = vsel %vm308, 0.0, %v7515
    %v7548 = vsel %vm308, 0.0, %v7516
    %v7549 = vsel %vm308, 0.0, %v7517
    %v7550 = vsel %vm308, 0.0, %v7518
    %v7551 = vsel %vm308, 0.0, %v7519
    %v7552 = vsel %vm308, 0.0, %v7520
    %v7553 = vsel %vm308, 0.0, %v7521
    %v7554 = vsel %vm308, 0.0, %v7522
    %v7555 = vsel %vm308, 0.0, %v7523
    %v7556 = vsel %vm308, 0.0, %v7524
    %v7557 = vsel %vm308, 0.0, %v7525
    %v7558 = vsel %vm308, %v7510, 0.0
    %v7559 = vsel %vm308, %v7511, 0.0
    %v7560 = vsel %vm308, %v7512, 0.0
    %v7561 = vsel %vm308, %v7513, 0.0
    %v7562 = vsel %vm308, %v7514, 0.0
    %v7563 = vsel %vm308, %v7515, 0.0
    %v7564 = vsel %vm308, %v7516, 0.0
    %v7565 = vsel %vm308, %v7517, 0.0
    %v7566 = vsel %vm308, %v7518, 0.0
    %v7567 = vsel %vm308, %v7519, 0.0
    %v7568 = vsel %vm308, %v7520, 0.0
    %v7569 = vsel %vm308, %v7521, 0.0
    %v7570 = vsel %vm308, %v7522, 0.0
    %v7571 = vsel %vm308, %v7523, 0.0
    %v7572 = vsel %vm308, %v7524, 0.0
    %v7573 = vsel %vm308, %v7525, 0.0
    %v7602 = vsel %vm631, %v632, %v635
    %v7603 = vrot.slane %v7542, 1
    %v7604 = vrot.slane %v7558, 1
    %v7605 = vsel %vm631, %v7603, %v7604
    %v7606 = vrot.slane %v7543, 1
    %v7607 = vrot.slane %v7559, 1
    %v7608 = vsel %vm631, %v7606, %v7607
    %v7609 = vrot.slane %v7544, 1
    %v7610 = vrot.slane %v7560, 1
    %v7611 = vsel %vm631, %v7609, %v7610
    %v7612 = vrot.slane %v7545, 1
    %v7613 = vrot.slane %v7561, 1
    %v7614 = vsel %vm631, %v7612, %v7613
    %v7615 = vrot.slane %v7546, 1
    %v7616 = vrot.slane %v7562, 1
    %v7617 = vsel %vm631, %v7615, %v7616
    %v7618 = vrot.slane %v7547, 1
    %v7619 = vrot.slane %v7563, 1
    %v7620 = vsel %vm631, %v7618, %v7619
    %v7621 = vrot.slane %v7548, 1
    %v7622 = vrot.slane %v7564, 1
    %v7623 = vsel %vm631, %v7621, %v7622
    %v7624 = vrot.slane %v7550, 1
    %v7625 = vrot.slane %v7566, 1
    %v7626 = vsel %vm631, %v7624, %v7625
    %v7627 = vrot.slane %v7551, 1
    %v7628 = vrot.slane %v7567, 1
    %v7629 = vsel %vm631, %v7627, %v7628
    %v7630 = vrot.slane %v7552, 1
    %v7631 = vrot.slane %v7568, 1
    %v7632 = vsel %vm631, %v7630, %v7631
    %v7633 = vrot.slane %v7553, 1
    %v7634 = vrot.slane %v7569, 1
    %v7635 = vsel %vm631, %v7633, %v7634
    %v7636 = vrot.slane %v7554, 1
    %v7637 = vrot.slane %v7570, 1
    %v7638 = vsel %vm631, %v7636, %v7637
    %v7639 = vrot.slane %v7555, 1
    %v7640 = vrot.slane %v7571, 1
    %v7641 = vsel %vm631, %v7639, %v7640
    %v7642 = vrot.slane %v7556, 1
    %v7643 = vrot.slane %v7572, 1
    %v7644 = vsel %vm631, %v7642, %v7643
    %7645 = vrot.lane.b32.xlu0 %v7602, 32
    %v7646 = vpop.permute.xlu0 %7645
    %7647 = vrot.lane.b32.xlu0 %v7605, 32
    %v7648 = vpop.permute.xlu0 %7647
    %7649 = vrot.lane.b32.xlu0 %v7608, 32
    %v7650 = vpop.permute.xlu0 %7649
    %7651 = vrot.lane.b32.xlu0 %v7611, 32
    %v7652 = vpop.permute.xlu0 %7651
    %7653 = vrot.lane.b32.xlu0 %v7614, 32
    %v7654 = vpop.permute.xlu0 %7653
    %7655 = vrot.lane.b32.xlu0 %v7617, 32
    %v7656 = vpop.permute.xlu0 %7655
    %7657 = vrot.lane.b32.xlu0 %v7620, 32
    %v7658 = vpop.permute.xlu0 %7657
    %7659 = vrot.lane.b32.xlu0 %v7623, 32
    %v7660 = vpop.permute.xlu0 %7659
    %7661 = vrot.lane.b32.xlu0 %v7626, 32
    %v7662 = vpop.permute.xlu0 %7661
    %7663 = vrot.lane.b32.xlu0 %v7629, 32
    %v7664 = vpop.permute.xlu0 %7663
    %7665 = vrot.lane.b32.xlu0 %v7632, 32
    %v7666 = vpop.permute.xlu0 %7665
    %7667 = vrot.lane.b32.xlu0 %v7635, 32
    %v7668 = vpop.permute.xlu0 %7667
    %7669 = vrot.lane.b32.xlu0 %v7638, 32
    %v7670 = vpop.permute.xlu0 %7669
    %7671 = vrot.lane.b32.xlu0 %v7641, 32
    %v7672 = vpop.permute.xlu0 %7671
    %7673 = vrot.lane.b32.xlu0 %v7644, 32
    %v7674 = vpop.permute.xlu0 %7673
    %v7690 = vsel %vm973, %v974, %v977
    %v7691 = vrot.slane %v7542, 2
    %v7692 = vrot.slane %v7558, 2
    %v7693 = vsel %vm973, %v7691, %v7692
    %v7694 = vrot.slane %v7543, 2
    %v7695 = vrot.slane %v7559, 2
    %v7696 = vsel %vm973, %v7694, %v7695
    %v7697 = vrot.slane %v7544, 2
    %v7698 = vrot.slane %v7560, 2
    %v7699 = vsel %vm973, %v7697, %v7698
    %v7700 = vrot.slane %v7545, 2
    %v7701 = vrot.slane %v7561, 2
    %v7702 = vsel %vm973, %v7700, %v7701
    %v7703 = vrot.slane %v7546, 2
    %v7704 = vrot.slane %v7562, 2
    %v7705 = vsel %vm973, %v7703, %v7704
    %v7706 = vrot.slane %v7547, 2
    %v7707 = vrot.slane %v7563, 2
    %v7708 = vsel %vm973, %v7706, %v7707
    %v7709 = vrot.slane %v7548, 2
    %v7710 = vrot.slane %v7564, 2
    %v7711 = vsel %vm973, %v7709, %v7710
    %v7712 = vrot.slane %v7550, 2
    %v7713 = vrot.slane %v7566, 2
    %v7714 = vsel %vm973, %v7712, %v7713
    %v7715 = vrot.slane %v7551, 2
    %v7716 = vrot.slane %v7567, 2
    %v7717 = vsel %vm973, %v7715, %v7716
    %v7718 = vrot.slane %v7552, 2
    %v7719 = vrot.slane %v7568, 2
    %v7720 = vsel %vm973, %v7718, %v7719
    %v7721 = vrot.slane %v7553, 2
    %v7722 = vrot.slane %v7569, 2
    %v7723 = vsel %vm973, %v7721, %v7722
    %v7724 = vrot.slane %v7554, 2
    %v7725 = vrot.slane %v7570, 2
    %v7726 = vsel %vm973, %v7724, %v7725
    %v7727 = vrot.slane %v7555, 2
    %v7728 = vrot.slane %v7571, 2
    %v7729 = vsel %vm973, %v7727, %v7728
    %v7730 = vrot.slane %v7556, 2
    %v7731 = vrot.slane %v7572, 2
    %v7732 = vsel %vm973, %v7730, %v7731
    %7733 = vrot.lane.b32.xlu0 %v7690, 64
    %v7734 = vpop.permute.xlu0 %7733
    %7735 = vrot.lane.b32.xlu0 %v7693, 64
    %v7736 = vpop.permute.xlu0 %7735
    %7737 = vrot.lane.b32.xlu0 %v7696, 64
    %v7738 = vpop.permute.xlu0 %7737
    %7739 = vrot.lane.b32.xlu0 %v7699, 64
    %v7740 = vpop.permute.xlu0 %7739
    %7741 = vrot.lane.b32.xlu0 %v7702, 64
    %v7742 = vpop.permute.xlu0 %7741
    %7743 = vrot.lane.b32.xlu0 %v7705, 64
    %v7744 = vpop.permute.xlu0 %7743
    %7745 = vrot.lane.b32.xlu0 %v7708, 64
    %v7746 = vpop.permute.xlu0 %7745
    %7747 = vrot.lane.b32.xlu0 %v7711, 64
    %v7748 = vpop.permute.xlu0 %7747
    %7749 = vrot.lane.b32.xlu0 %v7714, 64
    %v7750 = vpop.permute.xlu0 %7749
    %7751 = vrot.lane.b32.xlu0 %v7717, 64
    %v7752 = vpop.permute.xlu0 %7751
    %7753 = vrot.lane.b32.xlu0 %v7720, 64
    %v7754 = vpop.permute.xlu0 %7753
    %7755 = vrot.lane.b32.xlu0 %v7723, 64
    %v7756 = vpop.permute.xlu0 %7755
    %7757 = vrot.lane.b32.xlu0 %v7726, 64
    %v7758 = vpop.permute.xlu0 %7757
    %7759 = vrot.lane.b32.xlu0 %v7729, 64
    %v7760 = vpop.permute.xlu0 %7759
    %7761 = vrot.lane.b32.xlu0 %v7732, 64
    %v7762 = vpop.permute.xlu0 %7761
    %7780 = vrot.lane.b32.xlu0 %v7542, 96
    %v7781 = vpop.permute.xlu0 %7780
    %7782 = vrot.lane.b32.xlu0 %v7543, 96
    %v7783 = vpop.permute.xlu0 %7782
    %7784 = vrot.lane.b32.xlu0 %v7544, 96
    %v7785 = vpop.permute.xlu0 %7784
    %7786 = vrot.lane.b32.xlu0 %v7545, 96
    %v7787 = vpop.permute.xlu0 %7786
    %7788 = vrot.lane.b32.xlu0 %v7546, 96
    %v7789 = vpop.permute.xlu0 %7788
    %7790 = vrot.lane.b32.xlu0 %v7547, 96
    %v7791 = vpop.permute.xlu0 %7790
    %7792 = vrot.lane.b32.xlu0 %v7548, 96
    %v7793 = vpop.permute.xlu0 %7792
    %7794 = vrot.lane.b32.xlu0 %v7549, 96
    %v7795 = vpop.permute.xlu0 %7794
    %7796 = vrot.lane.b32.xlu0 %v7550, 96
    %v7797 = vpop.permute.xlu0 %7796
    %7798 = vrot.lane.b32.xlu0 %v7551, 96
    %v7799 = vpop.permute.xlu0 %7798
    %7800 = vrot.lane.b32.xlu0 %v7552, 96
    %v7801 = vpop.permute.xlu0 %7800
    %7802 = vrot.lane.b32.xlu0 %v7553, 96
    %v7803 = vpop.permute.xlu0 %7802
    %7804 = vrot.lane.b32.xlu0 %v7554, 96
    %v7805 = vpop.permute.xlu0 %7804
    %7806 = vrot.lane.b32.xlu0 %v7555, 96
    %v7807 = vpop.permute.xlu0 %7806
    %7808 = vrot.lane.b32.xlu0 %v7556, 96
    %v7809 = vpop.permute.xlu0 %7808
    %7810 = vrot.lane.b32.xlu0 %v7557, 96
    %v7811 = vpop.permute.xlu0 %7810
    %v7830 = vrot.slane %v7549, 1
    %v7831 = vrot.slane %v7565, 1
    %v7832 = vsel %vm631, %v7830, %v7831
    %v7833 = vrot.slane %v7557, 1
    %v7834 = vrot.slane %v7573, 1
    %v7835 = vsel %vm631, %v7833, %v7834
    %v7852 = vrot.slane %v7549, 2
    %v7853 = vrot.slane %v7565, 2
    %v7854 = vsel %vm973, %v7852, %v7853
    %v7855 = vrot.slane %v7557, 2
    %v7856 = vrot.slane %v7573, 2
    %v7857 = vsel %vm973, %v7855, %v7856
    %7858 = vrot.lane.b32.xlu0 %v7693, 32
    %v7859 = vpop.permute.xlu0 %7858
    %7860 = vrot.lane.b32.xlu0 %v7696, 32
    %v7861 = vpop.permute.xlu0 %7860
    %7862 = vrot.lane.b32.xlu0 %v7699, 32
    %v7863 = vpop.permute.xlu0 %7862
    %7864 = vrot.lane.b32.xlu0 %v7702, 32
    %v7865 = vpop.permute.xlu0 %7864
    %7866 = vrot.lane.b32.xlu0 %v7705, 32
    %v7867 = vpop.permute.xlu0 %7866
    %7868 = vrot.lane.b32.xlu0 %v7708, 32
    %v7869 = vpop.permute.xlu0 %7868
    %7870 = vrot.lane.b32.xlu0 %v7711, 32
    %v7871 = vpop.permute.xlu0 %7870
    %7872 = vrot.lane.b32.xlu0 %v7854, 32
    %v7873 = vpop.permute.xlu0 %7872
    %7874 = vrot.lane.b32.xlu0 %v7714, 32
    %v7875 = vpop.permute.xlu0 %7874
    %7876 = vrot.lane.b32.xlu0 %v7717, 32
    %v7877 = vpop.permute.xlu0 %7876
    %7878 = vrot.lane.b32.xlu0 %v7720, 32
    %v7879 = vpop.permute.xlu0 %7878
    %7880 = vrot.lane.b32.xlu0 %v7723, 32
    %v7881 = vpop.permute.xlu0 %7880
    %7882 = vrot.lane.b32.xlu0 %v7726, 32
    %v7883 = vpop.permute.xlu0 %7882
    %7884 = vrot.lane.b32.xlu0 %v7729, 32
    %v7885 = vpop.permute.xlu0 %7884
    %7886 = vrot.lane.b32.xlu0 %v7732, 32
    %v7887 = vpop.permute.xlu0 %7886
    %7888 = vrot.lane.b32.xlu0 %v7857, 32
    %v7889 = vpop.permute.xlu0 %7888
    %7906 = vrot.lane.b32.xlu0 %v7543, 64
    %v7907 = vpop.permute.xlu0 %7906
    %7908 = vrot.lane.b32.xlu0 %v7544, 64
    %v7909 = vpop.permute.xlu0 %7908
    %7910 = vrot.lane.b32.xlu0 %v7545, 64
    %v7911 = vpop.permute.xlu0 %7910
    %7912 = vrot.lane.b32.xlu0 %v7546, 64
    %v7913 = vpop.permute.xlu0 %7912
    %7914 = vrot.lane.b32.xlu0 %v7547, 64
    %v7915 = vpop.permute.xlu0 %7914
    %7916 = vrot.lane.b32.xlu0 %v7548, 64
    %v7917 = vpop.permute.xlu0 %7916
    %7918 = vrot.lane.b32.xlu0 %v7549, 64
    %v7919 = vpop.permute.xlu0 %7918
    %7920 = vrot.lane.b32.xlu0 %v503, 64
    %v7921 = vpop.permute.xlu0 %7920
    %7922 = vrot.lane.b32.xlu0 %v7551, 64
    %v7923 = vpop.permute.xlu0 %7922
    %7924 = vrot.lane.b32.xlu0 %v7552, 64
    %v7925 = vpop.permute.xlu0 %7924
    %7926 = vrot.lane.b32.xlu0 %v7553, 64
    %v7927 = vpop.permute.xlu0 %7926
    %7928 = vrot.lane.b32.xlu0 %v7554, 64
    %v7929 = vpop.permute.xlu0 %7928
    %7930 = vrot.lane.b32.xlu0 %v7555, 64
    %v7931 = vpop.permute.xlu0 %7930
    %7932 = vrot.lane.b32.xlu0 %v7556, 64
    %v7933 = vpop.permute.xlu0 %7932
    %7934 = vrot.lane.b32.xlu0 %v7557, 64
    %v7935 = vpop.permute.xlu0 %7934
    %7951 = vrot.lane.b32.xlu0 %v7608, 96
    %v7952 = vpop.permute.xlu0 %7951
    %7953 = vrot.lane.b32.xlu0 %v7611, 96
    %v7954 = vpop.permute.xlu0 %7953
    %7955 = vrot.lane.b32.xlu0 %v7614, 96
    %v7956 = vpop.permute.xlu0 %7955
    %7957 = vrot.lane.b32.xlu0 %v7617, 96
    %v7958 = vpop.permute.xlu0 %7957
    %7959 = vrot.lane.b32.xlu0 %v7620, 96
    %v7960 = vpop.permute.xlu0 %7959
    %7961 = vrot.lane.b32.xlu0 %v7623, 96
    %v7962 = vpop.permute.xlu0 %7961
    %7963 = vrot.lane.b32.xlu0 %v7832, 96
    %v7964 = vpop.permute.xlu0 %7963
    %7965 = vrot.lane.b32.xlu0 %v7602, 96
    %v7966 = vpop.permute.xlu0 %7965
    %7967 = vrot.lane.b32.xlu0 %v7629, 96
    %v7968 = vpop.permute.xlu0 %7967
    %7969 = vrot.lane.b32.xlu0 %v7632, 96
    %v7970 = vpop.permute.xlu0 %7969
    %7971 = vrot.lane.b32.xlu0 %v7635, 96
    %v7972 = vpop.permute.xlu0 %7971
    %7973 = vrot.lane.b32.xlu0 %v7638, 96
    %v7974 = vpop.permute.xlu0 %7973
    %7975 = vrot.lane.b32.xlu0 %v7641, 96
    %v7976 = vpop.permute.xlu0 %7975
    %7977 = vrot.lane.b32.xlu0 %v7644, 96
    %v7978 = vpop.permute.xlu0 %7977
    %7979 = vrot.lane.b32.xlu0 %v7835, 96
    %v7980 = vpop.permute.xlu0 %7979
    %v7996 = vsel %vm6841, %v503, %v7646
    %v7997 = vsel %vm6841, %v7542, %v7648
    %v7998 = vsel %vm6841, %v7543, %v7650
    %v7999 = vsel %vm6841, %v7544, %v7652
    %v8000 = vsel %vm6841, %v7545, %v7654
    %v8001 = vsel %vm6841, %v7546, %v7656
    %v8002 = vsel %vm6841, %v7547, %v7658
    %v8003 = vsel %vm6841, %v7548, %v7660
    %v8004 = vsel %vm6841, %v7550, %v7662
    %v8005 = vsel %vm6841, %v7551, %v7664
    %v8006 = vsel %vm6841, %v7552, %v7666
    %v8007 = vsel %vm6841, %v7553, %v7668
    %v8008 = vsel %vm6841, %v7554, %v7670
    %v8009 = vsel %vm6841, %v7555, %v7672
    %v8010 = vsel %vm6841, %v7556, %v7674
    %vm8011 = vcmask 523264
    %v8012 = vsel %vm8011, %v7996, %v7734
    %v8013 = vsel %vm8011, %v7997, %v7736
    %v8014 = vsel %vm8011, %v7998, %v7738
    %v8015 = vsel %vm8011, %v7999, %v7740
    %v8016 = vsel %vm8011, %v8000, %v7742
    %v8017 = vsel %vm8011, %v8001, %v7744
    %v8018 = vsel %vm8011, %v8002, %v7746
    %v8019 = vsel %vm8011, %v8003, %v7748
    %v8020 = vsel %vm8011, %v8004, %v7750
    %v8021 = vsel %vm8011, %v8005, %v7752
    %v8022 = vsel %vm8011, %v8006, %v7754
    %v8023 = vsel %vm8011, %v8007, %v7756
    %v8024 = vsel %vm8011, %v8008, %v7758
    %v8025 = vsel %vm8011, %v8009, %v7760
    %v8026 = vsel %vm8011, %v8010, %v7762
    %vm8027 = vcmask 785408
    %v8028 = vsel %vm8027, %v8012, %v7781
    %v8029 = vsel %vm8027, %v8013, %v7783
    %v8030 = vsel %vm8027, %v8014, %v7785
    %v8031 = vsel %vm8027, %v8015, %v7787
    %v8032 = vsel %vm8027, %v8016, %v7789
    %v8033 = vsel %vm8027, %v8017, %v7791
    %v8034 = vsel %vm8027, %v8018, %v7793
    %v8035 = vsel %vm8027, %v8019, %v7795
    %v8036 = vsel %vm8027, %v8012, %v7797
    %v8037 = vsel %vm8027, %v8020, %v7799
    %v8038 = vsel %vm8027, %v8021, %v7801
    %v8039 = vsel %vm8027, %v8022, %v7803
    %v8040 = vsel %vm8027, %v8023, %v7805
    %v8041 = vsel %vm8027, %v8024, %v7807
    %v8042 = vsel %vm8027, %v8025, %v7809
    %v8043 = vsel %vm8027, %v8026, %v7811
    %v8044 = vsel %vm6841, %v7605, %v7859
    %v8045 = vsel %vm6841, %v7608, %v7861
    %v8046 = vsel %vm6841, %v7611, %v7863
    %v8047 = vsel %vm6841, %v7614, %v7865
    %v8048 = vsel %vm6841, %v7617, %v7867
    %v8049 = vsel %vm6841, %v7620, %v7869
    %v8050 = vsel %vm6841, %v7623, %v7871
    %v8051 = vsel %vm6841, %v7832, %v7873
    %v8052 = vsel %vm6841, %v7626, %v7875
    %v8053 = vsel %vm6841, %v7629, %v7877
    %v8054 = vsel %vm6841, %v7632, %v7879
    %v8055 = vsel %vm6841, %v7635, %v7881
    %v8056 = vsel %vm6841, %v7638, %v7883
    %v8057 = vsel %vm6841, %v7641, %v7885
    %v8058 = vsel %vm6841, %v7644, %v7887
    %v8059 = vsel %vm6841, %v7835, %v7889
    %v8060 = vsel %vm8011, %v8044, %v7907
    %v8061 = vsel %vm8011, %v8045, %v7909
    %v8062 = vsel %vm8011, %v8046, %v7911
    %v8063 = vsel %vm8011, %v8047, %v7913
    %v8064 = vsel %vm8011, %v8048, %v7915
    %v8065 = vsel %vm8011, %v8049, %v7917
    %v8066 = vsel %vm8011, %v8050, %v7919
    %v8067 = vsel %vm8011, %v8051, %v7921
    %v8068 = vsel %vm8011, %v8052, %v7923
    %v8069 = vsel %vm8011, %v8053, %v7925
    %v8070 = vsel %vm8011, %v8054, %v7927
    %v8071 = vsel %vm8011, %v8055, %v7929
    %v8072 = vsel %vm8011, %v8056, %v7931
    %v8073 = vsel %vm8011, %v8057, %v7933
    %v8074 = vsel %vm8011, %v8058, %v7935
    %v8075 = vsel %vm8011, %v8059, %v7921
    %v8076 = vsel %vm8027, %v8060, %v7952
    %v8077 = vsel %vm8027, %v8061, %v7954
    %v8078 = vsel %vm8027, %v8062, %v7956
    %v8079 = vsel %vm8027, %v8063, %v7958
    %v8080 = vsel %vm8027, %v8064, %v7960
    %v8081 = vsel %vm8027, %v8065, %v7962
    %v8082 = vsel %vm8027, %v8066, %v7964
    %v8083 = vsel %vm8027, %v8067, %v7966
    %v8084 = vsel %vm8027, %v8068, %v7968
    %v8085 = vsel %vm8027, %v8069, %v7970
    %v8086 = vsel %vm8027, %v8070, %v7972
    %v8087 = vsel %vm8027, %v8071, %v7974
    %v8088 = vsel %vm8027, %v8072, %v7976
    %v8089 = vsel %vm8027, %v8073, %v7978
    %v8090 = vsel %vm8027, %v8074, %v7980
    %v8091 = vsel %vm8027, %v8075, %v7966
    %v8093 = vlaneseq
    %v8094 = vshrl.u32 %v8093, 7
    %v8095 = vsub.s32 0, %v8094
    %v8096 = vrot.slane %v7262, %v8095
    %v8098 = vsel %vm6841, %v7696, 0
    %v8100 = vsel %vm6841, %v7699, 0
    %v8102 = vsel %vm6841, %v7702, 0
    %v8104 = vsel %vm6841, %v7705, 0
    %v8106 = vsel %vm6841, %v7708, 0
    %v8108 = vsel %vm6841, %v7711, 0
    %v8110 = vsel %vm6841, %v7854, 0
    %v8112 = vsel %vm6841, %v7690, 0
    %v8114 = vsel %vm6841, %v7717, 0
    %v8116 = vsel %vm6841, %v7720, 0
    %v8118 = vsel %vm6841, %v7723, 0
    %v8120 = vsel %vm6841, %v7726, 0
    %v8122 = vsel %vm6841, %v7729, 0
    %v8124 = vsel %vm6841, %v7732, 0
    %v8126 = vsel %vm6841, %v7857, 0
    %8128 = vmatprep.subr.mxu0 0.0
    %8129 = vmatpush1.msra.mxu0 %v7226
    %8130 = vmatprep.subr.mxu0 0.0
    %8131 = vmatpush1.msra.mxu0 %v7227
    %8132 = vmatprep.subr.mxu0 0.0
    %8133 = vmatpush1.msra.mxu0 %v7228
    %8134 = vmatprep.subr.mxu0 0.0
    %8135 = vmatpush1.msra.mxu0 %v7229
    %8136 = vmatprep.subr.mxu0 0.0
    %8137 = vmatpush1.msra.mxu0 %v7230
    %8138 = vmatprep.subr.mxu0 0.0
    %8139 = vmatpush1.msra.mxu0 %v7231
    %8140 = vmatprep.subr.mxu0 0.0
    %8141 = vmatpush1.msra.mxu0 %v7232
    %8142 = vmatprep.subr.mxu0 0.0
    %8143 = vmatpush1.msra.mxu0 %v7233
    %8144 = vmatprep.subr.mxu0 0.0
    %8145 = vmatpush1.msra.mxu0 %v7234
    %8146 = vmatprep.subr.mxu0 0.0
    %8147 = vmatpush1.msra.mxu0 %v7235
    %8148 = vmatprep.subr.mxu0 0.0
    %8149 = vmatpush1.msra.mxu0 %v7236
    %8150 = vmatprep.subr.mxu0 0.0
    %8151 = vmatpush1.msra.mxu0 %v7237
    %8152 = vmatprep.subr.mxu0 0.0
    %8153 = vmatpush1.msra.mxu0 %v7238
    %8154 = vmatprep.subr.mxu0 0.0
    %8155 = vmatpush1.msra.mxu0 %v7239
    %8156 = vmatprep.subr.mxu0 0.0
    %8157 = vmatpush1.msra.mxu0 %v7240
    %8158 = vmatprep.subr.mxu0 0.0
    %8159 = vmatpush1.msra.mxu0 %v7241
    %8160 = vmatprep.subr.mxu0 0.0
    %8161 = vmatpush1.msra.mxu0 %v7242
    %8162 = vmatprep.subr.mxu0 0.0
    %8163 = vmatpush1.msra.mxu0 %v7243
    %8164 = vmatprep.subr.mxu0 0.0
    %8165 = vmatpush1.msra.mxu0 %v7244
    %8166 = vmatprep.subr.mxu0 0.0
    %8167 = vmatpush1.msra.mxu0 %v7245
    %8168 = vmatprep.subr.mxu0 0.0
    %8169 = vmatpush1.msra.mxu0 %v7246
    %8170 = vmatprep.subr.mxu0 0.0
    %8171 = vmatpush1.msra.mxu0 %v7247
    %8172 = vmatprep.subr.mxu0 0.0
    %8173 = vmatpush1.msra.mxu0 %v7248
    %8174 = vmatprep.subr.mxu0 0.0
    %8175 = vmatpush1.msra.mxu0 %v7249
    %8176 = vmatprep.subr.mxu0 0.0
    %8177 = vmatpush1.msra.mxu0 %v7250
    %8178 = vmatprep.subr.mxu0 0.0
    %8179 = vmatpush1.msra.mxu0 %v7251
    %8180 = vmatprep.subr.mxu0 0.0
    %8181 = vmatpush1.msra.mxu0 %v7252
    %8182 = vmatprep.subr.mxu0 0.0
    %8183 = vmatpush1.msra.mxu0 %v7253
    %8184 = vmatprep.subr.mxu0 0.0
    %8185 = vmatpush1.msra.mxu0 %v7254
    %8186 = vmatprep.subr.mxu0 0.0
    %8187 = vmatpush1.msra.mxu0 %v7255
    %8188 = vmatprep.subr.mxu0 0.0
    %8189 = vmatpush1.msra.mxu0 %v7256
    %8190 = vmatprep.subr.mxu0 0.0
    %8191 = vmatpush1.msra.mxu0 %v7257
    %8192 = vmatprep.mubr.f32.mxu0 %v8076
    %8193 = vmatmul.mubr.f32.gmra.mrb[0].mxu0 %v8028
    %v8194 = vpop.f32.mrb[0].mxu0
    %v8195 = vadd.f32 %v8096, %v8194
    %v8196 = vpop.f32.mrb[0].mxu0
    %8197 = vmatprep.mubr.f32.mxu0 %v8077
    %8198 = vmatmul.mubr.f32.gmra.mrb[0].mxu0 %v8029
    %v8199 = vpop.f32.mrb[0].mxu0
    %v8200 = vadd.f32 %v8096, %v8199
    %v8201 = vpop.f32.mrb[0].mxu0
    %8202 = vmatprep.mubr.f32.mxu0 %v8078
    %8203 = vmatmul.mubr.f32.gmra.mrb[0].mxu0 %v8030
    %v8204 = vpop.f32.mrb[0].mxu0
    %v8205 = vadd.f32 %v8096, %v8204
    %v8206 = vpop.f32.mrb[0].mxu0
    %8207 = vmatprep.mubr.f32.mxu0 %v8079
    %8208 = vmatmul.mubr.f32.gmra.mrb[0].mxu0 %v8031
    %v8209 = vpop.f32.mrb[0].mxu0
    %v8210 = vadd.f32 %v8096, %v8209
    %v8211 = vpop.f32.mrb[0].mxu0
    %8212 = vmatprep.mubr.f32.mxu0 %v8080
    %8213 = vmatmul.mubr.f32.gmra.mrb[0].mxu0 %v8032
    %v8214 = vpop.f32.mrb[0].mxu0
    %v8215 = vadd.f32 %v8096, %v8214
    %v8216 = vpop.f32.mrb[0].mxu0
    %8217 = vmatprep.mubr.f32.mxu0 %v8081
    %8218 = vmatmul.mubr.f32.gmra.mrb[0].mxu0 %v8033
    %v8219 = vpop.f32.mrb[0].mxu0
    %v8220 = vadd.f32 %v8096, %v8219
    %v8221 = vpop.f32.mrb[0].mxu0
    %8222 = vmatprep.mubr.f32.mxu0 %v8082
    %8223 = vmatmul.mubr.f32.gmra.mrb[0].mxu0 %v8034
    %v8224 = vpop.f32.mrb[0].mxu0
    %v8225 = vadd.f32 %v8096, %v8224
    %v8226 = vpop.f32.mrb[0].mxu0
    %8227 = vmatprep.mubr.f32.mxu0 %v8083
    %8228 = vmatmul.mubr.f32.gmra.mrb[0].mxu0 %v8035
    %v8229 = vpop.f32.mrb[0].mxu0
    %v8230 = vadd.f32 %v8096, %v8229
    %v8231 = vpop.f32.mrb[0].mxu0
    %8232 = vmatprep.mubr.f32.mxu0 %v8084
    %8233 = vmatmul.mubr.f32.gmra.mrb[0].mxu0 %v8036
    %v8234 = vpop.f32.mrb[0].mxu0
    %v8235 = vadd.f32 %v8096, %v8234
    %v8236 = vpop.f32.mrb[0].mxu0
    %8237 = vmatprep.mubr.f32.mxu0 %v8085
    %8238 = vmatmul.mubr.f32.gmra.mrb[0].mxu0 %v8037
    %v8239 = vpop.f32.mrb[0].mxu0
    %v8240 = vadd.f32 %v8096, %v8239
    %v8241 = vpop.f32.mrb[0].mxu0
    %8242 = vmatprep.mubr.f32.mxu0 %v8086
    %8243 = vmatmul.mubr.f32.gmra.mrb[0].mxu0 %v8038
    %v8244 = vpop.f32.mrb[0].mxu0
    %v8245 = vadd.f32 %v8096, %v8244
    %v8246 = vpop.f32.mrb[0].mxu0
    %8247 = vmatprep.mubr.f32.mxu0 %v8087
    %8248 = vmatmul.mubr.f32.gmra.mrb[0].mxu0 %v8039
    %v8249 = vpop.f32.mrb[0].mxu0
    %v8250 = vadd.f32 %v8096, %v8249
    %v8251 = vpop.f32.mrb[0].mxu0
    %8252 = vmatprep.mubr.f32.mxu0 %v8088
    %8253 = vmatmul.mubr.f32.gmra.mrb[0].mxu0 %v8040
    %v8254 = vpop.f32.mrb[0].mxu0
    %v8255 = vadd.f32 %v8096, %v8254
    %v8256 = vpop.f32.mrb[0].mxu0
    %8257 = vmatprep.mubr.f32.mxu0 %v8089
    %8258 = vmatmul.mubr.f32.gmra.mrb[0].mxu0 %v8041
    %v8259 = vpop.f32.mrb[0].mxu0
    %v8260 = vadd.f32 %v8096, %v8259
    %v8261 = vpop.f32.mrb[0].mxu0
    %8262 = vmatprep.mubr.f32.mxu0 %v8090
    %8263 = vmatmul.mubr.f32.gmra.mrb[0].mxu0 %v8042
    %v8264 = vpop.f32.mrb[0].mxu0
    %v8265 = vadd.f32 %v8096, %v8264
    %v8266 = vpop.f32.mrb[0].mxu0
    %8267 = vmatprep.mubr.f32.mxu0 %v8091
    %8268 = vmatmul.mubr.f32.gmra.mrb[0].mxu0 %v8043
    %v8269 = vpop.f32.mrb[0].mxu0
    %v8270 = vadd.f32 %v8096, %v8269
    %v8271 = vpop.f32.mrb[0].mxu0
    %8272 = vdwg.mxu0
    %8273 = vmatprep.subr.mxu0 0.0
    %8274 = vmatpush1.msra.mxu0 %v7258
    %8275 = vmatprep.subr.mxu0 0.0
    %8276 = vmatpush1.msra.mxu0 %v7259
    %8277 = vmatprep.subr.mxu0 0.0
    %8278 = vmatpush1.msra.mxu0 %v7260
    %8279 = vmatprep.subr.mxu0 0.0
    %8280 = vmatpush1.msra.mxu0 %v7261
    %8281 = vmatprep.subr.mxu0 0.0
    %8282 = vmatpush1.msra.mxu0 0.0
    %8283 = vmatprep.subr.mxu0 0.0
    %8284 = vmatpush1.msra.mxu0 0.0
    %8285 = vmatprep.subr.mxu0 0.0
    %8286 = vmatpush1.msra.mxu0 0.0
    %8287 = vmatprep.subr.mxu0 0.0
    %8288 = vmatpush1.msra.mxu0 0.0
    %8289 = vmatprep.subr.mxu0 0.0
    %8290 = vmatpush1.msra.mxu0 0.0
    %8291 = vmatprep.subr.mxu0 0.0
    %8292 = vmatpush1.msra.mxu0 0.0
    %8293 = vmatprep.subr.mxu0 0.0
    %8294 = vmatpush1.msra.mxu0 0.0
    %8295 = vmatprep.subr.mxu0 0.0
    %8296 = vmatpush1.msra.mxu0 0.0
    %8297 = vmatprep.subr.mxu0 0.0
    %8298 = vmatpush1.msra.mxu0 0.0
    %8299 = vmatprep.subr.mxu0 0.0
    %8300 = vmatpush1.msra.mxu0 0.0
    %8301 = vmatprep.subr.mxu0 0.0
    %8302 = vmatpush1.msra.mxu0 0.0
    %8303 = vmatprep.subr.mxu0 0.0
    %8304 = vmatpush1.msra.mxu0 0.0
    %8305 = vmatprep.subr.mxu0 0.0
    %8306 = vmatpush1.msra.mxu0 0.0
    %8307 = vmatprep.subr.mxu0 0.0
    %8308 = vmatpush1.msra.mxu0 0.0
    %8309 = vmatprep.subr.mxu0 0.0
    %8310 = vmatpush1.msra.mxu0 0.0
    %8311 = vmatprep.subr.mxu0 0.0
    %8312 = vmatpush1.msra.mxu0 0.0
    %8313 = vmatprep.subr.mxu0 0.0
    %8314 = vmatpush1.msra.mxu0 0.0
    %8315 = vmatprep.subr.mxu0 0.0
    %8316 = vmatpush1.msra.mxu0 0.0
    %8317 = vmatprep.subr.mxu0 0.0
    %8318 = vmatpush1.msra.mxu0 0.0
    %8319 = vmatprep.subr.mxu0 0.0
    %8320 = vmatpush1.msra.mxu0 0.0
    %8321 = vmatprep.subr.mxu0 0.0
    %8322 = vmatpush1.msra.mxu0 0.0
    %8323 = vmatprep.subr.mxu0 0.0
    %8324 = vmatpush1.msra.mxu0 0.0
    %8325 = vmatprep.subr.mxu0 0.0
    %8326 = vmatpush1.msra.mxu0 0.0
    %8327 = vmatprep.subr.mxu0 0.0
    %8328 = vmatpush1.msra.mxu0 0.0
    %8329 = vmatprep.subr.mxu0 0.0
    %8330 = vmatpush1.msra.mxu0 0.0
    %8331 = vmatprep.subr.mxu0 0.0
    %8332 = vmatpush1.msra.mxu0 0.0
    %8333 = vmatprep.subr.mxu0 0.0
    %8334 = vmatpush1.msra.mxu0 0.0
    %8335 = vmatprep.subr.mxu0 0.0
    %8336 = vmatpush1.msra.mxu0 0.0
    %8337 = vmatprep.mubr.f32.mxu0 0.0
    %8338 = vmatmul.mubr.f32.gmra.mrb[0].mxu0 %v8098
    %v8339 = vpop.f32.mrb[0].mxu0
    %v8340 = vadd.f32 %v8195, %v8339
    %v8341 = vpop.f32.mrb[0].mxu0
    %8342 = vmatprep.mubr.f32.mxu0 0.0
    %8343 = vmatmul.mubr.f32.gmra.mrb[0].mxu0 %v8100
    %v8344 = vpop.f32.mrb[0].mxu0
    %v8345 = vadd.f32 %v8200, %v8344
    %v8346 = vpop.f32.mrb[0].mxu0
    %8347 = vmatprep.mubr.f32.mxu0 0.0
    %8348 = vmatmul.mubr.f32.gmra.mrb[0].mxu0 %v8102
    %v8349 = vpop.f32.mrb[0].mxu0
    %v8350 = vadd.f32 %v8205, %v8349
    %v8351 = vpop.f32.mrb[0].mxu0
    %8352 = vmatprep.mubr.f32.mxu0 0.0
    %8353 = vmatmul.mubr.f32.gmra.mrb[0].mxu0 %v8104
    %v8354 = vpop.f32.mrb[0].mxu0
    %v8355 = vadd.f32 %v8210, %v8354
    %v8356 = vpop.f32.mrb[0].mxu0
    %8357 = vmatprep.mubr.f32.mxu0 0.0
    %8358 = vmatmul.mubr.f32.gmra.mrb[0].mxu0 %v8106
    %v8359 = vpop.f32.mrb[0].mxu0
    %v8360 = vadd.f32 %v8215, %v8359
    %v8361 = vpop.f32.mrb[0].mxu0
    %8362 = vmatprep.mubr.f32.mxu0 0.0
    %8363 = vmatmul.mubr.f32.gmra.mrb[0].mxu0 %v8108
    %v8364 = vpop.f32.mrb[0].mxu0
    %v8365 = vadd.f32 %v8220, %v8364
    %v8366 = vpop.f32.mrb[0].mxu0
    %8367 = vmatprep.mubr.f32.mxu0 0.0
    %8368 = vmatmul.mubr.f32.gmra.mrb[0].mxu0 %v8110
    %v8369 = vpop.f32.mrb[0].mxu0
    %v8370 = vadd.f32 %v8225, %v8369
    %v8371 = vpop.f32.mrb[0].mxu0
    %8372 = vmatprep.mubr.f32.mxu0 0.0
    %8373 = vmatmul.mubr.f32.gmra.mrb[0].mxu0 %v8112
    %v8374 = vpop.f32.mrb[0].mxu0
    %v8375 = vadd.f32 %v8230, %v8374
    %v8376 = vpop.f32.mrb[0].mxu0
    %8377 = vmatprep.mubr.f32.mxu0 0.0
    %8378 = vmatmul.mubr.f32.gmra.mrb[0].mxu0 %v8114
    %v8379 = vpop.f32.mrb[0].mxu0
    %v8380 = vadd.f32 %v8235, %v8379
    %v8381 = vpop.f32.mrb[0].mxu0
    %8382 = vmatprep.mubr.f32.mxu0 0.0
    %8383 = vmatmul.mubr.f32.gmra.mrb[0].mxu0 %v8116
    %v8384 = vpop.f32.mrb[0].mxu0
    %v8385 = vadd.f32 %v8240, %v8384
    %v8386 = vpop.f32.mrb[0].mxu0
    %8387 = vmatprep.mubr.f32.mxu0 0.0
    %8388 = vmatmul.mubr.f32.gmra.mrb[0].mxu0 %v8118
    %v8389 = vpop.f32.mrb[0].mxu0
    %v8390 = vadd.f32 %v8245, %v8389
    %v8391 = vpop.f32.mrb[0].mxu0
    %8392 = vmatprep.mubr.f32.mxu0 0.0
    %8393 = vmatmul.mubr.f32.gmra.mrb[0].mxu0 %v8120
    %v8394 = vpop.f32.mrb[0].mxu0
    %v8395 = vadd.f32 %v8250, %v8394
    %v8396 = vpop.f32.mrb[0].mxu0
    %8397 = vmatprep.mubr.f32.mxu0 0.0
    %8398 = vmatmul.mubr.f32.gmra.mrb[0].mxu0 %v8122
    %v8399 = vpop.f32.mrb[0].mxu0
    %v8400 = vadd.f32 %v8255, %v8399
    %v8401 = vpop.f32.mrb[0].mxu0
    %8402 = vmatprep.mubr.f32.mxu0 0.0
    %8403 = vmatmul.mubr.f32.gmra.mrb[0].mxu0 %v8124
    %v8404 = vpop.f32.mrb[0].mxu0
    %v8405 = vadd.f32 %v8260, %v8404
    %v8406 = vpop.f32.mrb[0].mxu0
    %8407 = vmatprep.mubr.f32.mxu0 0.0
    %8408 = vmatmul.mubr.f32.gmra.mrb[0].mxu0 %v8126
    %v8409 = vpop.f32.mrb[0].mxu0
    %v8410 = vadd.f32 %v8265, %v8409
    %v8411 = vpop.f32.mrb[0].mxu0
    %8412 = vmatprep.mubr.f32.mxu0 0.0
    %8413 = vmatmul.mubr.f32.gmra.mrb[0].mxu0 %v8112
    %v8414 = vpop.f32.mrb[0].mxu0
    %v8415 = vadd.f32 %v8270, %v8414
    %v8416 = vpop.f32.mrb[0].mxu0
    %8417 = vdwg.mxu0
    %v8418 = vmax.f32 %v8340, 0.0
    %v8419 = vmax.f32 %v8345, 0.0
    %v8420 = vmax.f32 %v8350, 0.0
    %v8421 = vmax.f32 %v8355, 0.0
    %v8422 = vmax.f32 %v8360, 0.0
    %v8423 = vmax.f32 %v8365, 0.0
    %v8424 = vmax.f32 %v8370, 0.0
    %v8425 = vmax.f32 %v8375, 0.0
    %v8426 = vmax.f32 %v8380, 0.0
    %v8427 = vmax.f32 %v8385, 0.0
    %v8428 = vmax.f32 %v8390, 0.0
    %v8429 = vmax.f32 %v8395, 0.0
    %v8430 = vmax.f32 %v8400, 0.0
    %v8431 = vmax.f32 %v8405, 0.0
    %v8432 = vmax.f32 %v8410, 0.0
    %v8433 = vmax.f32 %v8415, 0.0
    %v8450 = vcombine.high %v8418, %v8418
    %v8452 = vunpack.c.l.s4 1983009808
    %v8453 = vunpack.c.0.s8 %v8452
    %v8454 = vlaneseq
    %v8455 = vshrl.u32 %v8454, 7
    %v8456 = vsub.s32 %v8453, %v8455
    %v8457 = vrot.slane %v8418, %v8456
    %v8459 = vunpack.c.l.s4 1983009808
    %v8460 = vunpack.c.0.s8 %v8459
    %v8461 = vlaneseq
    %v8462 = vshrl.u32 %v8461, 7
    %v8463 = vsub.s32 %v8460, %v8462
    %v8464 = vrot.slane %v8450, %v8463
    %v8465 = vcombine.high %v8457, %v8457
    %v8466 = vcombine.high %v8464, %v8464
    %v8467 = vcombine.high %v8419, %v8419
    %v8469 = vunpack.c.l.s4 1983009808
    %v8470 = vunpack.c.0.s8 %v8469
    %v8471 = vlaneseq
    %v8472 = vshrl.u32 %v8471, 7
    %v8473 = vsub.s32 %v8470, %v8472
    %v8474 = vrot.slane %v8419, %v8473
    %v8476 = vunpack.c.l.s4 1983009808
    %v8477 = vunpack.c.0.s8 %v8476
    %v8478 = vlaneseq
    %v8479 = vshrl.u32 %v8478, 7
    %v8480 = vsub.s32 %v8477, %v8479
    %v8481 = vrot.slane %v8467, %v8480
    %v8482 = vcombine.high %v8474, %v8474
    %v8483 = vcombine.high %v8481, %v8481
    %v8484 = vcombine.high %v8420, %v8420
    %v8486 = vunpack.c.l.s4 1983009808
    %v8487 = vunpack.c.0.s8 %v8486
    %v8488 = vlaneseq
    %v8489 = vshrl.u32 %v8488, 7
    %v8490 = vsub.s32 %v8487, %v8489
    %v8491 = vrot.slane %v8420, %v8490
    %v8493 = vunpack.c.l.s4 1983009808
    %v8494 = vunpack.c.0.s8 %v8493
    %v8495 = vlaneseq
    %v8496 = vshrl.u32 %v8495, 7
    %v8497 = vsub.s32 %v8494, %v8496
    %v8498 = vrot.slane %v8484, %v8497
    %v8499 = vcombine.high %v8491, %v8491
    %v8500 = vcombine.high %v8498, %v8498
    %v8501 = vcombine.high %v8421, %v8421
    %v8503 = vunpack.c.l.s4 1983009808
    %v8504 = vunpack.c.0.s8 %v8503
    %v8505 = vlaneseq
    %v8506 = vshrl.u32 %v8505, 7
    %v8507 = vsub.s32 %v8504, %v8506
    %v8508 = vrot.slane %v8421, %v8507
    %v8510 = vunpack.c.l.s4 1983009808
    %v8511 = vunpack.c.0.s8 %v8510
    %v8512 = vlaneseq
    %v8513 = vshrl.u32 %v8512, 7
    %v8514 = vsub.s32 %v8511, %v8513
    %v8515 = vrot.slane %v8501, %v8514
    %v8516 = vcombine.high %v8508, %v8508
    %v8517 = vcombine.high %v8515, %v8515
    %v8518 = vcombine.high %v8422, %v8422
    %v8520 = vunpack.c.l.s4 1983009808
    %v8521 = vunpack.c.0.s8 %v8520
    %v8522 = vlaneseq
    %v8523 = vshrl.u32 %v8522, 7
    %v8524 = vsub.s32 %v8521, %v8523
    %v8525 = vrot.slane %v8422, %v8524
    %v8527 = vunpack.c.l.s4 1983009808
    %v8528 = vunpack.c.0.s8 %v8527
    %v8529 = vlaneseq
    %v8530 = vshrl.u32 %v8529, 7
    %v8531 = vsub.s32 %v8528, %v8530
    %v8532 = vrot.slane %v8518, %v8531
    %v8533 = vcombine.high %v8525, %v8525
    %v8534 = vcombine.high %v8532, %v8532
    %v8535 = vcombine.high %v8423, %v8423
    %v8537 = vunpack.c.l.s4 1983009808
    %v8538 = vunpack.c.0.s8 %v8537
    %v8539 = vlaneseq
    %v8540 = vshrl.u32 %v8539, 7
    %v8541 = vsub.s32 %v8538, %v8540
    %v8542 = vrot.slane %v8423, %v8541
    %v8544 = vunpack.c.l.s4 1983009808
    %v8545 = vunpack.c.0.s8 %v8544
    %v8546 = vlaneseq
    %v8547 = vshrl.u32 %v8546, 7
    %v8548 = vsub.s32 %v8545, %v8547
    %v8549 = vrot.slane %v8535, %v8548
    %v8550 = vcombine.high %v8542, %v8542
    %v8551 = vcombine.high %v8549, %v8549
    %v8552 = vcombine.high %v8424, %v8424
    %v8554 = vunpack.c.l.s4 1983009808
    %v8555 = vunpack.c.0.s8 %v8554
    %v8556 = vlaneseq
    %v8557 = vshrl.u32 %v8556, 7
    %v8558 = vsub.s32 %v8555, %v8557
    %v8559 = vrot.slane %v8424, %v8558
    %v8561 = vunpack.c.l.s4 1983009808
    %v8562 = vunpack.c.0.s8 %v8561
    %v8563 = vlaneseq
    %v8564 = vshrl.u32 %v8563, 7
    %v8565 = vsub.s32 %v8562, %v8564
    %v8566 = vrot.slane %v8552, %v8565
    %v8567 = vcombine.high %v8559, %v8559
    %v8568 = vcombine.high %v8566, %v8566
    %v8569 = vcombine.high %v8425, %v8425
    %v8571 = vunpack.c.l.s4 1983009808
    %v8572 = vunpack.c.0.s8 %v8571
    %v8573 = vlaneseq
    %v8574 = vshrl.u32 %v8573, 7
    %v8575 = vsub.s32 %v8572, %v8574
    %v8576 = vrot.slane %v8425, %v8575
    %v8578 = vunpack.c.l.s4 1983009808
    %v8579 = vunpack.c.0.s8 %v8578
    %v8580 = vlaneseq
    %v8581 = vshrl.u32 %v8580, 7
    %v8582 = vsub.s32 %v8579, %v8581
    %v8583 = vrot.slane %v8569, %v8582
    %v8584 = vcombine.high %v8576, %v8576
    %v8585 = vcombine.high %v8583, %v8583
    %v8586 = vcombine.high %v8426, %v8426
    %v8588 = vunpack.c.l.s4 1983009808
    %v8589 = vunpack.c.0.s8 %v8588
    %v8590 = vlaneseq
    %v8591 = vshrl.u32 %v8590, 7
    %v8592 = vsub.s32 %v8589, %v8591
    %v8593 = vrot.slane %v8426, %v8592
    %v8595 = vunpack.c.l.s4 1983009808
    %v8596 = vunpack.c.0.s8 %v8595
    %v8597 = vlaneseq
    %v8598 = vshrl.u32 %v8597, 7
    %v8599 = vsub.s32 %v8596, %v8598
    %v8600 = vrot.slane %v8586, %v8599
    %v8601 = vcombine.high %v8593, %v8593
    %v8602 = vcombine.high %v8600, %v8600
    %v8603 = vcombine.high %v8427, %v8427
    %v8605 = vunpack.c.l.s4 1983009808
    %v8606 = vunpack.c.0.s8 %v8605
    %v8607 = vlaneseq
    %v8608 = vshrl.u32 %v8607, 7
    %v8609 = vsub.s32 %v8606, %v8608
    %v8610 = vrot.slane %v8427, %v8609
    %v8612 = vunpack.c.l.s4 1983009808
    %v8613 = vunpack.c.0.s8 %v8612
    %v8614 = vlaneseq
    %v8615 = vshrl.u32 %v8614, 7
    %v8616 = vsub.s32 %v8613, %v8615
    %v8617 = vrot.slane %v8603, %v8616
    %v8618 = vcombine.high %v8610, %v8610
    %v8619 = vcombine.high %v8617, %v8617
    %v8620 = vcombine.high %v8428, %v8428
    %v8622 = vunpack.c.l.s4 1983009808
    %v8623 = vunpack.c.0.s8 %v8622
    %v8624 = vlaneseq
    %v8625 = vshrl.u32 %v8624, 7
    %v8626 = vsub.s32 %v8623, %v8625
    %v8627 = vrot.slane %v8428, %v8626
    %v8629 = vunpack.c.l.s4 1983009808
    %v8630 = vunpack.c.0.s8 %v8629
    %v8631 = vlaneseq
    %v8632 = vshrl.u32 %v8631, 7
    %v8633 = vsub.s32 %v8630, %v8632
    %v8634 = vrot.slane %v8620, %v8633
    %v8635 = vcombine.high %v8627, %v8627
    %v8636 = vcombine.high %v8634, %v8634
    %v8637 = vcombine.high %v8429, %v8429
    %v8639 = vunpack.c.l.s4 1983009808
    %v8640 = vunpack.c.0.s8 %v8639
    %v8641 = vlaneseq
    %v8642 = vshrl.u32 %v8641, 7
    %v8643 = vsub.s32 %v8640, %v8642
    %v8644 = vrot.slane %v8429, %v8643
    %v8646 = vunpack.c.l.s4 1983009808
    %v8647 = vunpack.c.0.s8 %v8646
    %v8648 = vlaneseq
    %v8649 = vshrl.u32 %v8648, 7
    %v8650 = vsub.s32 %v8647, %v8649
    %v8651 = vrot.slane %v8637, %v8650
    %v8652 = vcombine.high %v8644, %v8644
    %v8653 = vcombine.high %v8651, %v8651
    %v8654 = vcombine.high %v8430, %v8430
    %v8656 = vunpack.c.l.s4 1983009808
    %v8657 = vunpack.c.0.s8 %v8656
    %v8658 = vlaneseq
    %v8659 = vshrl.u32 %v8658, 7
    %v8660 = vsub.s32 %v8657, %v8659
    %v8661 = vrot.slane %v8430, %v8660
    %v8663 = vunpack.c.l.s4 1983009808
    %v8664 = vunpack.c.0.s8 %v8663
    %v8665 = vlaneseq
    %v8666 = vshrl.u32 %v8665, 7
    %v8667 = vsub.s32 %v8664, %v8666
    %v8668 = vrot.slane %v8654, %v8667
    %v8669 = vcombine.high %v8661, %v8661
    %v8670 = vcombine.high %v8668, %v8668
    %v8671 = vcombine.high %v8431, %v8431
    %v8673 = vunpack.c.l.s4 1983009808
    %v8674 = vunpack.c.0.s8 %v8673
    %v8675 = vlaneseq
    %v8676 = vshrl.u32 %v8675, 7
    %v8677 = vsub.s32 %v8674, %v8676
    %v8678 = vrot.slane %v8431, %v8677
    %v8680 = vunpack.c.l.s4 1983009808
    %v8681 = vunpack.c.0.s8 %v8680
    %v8682 = vlaneseq
    %v8683 = vshrl.u32 %v8682, 7
    %v8684 = vsub.s32 %v8681, %v8683
    %v8685 = vrot.slane %v8671, %v8684
    %v8686 = vcombine.high %v8678, %v8678
    %v8687 = vcombine.high %v8685, %v8685
    %v8688 = vcombine.high %v8432, %v8432
    %v8690 = vunpack.c.l.s4 1983009808
    %v8691 = vunpack.c.0.s8 %v8690
    %v8692 = vlaneseq
    %v8693 = vshrl.u32 %v8692, 7
    %v8694 = vsub.s32 %v8691, %v8693
    %v8695 = vrot.slane %v8432, %v8694
    %v8697 = vunpack.c.l.s4 1983009808
    %v8698 = vunpack.c.0.s8 %v8697
    %v8699 = vlaneseq
    %v8700 = vshrl.u32 %v8699, 7
    %v8701 = vsub.s32 %v8698, %v8700
    %v8702 = vrot.slane %v8688, %v8701
    %v8703 = vcombine.high %v8695, %v8695
    %v8704 = vcombine.high %v8702, %v8702
    %v8705 = vcombine.high %v8433, %v8433
    %v8707 = vunpack.c.l.s4 1983009808
    %v8708 = vunpack.c.0.s8 %v8707
    %v8709 = vlaneseq
    %v8710 = vshrl.u32 %v8709, 7
    %v8711 = vsub.s32 %v8708, %v8710
    %v8712 = vrot.slane %v8433, %v8711
    %v8714 = vunpack.c.l.s4 1983009808
    %v8715 = vunpack.c.0.s8 %v8714
    %v8716 = vlaneseq
    %v8717 = vshrl.u32 %v8716, 7
    %v8718 = vsub.s32 %v8715, %v8717
    %v8719 = vrot.slane %v8705, %v8718
    %v8720 = vcombine.high %v8712, %v8712
    %v8721 = vcombine.high %v8719, %v8719
    %vm8786 = vcmask 517120
    %v8787 = vsel %vm8786, %v8457, -inf
    %v8788 = vrot.slane %v8787, 4
    %v8789 = vmax.f32 %v8787, %v8788
    %v8790 = vrot.slane %v8789, 2
    %v8791 = vmax.f32 %v8789, %v8790
    %v8792 = vrot.slane %v8791, 1
    %v8793 = vmax.f32 %v8791, %v8792
    %v8794 = vsel %vm8786, %v8465, -inf
    %v8795 = vrot.slane %v8794, 4
    %v8796 = vmax.f32 %v8794, %v8795
    %v8797 = vrot.slane %v8796, 2
    %v8798 = vmax.f32 %v8796, %v8797
    %v8799 = vrot.slane %v8798, 1
    %v8800 = vmax.f32 %v8798, %v8799
    %v8801 = vsel %vm8786, %v8464, -inf
    %v8802 = vrot.slane %v8801, 4
    %v8803 = vmax.f32 %v8801, %v8802
    %v8804 = vrot.slane %v8803, 2
    %v8805 = vmax.f32 %v8803, %v8804
    %v8806 = vrot.slane %v8805, 1
    %v8807 = vmax.f32 %v8805, %v8806
    %v8808 = vsel %vm8786, %v8466, -inf
    %v8809 = vrot.slane %v8808, 4
    %v8810 = vmax.f32 %v8808, %v8809
    %v8811 = vrot.slane %v8810, 2
    %v8812 = vmax.f32 %v8810, %v8811
    %v8813 = vrot.slane %v8812, 1
    %v8814 = vmax.f32 %v8812, %v8813
    %v8815 = vsel %vm8786, %v8474, -inf
    %v8816 = vrot.slane %v8815, 4
    %v8817 = vmax.f32 %v8815, %v8816
    %v8818 = vrot.slane %v8817, 2
    %v8819 = vmax.f32 %v8817, %v8818
    %v8820 = vrot.slane %v8819, 1
    %v8821 = vmax.f32 %v8819, %v8820
    %v8822 = vsel %vm8786, %v8482, -inf
    %v8823 = vrot.slane %v8822, 4
    %v8824 = vmax.f32 %v8822, %v8823
    %v8825 = vrot.slane %v8824, 2
    %v8826 = vmax.f32 %v8824, %v8825
    %v8827 = vrot.slane %v8826, 1
    %v8828 = vmax.f32 %v8826, %v8827
    %v8829 = vsel %vm8786, %v8481, -inf
    %v8830 = vrot.slane %v8829, 4
    %v8831 = vmax.f32 %v8829, %v8830
    %v8832 = vrot.slane %v8831, 2
    %v8833 = vmax.f32 %v8831, %v8832
    %v8834 = vrot.slane %v8833, 1
    %v8835 = vmax.f32 %v8833, %v8834
    %v8836 = vsel %vm8786, %v8483, -inf
    %v8837 = vrot.slane %v8836, 4
    %v8838 = vmax.f32 %v8836, %v8837
    %v8839 = vrot.slane %v8838, 2
    %v8840 = vmax.f32 %v8838, %v8839
    %v8841 = vrot.slane %v8840, 1
    %v8842 = vmax.f32 %v8840, %v8841
    %v8843 = vsel %vm8786, %v8491, -inf
    %v8844 = vrot.slane %v8843, 4
    %v8845 = vmax.f32 %v8843, %v8844
    %v8846 = vrot.slane %v8845, 2
    %v8847 = vmax.f32 %v8845, %v8846
    %v8848 = vrot.slane %v8847, 1
    %v8849 = vmax.f32 %v8847, %v8848
    %v8850 = vsel %vm8786, %v8499, -inf
    %v8851 = vrot.slane %v8850, 4
    %v8852 = vmax.f32 %v8850, %v8851
    %v8853 = vrot.slane %v8852, 2
    %v8854 = vmax.f32 %v8852, %v8853
    %v8855 = vrot.slane %v8854, 1
    %v8856 = vmax.f32 %v8854, %v8855
    %v8857 = vsel %vm8786, %v8498, -inf
    %v8858 = vrot.slane %v8857, 4
    %v8859 = vmax.f32 %v8857, %v8858
    %v8860 = vrot.slane %v8859, 2
    %v8861 = vmax.f32 %v8859, %v8860
    %v8862 = vrot.slane %v8861, 1
    %v8863 = vmax.f32 %v8861, %v8862
    %v8864 = vsel %vm8786, %v8500, -inf
    %v8865 = vrot.slane %v8864, 4
    %v8866 = vmax.f32 %v8864, %v8865
    %v8867 = vrot.slane %v8866, 2
    %v8868 = vmax.f32 %v8866, %v8867
    %v8869 = vrot.slane %v8868, 1
    %v8870 = vmax.f32 %v8868, %v8869
    %v8871 = vsel %vm8786, %v8508, -inf
    %v8872 = vrot.slane %v8871, 4
    %v8873 = vmax.f32 %v8871, %v8872
    %v8874 = vrot.slane %v8873, 2
    %v8875 = vmax.f32 %v8873, %v8874
    %v8876 = vrot.slane %v8875, 1
    %v8877 = vmax.f32 %v8875, %v8876
    %v8878 = vsel %vm8786, %v8516, -inf
    %v8879 = vrot.slane %v8878, 4
    %v8880 = vmax.f32 %v8878, %v8879
    %v8881 = vrot.slane %v8880, 2
    %v8882 = vmax.f32 %v8880, %v8881
    %v8883 = vrot.slane %v8882, 1
    %v8884 = vmax.f32 %v8882, %v8883
    %v8885 = vsel %vm8786, %v8515, -inf
    %v8886 = vrot.slane %v8885, 4
    %v8887 = vmax.f32 %v8885, %v8886
    %v8888 = vrot.slane %v8887, 2
    %v8889 = vmax.f32 %v8887, %v8888
    %v8890 = vrot.slane %v8889, 1
    %v8891 = vmax.f32 %v8889, %v8890
    %v8892 = vsel %vm8786, %v8517, -inf
    %v8893 = vrot.slane %v8892, 4
    %v8894 = vmax.f32 %v8892, %v8893
    %v8895 = vrot.slane %v8894, 2
    %v8896 = vmax.f32 %v8894, %v8895
    %v8897 = vrot.slane %v8896, 1
    %v8898 = vmax.f32 %v8896, %v8897
    %v8899 = vsel %vm8786, %v8525, -inf
    %v8900 = vrot.slane %v8899, 4
    %v8901 = vmax.f32 %v8899, %v8900
    %v8902 = vrot.slane %v8901, 2
    %v8903 = vmax.f32 %v8901, %v8902
    %v8904 = vrot.slane %v8903, 1
    %v8905 = vmax.f32 %v8903, %v8904
    %v8906 = vsel %vm8786, %v8533, -inf
    %v8907 = vrot.slane %v8906, 4
    %v8908 = vmax.f32 %v8906, %v8907
    %v8909 = vrot.slane %v8908, 2
    %v8910 = vmax.f32 %v8908, %v8909
    %v8911 = vrot.slane %v8910, 1
    %v8912 = vmax.f32 %v8910, %v8911
    %v8913 = vsel %vm8786, %v8532, -inf
    %v8914 = vrot.slane %v8913, 4
    %v8915 = vmax.f32 %v8913, %v8914
    %v8916 = vrot.slane %v8915, 2
    %v8917 = vmax.f32 %v8915, %v8916
    %v8918 = vrot.slane %v8917, 1
    %v8919 = vmax.f32 %v8917, %v8918
    %v8920 = vsel %vm8786, %v8534, -inf
    %v8921 = vrot.slane %v8920, 4
    %v8922 = vmax.f32 %v8920, %v8921
    %v8923 = vrot.slane %v8922, 2
    %v8924 = vmax.f32 %v8922, %v8923
    %v8925 = vrot.slane %v8924, 1
    %v8926 = vmax.f32 %v8924, %v8925
    %v8927 = vsel %vm8786, %v8542, -inf
    %v8928 = vrot.slane %v8927, 4
    %v8929 = vmax.f32 %v8927, %v8928
    %v8930 = vrot.slane %v8929, 2
    %v8931 = vmax.f32 %v8929, %v8930
    %v8932 = vrot.slane %v8931, 1
    %v8933 = vmax.f32 %v8931, %v8932
    %v8934 = vsel %vm8786, %v8550, -inf
    %v8935 = vrot.slane %v8934, 4
    %v8936 = vmax.f32 %v8934, %v8935
    %v8937 = vrot.slane %v8936, 2
    %v8938 = vmax.f32 %v8936, %v8937
    %v8939 = vrot.slane %v8938, 1
    %v8940 = vmax.f32 %v8938, %v8939
    %v8941 = vsel %vm8786, %v8549, -inf
    %v8942 = vrot.slane %v8941, 4
    %v8943 = vmax.f32 %v8941, %v8942
    %v8944 = vrot.slane %v8943, 2
    %v8945 = vmax.f32 %v8943, %v8944
    %v8946 = vrot.slane %v8945, 1
    %v8947 = vmax.f32 %v8945, %v8946
    %v8948 = vsel %vm8786, %v8551, -inf
    %v8949 = vrot.slane %v8948, 4
    %v8950 = vmax.f32 %v8948, %v8949
    %v8951 = vrot.slane %v8950, 2
    %v8952 = vmax.f32 %v8950, %v8951
    %v8953 = vrot.slane %v8952, 1
    %v8954 = vmax.f32 %v8952, %v8953
    %v8955 = vsel %vm8786, %v8559, -inf
    %v8956 = vrot.slane %v8955, 4
    %v8957 = vmax.f32 %v8955, %v8956
    %v8958 = vrot.slane %v8957, 2
    %v8959 = vmax.f32 %v8957, %v8958
    %v8960 = vrot.slane %v8959, 1
    %v8961 = vmax.f32 %v8959, %v8960
    %v8962 = vsel %vm8786, %v8567, -inf
    %v8963 = vrot.slane %v8962, 4
    %v8964 = vmax.f32 %v8962, %v8963
    %v8965 = vrot.slane %v8964, 2
    %v8966 = vmax.f32 %v8964, %v8965
    %v8967 = vrot.slane %v8966, 1
    %v8968 = vmax.f32 %v8966, %v8967
    %v8969 = vsel %vm8786, %v8566, -inf
    %v8970 = vrot.slane %v8969, 4
    %v8971 = vmax.f32 %v8969, %v8970
    %v8972 = vrot.slane %v8971, 2
    %v8973 = vmax.f32 %v8971, %v8972
    %v8974 = vrot.slane %v8973, 1
    %v8975 = vmax.f32 %v8973, %v8974
    %v8976 = vsel %vm8786, %v8568, -inf
    %v8977 = vrot.slane %v8976, 4
    %v8978 = vmax.f32 %v8976, %v8977
    %v8979 = vrot.slane %v8978, 2
    %v8980 = vmax.f32 %v8978, %v8979
    %v8981 = vrot.slane %v8980, 1
    %v8982 = vmax.f32 %v8980, %v8981
    %v8983 = vsel %vm8786, %v8576, -inf
    %v8984 = vrot.slane %v8983, 4
    %v8985 = vmax.f32 %v8983, %v8984
    %v8986 = vrot.slane %v8985, 2
    %v8987 = vmax.f32 %v8985, %v8986
    %v8988 = vrot.slane %v8987, 1
    %v8989 = vmax.f32 %v8987, %v8988
    %v8990 = vsel %vm8786, %v8584, -inf
    %v8991 = vrot.slane %v8990, 4
    %v8992 = vmax.f32 %v8990, %v8991
    %v8993 = vrot.slane %v8992, 2
    %v8994 = vmax.f32 %v8992, %v8993
    %v8995 = vrot.slane %v8994, 1
    %v8996 = vmax.f32 %v8994, %v8995
    %v8997 = vsel %vm8786, %v8583, -inf
    %v8998 = vrot.slane %v8997, 4
    %v8999 = vmax.f32 %v8997, %v8998
    %v9000 = vrot.slane %v8999, 2
    %v9001 = vmax.f32 %v8999, %v9000
    %v9002 = vrot.slane %v9001, 1
    %v9003 = vmax.f32 %v9001, %v9002
    %v9004 = vsel %vm8786, %v8585, -inf
    %v9005 = vrot.slane %v9004, 4
    %v9006 = vmax.f32 %v9004, %v9005
    %v9007 = vrot.slane %v9006, 2
    %v9008 = vmax.f32 %v9006, %v9007
    %v9009 = vrot.slane %v9008, 1
    %v9010 = vmax.f32 %v9008, %v9009
    %v9011 = vsel %vm8786, %v8593, -inf
    %v9012 = vrot.slane %v9011, 4
    %v9013 = vmax.f32 %v9011, %v9012
    %v9014 = vrot.slane %v9013, 2
    %v9015 = vmax.f32 %v9013, %v9014
    %v9016 = vrot.slane %v9015, 1
    %v9017 = vmax.f32 %v9015, %v9016
    %v9018 = vsel %vm8786, %v8601, -inf
    %v9019 = vrot.slane %v9018, 4
    %v9020 = vmax.f32 %v9018, %v9019
    %v9021 = vrot.slane %v9020, 2
    %v9022 = vmax.f32 %v9020, %v9021
    %v9023 = vrot.slane %v9022, 1
    %v9024 = vmax.f32 %v9022, %v9023
    %v9025 = vsel %vm8786, %v8600, -inf
    %v9026 = vrot.slane %v9025, 4
    %v9027 = vmax.f32 %v9025, %v9026
    %v9028 = vrot.slane %v9027, 2
    %v9029 = vmax.f32 %v9027, %v9028
    %v9030 = vrot.slane %v9029, 1
    %v9031 = vmax.f32 %v9029, %v9030
    %v9032 = vsel %vm8786, %v8602, -inf
    %v9033 = vrot.slane %v9032, 4
    %v9034 = vmax.f32 %v9032, %v9033
    %v9035 = vrot.slane %v9034, 2
    %v9036 = vmax.f32 %v9034, %v9035
    %v9037 = vrot.slane %v9036, 1
    %v9038 = vmax.f32 %v9036, %v9037
    %v9039 = vsel %vm8786, %v8610, -inf
    %v9040 = vrot.slane %v9039, 4
    %v9041 = vmax.f32 %v9039, %v9040
    %v9042 = vrot.slane %v9041, 2
    %v9043 = vmax.f32 %v9041, %v9042
    %v9044 = vrot.slane %v9043, 1
    %v9045 = vmax.f32 %v9043, %v9044
    %v9046 = vsel %vm8786, %v8618, -inf
    %v9047 = vrot.slane %v9046, 4
    %v9048 = vmax.f32 %v9046, %v9047
    %v9049 = vrot.slane %v9048, 2
    %v9050 = vmax.f32 %v9048, %v9049
    %v9051 = vrot.slane %v9050, 1
    %v9052 = vmax.f32 %v9050, %v9051
    %v9053 = vsel %vm8786, %v8617, -inf
    %v9054 = vrot.slane %v9053, 4
    %v9055 = vmax.f32 %v9053, %v9054
    %v9056 = vrot.slane %v9055, 2
    %v9057 = vmax.f32 %v9055, %v9056
    %v9058 = vrot.slane %v9057, 1
    %v9059 = vmax.f32 %v9057, %v9058
    %v9060 = vsel %vm8786, %v8619, -inf
    %v9061 = vrot.slane %v9060, 4
    %v9062 = vmax.f32 %v9060, %v9061
    %v9063 = vrot.slane %v9062, 2
    %v9064 = vmax.f32 %v9062, %v9063
    %v9065 = vrot.slane %v9064, 1
    %v9066 = vmax.f32 %v9064, %v9065
    %v9067 = vsel %vm8786, %v8627, -inf
    %v9068 = vrot.slane %v9067, 4
    %v9069 = vmax.f32 %v9067, %v9068
    %v9070 = vrot.slane %v9069, 2
    %v9071 = vmax.f32 %v9069, %v9070
    %v9072 = vrot.slane %v9071, 1
    %v9073 = vmax.f32 %v9071, %v9072
    %v9074 = vsel %vm8786, %v8635, -inf
    %v9075 = vrot.slane %v9074, 4
    %v9076 = vmax.f32 %v9074, %v9075
    %v9077 = vrot.slane %v9076, 2
    %v9078 = vmax.f32 %v9076, %v9077
    %v9079 = vrot.slane %v9078, 1
    %v9080 = vmax.f32 %v9078, %v9079
    %v9081 = vsel %vm8786, %v8634, -inf
    %v9082 = vrot.slane %v9081, 4
    %v9083 = vmax.f32 %v9081, %v9082
    %v9084 = vrot.slane %v9083, 2
    %v9085 = vmax.f32 %v9083, %v9084
    %v9086 = vrot.slane %v9085, 1
    %v9087 = vmax.f32 %v9085, %v9086
    %v9088 = vsel %vm8786, %v8636, -inf
    %v9089 = vrot.slane %v9088, 4
    %v9090 = vmax.f32 %v9088, %v9089
    %v9091 = vrot.slane %v9090, 2
    %v9092 = vmax.f32 %v9090, %v9091
    %v9093 = vrot.slane %v9092, 1
    %v9094 = vmax.f32 %v9092, %v9093
    %v9095 = vsel %vm8786, %v8644, -inf
    %v9096 = vrot.slane %v9095, 4
    %v9097 = vmax.f32 %v9095, %v9096
    %v9098 = vrot.slane %v9097, 2
    %v9099 = vmax.f32 %v9097, %v9098
    %v9100 = vrot.slane %v9099, 1
    %v9101 = vmax.f32 %v9099, %v9100
    %v9102 = vsel %vm8786, %v8652, -inf
    %v9103 = vrot.slane %v9102, 4
    %v9104 = vmax.f32 %v9102, %v9103
    %v9105 = vrot.slane %v9104, 2
    %v9106 = vmax.f32 %v9104, %v9105
    %v9107 = vrot.slane %v9106, 1
    %v9108 = vmax.f32 %v9106, %v9107
    %v9109 = vsel %vm8786, %v8651, -inf
    %v9110 = vrot.slane %v9109, 4
    %v9111 = vmax.f32 %v9109, %v9110
    %v9112 = vrot.slane %v9111, 2
    %v9113 = vmax.f32 %v9111, %v9112
    %v9114 = vrot.slane %v9113, 1
    %v9115 = vmax.f32 %v9113, %v9114
    %v9116 = vsel %vm8786, %v8653, -inf
    %v9117 = vrot.slane %v9116, 4
    %v9118 = vmax.f32 %v9116, %v9117
    %v9119 = vrot.slane %v9118, 2
    %v9120 = vmax.f32 %v9118, %v9119
    %v9121 = vrot.slane %v9120, 1
    %v9122 = vmax.f32 %v9120, %v9121
    %v9123 = vsel %vm8786, %v8661, -inf
    %v9124 = vrot.slane %v9123, 4
    %v9125 = vmax.f32 %v9123, %v9124
    %v9126 = vrot.slane %v9125, 2
    %v9127 = vmax.f32 %v9125, %v9126
    %v9128 = vrot.slane %v9127, 1
    %v9129 = vmax.f32 %v9127, %v9128
    %v9130 = vsel %vm8786, %v8669, -inf
    %v9131 = vrot.slane %v9130, 4
    %v9132 = vmax.f32 %v9130, %v9131
    %v9133 = vrot.slane %v9132, 2
    %v9134 = vmax.f32 %v9132, %v9133
    %v9135 = vrot.slane %v9134, 1
    %v9136 = vmax.f32 %v9134, %v9135
    %v9137 = vsel %vm8786, %v8668, -inf
    %v9138 = vrot.slane %v9137, 4
    %v9139 = vmax.f32 %v9137, %v9138
    %v9140 = vrot.slane %v9139, 2
    %v9141 = vmax.f32 %v9139, %v9140
    %v9142 = vrot.slane %v9141, 1
    %v9143 = vmax.f32 %v9141, %v9142
    %v9144 = vsel %vm8786, %v8670, -inf
    %v9145 = vrot.slane %v9144, 4
    %v9146 = vmax.f32 %v9144, %v9145
    %v9147 = vrot.slane %v9146, 2
    %v9148 = vmax.f32 %v9146, %v9147
    %v9149 = vrot.slane %v9148, 1
    %v9150 = vmax.f32 %v9148, %v9149
    %v9151 = vsel %vm8786, %v8678, -inf
    %v9152 = vrot.slane %v9151, 4
    %v9153 = vmax.f32 %v9151, %v9152
    %v9154 = vrot.slane %v9153, 2
    %v9155 = vmax.f32 %v9153, %v9154
    %v9156 = vrot.slane %v9155, 1
    %v9157 = vmax.f32 %v9155, %v9156
    %v9158 = vsel %vm8786, %v8686, -inf
    %v9159 = vrot.slane %v9158, 4
    %v9160 = vmax.f32 %v9158, %v9159
    %v9161 = vrot.slane %v9160, 2
    %v9162 = vmax.f32 %v9160, %v9161
    %v9163 = vrot.slane %v9162, 1
    %v9164 = vmax.f32 %v9162, %v9163
    %v9165 = vsel %vm8786, %v8685, -inf
    %v9166 = vrot.slane %v9165, 4
    %v9167 = vmax.f32 %v9165, %v9166
    %v9168 = vrot.slane %v9167, 2
    %v9169 = vmax.f32 %v9167, %v9168
    %v9170 = vrot.slane %v9169, 1
    %v9171 = vmax.f32 %v9169, %v9170
    %v9172 = vsel %vm8786, %v8687, -inf
    %v9173 = vrot.slane %v9172, 4
    %v9174 = vmax.f32 %v9172, %v9173
    %v9175 = vrot.slane %v9174, 2
    %v9176 = vmax.f32 %v9174, %v9175
    %v9177 = vrot.slane %v9176, 1
    %v9178 = vmax.f32 %v9176, %v9177
    %v9179 = vsel %vm8786, %v8695, -inf
    %v9180 = vrot.slane %v9179, 4
    %v9181 = vmax.f32 %v9179, %v9180
    %v9182 = vrot.slane %v9181, 2
    %v9183 = vmax.f32 %v9181, %v9182
    %v9184 = vrot.slane %v9183, 1
    %v9185 = vmax.f32 %v9183, %v9184
    %v9186 = vsel %vm8786, %v8703, -inf
    %v9187 = vrot.slane %v9186, 4
    %v9188 = vmax.f32 %v9186, %v9187
    %v9189 = vrot.slane %v9188, 2
    %v9190 = vmax.f32 %v9188, %v9189
    %v9191 = vrot.slane %v9190, 1
    %v9192 = vmax.f32 %v9190, %v9191
    %v9193 = vsel %vm8786, %v8702, -inf
    %v9194 = vrot.slane %v9193, 4
    %v9195 = vmax.f32 %v9193, %v9194
    %v9196 = vrot.slane %v9195, 2
    %v9197 = vmax.f32 %v9195, %v9196
    %v9198 = vrot.slane %v9197, 1
    %v9199 = vmax.f32 %v9197, %v9198
    %v9200 = vsel %vm8786, %v8704, -inf
    %v9201 = vrot.slane %v9200, 4
    %v9202 = vmax.f32 %v9200, %v9201
    %v9203 = vrot.slane %v9202, 2
    %v9204 = vmax.f32 %v9202, %v9203
    %v9205 = vrot.slane %v9204, 1
    %v9206 = vmax.f32 %v9204, %v9205
    %v9207 = vsel %vm8786, %v8712, -inf
    %v9208 = vrot.slane %v9207, 4
    %v9209 = vmax.f32 %v9207, %v9208
    %v9210 = vrot.slane %v9209, 2
    %v9211 = vmax.f32 %v9209, %v9210
    %v9212 = vrot.slane %v9211, 1
    %v9213 = vmax.f32 %v9211, %v9212
    %v9214 = vsel %vm8786, %v8720, -inf
    %v9215 = vrot.slane %v9214, 4
    %v9216 = vmax.f32 %v9214, %v9215
    %v9217 = vrot.slane %v9216, 2
    %v9218 = vmax.f32 %v9216, %v9217
    %v9219 = vrot.slane %v9218, 1
    %v9220 = vmax.f32 %v9218, %v9219
    %v9221 = vsel %vm8786, %v8719, -inf
    %v9222 = vrot.slane %v9221, 4
    %v9223 = vmax.f32 %v9221, %v9222
    %v9224 = vrot.slane %v9223, 2
    %v9225 = vmax.f32 %v9223, %v9224
    %v9226 = vrot.slane %v9225, 1
    %v9227 = vmax.f32 %v9225, %v9226
    %v9228 = vsel %vm8786, %v8721, -inf
    %v9229 = vrot.slane %v9228, 4
    %v9230 = vmax.f32 %v9228, %v9229
    %v9231 = vrot.slane %v9230, 2
    %v9232 = vmax.f32 %v9230, %v9231
    %v9233 = vrot.slane %v9232, 1
    %v9234 = vmax.f32 %v9232, %v9233
    %v9235 = vsel %vm8011, %v8793, -inf
    %v9236 = vsel %vm8011, %v8821, -inf
    %v9237 = vmax.f32 %v9235, %v9236
    %v9238 = vsel %vm8011, %v8800, -inf
    %v9239 = vsel %vm8011, %v8828, -inf
    %v9240 = vmax.f32 %v9238, %v9239
    %v9241 = vsel %vm8011, %v8807, -inf
    %v9242 = vsel %vm8011, %v8835, -inf
    %v9243 = vmax.f32 %v9241, %v9242
    %v9244 = vsel %vm8011, %v8814, -inf
    %v9245 = vsel %vm8011, %v8842, -inf
    %v9246 = vmax.f32 %v9244, %v9245
    %v9247 = vsel %vm8011, %v8849, -inf
    %v9248 = vsel %vm8011, %v8877, -inf
    %v9249 = vmax.f32 %v9247, %v9248
    %v9250 = vsel %vm8011, %v8856, -inf
    %v9251 = vsel %vm8011, %v8884, -inf
    %v9252 = vmax.f32 %v9250, %v9251
    %v9253 = vsel %vm8011, %v8863, -inf
    %v9254 = vsel %vm8011, %v8891, -inf
    %v9255 = vmax.f32 %v9253, %v9254
    %v9256 = vsel %vm8011, %v8870, -inf
    %v9257 = vsel %vm8011, %v8898, -inf
    %v9258 = vmax.f32 %v9256, %v9257
    %v9259 = vsel %vm8011, %v8905, -inf
    %v9260 = vsel %vm8011, %v8933, -inf
    %v9261 = vmax.f32 %v9259, %v9260
    %v9262 = vsel %vm8011, %v8912, -inf
    %v9263 = vsel %vm8011, %v8940, -inf
    %v9264 = vmax.f32 %v9262, %v9263
    %v9265 = vsel %vm8011, %v8919, -inf
    %v9266 = vsel %vm8011, %v8947, -inf
    %v9267 = vmax.f32 %v9265, %v9266
    %v9268 = vsel %vm8011, %v8926, -inf
    %v9269 = vsel %vm8011, %v8954, -inf
    %v9270 = vmax.f32 %v9268, %v9269
    %v9271 = vsel %vm8011, %v8961, -inf
    %v9272 = vsel %vm8011, %v8989, -inf
    %v9273 = vmax.f32 %v9271, %v9272
    %v9274 = vsel %vm8011, %v8968, -inf
    %v9275 = vsel %vm8011, %v8996, -inf
    %v9276 = vmax.f32 %v9274, %v9275
    %v9277 = vsel %vm8011, %v8975, -inf
    %v9278 = vsel %vm8011, %v9003, -inf
    %v9279 = vmax.f32 %v9277, %v9278
    %v9280 = vsel %vm8011, %v8982, -inf
    %v9281 = vsel %vm8011, %v9010, -inf
    %v9282 = vmax.f32 %v9280, %v9281
    %v9283 = vsel %vm8011, %v9017, -inf
    %v9284 = vsel %vm8011, %v9045, -inf
    %v9285 = vmax.f32 %v9283, %v9284
    %v9286 = vsel %vm8011, %v9024, -inf
    %v9287 = vsel %vm8011, %v9052, -inf
    %v9288 = vmax.f32 %v9286, %v9287
    %v9289 = vsel %vm8011, %v9031, -inf
    %v9290 = vsel %vm8011, %v9059, -inf
    %v9291 = vmax.f32 %v9289, %v9290
    %v9292 = vsel %vm8011, %v9038, -inf
    %v9293 = vsel %vm8011, %v9066, -inf
    %v9294 = vmax.f32 %v9292, %v9293
    %v9295 = vsel %vm8011, %v9073, -inf
    %v9296 = vsel %vm8011, %v9101, -inf
    %v9297 = vmax.f32 %v9295, %v9296
    %v9298 = vsel %vm8011, %v9080, -inf
    %v9299 = vsel %vm8011, %v9108, -inf
    %v9300 = vmax.f32 %v9298, %v9299
    %v9301 = vsel %vm8011, %v9087, -inf
    %v9302 = vsel %vm8011, %v9115, -inf
    %v9303 = vmax.f32 %v9301, %v9302
    %v9304 = vsel %vm8011, %v9094, -inf
    %v9305 = vsel %vm8011, %v9122, -inf
    %v9306 = vmax.f32 %v9304, %v9305
    %v9307 = vsel %vm8011, %v9129, -inf
    %v9308 = vsel %vm8011, %v9157, -inf
    %v9309 = vmax.f32 %v9307, %v9308
    %v9310 = vsel %vm8011, %v9136, -inf
    %v9311 = vsel %vm8011, %v9164, -inf
    %v9312 = vmax.f32 %v9310, %v9311
    %v9313 = vsel %vm8011, %v9143, -inf
    %v9314 = vsel %vm8011, %v9171, -inf
    %v9315 = vmax.f32 %v9313, %v9314
    %v9316 = vsel %vm8011, %v9150, -inf
    %v9317 = vsel %vm8011, %v9178, -inf
    %v9318 = vmax.f32 %v9316, %v9317
    %v9319 = vsel %vm8011, %v9185, -inf
    %v9320 = vsel %vm8011, %v9213, -inf
    %v9321 = vmax.f32 %v9319, %v9320
    %v9322 = vsel %vm8011, %v9192, -inf
    %v9323 = vsel %vm8011, %v9220, -inf
    %v9324 = vmax.f32 %v9322, %v9323
    %v9325 = vsel %vm8011, %v9199, -inf
    %v9326 = vsel %vm8011, %v9227, -inf
    %v9327 = vmax.f32 %v9325, %v9326
    %v9328 = vsel %vm8011, %v9206, -inf
    %v9329 = vsel %vm8011, %v9234, -inf
    %v9330 = vmax.f32 %v9328, %v9329
    %v9331 = vld [vmem:[#allocation8] sm:$0xff]
    %v9332 = vld [vmem:[#allocation8 + $0x8] sm:$0xff]
    %v9333 = vld [vmem:[#allocation8 + $0x10] sm:$0xff]
    %v9334 = vld [vmem:[#allocation8 + $0x18] sm:$0xff]
    %v9335 = vld [vmem:[#allocation8 + $0x20] sm:$0xff]
    %v9336 = vld [vmem:[#allocation8 + $0x28] sm:$0xff]
    %v9337 = vld [vmem:[#allocation8 + $0x30] sm:$0xff]
    %v9338 = vld [vmem:[#allocation8 + $0x38] sm:$0xff]
    %v9339 = vld [vmem:[#allocation8 + $0x40] sm:$0xff]
    %v9340 = vld [vmem:[#allocation8 + $0x48] sm:$0xff]
    %v9341 = vld [vmem:[#allocation8 + $0x50] sm:$0xff]
    %v9342 = vld [vmem:[#allocation8 + $0x58] sm:$0xff]
    %v9343 = vld [vmem:[#allocation8 + $0x60] sm:$0xff]
    %v9344 = vld [vmem:[#allocation8 + $0x68] sm:$0xff]
    %v9345 = vld [vmem:[#allocation8 + $0x70] sm:$0xff]
    %v9346 = vld [vmem:[#allocation8 + $0x78] sm:$0xff]
    %v9347 = vld [vmem:[#allocation8 + $0x80] sm:$0xff]
    %v9348 = vld [vmem:[#allocation8 + $0x88] sm:$0xff]
    %v9349 = vld [vmem:[#allocation8 + $0x90] sm:$0xff]
    %v9350 = vld [vmem:[#allocation8 + $0x98] sm:$0xff]
    %v9351 = vld [vmem:[#allocation8 + $0xa0] sm:$0xff]
    %v9352 = vld [vmem:[#allocation8 + $0xa8] sm:$0xff]
    %v9353 = vld [vmem:[#allocation8 + $0xb0] sm:$0xff]
    %v9354 = vld [vmem:[#allocation8 + $0xb8] sm:$0xff]
    %v9355 = vld [vmem:[#allocation8 + $0xc0] sm:$0xff]
    %v9356 = vld [vmem:[#allocation8 + $0xc8] sm:$0xff]
    %v9357 = vld [vmem:[#allocation8 + $0xd0] sm:$0xff]
    %v9358 = vld [vmem:[#allocation8 + $0xd8] sm:$0xff]
    %v9359 = vld [vmem:[#allocation8 + $0xe0] sm:$0xff]
    %v9360 = vld [vmem:[#allocation8 + $0xe8] sm:$0xff]
    %v9361 = vld [vmem:[#allocation8 + $0xf0] sm:$0xff]
    %v9362 = vld [vmem:[#allocation8 + $0xf8] sm:$0xff]
    %v9363 = vld [vmem:[#allocation8 + $0x100] sm:$0xff]
    %v9364 = vld [vmem:[#allocation8 + $0x108] sm:$0xff]
    %v9365 = vld [vmem:[#allocation8 + $0x110] sm:$0xff]
    %v9366 = vld [vmem:[#allocation8 + $0x118] sm:$0xff]
    %v9367 = vld [vmem:[#allocation8 + $0x120] sm:$0xff]
    %v9368 = vld [vmem:[#allocation8 + $0x128] sm:$0xff]
    %v9369 = vld [vmem:[#allocation8 + $0x130] sm:$0xff]
    %v9370 = vld [vmem:[#allocation8 + $0x138] sm:$0xff]
    %v9371 = vld [vmem:[#allocation8 + $0x140] sm:$0xff]
    %v9372 = vld [vmem:[#allocation8 + $0x148] sm:$0xff]
    %v9373 = vld [vmem:[#allocation8 + $0x150] sm:$0xff]
    %v9374 = vld [vmem:[#allocation8 + $0x158] sm:$0xff]
    %v9375 = vld [vmem:[#allocation8 + $0x160] sm:$0xff]
    %v9376 = vld [vmem:[#allocation8 + $0x168] sm:$0xff]
    %v9377 = vld [vmem:[#allocation8 + $0x170] sm:$0xff]
    %v9378 = vld [vmem:[#allocation8 + $0x178] sm:$0xff]
    %v9379 = vld [vmem:[#allocation8 + $0x180] sm:$0xff]
    %v9380 = vld [vmem:[#allocation8 + $0x188] sm:$0xff]
    %v9381 = vld [vmem:[#allocation8 + $0x190] sm:$0xff]
    %v9382 = vld [vmem:[#allocation8 + $0x198] sm:$0xff]
    %v9383 = vld [vmem:[#allocation8 + $0x1a0] sm:$0xff]
    %v9384 = vld [vmem:[#allocation8 + $0x1a8] sm:$0xff]
    %v9385 = vld [vmem:[#allocation8 + $0x1b0] sm:$0xff]
    %v9386 = vld [vmem:[#allocation8 + $0x1b8] sm:$0xff]
    %v9387 = vld [vmem:[#allocation8 + $0x1c0] sm:$0xff]
    %v9388 = vld [vmem:[#allocation8 + $0x1c8] sm:$0xff]
    %v9389 = vld [vmem:[#allocation8 + $0x1d0] sm:$0xff]
    %v9390 = vld [vmem:[#allocation8 + $0x1d8] sm:$0xff]
    %v9391 = vld [vmem:[#allocation8 + $0x1e0] sm:$0xff]
    %v9392 = vld [vmem:[#allocation8 + $0x1e8] sm:$0xff]
    %v9393 = vld [vmem:[#allocation8 + $0x1f0] sm:$0xff]
    %v9394 = vld [vmem:[#allocation8 + $0x1f8] sm:$0xff]
    %v9395 = vld [vmem:[#allocation8 + $0x200] sm:$0xff]
    %v9396 = vld [vmem:[#allocation8 + $0x208] sm:$0xff]
    %v9397 = vld [vmem:[#allocation8 + $0x210] sm:$0xff]
    %v9398 = vld [vmem:[#allocation8 + $0x218] sm:$0xff]
    %v9399 = vld [vmem:[#allocation8 + $0x220] sm:$0xff]
    %v9400 = vld [vmem:[#allocation8 + $0x228] sm:$0xff]
    %v9401 = vld [vmem:[#allocation8 + $0x230] sm:$0xff]
    %v9402 = vld [vmem:[#allocation8 + $0x238] sm:$0xff]
    %v9403 = vld [vmem:[#allocation10] sm:$0x1]
    %v9436 = vsel %vm7391, %v9240, %v9237
    %v9437 = vsel %vm7393, %v9243, %v9436
    %v9438 = vsel %vm7395, %v9246, %v9437
    %v9439 = vsel %vm7391, %v9252, %v9249
    %v9440 = vsel %vm7393, %v9255, %v9439
    %v9441 = vsel %vm7395, %v9258, %v9440
    %v9442 = vsel %vm7391, %v9264, %v9261
    %v9443 = vsel %vm7393, %v9267, %v9442
    %v9444 = vsel %vm7395, %v9270, %v9443
    %v9445 = vsel %vm7391, %v9276, %v9273
    %v9446 = vsel %vm7393, %v9279, %v9445
    %v9447 = vsel %vm7395, %v9282, %v9446
    %v9448 = vsel %vm7391, %v9288, %v9285
    %v9449 = vsel %vm7393, %v9291, %v9448
    %v9450 = vsel %vm7395, %v9294, %v9449
    %v9451 = vsel %vm7391, %v9300, %v9297
    %v9452 = vsel %vm7393, %v9303, %v9451
    %v9453 = vsel %vm7395, %v9306, %v9452
    %v9454 = vsel %vm7391, %v9312, %v9309
    %v9455 = vsel %vm7393, %v9315, %v9454
    %v9456 = vsel %vm7395, %v9318, %v9455
    %v9457 = vsel %vm7391, %v9324, %v9321
    %v9458 = vsel %vm7393, %v9327, %v9457
    %v9459 = vsel %vm7395, %v9330, %v9458
    %v9460 = vrot.slane %v9438, 7
    %v9461 = vrot.slane %v9441, 7
    %v9462 = vrot.slane %v9444, 7
    %v9463 = vrot.slane %v9447, 7
    %v9464 = vrot.slane %v9450, 7
    %v9465 = vrot.slane %v9453, 7
    %v9466 = vrot.slane %v9456, 7
    %v9467 = vrot.slane %v9459, 7
    %v9476 = vsel %vm308, 0.0, %v9460
    %v9477 = vsel %vm308, 0.0, %v9461
    %v9478 = vsel %vm308, 0.0, %v9462
    %v9479 = vsel %vm308, 0.0, %v9463
    %v9480 = vsel %vm308, 0.0, %v9464
    %v9481 = vsel %vm308, 0.0, %v9465
    %v9482 = vsel %vm308, 0.0, %v9466
    %v9483 = vsel %vm308, 0.0, %v9467
    %vm9484 = vcmask 1044480
    %v9485 = vsel %vm9484, %v503, 0.0
    %v9486 = vsel %vm9484, %v9476, 0.0
    %v9487 = vsel %vm9484, %v9477, 0.0
    %v9488 = vsel %vm9484, %v9478, 0.0
    %v9489 = vsel %vm9484, %v9479, 0.0
    %v9490 = vsel %vm9484, %v9480, 0.0
    %v9491 = vsel %vm9484, %v9481, 0.0
    %v9492 = vsel %vm9484, %v9482, 0.0
    %v9493 = vsel %vm9484, %v9483, 0.0
    %v9501 = vrot.slane %v9485, 1
    %v9502 = vrot.slane %v9486, 1
    %v9503 = vrot.slane %v9487, 1
    %v9504 = vrot.slane %v9488, 1
    %v9505 = vrot.slane %v9490, 1
    %v9506 = vrot.slane %v9491, 1
    %v9507 = vrot.slane %v9492, 1
    %9508 = vrot.lane.b32.xlu0 %v9501, 64
    %v9509 = vpop.permute.xlu0 %9508
    %9510 = vrot.lane.b32.xlu0 %v9502, 64
    %v9511 = vpop.permute.xlu0 %9510
    %9512 = vrot.lane.b32.xlu0 %v9503, 64
    %v9513 = vpop.permute.xlu0 %9512
    %9514 = vrot.lane.b32.xlu0 %v9504, 64
    %v9515 = vpop.permute.xlu0 %9514
    %9516 = vrot.lane.b32.xlu0 %v9505, 64
    %v9517 = vpop.permute.xlu0 %9516
    %9518 = vrot.lane.b32.xlu0 %v9506, 64
    %v9519 = vpop.permute.xlu0 %9518
    %9520 = vrot.lane.b32.xlu0 %v9507, 64
    %v9521 = vpop.permute.xlu0 %9520
    %v9529 = vrot.slane %v9485, 2
    %v9530 = vrot.slane %v9486, 2
    %v9531 = vrot.slane %v9487, 2
    %v9532 = vrot.slane %v9488, 2
    %v9533 = vrot.slane %v9490, 2
    %v9534 = vrot.slane %v9491, 2
    %v9535 = vrot.slane %v9492, 2
    %9545 = vrot.lane.b32.xlu0 %v9486, 64
    %v9546 = vpop.permute.xlu0 %9545
    %9547 = vrot.lane.b32.xlu0 %v9487, 64
    %v9548 = vpop.permute.xlu0 %9547
    %9549 = vrot.lane.b32.xlu0 %v9488, 64
    %v9550 = vpop.permute.xlu0 %9549
    %9551 = vrot.lane.b32.xlu0 %v9489, 64
    %v9552 = vpop.permute.xlu0 %9551
    %9553 = vrot.lane.b32.xlu0 %v9490, 64
    %v9554 = vpop.permute.xlu0 %9553
    %9555 = vrot.lane.b32.xlu0 %v9491, 64
    %v9556 = vpop.permute.xlu0 %9555
    %9557 = vrot.lane.b32.xlu0 %v9492, 64
    %v9558 = vpop.permute.xlu0 %9557
    %9559 = vrot.lane.b32.xlu0 %v9493, 64
    %v9560 = vpop.permute.xlu0 %9559
    %v9569 = vrot.slane %v9489, 1
    %v9570 = vrot.slane %v9493, 1
    %v9579 = vrot.slane %v9489, 2
    %v9580 = vrot.slane %v9493, 2
    %9581 = vrot.lane.b32.xlu0 %v9530, 64
    %v9582 = vpop.permute.xlu0 %9581
    %9583 = vrot.lane.b32.xlu0 %v9531, 64
    %v9584 = vpop.permute.xlu0 %9583
    %9585 = vrot.lane.b32.xlu0 %v9532, 64
    %v9586 = vpop.permute.xlu0 %9585
    %9587 = vrot.lane.b32.xlu0 %v9579, 64
    %v9588 = vpop.permute.xlu0 %9587
    %9589 = vrot.lane.b32.xlu0 %v9533, 64
    %v9590 = vpop.permute.xlu0 %9589
    %9591 = vrot.lane.b32.xlu0 %v9534, 64
    %v9592 = vpop.permute.xlu0 %9591
    %9593 = vrot.lane.b32.xlu0 %v9535, 64
    %v9594 = vpop.permute.xlu0 %9593
    %9595 = vrot.lane.b32.xlu0 %v9580, 64
    %v9596 = vpop.permute.xlu0 %9595
    %9605 = vrot.lane.b32.xlu0 %v9569, 64
    %v9606 = vpop.permute.xlu0 %9605
    %9607 = vrot.lane.b32.xlu0 %v9570, 64
    %v9608 = vpop.permute.xlu0 %9607
    %v9611 = vsel %vm8011, %v9485, %v9509
    %v9612 = vsel %vm8011, %v9486, %v9511
    %v9613 = vsel %vm8011, %v9487, %v9513
    %v9614 = vsel %vm8011, %v9488, %v9515
    %v9615 = vsel %vm8011, %v9490, %v9517
    %v9616 = vsel %vm8011, %v9491, %v9519
    %v9617 = vsel %vm8011, %v9492, %v9521
    %v9618 = vsel %vm8011, %v9529, %v9546
    %v9619 = vsel %vm8011, %v9530, %v9548
    %v9620 = vsel %vm8011, %v9531, %v9550
    %v9621 = vsel %vm8011, %v9532, %v9552
    %v9622 = vsel %vm8011, %v9529, %v9554
    %v9623 = vsel %vm8011, %v9533, %v9556
    %v9624 = vsel %vm8011, %v9534, %v9558
    %v9625 = vsel %vm8011, %v9535, %v9560
    %v9626 = vsel %vm8011, %v9502, %v9582
    %v9627 = vsel %vm8011, %v9503, %v9584
    %v9628 = vsel %vm8011, %v9504, %v9586
    %v9629 = vsel %vm8011, %v9569, %v9588
    %v9630 = vsel %vm8011, %v9505, %v9590
    %v9631 = vsel %vm8011, %v9506, %v9592
    %v9632 = vsel %vm8011, %v9507, %v9594
    %v9633 = vsel %vm8011, %v9570, %v9596
    %v9634 = vsel %vm8011, %v9489, %v9606
    %v9635 = vsel %vm8011, %v9493, %v9608
    %v9661 = vcombine.low %v9611, %v9618
    %v9662 = vcombine.low %v9626, %v9613
    %v9663 = vcombine.low %v9612, %v9619
    %v9664 = vcombine.low %v9627, %v9614
    %v9665 = vcombine.low %v9613, %v9620
    %v9666 = vcombine.low %v9628, %v9634
    %v9667 = vcombine.low %v9614, %v9621
    %v9668 = vcombine.low %v9629, %v9611
    %v9669 = vcombine.low %v9611, %v9622
    %v9670 = vcombine.low %v9630, %v9616
    %v9671 = vcombine.low %v9615, %v9623
    %v9672 = vcombine.low %v9631, %v9617
    %v9673 = vcombine.low %v9616, %v9624
    %v9674 = vcombine.low %v9632, %v9635
    %v9675 = vcombine.low %v9617, %v9625
    %v9676 = vcombine.low %v9633, %v9611
    %v9678 = vlaneseq
    %v9679 = vshrl.u32 %v9678, 7
    %v9680 = vsub.s32 0, %v9679
    %v9681 = vrot.slane %v9403, %v9680
    %v9683 = vcombine.low %v9661, %v9663
    %v9684 = vcombine.high %v9661, %v9663
    %v9685 = vcombine.low %v9662, %v9664
    %v9686 = vcombine.high %v9662, %v9664
    %v9687 = vcombine.low %v9531, %v9532
    %v9688 = vcombine.low %v9665, %v9667
    %v9689 = vcombine.high %v9665, %v9667
    %v9690 = vcombine.low %v9666, %v9668
    %v9691 = vcombine.high %v9666, %v9668
    %v9692 = vcombine.low %v9579, %v9529
    %v9693 = vcombine.low %v9669, %v9671
    %v9694 = vcombine.high %v9669, %v9671
    %v9695 = vcombine.low %v9670, %v9672
    %v9696 = vcombine.high %v9670, %v9672
    %v9697 = vcombine.low %v9534, %v9535
    %v9698 = vcombine.low %v9673, %v9675
    %v9699 = vcombine.high %v9673, %v9675
    %v9700 = vcombine.low %v9674, %v9676
    %v9701 = vcombine.high %v9674, %v9676
    %v9702 = vcombine.low %v9580, %v9529
    %v9719 = vsel %vm8011, %v9687, 0
    %v9721 = vsel %vm8011, %v9692, 0
    %v9723 = vsel %vm8011, %v9697, 0
    %v9725 = vsel %vm8011, %v9702, 0
    %9727 = vmatprep.subr.mxu0 0.0
    %9728 = vmatpush1.msra.mxu0 %v9331
    %9729 = vmatprep.subr.mxu0 0.0
    %9730 = vmatpush1.msra.mxu0 %v9332
    %9731 = vmatprep.subr.mxu0 0.0
    %9732 = vmatpush1.msra.mxu0 %v9333
    %9733 = vmatprep.subr.mxu0 0.0
    %9734 = vmatpush1.msra.mxu0 %v9334
    %9735 = vmatprep.subr.mxu0 0.0
    %9736 = vmatpush1.msra.mxu0 %v9335
    %9737 = vmatprep.subr.mxu0 0.0
    %9738 = vmatpush1.msra.mxu0 %v9336
    %9739 = vmatprep.subr.mxu0 0.0
    %9740 = vmatpush1.msra.mxu0 %v9337
    %9741 = vmatprep.subr.mxu0 0.0
    %9742 = vmatpush1.msra.mxu0 %v9338
    %9743 = vmatprep.subr.mxu0 0.0
    %9744 = vmatpush1.msra.mxu0 %v9339
    %9745 = vmatprep.subr.mxu0 0.0
    %9746 = vmatpush1.msra.mxu0 %v9340
    %9747 = vmatprep.subr.mxu0 0.0
    %9748 = vmatpush1.msra.mxu0 %v9341
    %9749 = vmatprep.subr.mxu0 0.0
    %9750 = vmatpush1.msra.mxu0 %v9342
    %9751 = vmatprep.subr.mxu0 0.0
    %9752 = vmatpush1.msra.mxu0 %v9343
    %9753 = vmatprep.subr.mxu0 0.0
    %9754 = vmatpush1.msra.mxu0 %v9344
    %9755 = vmatprep.subr.mxu0 0.0
    %9756 = vmatpush1.msra.mxu0 %v9345
    %9757 = vmatprep.subr.mxu0 0.0
    %9758 = vmatpush1.msra.mxu0 %v9346
    %9759 = vmatprep.subr.mxu0 0.0
    %9760 = vmatpush1.msra.mxu0 %v9347
    %9761 = vmatprep.subr.mxu0 0.0
    %9762 = vmatpush1.msra.mxu0 %v9348
    %9763 = vmatprep.subr.mxu0 0.0
    %9764 = vmatpush1.msra.mxu0 %v9349
    %9765 = vmatprep.subr.mxu0 0.0
    %9766 = vmatpush1.msra.mxu0 %v9350
    %9767 = vmatprep.subr.mxu0 0.0
    %9768 = vmatpush1.msra.mxu0 %v9351
    %9769 = vmatprep.subr.mxu0 0.0
    %9770 = vmatpush1.msra.mxu0 %v9352
    %9771 = vmatprep.subr.mxu0 0.0
    %9772 = vmatpush1.msra.mxu0 %v9353
    %9773 = vmatprep.subr.mxu0 0.0
    %9774 = vmatpush1.msra.mxu0 %v9354
    %9775 = vmatprep.subr.mxu0 0.0
    %9776 = vmatpush1.msra.mxu0 %v9355
    %9777 = vmatprep.subr.mxu0 0.0
    %9778 = vmatpush1.msra.mxu0 %v9356
    %9779 = vmatprep.subr.mxu0 0.0
    %9780 = vmatpush1.msra.mxu0 %v9357
    %9781 = vmatprep.subr.mxu0 0.0
    %9782 = vmatpush1.msra.mxu0 %v9358
    %9783 = vmatprep.subr.mxu0 0.0
    %9784 = vmatpush1.msra.mxu0 %v9359
    %9785 = vmatprep.subr.mxu0 0.0
    %9786 = vmatpush1.msra.mxu0 %v9360
    %9787 = vmatprep.subr.mxu0 0.0
    %9788 = vmatpush1.msra.mxu0 %v9361
    %9789 = vmatprep.subr.mxu0 0.0
    %9790 = vmatpush1.msra.mxu0 %v9362
    %9791 = vmatprep.mubr.f32.mxu0 %v9684
    %9792 = vmatmul.mubr.f32.gmra.mrb[0].mxu0 %v9683
    %v9793 = vpop.f32.mrb[0].mxu0
    %v9794 = vadd.f32 %v9681, %v9793
    %v9795 = vpop.f32.mrb[0].mxu0
    %9796 = vmatprep.mubr.f32.mxu0 %v9689
    %9797 = vmatmul.mubr.f32.gmra.mrb[0].mxu0 %v9688
    %v9798 = vpop.f32.mrb[0].mxu0
    %v9799 = vadd.f32 %v9681, %v9798
    %v9800 = vpop.f32.mrb[0].mxu0
    %9801 = vmatprep.mubr.f32.mxu0 %v9694
    %9802 = vmatmul.mubr.f32.gmra.mrb[0].mxu0 %v9693
    %v9803 = vpop.f32.mrb[0].mxu0
    %v9804 = vadd.f32 %v9681, %v9803
    %v9805 = vpop.f32.mrb[0].mxu0
    %9806 = vmatprep.mubr.f32.mxu0 %v9699
    %9807 = vmatmul.mubr.f32.gmra.mrb[0].mxu0 %v9698
    %v9808 = vpop.f32.mrb[0].mxu0
    %v9809 = vadd.f32 %v9681, %v9808
    %v9810 = vpop.f32.mrb[0].mxu0
    %9811 = vdwg.mxu0
    %9812 = vmatprep.subr.mxu0 0.0
    %9813 = vmatpush1.msra.mxu0 %v9363
    %9814 = vmatprep.subr.mxu0 0.0
    %9815 = vmatpush1.msra.mxu0 %v9364
    %9816 = vmatprep.subr.mxu0 0.0
    %9817 = vmatpush1.msra.mxu0 %v9365
    %9818 = vmatprep.subr.mxu0 0.0
    %9819 = vmatpush1.msra.mxu0 %v9366
    %9820 = vmatprep.subr.mxu0 0.0
    %9821 = vmatpush1.msra.mxu0 %v9367
    %9822 = vmatprep.subr.mxu0 0.0
    %9823 = vmatpush1.msra.mxu0 %v9368
    %9824 = vmatprep.subr.mxu0 0.0
    %9825 = vmatpush1.msra.mxu0 %v9369
    %9826 = vmatprep.subr.mxu0 0.0
    %9827 = vmatpush1.msra.mxu0 %v9370
    %9828 = vmatprep.subr.mxu0 0.0
    %9829 = vmatpush1.msra.mxu0 %v9371
    %9830 = vmatprep.subr.mxu0 0.0
    %9831 = vmatpush1.msra.mxu0 %v9372
    %9832 = vmatprep.subr.mxu0 0.0
    %9833 = vmatpush1.msra.mxu0 %v9373
    %9834 = vmatprep.subr.mxu0 0.0
    %9835 = vmatpush1.msra.mxu0 %v9374
    %9836 = vmatprep.subr.mxu0 0.0
    %9837 = vmatpush1.msra.mxu0 %v9375
    %9838 = vmatprep.subr.mxu0 0.0
    %9839 = vmatpush1.msra.mxu0 %v9376
    %9840 = vmatprep.subr.mxu0 0.0
    %9841 = vmatpush1.msra.mxu0 %v9377
    %9842 = vmatprep.subr.mxu0 0.0
    %9843 = vmatpush1.msra.mxu0 %v9378
    %9844 = vmatprep.subr.mxu0 0.0
    %9845 = vmatpush1.msra.mxu0 %v9379
    %9846 = vmatprep.subr.mxu0 0.0
    %9847 = vmatpush1.msra.mxu0 %v9380
    %9848 = vmatprep.subr.mxu0 0.0
    %9849 = vmatpush1.msra.mxu0 %v9381
    %9850 = vmatprep.subr.mxu0 0.0
    %9851 = vmatpush1.msra.mxu0 %v9382
    %9852 = vmatprep.subr.mxu0 0.0
    %9853 = vmatpush1.msra.mxu0 %v9383
    %9854 = vmatprep.subr.mxu0 0.0
    %9855 = vmatpush1.msra.mxu0 %v9384
    %9856 = vmatprep.subr.mxu0 0.0
    %9857 = vmatpush1.msra.mxu0 %v9385
    %9858 = vmatprep.subr.mxu0 0.0
    %9859 = vmatpush1.msra.mxu0 %v9386
    %9860 = vmatprep.subr.mxu0 0.0
    %9861 = vmatpush1.msra.mxu0 %v9387
    %9862 = vmatprep.subr.mxu0 0.0
    %9863 = vmatpush1.msra.mxu0 %v9388
    %9864 = vmatprep.subr.mxu0 0.0
    %9865 = vmatpush1.msra.mxu0 %v9389
    %9866 = vmatprep.subr.mxu0 0.0
    %9867 = vmatpush1.msra.mxu0 %v9390
    %9868 = vmatprep.subr.mxu0 0.0
    %9869 = vmatpush1.msra.mxu0 %v9391
    %9870 = vmatprep.subr.mxu0 0.0
    %9871 = vmatpush1.msra.mxu0 %v9392
    %9872 = vmatprep.subr.mxu0 0.0
    %9873 = vmatpush1.msra.mxu0 %v9393
    %9874 = vmatprep.subr.mxu0 0.0
    %9875 = vmatpush1.msra.mxu0 %v9394
    %9876 = vmatprep.mubr.f32.mxu0 %v9686
    %9877 = vmatmul.mubr.f32.gmra.mrb[0].mxu0 %v9685
    %v9878 = vpop.f32.mrb[0].mxu0
    %v9879 = vadd.f32 %v9794, %v9878
    %v9880 = vpop.f32.mrb[0].mxu0
    %9881 = vmatprep.mubr.f32.mxu0 %v9691
    %9882 = vmatmul.mubr.f32.gmra.mrb[0].mxu0 %v9690
    %v9883 = vpop.f32.mrb[0].mxu0
    %v9884 = vadd.f32 %v9799, %v9883
    %v9885 = vpop.f32.mrb[0].mxu0
    %9886 = vmatprep.mubr.f32.mxu0 %v9696
    %9887 = vmatmul.mubr.f32.gmra.mrb[0].mxu0 %v9695
    %v9888 = vpop.f32.mrb[0].mxu0
    %v9889 = vadd.f32 %v9804, %v9888
    %v9890 = vpop.f32.mrb[0].mxu0
    %9891 = vmatprep.mubr.f32.mxu0 %v9701
    %9892 = vmatmul.mubr.f32.gmra.mrb[0].mxu0 %v9700
    %v9893 = vpop.f32.mrb[0].mxu0
    %v9894 = vadd.f32 %v9809, %v9893
    %v9895 = vpop.f32.mrb[0].mxu0
    %9896 = vdwg.mxu0
    %9897 = vmatprep.subr.mxu0 0.0
    %9898 = vmatpush1.msra.mxu0 %v9395
    %9899 = vmatprep.subr.mxu0 0.0
    %9900 = vmatpush1.msra.mxu0 %v9396
    %9901 = vmatprep.subr.mxu0 0.0
    %9902 = vmatpush1.msra.mxu0 %v9397
    %9903 = vmatprep.subr.mxu0 0.0
    %9904 = vmatpush1.msra.mxu0 %v9398
    %9905 = vmatprep.subr.mxu0 0.0
    %9906 = vmatpush1.msra.mxu0 %v9399
    %9907 = vmatprep.subr.mxu0 0.0
    %9908 = vmatpush1.msra.mxu0 %v9400
    %9909 = vmatprep.subr.mxu0 0.0
    %9910 = vmatpush1.msra.mxu0 %v9401
    %9911 = vmatprep.subr.mxu0 0.0
    %9912 = vmatpush1.msra.mxu0 %v9402
    %9913 = vmatprep.subr.mxu0 0.0
    %9914 = vmatpush1.msra.mxu0 0.0
    %9915 = vmatprep.subr.mxu0 0.0
    %9916 = vmatpush1.msra.mxu0 0.0
    %9917 = vmatprep.subr.mxu0 0.0
    %9918 = vmatpush1.msra.mxu0 0.0
    %9919 = vmatprep.subr.mxu0 0.0
    %9920 = vmatpush1.msra.mxu0 0.0
    %9921 = vmatprep.subr.mxu0 0.0
    %9922 = vmatpush1.msra.mxu0 0.0
    %9923 = vmatprep.subr.mxu0 0.0
    %9924 = vmatpush1.msra.mxu0 0.0
    %9925 = vmatprep.subr.mxu0 0.0
    %9926 = vmatpush1.msra.mxu0 0.0
    %9927 = vmatprep.subr.mxu0 0.0
    %9928 = vmatpush1.msra.mxu0 0.0
    %9929 = vmatprep.subr.mxu0 0.0
    %9930 = vmatpush1.msra.mxu0 0.0
    %9931 = vmatprep.subr.mxu0 0.0
    %9932 = vmatpush1.msra.mxu0 0.0
    %9933 = vmatprep.subr.mxu0 0.0
    %9934 = vmatpush1.msra.mxu0 0.0
    %9935 = vmatprep.subr.mxu0 0.0
    %9936 = vmatpush1.msra.mxu0 0.0
    %9937 = vmatprep.subr.mxu0 0.0
    %9938 = vmatpush1.msra.mxu0 0.0
    %9939 = vmatprep.subr.mxu0 0.0
    %9940 = vmatpush1.msra.mxu0 0.0
    %9941 = vmatprep.subr.mxu0 0.0
    %9942 = vmatpush1.msra.mxu0 0.0
    %9943 = vmatprep.subr.mxu0 0.0
    %9944 = vmatpush1.msra.mxu0 0.0
    %9945 = vmatprep.subr.mxu0 0.0
    %9946 = vmatpush1.msra.mxu0 0.0
    %9947 = vmatprep.subr.mxu0 0.0
    %9948 = vmatpush1.msra.mxu0 0.0
    %9949 = vmatprep.subr.mxu0 0.0
    %9950 = vmatpush1.msra.mxu0 0.0
    %9951 = vmatprep.subr.mxu0 0.0
    %9952 = vmatpush1.msra.mxu0 0.0
    %9953 = vmatprep.subr.mxu0 0.0
    %9954 = vmatpush1.msra.mxu0 0.0
    %9955 = vmatprep.subr.mxu0 0.0
    %9956 = vmatpush1.msra.mxu0 0.0
    %9957 = vmatprep.subr.mxu0 0.0
    %9958 = vmatpush1.msra.mxu0 0.0
    %9959 = vmatprep.subr.mxu0 0.0
    %9960 = vmatpush1.msra.mxu0 0.0
    %9961 = vmatprep.mubr.f32.mxu0 0.0
    %9962 = vmatmul.mubr.f32.gmra.mrb[0].mxu0 %v9719
    %v9963 = vpop.f32.mrb[0].mxu0
    %v9964 = vadd.f32 %v9879, %v9963
    %v9965 = vpop.f32.mrb[0].mxu0
    %9966 = vmatprep.mubr.f32.mxu0 0.0
    %9967 = vmatmul.mubr.f32.gmra.mrb[0].mxu0 %v9721
    %v9968 = vpop.f32.mrb[0].mxu0
    %v9969 = vadd.f32 %v9884, %v9968
    %v9970 = vpop.f32.mrb[0].mxu0
    %9971 = vmatprep.mubr.f32.mxu0 0.0
    %9972 = vmatmul.mubr.f32.gmra.mrb[0].mxu0 %v9723
    %v9973 = vpop.f32.mrb[0].mxu0
    %v9974 = vadd.f32 %v9889, %v9973
    %v9975 = vpop.f32.mrb[0].mxu0
    %9976 = vmatprep.mubr.f32.mxu0 0.0
    %9977 = vmatmul.mubr.f32.gmra.mrb[0].mxu0 %v9725
    %v9978 = vpop.f32.mrb[0].mxu0
    %v9979 = vadd.f32 %v9894, %v9978
    %v9980 = vpop.f32.mrb[0].mxu0
    %9981 = vdwg.mxu0
    %v9982 = vmax.f32 %v9964, 0.0
    %v9983 = vmax.f32 %v9969, 0.0
    %v9984 = vmax.f32 %v9974, 0.0
    %v9985 = vmax.f32 %v9979, 0.0
    %v9990 = vcombine.high %v9982, %v9982
    %v9992 = vunpack.c.l.s4 1983009808
    %v9993 = vunpack.c.0.s8 %v9992
    %v9994 = vlaneseq
    %v9995 = vshrl.u32 %v9994, 7
    %v9996 = vsub.s32 %v9993, %v9995
    %v9997 = vrot.slane %v9982, %v9996
    %v9999 = vunpack.c.l.s4 1983009808
    %v10000 = vunpack.c.0.s8 %v9999
    %v10001 = vlaneseq
    %v10002 = vshrl.u32 %v10001, 7
    %v10003 = vsub.s32 %v10000, %v10002
    %v10004 = vrot.slane %v9990, %v10003
    %v10005 = vcombine.high %v9997, %v9997
    %v10006 = vcombine.high %v10004, %v10004
    %v10007 = vcombine.high %v9983, %v9983
    %v10009 = vunpack.c.l.s4 1983009808
    %v10010 = vunpack.c.0.s8 %v10009
    %v10011 = vlaneseq
    %v10012 = vshrl.u32 %v10011, 7
    %v10013 = vsub.s32 %v10010, %v10012
    %v10014 = vrot.slane %v9983, %v10013
    %v10016 = vunpack.c.l.s4 1983009808
    %v10017 = vunpack.c.0.s8 %v10016
    %v10018 = vlaneseq
    %v10019 = vshrl.u32 %v10018, 7
    %v10020 = vsub.s32 %v10017, %v10019
    %v10021 = vrot.slane %v10007, %v10020
    %v10022 = vcombine.high %v10014, %v10014
    %v10023 = vcombine.high %v10021, %v10021
    %v10024 = vcombine.high %v9984, %v9984
    %v10026 = vunpack.c.l.s4 1983009808
    %v10027 = vunpack.c.0.s8 %v10026
    %v10028 = vlaneseq
    %v10029 = vshrl.u32 %v10028, 7
    %v10030 = vsub.s32 %v10027, %v10029
    %v10031 = vrot.slane %v9984, %v10030
    %v10033 = vunpack.c.l.s4 1983009808
    %v10034 = vunpack.c.0.s8 %v10033
    %v10035 = vlaneseq
    %v10036 = vshrl.u32 %v10035, 7
    %v10037 = vsub.s32 %v10034, %v10036
    %v10038 = vrot.slane %v10024, %v10037
    %v10039 = vcombine.high %v10031, %v10031
    %v10040 = vcombine.high %v10038, %v10038
    %v10041 = vcombine.high %v9985, %v9985
    %v10043 = vunpack.c.l.s4 1983009808
    %v10044 = vunpack.c.0.s8 %v10043
    %v10045 = vlaneseq
    %v10046 = vshrl.u32 %v10045, 7
    %v10047 = vsub.s32 %v10044, %v10046
    %v10048 = vrot.slane %v9985, %v10047
    %v10050 = vunpack.c.l.s4 1983009808
    %v10051 = vunpack.c.0.s8 %v10050
    %v10052 = vlaneseq
    %v10053 = vshrl.u32 %v10052, 7
    %v10054 = vsub.s32 %v10051, %v10053
    %v10055 = vrot.slane %v10041, %v10054
    %v10056 = vcombine.high %v10048, %v10048
    %v10057 = vcombine.high %v10055, %v10055
    %vm10074 = vcmask 1041408
    %v10075 = vsel %vm10074, %v9997, -inf
    %v10076 = vrot.slane %v10075, 4
    %v10077 = vmax.f32 %v10075, %v10076
    %v10078 = vrot.slane %v10077, 2
    %v10079 = vmax.f32 %v10077, %v10078
    %v10080 = vrot.slane %v10079, 1
    %v10081 = vmax.f32 %v10079, %v10080
    %v10082 = vsel %vm10074, %v10005, -inf
    %v10083 = vrot.slane %v10082, 4
    %v10084 = vmax.f32 %v10082, %v10083
    %v10085 = vrot.slane %v10084, 2
    %v10086 = vmax.f32 %v10084, %v10085
    %v10087 = vrot.slane %v10086, 1
    %v10088 = vmax.f32 %v10086, %v10087
    %v10089 = vsel %vm10074, %v10004, -inf
    %v10090 = vrot.slane %v10089, 4
    %v10091 = vmax.f32 %v10089, %v10090
    %v10092 = vrot.slane %v10091, 2
    %v10093 = vmax.f32 %v10091, %v10092
    %v10094 = vrot.slane %v10093, 1
    %v10095 = vmax.f32 %v10093, %v10094
    %v10096 = vsel %vm10074, %v10006, -inf
    %v10097 = vrot.slane %v10096, 4
    %v10098 = vmax.f32 %v10096, %v10097
    %v10099 = vrot.slane %v10098, 2
    %v10100 = vmax.f32 %v10098, %v10099
    %v10101 = vrot.slane %v10100, 1
    %v10102 = vmax.f32 %v10100, %v10101
    %v10103 = vsel %vm10074, %v10014, -inf
    %v10104 = vrot.slane %v10103, 4
    %v10105 = vmax.f32 %v10103, %v10104
    %v10106 = vrot.slane %v10105, 2
    %v10107 = vmax.f32 %v10105, %v10106
    %v10108 = vrot.slane %v10107, 1
    %v10109 = vmax.f32 %v10107, %v10108
    %v10110 = vsel %vm10074, %v10022, -inf
    %v10111 = vrot.slane %v10110, 4
    %v10112 = vmax.f32 %v10110, %v10111
    %v10113 = vrot.slane %v10112, 2
    %v10114 = vmax.f32 %v10112, %v10113
    %v10115 = vrot.slane %v10114, 1
    %v10116 = vmax.f32 %v10114, %v10115
    %v10117 = vsel %vm10074, %v10021, -inf
    %v10118 = vrot.slane %v10117, 4
    %v10119 = vmax.f32 %v10117, %v10118
    %v10120 = vrot.slane %v10119, 2
    %v10121 = vmax.f32 %v10119, %v10120
    %v10122 = vrot.slane %v10121, 1
    %v10123 = vmax.f32 %v10121, %v10122
    %v10124 = vsel %vm10074, %v10023, -inf
    %v10125 = vrot.slane %v10124, 4
    %v10126 = vmax.f32 %v10124, %v10125
    %v10127 = vrot.slane %v10126, 2
    %v10128 = vmax.f32 %v10126, %v10127
    %v10129 = vrot.slane %v10128, 1
    %v10130 = vmax.f32 %v10128, %v10129
    %v10131 = vsel %vm10074, %v10031, -inf
    %v10132 = vrot.slane %v10131, 4
    %v10133 = vmax.f32 %v10131, %v10132
    %v10134 = vrot.slane %v10133, 2
    %v10135 = vmax.f32 %v10133, %v10134
    %v10136 = vrot.slane %v10135, 1
    %v10137 = vmax.f32 %v10135, %v10136
    %v10138 = vsel %vm10074, %v10039, -inf
    %v10139 = vrot.slane %v10138, 4
    %v10140 = vmax.f32 %v10138, %v10139
    %v10141 = vrot.slane %v10140, 2
    %v10142 = vmax.f32 %v10140, %v10141
    %v10143 = vrot.slane %v10142, 1
    %v10144 = vmax.f32 %v10142, %v10143
    %v10145 = vsel %vm10074, %v10038, -inf
    %v10146 = vrot.slane %v10145, 4
    %v10147 = vmax.f32 %v10145, %v10146
    %v10148 = vrot.slane %v10147, 2
    %v10149 = vmax.f32 %v10147, %v10148
    %v10150 = vrot.slane %v10149, 1
    %v10151 = vmax.f32 %v10149, %v10150
    %v10152 = vsel %vm10074, %v10040, -inf
    %v10153 = vrot.slane %v10152, 4
    %v10154 = vmax.f32 %v10152, %v10153
    %v10155 = vrot.slane %v10154, 2
    %v10156 = vmax.f32 %v10154, %v10155
    %v10157 = vrot.slane %v10156, 1
    %v10158 = vmax.f32 %v10156, %v10157
    %v10159 = vsel %vm10074, %v10048, -inf
    %v10160 = vrot.slane %v10159, 4
    %v10161 = vmax.f32 %v10159, %v10160
    %v10162 = vrot.slane %v10161, 2
    %v10163 = vmax.f32 %v10161, %v10162
    %v10164 = vrot.slane %v10163, 1
    %v10165 = vmax.f32 %v10163, %v10164
    %v10166 = vsel %vm10074, %v10056, -inf
    %v10167 = vrot.slane %v10166, 4
    %v10168 = vmax.f32 %v10166, %v10167
    %v10169 = vrot.slane %v10168, 2
    %v10170 = vmax.f32 %v10168, %v10169
    %v10171 = vrot.slane %v10170, 1
    %v10172 = vmax.f32 %v10170, %v10171
    %v10173 = vsel %vm10074, %v10055, -inf
    %v10174 = vrot.slane %v10173, 4
    %v10175 = vmax.f32 %v10173, %v10174
    %v10176 = vrot.slane %v10175, 2
    %v10177 = vmax.f32 %v10175, %v10176
    %v10178 = vrot.slane %v10177, 1
    %v10179 = vmax.f32 %v10177, %v10178
    %v10180 = vsel %vm10074, %v10057, -inf
    %v10181 = vrot.slane %v10180, 4
    %v10182 = vmax.f32 %v10180, %v10181
    %v10183 = vrot.slane %v10182, 2
    %v10184 = vmax.f32 %v10182, %v10183
    %v10185 = vrot.slane %v10184, 1
    %v10186 = vmax.f32 %v10184, %v10185
    %v10187 = vmax.f32 %v10081, %v10095
    %v10188 = vmax.f32 %v10088, %v10102
    %v10189 = vmax.f32 %v10109, %v10123
    %v10190 = vmax.f32 %v10116, %v10130
    %v10191 = vmax.f32 %v10137, %v10151
    %v10192 = vmax.f32 %v10144, %v10158
    %v10193 = vmax.f32 %v10165, %v10179
    %v10194 = vmax.f32 %v10172, %v10186
    %v10195 = vld [vmem:[#allocation11] sm:$0xff]
    %v10196 = vld [vmem:[#allocation11 + $0x8] sm:$0xff]
    %v10197 = vld [vmem:[#allocation11 + $0x10] sm:$0xff]
    %v10198 = vld [vmem:[#allocation11 + $0x18] sm:$0xff]
    %v10199 = vld [vmem:[#allocation11 + $0x20] sm:$0xff]
    %v10200 = vld [vmem:[#allocation11 + $0x28] sm:$0xff]
    %v10201 = vld [vmem:[#allocation11 + $0x30] sm:$0xff]
    %v10202 = vld [vmem:[#allocation11 + $0x38] sm:$0xff]
    %v10203 = vld [vmem:[#allocation11 + $0x40] sm:$0xff]
    %v10204 = vld [vmem:[#allocation11 + $0x48] sm:$0xff]
    %v10205 = vld [vmem:[#allocation11 + $0x50] sm:$0xff]
    %v10206 = vld [vmem:[#allocation11 + $0x58] sm:$0xff]
    %v10207 = vld [vmem:[#allocation11 + $0x60] sm:$0xff]
    %v10208 = vld [vmem:[#allocation11 + $0x68] sm:$0xff]
    %v10209 = vld [vmem:[#allocation11 + $0x70] sm:$0xff]
    %v10210 = vld [vmem:[#allocation11 + $0x78] sm:$0xff]
    %v10211 = vld [vmem:[#allocation11 + $0x80] sm:$0xff]
    %v10212 = vld [vmem:[#allocation11 + $0x88] sm:$0xff]
    %v10213 = vld [vmem:[#allocation11 + $0x90] sm:$0xff]
    %v10214 = vld [vmem:[#allocation11 + $0x98] sm:$0xff]
    %v10215 = vld [vmem:[#allocation11 + $0xa0] sm:$0xff]
    %v10216 = vld [vmem:[#allocation11 + $0xa8] sm:$0xff]
    %v10217 = vld [vmem:[#allocation11 + $0xb0] sm:$0xff]
    %v10218 = vld [vmem:[#allocation11 + $0xb8] sm:$0xff]
    %v10219 = vld [vmem:[#allocation11 + $0xc0] sm:$0xff]
    %v10220 = vld [vmem:[#allocation11 + $0xc8] sm:$0xff]
    %v10221 = vld [vmem:[#allocation11 + $0xd0] sm:$0xff]
    %v10222 = vld [vmem:[#allocation11 + $0xd8] sm:$0xff]
    %v10223 = vld [vmem:[#allocation11 + $0xe0] sm:$0xff]
    %v10224 = vld [vmem:[#allocation11 + $0xe8] sm:$0xff]
    %v10225 = vld [vmem:[#allocation11 + $0xf0] sm:$0xff]
    %v10226 = vld [vmem:[#allocation11 + $0xf8] sm:$0xff]
    %v10227 = vld [vmem:[#allocation11 + $0x100] sm:$0xff]
    %v10228 = vld [vmem:[#allocation11 + $0x108] sm:$0xff]
    %v10229 = vld [vmem:[#allocation11 + $0x110] sm:$0xff]
    %v10230 = vld [vmem:[#allocation11 + $0x118] sm:$0xff]
    %v10231 = vld [vmem:[#allocation11 + $0x120] sm:$0xff]
    %v10232 = vld [vmem:[#allocation11 + $0x128] sm:$0xff]
    %v10233 = vld [vmem:[#allocation11 + $0x130] sm:$0xff]
    %v10234 = vld [vmem:[#allocation11 + $0x138] sm:$0xff]
    %v10235 = vld [vmem:[#allocation11 + $0x140] sm:$0xff]
    %v10236 = vld [vmem:[#allocation11 + $0x148] sm:$0xff]
    %v10237 = vld [vmem:[#allocation11 + $0x150] sm:$0xff]
    %v10238 = vld [vmem:[#allocation11 + $0x158] sm:$0xff]
    %v10239 = vld [vmem:[#allocation11 + $0x160] sm:$0xff]
    %v10240 = vld [vmem:[#allocation11 + $0x168] sm:$0xff]
    %v10241 = vld [vmem:[#allocation11 + $0x170] sm:$0xff]
    %v10242 = vld [vmem:[#allocation11 + $0x178] sm:$0xff]
    %v10243 = vld [vmem:[#allocation11 + $0x180] sm:$0xff]
    %v10244 = vld [vmem:[#allocation11 + $0x188] sm:$0xff]
    %v10245 = vld [vmem:[#allocation11 + $0x190] sm:$0xff]
    %v10246 = vld [vmem:[#allocation11 + $0x198] sm:$0xff]
    %v10247 = vld [vmem:[#allocation11 + $0x1a0] sm:$0xff]
    %v10248 = vld [vmem:[#allocation11 + $0x1a8] sm:$0xff]
    %v10249 = vld [vmem:[#allocation11 + $0x1b0] sm:$0xff]
    %v10250 = vld [vmem:[#allocation11 + $0x1b8] sm:$0xff]
    %v10251 = vld [vmem:[#allocation11 + $0x1c0] sm:$0xff]
    %v10252 = vld [vmem:[#allocation11 + $0x1c8] sm:$0xff]
    %v10253 = vld [vmem:[#allocation11 + $0x1d0] sm:$0xff]
    %v10254 = vld [vmem:[#allocation11 + $0x1d8] sm:$0xff]
    %v10255 = vld [vmem:[#allocation11 + $0x1e0] sm:$0xff]
    %v10256 = vld [vmem:[#allocation11 + $0x1e8] sm:$0xff]
    %v10257 = vld [vmem:[#allocation11 + $0x1f0] sm:$0xff]
    %v10258 = vld [vmem:[#allocation11 + $0x1f8] sm:$0xff]
    %v10259 = vld [vmem:[#allocation11 + $0x200] sm:$0xff]
    %v10260 = vld [vmem:[#allocation11 + $0x208] sm:$0xff]
    %v10261 = vld [vmem:[#allocation11 + $0x210] sm:$0xff]
    %v10262 = vld [vmem:[#allocation11 + $0x218] sm:$0xff]
    %v10263 = vld [vmem:[#allocation11 + $0x220] sm:$0xff]
    %v10264 = vld [vmem:[#allocation11 + $0x228] sm:$0xff]
    %v10265 = vld [vmem:[#allocation11 + $0x230] sm:$0xff]
    %v10266 = vld [vmem:[#allocation11 + $0x238] sm:$0xff]
    %v10267 = vld [vmem:[#allocation11 + $0x240] sm:$0xff]
    %v10268 = vld [vmem:[#allocation11 + $0x248] sm:$0xff]
    %v10269 = vld [vmem:[#allocation11 + $0x250] sm:$0xff]
    %v10270 = vld [vmem:[#allocation11 + $0x258] sm:$0xff]
    %v10271 = vld [vmem:[#allocation11 + $0x260] sm:$0xff]
    %v10272 = vld [vmem:[#allocation11 + $0x268] sm:$0xff]
    %v10273 = vld [vmem:[#allocation11 + $0x270] sm:$0xff]
    %v10274 = vld [vmem:[#allocation11 + $0x278] sm:$0xff]
    %v10275 = vld [vmem:[#allocation11 + $0x280] sm:$0xff]
    %v10276 = vld [vmem:[#allocation11 + $0x288] sm:$0xff]
    %v10277 = vld [vmem:[#allocation11 + $0x290] sm:$0xff]
    %v10278 = vld [vmem:[#allocation11 + $0x298] sm:$0xff]
    %v10279 = vld [vmem:[#allocation11 + $0x2a0] sm:$0xff]
    %v10280 = vld [vmem:[#allocation11 + $0x2a8] sm:$0xff]
    %v10281 = vld [vmem:[#allocation11 + $0x2b0] sm:$0xff]
    %v10282 = vld [vmem:[#allocation11 + $0x2b8] sm:$0xff]
    %v10283 = vld [vmem:[#allocation11 + $0x2c0] sm:$0xff]
    %v10284 = vld [vmem:[#allocation11 + $0x2c8] sm:$0xff]
    %v10285 = vld [vmem:[#allocation11 + $0x2d0] sm:$0xff]
    %v10286 = vld [vmem:[#allocation11 + $0x2d8] sm:$0xff]
    %v10287 = vld [vmem:[#allocation11 + $0x2e0] sm:$0xff]
    %v10288 = vld [vmem:[#allocation11 + $0x2e8] sm:$0xff]
    %v10289 = vld [vmem:[#allocation11 + $0x2f0] sm:$0xff]
    %v10290 = vld [vmem:[#allocation11 + $0x2f8] sm:$0xff]
    %v10291 = vld [vmem:[#allocation11 + $0x300] sm:$0xff]
    %v10292 = vld [vmem:[#allocation11 + $0x308] sm:$0xff]
    %v10293 = vld [vmem:[#allocation11 + $0x310] sm:$0xff]
    %v10294 = vld [vmem:[#allocation11 + $0x318] sm:$0xff]
    %v10295 = vld [vmem:[#allocation11 + $0x320] sm:$0xff]
    %v10296 = vld [vmem:[#allocation11 + $0x328] sm:$0xff]
    %v10297 = vld [vmem:[#allocation11 + $0x330] sm:$0xff]
    %v10298 = vld [vmem:[#allocation11 + $0x338] sm:$0xff]
    %v10299 = vld [vmem:[#allocation11 + $0x340] sm:$0xff]
    %v10300 = vld [vmem:[#allocation11 + $0x348] sm:$0xff]
    %v10301 = vld [vmem:[#allocation11 + $0x350] sm:$0xff]
    %v10302 = vld [vmem:[#allocation11 + $0x358] sm:$0xff]
    %v10303 = vld [vmem:[#allocation11 + $0x360] sm:$0xff]
    %v10304 = vld [vmem:[#allocation11 + $0x368] sm:$0xff]
    %v10305 = vld [vmem:[#allocation11 + $0x370] sm:$0xff]
    %v10306 = vld [vmem:[#allocation11 + $0x378] sm:$0xff]
    %v10307 = vld [vmem:[#allocation11 + $0x380] sm:$0xff]
    %v10308 = vld [vmem:[#allocation11 + $0x388] sm:$0xff]
    %v10309 = vld [vmem:[#allocation11 + $0x390] sm:$0xff]
    %v10310 = vld [vmem:[#allocation11 + $0x398] sm:$0xff]
    %v10311 = vld [vmem:[#allocation11 + $0x3a0] sm:$0xff]
    %v10312 = vld [vmem:[#allocation11 + $0x3a8] sm:$0xff]
    %v10313 = vld [vmem:[#allocation11 + $0x3b0] sm:$0xff]
    %v10314 = vld [vmem:[#allocation11 + $0x3b8] sm:$0xff]
    %v10315 = vld [vmem:[#allocation11 + $0x3c0] sm:$0xff]
    %v10316 = vld [vmem:[#allocation11 + $0x3c8] sm:$0xff]
    %v10317 = vld [vmem:[#allocation11 + $0x3d0] sm:$0xff]
    %v10318 = vld [vmem:[#allocation11 + $0x3d8] sm:$0xff]
    %v10319 = vld [vmem:[#allocation11 + $0x3e0] sm:$0xff]
    %v10320 = vld [vmem:[#allocation11 + $0x3e8] sm:$0xff]
    %v10321 = vld [vmem:[#allocation11 + $0x3f0] sm:$0xff]
    %v10322 = vld [vmem:[#allocation11 + $0x3f8] sm:$0xff]
    %v10323 = vld [vmem:[#allocation11 + $0x400] sm:$0xff]
    %v10324 = vld [vmem:[#allocation11 + $0x408] sm:$0xff]
    %v10325 = vld [vmem:[#allocation11 + $0x410] sm:$0xff]
    %v10326 = vld [vmem:[#allocation11 + $0x418] sm:$0xff]
    %v10327 = vld [vmem:[#allocation11 + $0x420] sm:$0xff]
    %v10328 = vld [vmem:[#allocation11 + $0x428] sm:$0xff]
    %v10329 = vld [vmem:[#allocation11 + $0x430] sm:$0xff]
    %v10330 = vld [vmem:[#allocation11 + $0x438] sm:$0xff]
    %v10331 = vld [vmem:[#allocation11 + $0x440] sm:$0xff]
    %v10332 = vld [vmem:[#allocation11 + $0x448] sm:$0xff]
    %v10333 = vld [vmem:[#allocation11 + $0x450] sm:$0xff]
    %v10334 = vld [vmem:[#allocation11 + $0x458] sm:$0xff]
    %v10335 = vld [vmem:[#allocation11 + $0x460] sm:$0xff]
    %v10336 = vld [vmem:[#allocation11 + $0x468] sm:$0xff]
    %v10337 = vld [vmem:[#allocation11 + $0x470] sm:$0xff]
    %v10338 = vld [vmem:[#allocation11 + $0x478] sm:$0xff]
    %v10339 = vld [vmem:[#allocation11 + $0x480] sm:$0xff]
    %v10340 = vld [vmem:[#allocation11 + $0x488] sm:$0xff]
    %v10341 = vld [vmem:[#allocation11 + $0x490] sm:$0xff]
    %v10342 = vld [vmem:[#allocation11 + $0x498] sm:$0xff]
    %v10343 = vld [vmem:[#allocation11 + $0x4a0] sm:$0xff]
    %v10344 = vld [vmem:[#allocation11 + $0x4a8] sm:$0xff]
    %v10345 = vld [vmem:[#allocation11 + $0x4b0] sm:$0xff]
    %v10346 = vld [vmem:[#allocation11 + $0x4b8] sm:$0xff]
    %v10347 = vld [vmem:[#allocation11 + $0x4c0] sm:$0xff]
    %v10348 = vld [vmem:[#allocation11 + $0x4c8] sm:$0xff]
    %v10349 = vld [vmem:[#allocation11 + $0x4d0] sm:$0xff]
    %v10350 = vld [vmem:[#allocation11 + $0x4d8] sm:$0xff]
    %v10351 = vld [vmem:[#allocation11 + $0x4e0] sm:$0xff]
    %v10352 = vld [vmem:[#allocation11 + $0x4e8] sm:$0xff]
    %v10353 = vld [vmem:[#allocation11 + $0x4f0] sm:$0xff]
    %v10354 = vld [vmem:[#allocation11 + $0x4f8] sm:$0xff]
    %v10355 = vld [vmem:[#allocation11 + $0x500] sm:$0xff]
    %v10356 = vld [vmem:[#allocation11 + $0x508] sm:$0xff]
    %v10357 = vld [vmem:[#allocation11 + $0x510] sm:$0xff]
    %v10358 = vld [vmem:[#allocation11 + $0x518] sm:$0xff]
    %v10359 = vld [vmem:[#allocation11 + $0x520] sm:$0xff]
    %v10360 = vld [vmem:[#allocation11 + $0x528] sm:$0xff]
    %v10361 = vld [vmem:[#allocation11 + $0x530] sm:$0xff]
    %v10362 = vld [vmem:[#allocation11 + $0x538] sm:$0xff]
    %v10363 = vld [vmem:[#allocation11 + $0x540] sm:$0xff]
    %v10364 = vld [vmem:[#allocation11 + $0x548] sm:$0xff]
    %v10365 = vld [vmem:[#allocation11 + $0x550] sm:$0xff]
    %v10366 = vld [vmem:[#allocation11 + $0x558] sm:$0xff]
    %v10367 = vld [vmem:[#allocation11 + $0x560] sm:$0xff]
    %v10368 = vld [vmem:[#allocation11 + $0x568] sm:$0xff]
    %v10369 = vld [vmem:[#allocation11 + $0x570] sm:$0xff]
    %v10370 = vld [vmem:[#allocation11 + $0x578] sm:$0xff]
    %v10371 = vld [vmem:[#allocation11 + $0x580] sm:$0xff]
    %v10372 = vld [vmem:[#allocation11 + $0x588] sm:$0xff]
    %v10373 = vld [vmem:[#allocation11 + $0x590] sm:$0xff]
    %v10374 = vld [vmem:[#allocation11 + $0x598] sm:$0xff]
    %v10375 = vld [vmem:[#allocation11 + $0x5a0] sm:$0xff]
    %v10376 = vld [vmem:[#allocation11 + $0x5a8] sm:$0xff]
    %v10377 = vld [vmem:[#allocation11 + $0x5b0] sm:$0xff]
    %v10378 = vld [vmem:[#allocation11 + $0x5b8] sm:$0xff]
    %v10379 = vld [vmem:[#allocation11 + $0x5c0] sm:$0xff]
    %v10380 = vld [vmem:[#allocation11 + $0x5c8] sm:$0xff]
    %v10381 = vld [vmem:[#allocation11 + $0x5d0] sm:$0xff]
    %v10382 = vld [vmem:[#allocation11 + $0x5d8] sm:$0xff]
    %v10383 = vld [vmem:[#allocation11 + $0x5e0] sm:$0xff]
    %v10384 = vld [vmem:[#allocation11 + $0x5e8] sm:$0xff]
    %v10385 = vld [vmem:[#allocation11 + $0x5f0] sm:$0xff]
    %v10386 = vld [vmem:[#allocation11 + $0x5f8] sm:$0xff]
    %v10387 = vld [vmem:[#allocation11 + $0x600] sm:$0xff]
    %v10388 = vld [vmem:[#allocation11 + $0x608] sm:$0xff]
    %v10389 = vld [vmem:[#allocation11 + $0x610] sm:$0xff]
    %v10390 = vld [vmem:[#allocation11 + $0x618] sm:$0xff]
    %v10391 = vld [vmem:[#allocation11 + $0x620] sm:$0xff]
    %v10392 = vld [vmem:[#allocation11 + $0x628] sm:$0xff]
    %v10393 = vld [vmem:[#allocation11 + $0x630] sm:$0xff]
    %v10394 = vld [vmem:[#allocation11 + $0x638] sm:$0xff]
    %v10395 = vld [vmem:[#allocation11 + $0x640] sm:$0xff]
    %v10396 = vld [vmem:[#allocation11 + $0x648] sm:$0xff]
    %v10397 = vld [vmem:[#allocation11 + $0x650] sm:$0xff]
    %v10398 = vld [vmem:[#allocation11 + $0x658] sm:$0xff]
    %v10399 = vld [vmem:[#allocation11 + $0x660] sm:$0xff]
    %v10400 = vld [vmem:[#allocation11 + $0x668] sm:$0xff]
    %v10401 = vld [vmem:[#allocation11 + $0x670] sm:$0xff]
    %v10402 = vld [vmem:[#allocation11 + $0x678] sm:$0xff]
    %v10403 = vld [vmem:[#allocation11 + $0x680] sm:$0xff]
    %v10404 = vld [vmem:[#allocation11 + $0x688] sm:$0xff]
    %v10405 = vld [vmem:[#allocation11 + $0x690] sm:$0xff]
    %v10406 = vld [vmem:[#allocation11 + $0x698] sm:$0xff]
    %v10407 = vld [vmem:[#allocation11 + $0x6a0] sm:$0xff]
    %v10408 = vld [vmem:[#allocation11 + $0x6a8] sm:$0xff]
    %v10409 = vld [vmem:[#allocation11 + $0x6b0] sm:$0xff]
    %v10410 = vld [vmem:[#allocation11 + $0x6b8] sm:$0xff]
    %v10411 = vld [vmem:[#allocation11 + $0x6c0] sm:$0xff]
    %v10412 = vld [vmem:[#allocation11 + $0x6c8] sm:$0xff]
    %v10413 = vld [vmem:[#allocation11 + $0x6d0] sm:$0xff]
    %v10414 = vld [vmem:[#allocation11 + $0x6d8] sm:$0xff]
    %v10415 = vld [vmem:[#allocation11 + $0x6e0] sm:$0xff]
    %v10416 = vld [vmem:[#allocation11 + $0x6e8] sm:$0xff]
    %v10417 = vld [vmem:[#allocation11 + $0x6f0] sm:$0xff]
    %v10418 = vld [vmem:[#allocation11 + $0x6f8] sm:$0xff]
    %v10419 = vld [vmem:[#allocation11 + $0x700] sm:$0xff]
    %v10420 = vld [vmem:[#allocation11 + $0x708] sm:$0xff]
    %v10421 = vld [vmem:[#allocation11 + $0x710] sm:$0xff]
    %v10422 = vld [vmem:[#allocation11 + $0x718] sm:$0xff]
    %v10423 = vld [vmem:[#allocation11 + $0x720] sm:$0xff]
    %v10424 = vld [vmem:[#allocation11 + $0x728] sm:$0xff]
    %v10425 = vld [vmem:[#allocation11 + $0x730] sm:$0xff]
    %v10426 = vld [vmem:[#allocation11 + $0x738] sm:$0xff]
    %v10427 = vld [vmem:[#allocation11 + $0x740] sm:$0xff]
    %v10428 = vld [vmem:[#allocation11 + $0x748] sm:$0xff]
    %v10429 = vld [vmem:[#allocation11 + $0x750] sm:$0xff]
    %v10430 = vld [vmem:[#allocation11 + $0x758] sm:$0xff]
    %v10431 = vld [vmem:[#allocation11 + $0x760] sm:$0xff]
    %v10432 = vld [vmem:[#allocation11 + $0x768] sm:$0xff]
    %v10433 = vld [vmem:[#allocation11 + $0x770] sm:$0xff]
    %v10434 = vld [vmem:[#allocation11 + $0x778] sm:$0xff]
    %v10435 = vld [vmem:[#allocation11 + $0x780] sm:$0xff]
    %v10436 = vld [vmem:[#allocation11 + $0x788] sm:$0xff]
    %v10437 = vld [vmem:[#allocation11 + $0x790] sm:$0xff]
    %v10438 = vld [vmem:[#allocation11 + $0x798] sm:$0xff]
    %v10439 = vld [vmem:[#allocation11 + $0x7a0] sm:$0xff]
    %v10440 = vld [vmem:[#allocation11 + $0x7a8] sm:$0xff]
    %v10441 = vld [vmem:[#allocation11 + $0x7b0] sm:$0xff]
    %v10442 = vld [vmem:[#allocation11 + $0x7b8] sm:$0xff]
    %v10443 = vld [vmem:[#allocation11 + $0x7c0] sm:$0xff]
    %v10444 = vld [vmem:[#allocation11 + $0x7c8] sm:$0xff]
    %v10445 = vld [vmem:[#allocation11 + $0x7d0] sm:$0xff]
    %v10446 = vld [vmem:[#allocation11 + $0x7d8] sm:$0xff]
    %v10447 = vld [vmem:[#allocation11 + $0x7e0] sm:$0xff]
    %v10448 = vld [vmem:[#allocation11 + $0x7e8] sm:$0xff]
    %v10449 = vld [vmem:[#allocation11 + $0x7f0] sm:$0xff]
    %v10450 = vld [vmem:[#allocation11 + $0x7f8] sm:$0xff]
    %v10451 = vld [vmem:[#allocation11 + $0x800] sm:$0xff]
    %v10452 = vld [vmem:[#allocation11 + $0x808] sm:$0xff]
    %v10453 = vld [vmem:[#allocation11 + $0x810] sm:$0xff]
    %v10454 = vld [vmem:[#allocation11 + $0x818] sm:$0xff]
    %v10455 = vld [vmem:[#allocation11 + $0x820] sm:$0xff]
    %v10456 = vld [vmem:[#allocation11 + $0x828] sm:$0xff]
    %v10457 = vld [vmem:[#allocation11 + $0x830] sm:$0xff]
    %v10458 = vld [vmem:[#allocation11 + $0x838] sm:$0xff]
    %v10459 = vld [vmem:[#allocation11 + $0x840] sm:$0xff]
    %v10460 = vld [vmem:[#allocation11 + $0x848] sm:$0xff]
    %v10461 = vld [vmem:[#allocation11 + $0x850] sm:$0xff]
    %v10462 = vld [vmem:[#allocation11 + $0x858] sm:$0xff]
    %v10463 = vld [vmem:[#allocation11 + $0x860] sm:$0xff]
    %v10464 = vld [vmem:[#allocation11 + $0x868] sm:$0xff]
    %v10465 = vld [vmem:[#allocation11 + $0x870] sm:$0xff]
    %v10466 = vld [vmem:[#allocation11 + $0x878] sm:$0xff]
    %v10467 = vld [vmem:[#allocation11 + $0x880] sm:$0xff]
    %v10468 = vld [vmem:[#allocation11 + $0x888] sm:$0xff]
    %v10469 = vld [vmem:[#allocation11 + $0x890] sm:$0xff]
    %v10470 = vld [vmem:[#allocation11 + $0x898] sm:$0xff]
    %v10471 = vld [vmem:[#allocation11 + $0x8a0] sm:$0xff]
    %v10472 = vld [vmem:[#allocation11 + $0x8a8] sm:$0xff]
    %v10473 = vld [vmem:[#allocation11 + $0x8b0] sm:$0xff]
    %v10474 = vld [vmem:[#allocation11 + $0x8b8] sm:$0xff]
    %v10475 = vld [vmem:[#allocation11 + $0x8c0] sm:$0xff]
    %v10476 = vld [vmem:[#allocation11 + $0x8c8] sm:$0xff]
    %v10477 = vld [vmem:[#allocation11 + $0x8d0] sm:$0xff]
    %v10478 = vld [vmem:[#allocation11 + $0x8d8] sm:$0xff]
    %v10479 = vld [vmem:[#allocation11 + $0x8e0] sm:$0xff]
    %v10480 = vld [vmem:[#allocation11 + $0x8e8] sm:$0xff]
    %v10481 = vld [vmem:[#allocation11 + $0x8f0] sm:$0xff]
    %v10482 = vld [vmem:[#allocation11 + $0x8f8] sm:$0xff]
    %v10483 = vld [vmem:[#allocation13] sm:$0x3]
    %v10492 = vsel %vm7391, %v10188, %v10187
    %v10493 = vsel %vm7391, %v10190, %v10189
    %v10494 = vsel %vm7391, %v10192, %v10191
    %v10495 = vsel %vm7391, %v10194, %v10193
    %v10496 = vrot.slane %v10492, 7
    %v10497 = vrot.slane %v10493, 7
    %v10498 = vrot.slane %v10494, 7
    %v10499 = vrot.slane %v10495, 7
    %v10504 = vsel %vm308, 0.0, %v10496
    %v10505 = vsel %vm308, 0.0, %v10497
    %v10506 = vsel %vm308, 0.0, %v10498
    %v10507 = vsel %vm308, 0.0, %v10499
    %vm10508 = vcmask 1042432
    %v10509 = vsel %vm10508, %v503, 0.0
    %v10510 = vsel %vm10508, %v10504, 0.0
    %v10511 = vsel %vm10508, %v10505, 0.0
    %v10512 = vsel %vm10508, %v10506, 0.0
    %v10513 = vsel %vm10508, %v10507, 0.0
    %v10517 = vrot.slane %v10509, 1
    %v10518 = vrot.slane %v10510, 1
    %v10519 = vrot.slane %v10512, 1
    %v10520 = vrot.slane %v10509, 2
    %v10521 = vrot.slane %v10510, 2
    %v10522 = vrot.slane %v10512, 2
    %v10525 = vrot.slane %v10511, 1
    %v10526 = vrot.slane %v10513, 1
    %v10527 = vrot.slane %v10511, 2
    %v10528 = vrot.slane %v10513, 2
    %v10529 = vcombine.low %v10509, %v10517
    %v10530 = vcombine.low %v10520, %v10510
    %v10532 = vunpack.c.l.s4 1983009808
    %v10533 = vunpack.c.0.s8 %v10532
    %v10534 = vlaneseq
    %v10535 = vshrl.u32 %v10534, 7
    %v10536 = vsub.s32 %v10533, %v10535
    %v10537 = vrot.slane %v10529, %v10536
    %v10539 = vunpack.c.l.s4 1983009808
    %v10540 = vunpack.c.0.s8 %v10539
    %v10541 = vlaneseq
    %v10542 = vshrl.u32 %v10541, 7
    %v10543 = vsub.s32 %v10540, %v10542
    %v10544 = vrot.slane %v10530, %v10543
    %v10545 = vcombine.low %v10537, %v10544
    %v10546 = vcombine.low %v10518, %v10521
    %v10547 = vcombine.low %v10511, %v10525
    %v10549 = vunpack.c.l.s4 1983009808
    %v10550 = vunpack.c.0.s8 %v10549
    %v10551 = vlaneseq
    %v10552 = vshrl.u32 %v10551, 7
    %v10553 = vsub.s32 %v10550, %v10552
    %v10554 = vrot.slane %v10546, %v10553
    %v10556 = vunpack.c.l.s4 1983009808
    %v10557 = vunpack.c.0.s8 %v10556
    %v10558 = vlaneseq
    %v10559 = vshrl.u32 %v10558, 7
    %v10560 = vsub.s32 %v10557, %v10559
    %v10561 = vrot.slane %v10547, %v10560
    %v10562 = vcombine.low %v10554, %v10561
    %v10564 = vunpack.c.l.s4 1983009808
    %v10565 = vunpack.c.0.s8 %v10564
    %v10566 = vlaneseq
    %v10567 = vshrl.u32 %v10566, 7
    %v10568 = vsub.s32 %v10565, %v10567
    %v10569 = vrot.slane %v10527, %v10568
    %v10570 = vcombine.low %v10510, %v10518
    %v10571 = vcombine.low %v10521, %v10511
    %v10573 = vunpack.c.l.s4 1983009808
    %v10574 = vunpack.c.0.s8 %v10573
    %v10575 = vlaneseq
    %v10576 = vshrl.u32 %v10575, 7
    %v10577 = vsub.s32 %v10574, %v10576
    %v10578 = vrot.slane %v10570, %v10577
    %v10580 = vunpack.c.l.s4 1983009808
    %v10581 = vunpack.c.0.s8 %v10580
    %v10582 = vlaneseq
    %v10583 = vshrl.u32 %v10582, 7
    %v10584 = vsub.s32 %v10581, %v10583
    %v10585 = vrot.slane %v10571, %v10584
    %v10586 = vcombine.low %v10578, %v10585
    %v10587 = vcombine.low %v10525, %v10527
    %v10589 = vunpack.c.l.s4 1983009808
    %v10590 = vunpack.c.0.s8 %v10589
    %v10591 = vlaneseq
    %v10592 = vshrl.u32 %v10591, 7
    %v10593 = vsub.s32 %v10590, %v10592
    %v10594 = vrot.slane %v10587, %v10593
    %v10595 = vcombine.low %v10594, %v10537
    %v10597 = vunpack.c.l.s4 1983009808
    %v10598 = vunpack.c.0.s8 %v10597
    %v10599 = vlaneseq
    %v10600 = vshrl.u32 %v10599, 7
    %v10601 = vsub.s32 %v10598, %v10600
    %v10602 = vrot.slane %v10520, %v10601
    %v10603 = vcombine.low %v10520, %v10512
    %v10605 = vunpack.c.l.s4 1983009808
    %v10606 = vunpack.c.0.s8 %v10605
    %v10607 = vlaneseq
    %v10608 = vshrl.u32 %v10607, 7
    %v10609 = vsub.s32 %v10606, %v10608
    %v10610 = vrot.slane %v10603, %v10609
    %v10611 = vcombine.low %v10537, %v10610
    %v10612 = vcombine.low %v10519, %v10522
    %v10613 = vcombine.low %v10513, %v10526
    %v10615 = vunpack.c.l.s4 1983009808
    %v10616 = vunpack.c.0.s8 %v10615
    %v10617 = vlaneseq
    %v10618 = vshrl.u32 %v10617, 7
    %v10619 = vsub.s32 %v10616, %v10618
    %v10620 = vrot.slane %v10612, %v10619
    %v10622 = vunpack.c.l.s4 1983009808
    %v10623 = vunpack.c.0.s8 %v10622
    %v10624 = vlaneseq
    %v10625 = vshrl.u32 %v10624, 7
    %v10626 = vsub.s32 %v10623, %v10625
    %v10627 = vrot.slane %v10613, %v10626
    %v10628 = vcombine.low %v10620, %v10627
    %v10630 = vunpack.c.l.s4 1983009808
    %v10631 = vunpack.c.0.s8 %v10630
    %v10632 = vlaneseq
    %v10633 = vshrl.u32 %v10632, 7
    %v10634 = vsub.s32 %v10631, %v10633
    %v10635 = vrot.slane %v10528, %v10634
    %v10636 = vcombine.low %v10512, %v10519
    %v10637 = vcombine.low %v10522, %v10513
    %v10639 = vunpack.c.l.s4 1983009808
    %v10640 = vunpack.c.0.s8 %v10639
    %v10641 = vlaneseq
    %v10642 = vshrl.u32 %v10641, 7
    %v10643 = vsub.s32 %v10640, %v10642
    %v10644 = vrot.slane %v10636, %v10643
    %v10646 = vunpack.c.l.s4 1983009808
    %v10647 = vunpack.c.0.s8 %v10646
    %v10648 = vlaneseq
    %v10649 = vshrl.u32 %v10648, 7
    %v10650 = vsub.s32 %v10647, %v10649
    %v10651 = vrot.slane %v10637, %v10650
    %v10652 = vcombine.low %v10644, %v10651
    %v10653 = vcombine.low %v10526, %v10528
    %v10655 = vunpack.c.l.s4 1983009808
    %v10656 = vunpack.c.0.s8 %v10655
    %v10657 = vlaneseq
    %v10658 = vshrl.u32 %v10657, 7
    %v10659 = vsub.s32 %v10656, %v10658
    %v10660 = vrot.slane %v10653, %v10659
    %v10661 = vcombine.low %v10660, %v10537
    %v10663 = vlaneseq
    %v10664 = vshrl.u32 %v10663, 7
    %v10665 = vsub.s32 0, %v10664
    %v10666 = vrot.slane %v10483, %v10665
    %v10667 = vlaneseq
    %v10668 = vshrl.u32 %v10667, 7
    %v10669 = vsub.s32 1, %v10668
    %v10670 = vrot.slane %v10483, %v10669
    %v10673 = vcombine.low %v10545, %v10586
    %v10674 = vcombine.high %v10545, %v10586
    %v10675 = vcombine.low %v10611, %v10652
    %v10676 = vcombine.high %v10611, %v10652
    %v10678 = vunpack.c.l.s4 1983009808
    %v10679 = vunpack.c.0.s8 %v10678
    %v10680 = vlaneseq
    %v10681 = vshrl.u32 %v10680, 7
    %v10682 = vsub.s32 %v10679, %v10681
    %v10683 = vrot.slane %v10673, %v10682
    %v10685 = vunpack.c.l.s4 1983009808
    %v10686 = vunpack.c.0.s8 %v10685
    %v10687 = vlaneseq
    %v10688 = vshrl.u32 %v10687, 7
    %v10689 = vsub.s32 %v10686, %v10688
    %v10690 = vrot.slane %v10674, %v10689
    %v10692 = vunpack.c.l.s4 1983009808
    %v10693 = vunpack.c.0.s8 %v10692
    %v10694 = vlaneseq
    %v10695 = vshrl.u32 %v10694, 7
    %v10696 = vsub.s32 %v10693, %v10695
    %v10697 = vrot.slane %v10675, %v10696
    %v10699 = vunpack.c.l.s4 1983009808
    %v10700 = vunpack.c.0.s8 %v10699
    %v10701 = vlaneseq
    %v10702 = vshrl.u32 %v10701, 7
    %v10703 = vsub.s32 %v10700, %v10702
    %v10704 = vrot.slane %v10676, %v10703
    %v10705 = vcombine.low %v10683, %v10697
    %v10706 = vcombine.high %v10683, %v10697
    %v10707 = vcombine.low %v10690, %v10704
    %v10708 = vcombine.high %v10690, %v10704
    %v10709 = vcombine.low %v10562, %v10595
    %v10710 = vcombine.high %v10562, %v10595
    %v10711 = vcombine.low %v10628, %v10661
    %v10712 = vcombine.high %v10628, %v10661
    %v10714 = vunpack.c.l.s4 1983009808
    %v10715 = vunpack.c.0.s8 %v10714
    %v10716 = vlaneseq
    %v10717 = vshrl.u32 %v10716, 7
    %v10718 = vsub.s32 %v10715, %v10717
    %v10719 = vrot.slane %v10709, %v10718
    %v10721 = vunpack.c.l.s4 1983009808
    %v10722 = vunpack.c.0.s8 %v10721
    %v10723 = vlaneseq
    %v10724 = vshrl.u32 %v10723, 7
    %v10725 = vsub.s32 %v10722, %v10724
    %v10726 = vrot.slane %v10710, %v10725
    %v10728 = vunpack.c.l.s4 1983009808
    %v10729 = vunpack.c.0.s8 %v10728
    %v10730 = vlaneseq
    %v10731 = vshrl.u32 %v10730, 7
    %v10732 = vsub.s32 %v10729, %v10731
    %v10733 = vrot.slane %v10711, %v10732
    %v10735 = vunpack.c.l.s4 1983009808
    %v10736 = vunpack.c.0.s8 %v10735
    %v10737 = vlaneseq
    %v10738 = vshrl.u32 %v10737, 7
    %v10739 = vsub.s32 %v10736, %v10738
    %v10740 = vrot.slane %v10712, %v10739
    %v10741 = vcombine.low %v10719, %v10733
    %v10742 = vcombine.high %v10719, %v10733
    %v10743 = vcombine.low %v10726, %v10740
    %v10744 = vcombine.high %v10726, %v10740
    %v10745 = vcombine.low %v10569, %v10602
    %v10746 = vcombine.low %v10635, %v10602
    %v10748 = vunpack.c.l.s4 1983009808
    %v10749 = vunpack.c.0.s8 %v10748
    %v10750 = vlaneseq
    %v10751 = vshrl.u32 %v10750, 7
    %v10752 = vsub.s32 %v10749, %v10751
    %v10753 = vrot.slane %v10745, %v10752
    %v10755 = vunpack.c.l.s4 1983009808
    %v10756 = vunpack.c.0.s8 %v10755
    %v10757 = vlaneseq
    %v10758 = vshrl.u32 %v10757, 7
    %v10759 = vsub.s32 %v10756, %v10758
    %v10760 = vrot.slane %v10746, %v10759
    %v10761 = vcombine.low %v10753, %v10760
    %10771 = vmatprep.subr.mxu0 %v10196
    %10772 = vmatpush1.msra.mxu0 %v10195
    %10773 = vmatprep.subr.mxu0 %v10198
    %10774 = vmatpush1.msra.mxu0 %v10197
    %10775 = vmatprep.subr.mxu0 %v10200
    %10776 = vmatpush1.msra.mxu0 %v10199
    %10777 = vmatprep.subr.mxu0 %v10202
    %10778 = vmatpush1.msra.mxu0 %v10201
    %10779 = vmatprep.subr.mxu0 %v10204
    %10780 = vmatpush1.msra.mxu0 %v10203
    %10781 = vmatprep.subr.mxu0 %v10206
    %10782 = vmatpush1.msra.mxu0 %v10205
    %10783 = vmatprep.subr.mxu0 %v10208
    %10784 = vmatpush1.msra.mxu0 %v10207
    %10785 = vmatprep.subr.mxu0 %v10210
    %10786 = vmatpush1.msra.mxu0 %v10209
    %10787 = vmatprep.subr.mxu0 %v10212
    %10788 = vmatpush1.msra.mxu0 %v10211
    %10789 = vmatprep.subr.mxu0 %v10214
    %10790 = vmatpush1.msra.mxu0 %v10213
    %10791 = vmatprep.subr.mxu0 %v10216
    %10792 = vmatpush1.msra.mxu0 %v10215
    %10793 = vmatprep.subr.mxu0 %v10218
    %10794 = vmatpush1.msra.mxu0 %v10217
    %10795 = vmatprep.subr.mxu0 %v10220
    %10796 = vmatpush1.msra.mxu0 %v10219
    %10797 = vmatprep.subr.mxu0 %v10222
    %10798 = vmatpush1.msra.mxu0 %v10221
    %10799 = vmatprep.subr.mxu0 %v10224
    %10800 = vmatpush1.msra.mxu0 %v10223
    %10801 = vmatprep.subr.mxu0 %v10226
    %10802 = vmatpush1.msra.mxu0 %v10225
    %10803 = vmatprep.subr.mxu0 %v10228
    %10804 = vmatpush1.msra.mxu0 %v10227
    %10805 = vmatprep.subr.mxu0 %v10230
    %10806 = vmatpush1.msra.mxu0 %v10229
    %10807 = vmatprep.subr.mxu0 %v10232
    %10808 = vmatpush1.msra.mxu0 %v10231
    %10809 = vmatprep.subr.mxu0 %v10234
    %10810 = vmatpush1.msra.mxu0 %v10233
    %10811 = vmatprep.subr.mxu0 %v10236
    %10812 = vmatpush1.msra.mxu0 %v10235
    %10813 = vmatprep.subr.mxu0 %v10238
    %10814 = vmatpush1.msra.mxu0 %v10237
    %10815 = vmatprep.subr.mxu0 %v10240
    %10816 = vmatpush1.msra.mxu0 %v10239
    %10817 = vmatprep.subr.mxu0 %v10242
    %10818 = vmatpush1.msra.mxu0 %v10241
    %10819 = vmatprep.subr.mxu0 %v10244
    %10820 = vmatpush1.msra.mxu0 %v10243
    %10821 = vmatprep.subr.mxu0 %v10246
    %10822 = vmatpush1.msra.mxu0 %v10245
    %10823 = vmatprep.subr.mxu0 %v10248
    %10824 = vmatpush1.msra.mxu0 %v10247
    %10825 = vmatprep.subr.mxu0 %v10250
    %10826 = vmatpush1.msra.mxu0 %v10249
    %10827 = vmatprep.subr.mxu0 %v10252
    %10828 = vmatpush1.msra.mxu0 %v10251
    %10829 = vmatprep.subr.mxu0 %v10254
    %10830 = vmatpush1.msra.mxu0 %v10253
    %10831 = vmatprep.subr.mxu0 %v10256
    %10832 = vmatpush1.msra.mxu0 %v10255
    %10833 = vmatprep.subr.mxu0 %v10258
    %10834 = vmatpush1.msra.mxu0 %v10257
    %10835 = vmatprep.mubr.f32.mxu0 %v10706
    %10836 = vmatmul.mubr.f32.gmra.mrb[0].mxu0 %v10705
    %v10837 = vpop.f32.mrb[0].mxu0
    %v10838 = vadd.f32 %v10666, %v10837
    %v10839 = vpop.f32.mrb[0].mxu0
    %v10840 = vadd.f32 %v10670, %v10839
    %10841 = vdwg.mxu0
    %10842 = vmatprep.subr.mxu0 %v10260
    %10843 = vmatpush1.msra.mxu0 %v10259
    %10844 = vmatprep.subr.mxu0 %v10262
    %10845 = vmatpush1.msra.mxu0 %v10261
    %10846 = vmatprep.subr.mxu0 %v10264
    %10847 = vmatpush1.msra.mxu0 %v10263
    %10848 = vmatprep.subr.mxu0 %v10266
    %10849 = vmatpush1.msra.mxu0 %v10265
    %10850 = vmatprep.subr.mxu0 %v10268
    %10851 = vmatpush1.msra.mxu0 %v10267
    %10852 = vmatprep.subr.mxu0 %v10270
    %10853 = vmatpush1.msra.mxu0 %v10269
    %10854 = vmatprep.subr.mxu0 %v10272
    %10855 = vmatpush1.msra.mxu0 %v10271
    %10856 = vmatprep.subr.mxu0 %v10274
    %10857 = vmatpush1.msra.mxu0 %v10273
    %10858 = vmatprep.subr.mxu0 %v10276
    %10859 = vmatpush1.msra.mxu0 %v10275
    %10860 = vmatprep.subr.mxu0 %v10278
    %10861 = vmatpush1.msra.mxu0 %v10277
    %10862 = vmatprep.subr.mxu0 %v10280
    %10863 = vmatpush1.msra.mxu0 %v10279
    %10864 = vmatprep.subr.mxu0 %v10282
    %10865 = vmatpush1.msra.mxu0 %v10281
    %10866 = vmatprep.subr.mxu0 %v10284
    %10867 = vmatpush1.msra.mxu0 %v10283
    %10868 = vmatprep.subr.mxu0 %v10286
    %10869 = vmatpush1.msra.mxu0 %v10285
    %10870 = vmatprep.subr.mxu0 %v10288
    %10871 = vmatpush1.msra.mxu0 %v10287
    %10872 = vmatprep.subr.mxu0 %v10290
    %10873 = vmatpush1.msra.mxu0 %v10289
    %10874 = vmatprep.subr.mxu0 %v10292
    %10875 = vmatpush1.msra.mxu0 %v10291
    %10876 = vmatprep.subr.mxu0 %v10294
    %10877 = vmatpush1.msra.mxu0 %v10293
    %10878 = vmatprep.subr.mxu0 %v10296
    %10879 = vmatpush1.msra.mxu0 %v10295
    %10880 = vmatprep.subr.mxu0 %v10298
    %10881 = vmatpush1.msra.mxu0 %v10297
    %10882 = vmatprep.subr.mxu0 %v10300
    %10883 = vmatpush1.msra.mxu0 %v10299
    %10884 = vmatprep.subr.mxu0 %v10302
    %10885 = vmatpush1.msra.mxu0 %v10301
    %10886 = vmatprep.subr.mxu0 %v10304
    %10887 = vmatpush1.msra.mxu0 %v10303
    %10888 = vmatprep.subr.mxu0 %v10306
    %10889 = vmatpush1.msra.mxu0 %v10305
    %10890 = vmatprep.subr.mxu0 %v10308
    %10891 = vmatpush1.msra.mxu0 %v10307
    %10892 = vmatprep.subr.mxu0 %v10310
    %10893 = vmatpush1.msra.mxu0 %v10309
    %10894 = vmatprep.subr.mxu0 %v10312
    %10895 = vmatpush1.msra.mxu0 %v10311
    %10896 = vmatprep.subr.mxu0 %v10314
    %10897 = vmatpush1.msra.mxu0 %v10313
    %10898 = vmatprep.subr.mxu0 %v10316
    %10899 = vmatpush1.msra.mxu0 %v10315
    %10900 = vmatprep.subr.mxu0 %v10318
    %10901 = vmatpush1.msra.mxu0 %v10317
    %10902 = vmatprep.subr.mxu0 %v10320
    %10903 = vmatpush1.msra.mxu0 %v10319
    %10904 = vmatprep.subr.mxu0 %v10322
    %10905 = vmatpush1.msra.mxu0 %v10321
    %10906 = vmatprep.mubr.f32.mxu0 %v10708
    %10907 = vmatmul.mubr.f32.gmra.mrb[0].mxu0 %v10707
    %v10908 = vpop.f32.mrb[0].mxu0
    %v10909 = vadd.f32 %v10838, %v10908
    %v10910 = vpop.f32.mrb[0].mxu0
    %v10911 = vadd.f32 %v10840, %v10910
    %10912 = vdwg.mxu0
    %10913 = vmatprep.subr.mxu0 %v10324
    %10914 = vmatpush1.msra.mxu0 %v10323
    %10915 = vmatprep.subr.mxu0 %v10326
    %10916 = vmatpush1.msra.mxu0 %v10325
    %10917 = vmatprep.subr.mxu0 %v10328
    %10918 = vmatpush1.msra.mxu0 %v10327
    %10919 = vmatprep.subr.mxu0 %v10330
    %10920 = vmatpush1.msra.mxu0 %v10329
    %10921 = vmatprep.subr.mxu0 %v10332
    %10922 = vmatpush1.msra.mxu0 %v10331
    %10923 = vmatprep.subr.mxu0 %v10334
    %10924 = vmatpush1.msra.mxu0 %v10333
    %10925 = vmatprep.subr.mxu0 %v10336
    %10926 = vmatpush1.msra.mxu0 %v10335
    %10927 = vmatprep.subr.mxu0 %v10338
    %10928 = vmatpush1.msra.mxu0 %v10337
    %10929 = vmatprep.subr.mxu0 %v10340
    %10930 = vmatpush1.msra.mxu0 %v10339
    %10931 = vmatprep.subr.mxu0 %v10342
    %10932 = vmatpush1.msra.mxu0 %v10341
    %10933 = vmatprep.subr.mxu0 %v10344
    %10934 = vmatpush1.msra.mxu0 %v10343
    %10935 = vmatprep.subr.mxu0 %v10346
    %10936 = vmatpush1.msra.mxu0 %v10345
    %10937 = vmatprep.subr.mxu0 %v10348
    %10938 = vmatpush1.msra.mxu0 %v10347
    %10939 = vmatprep.subr.mxu0 %v10350
    %10940 = vmatpush1.msra.mxu0 %v10349
    %10941 = vmatprep.subr.mxu0 %v10352
    %10942 = vmatpush1.msra.mxu0 %v10351
    %10943 = vmatprep.subr.mxu0 %v10354
    %10944 = vmatpush1.msra.mxu0 %v10353
    %10945 = vmatprep.subr.mxu0 %v10356
    %10946 = vmatpush1.msra.mxu0 %v10355
    %10947 = vmatprep.subr.mxu0 %v10358
    %10948 = vmatpush1.msra.mxu0 %v10357
    %10949 = vmatprep.subr.mxu0 %v10360
    %10950 = vmatpush1.msra.mxu0 %v10359
    %10951 = vmatprep.subr.mxu0 %v10362
    %10952 = vmatpush1.msra.mxu0 %v10361
    %10953 = vmatprep.subr.mxu0 %v10364
    %10954 = vmatpush1.msra.mxu0 %v10363
    %10955 = vmatprep.subr.mxu0 %v10366
    %10956 = vmatpush1.msra.mxu0 %v10365
    %10957 = vmatprep.subr.mxu0 %v10368
    %10958 = vmatpush1.msra.mxu0 %v10367
    %10959 = vmatprep.subr.mxu0 %v10370
    %10960 = vmatpush1.msra.mxu0 %v10369
    %10961 = vmatprep.subr.mxu0 %v10372
    %10962 = vmatpush1.msra.mxu0 %v10371
    %10963 = vmatprep.subr.mxu0 %v10374
    %10964 = vmatpush1.msra.mxu0 %v10373
    %10965 = vmatprep.subr.mxu0 %v10376
    %10966 = vmatpush1.msra.mxu0 %v10375
    %10967 = vmatprep.subr.mxu0 %v10378
    %10968 = vmatpush1.msra.mxu0 %v10377
    %10969 = vmatprep.subr.mxu0 %v10380
    %10970 = vmatpush1.msra.mxu0 %v10379
    %10971 = vmatprep.subr.mxu0 %v10382
    %10972 = vmatpush1.msra.mxu0 %v10381
    %10973 = vmatprep.subr.mxu0 %v10384
    %10974 = vmatpush1.msra.mxu0 %v10383
    %10975 = vmatprep.subr.mxu0 %v10386
    %10976 = vmatpush1.msra.mxu0 %v10385
    %10977 = vmatprep.mubr.f32.mxu0 %v10742
    %10978 = vmatmul.mubr.f32.gmra.mrb[0].mxu0 %v10741
    %v10979 = vpop.f32.mrb[0].mxu0
    %v10980 = vadd.f32 %v10909, %v10979
    %v10981 = vpop.f32.mrb[0].mxu0
    %v10982 = vadd.f32 %v10911, %v10981
    %10983 = vdwg.mxu0
    %10984 = vmatprep.subr.mxu0 %v10388
    %10985 = vmatpush1.msra.mxu0 %v10387
    %10986 = vmatprep.subr.mxu0 %v10390
    %10987 = vmatpush1.msra.mxu0 %v10389
    %10988 = vmatprep.subr.mxu0 %v10392
    %10989 = vmatpush1.msra.mxu0 %v10391
    %10990 = vmatprep.subr.mxu0 %v10394
    %10991 = vmatpush1.msra.mxu0 %v10393
    %10992 = vmatprep.subr.mxu0 %v10396
    %10993 = vmatpush1.msra.mxu0 %v10395
    %10994 = vmatprep.subr.mxu0 %v10398
    %10995 = vmatpush1.msra.mxu0 %v10397
    %10996 = vmatprep.subr.mxu0 %v10400
    %10997 = vmatpush1.msra.mxu0 %v10399
    %10998 = vmatprep.subr.mxu0 %v10402
    %10999 = vmatpush1.msra.mxu0 %v10401
    %11000 = vmatprep.subr.mxu0 %v10404
    %11001 = vmatpush1.msra.mxu0 %v10403
    %11002 = vmatprep.subr.mxu0 %v10406
    %11003 = vmatpush1.msra.mxu0 %v10405
    %11004 = vmatprep.subr.mxu0 %v10408
    %11005 = vmatpush1.msra.mxu0 %v10407
    %11006 = vmatprep.subr.mxu0 %v10410
    %11007 = vmatpush1.msra.mxu0 %v10409
    %11008 = vmatprep.subr.mxu0 %v10412
    %11009 = vmatpush1.msra.mxu0 %v10411
    %11010 = vmatprep.subr.mxu0 %v10414
    %11011 = vmatpush1.msra.mxu0 %v10413
    %11012 = vmatprep.subr.mxu0 %v10416
    %11013 = vmatpush1.msra.mxu0 %v10415
    %11014 = vmatprep.subr.mxu0 %v10418
    %11015 = vmatpush1.msra.mxu0 %v10417
    %11016 = vmatprep.subr.mxu0 %v10420
    %11017 = vmatpush1.msra.mxu0 %v10419
    %11018 = vmatprep.subr.mxu0 %v10422
    %11019 = vmatpush1.msra.mxu0 %v10421
    %11020 = vmatprep.subr.mxu0 %v10424
    %11021 = vmatpush1.msra.mxu0 %v10423
    %11022 = vmatprep.subr.mxu0 %v10426
    %11023 = vmatpush1.msra.mxu0 %v10425
    %11024 = vmatprep.subr.mxu0 %v10428
    %11025 = vmatpush1.msra.mxu0 %v10427
    %11026 = vmatprep.subr.mxu0 %v10430
    %11027 = vmatpush1.msra.mxu0 %v10429
    %11028 = vmatprep.subr.mxu0 %v10432
    %11029 = vmatpush1.msra.mxu0 %v10431
    %11030 = vmatprep.subr.mxu0 %v10434
    %11031 = vmatpush1.msra.mxu0 %v10433
    %11032 = vmatprep.subr.mxu0 %v10436
    %11033 = vmatpush1.msra.mxu0 %v10435
    %11034 = vmatprep.subr.mxu0 %v10438
    %11035 = vmatpush1.msra.mxu0 %v10437
    %11036 = vmatprep.subr.mxu0 %v10440
    %11037 = vmatpush1.msra.mxu0 %v10439
    %11038 = vmatprep.subr.mxu0 %v10442
    %11039 = vmatpush1.msra.mxu0 %v10441
    %11040 = vmatprep.subr.mxu0 %v10444
    %11041 = vmatpush1.msra.mxu0 %v10443
    %11042 = vmatprep.subr.mxu0 %v10446
    %11043 = vmatpush1.msra.mxu0 %v10445
    %11044 = vmatprep.subr.mxu0 %v10448
    %11045 = vmatpush1.msra.mxu0 %v10447
    %11046 = vmatprep.subr.mxu0 %v10450
    %11047 = vmatpush1.msra.mxu0 %v10449
    %11048 = vmatprep.mubr.f32.mxu0 %v10744
    %11049 = vmatmul.mubr.f32.gmra.mrb[0].mxu0 %v10743
    %v11050 = vpop.f32.mrb[0].mxu0
    %v11051 = vadd.f32 %v10980, %v11050
    %v11052 = vpop.f32.mrb[0].mxu0
    %v11053 = vadd.f32 %v10982, %v11052
    %11054 = vdwg.mxu0
    %11055 = vmatprep.subr.mxu0 %v10452
    %11056 = vmatpush1.msra.mxu0 %v10451
    %11057 = vmatprep.subr.mxu0 %v10454
    %11058 = vmatpush1.msra.mxu0 %v10453
    %11059 = vmatprep.subr.mxu0 %v10456
    %11060 = vmatpush1.msra.mxu0 %v10455
    %11061 = vmatprep.subr.mxu0 %v10458
    %11062 = vmatpush1.msra.mxu0 %v10457
    %11063 = vmatprep.subr.mxu0 %v10460
    %11064 = vmatpush1.msra.mxu0 %v10459
    %11065 = vmatprep.subr.mxu0 %v10462
    %11066 = vmatpush1.msra.mxu0 %v10461
    %11067 = vmatprep.subr.mxu0 %v10464
    %11068 = vmatpush1.msra.mxu0 %v10463
    %11069 = vmatprep.subr.mxu0 %v10466
    %11070 = vmatpush1.msra.mxu0 %v10465
    %11071 = vmatprep.subr.mxu0 %v10468
    %11072 = vmatpush1.msra.mxu0 %v10467
    %11073 = vmatprep.subr.mxu0 %v10470
    %11074 = vmatpush1.msra.mxu0 %v10469
    %11075 = vmatprep.subr.mxu0 %v10472
    %11076 = vmatpush1.msra.mxu0 %v10471
    %11077 = vmatprep.subr.mxu0 %v10474
    %11078 = vmatpush1.msra.mxu0 %v10473
    %11079 = vmatprep.subr.mxu0 %v10476
    %11080 = vmatpush1.msra.mxu0 %v10475
    %11081 = vmatprep.subr.mxu0 %v10478
    %11082 = vmatpush1.msra.mxu0 %v10477
    %11083 = vmatprep.subr.mxu0 %v10480
    %11084 = vmatpush1.msra.mxu0 %v10479
    %11085 = vmatprep.subr.mxu0 %v10482
    %11086 = vmatpush1.msra.mxu0 %v10481
    %11087 = vmatprep.subr.mxu0 0.0
    %11088 = vmatpush1.msra.mxu0 0.0
    %11089 = vmatprep.subr.mxu0 0.0
    %11090 = vmatpush1.msra.mxu0 0.0
    %11091 = vmatprep.subr.mxu0 0.0
    %11092 = vmatpush1.msra.mxu0 0.0
    %11093 = vmatprep.subr.mxu0 0.0
    %11094 = vmatpush1.msra.mxu0 0.0
    %11095 = vmatprep.subr.mxu0 0.0
    %11096 = vmatpush1.msra.mxu0 0.0
    %11097 = vmatprep.subr.mxu0 0.0
    %11098 = vmatpush1.msra.mxu0 0.0
    %11099 = vmatprep.subr.mxu0 0.0
    %11100 = vmatpush1.msra.mxu0 0.0
    %11101 = vmatprep.subr.mxu0 0.0
    %11102 = vmatpush1.msra.mxu0 0.0
    %11103 = vmatprep.subr.mxu0 0.0
    %11104 = vmatpush1.msra.mxu0 0.0
    %11105 = vmatprep.subr.mxu0 0.0
    %11106 = vmatpush1.msra.mxu0 0.0
    %11107 = vmatprep.subr.mxu0 0.0
    %11108 = vmatpush1.msra.mxu0 0.0
    %11109 = vmatprep.subr.mxu0 0.0
    %11110 = vmatpush1.msra.mxu0 0.0
    %11111 = vmatprep.subr.mxu0 0.0
    %11112 = vmatpush1.msra.mxu0 0.0
    %11113 = vmatprep.subr.mxu0 0.0
    %11114 = vmatpush1.msra.mxu0 0.0
    %11115 = vmatprep.subr.mxu0 0.0
    %11116 = vmatpush1.msra.mxu0 0.0
    %11117 = vmatprep.subr.mxu0 0.0
    %11118 = vmatpush1.msra.mxu0 0.0
    %11119 = vmatprep.mubr.f32.mxu0 0.0
    %11120 = vmatmul.mubr.f32.gmra.mrb[0].mxu0 %v10761
    %v11121 = vpop.f32.mrb[0].mxu0
    %v11122 = vadd.f32 %v11051, %v11121
    %v11123 = vpop.f32.mrb[0].mxu0
    %v11124 = vadd.f32 %v11053, %v11123
    %11125 = vdwg.mxu0
    %v11126 = vmax.f32 %v11122, 0.0
    %v11127 = vmax.f32 %v11124, 0.0
    %v11130 = vcombine.low %v11126, %v11127
    %v11131 = vcombine.high %v11126, %v11127
    %v11133 = vunpack.c.l.s4 1983009808
    %v11134 = vunpack.c.0.s8 %v11133
    %v11135 = vlaneseq
    %v11136 = vshrl.u32 %v11135, 7
    %v11137 = vsub.s32 %v11134, %v11136
    %v11138 = vrot.slane %v11130, %v11137
    %v11140 = vunpack.c.l.s4 1983009808
    %v11141 = vunpack.c.0.s8 %v11140
    %v11142 = vlaneseq
    %v11143 = vshrl.u32 %v11142, 7
    %v11144 = vsub.s32 %v11141, %v11143
    %v11145 = vrot.slane %v11131, %v11144
    %v11146 = vcombine.high %v11138, %v11138
    %v11147 = vcombine.high %v11145, %v11145
    %v11149 = vunpack.c.l.s4 1983009808
    %v11150 = vunpack.c.0.s8 %v11149
    %v11151 = vlaneseq
    %v11152 = vshrl.u32 %v11151, 7
    %v11153 = vsub.s32 %v11150, %v11152
    %v11154 = vrot.slane %v11138, %v11153
    %v11155 = vcombine.high %v11154, %v11154
    %v11157 = vunpack.c.l.s4 1983009808
    %v11158 = vunpack.c.0.s8 %v11157
    %v11159 = vlaneseq
    %v11160 = vshrl.u32 %v11159, 7
    %v11161 = vsub.s32 %v11158, %v11160
    %v11162 = vrot.slane %v11146, %v11161
    %v11163 = vcombine.high %v11162, %v11162
    %v11165 = vunpack.c.l.s4 1983009808
    %v11166 = vunpack.c.0.s8 %v11165
    %v11167 = vlaneseq
    %v11168 = vshrl.u32 %v11167, 7
    %v11169 = vsub.s32 %v11166, %v11168
    %v11170 = vrot.slane %v11145, %v11169
    %v11171 = vcombine.high %v11170, %v11170
    %v11173 = vunpack.c.l.s4 1983009808
    %v11174 = vunpack.c.0.s8 %v11173
    %v11175 = vlaneseq
    %v11176 = vshrl.u32 %v11175, 7
    %v11177 = vsub.s32 %v11174, %v11176
    %v11178 = vrot.slane %v11147, %v11177
    %v11179 = vcombine.high %v11178, %v11178
    %v11188 = vsel %vm10074, %v11154, -inf
    %v11189 = vrot.slane %v11188, 4
    %v11190 = vmax.f32 %v11188, %v11189
    %v11191 = vrot.slane %v11190, 2
    %v11192 = vmax.f32 %v11190, %v11191
    %v11193 = vrot.slane %v11192, 1
    %v11194 = vmax.f32 %v11192, %v11193
    %v11195 = vsel %vm10074, %v11155, -inf
    %v11196 = vrot.slane %v11195, 4
    %v11197 = vmax.f32 %v11195, %v11196
    %v11198 = vrot.slane %v11197, 2
    %v11199 = vmax.f32 %v11197, %v11198
    %v11200 = vrot.slane %v11199, 1
    %v11201 = vmax.f32 %v11199, %v11200
    %v11202 = vsel %vm10074, %v11162, -inf
    %v11203 = vrot.slane %v11202, 4
    %v11204 = vmax.f32 %v11202, %v11203
    %v11205 = vrot.slane %v11204, 2
    %v11206 = vmax.f32 %v11204, %v11205
    %v11207 = vrot.slane %v11206, 1
    %v11208 = vmax.f32 %v11206, %v11207
    %v11209 = vsel %vm10074, %v11163, -inf
    %v11210 = vrot.slane %v11209, 4
    %v11211 = vmax.f32 %v11209, %v11210
    %v11212 = vrot.slane %v11211, 2
    %v11213 = vmax.f32 %v11211, %v11212
    %v11214 = vrot.slane %v11213, 1
    %v11215 = vmax.f32 %v11213, %v11214
    %v11216 = vsel %vm10074, %v11170, -inf
    %v11217 = vrot.slane %v11216, 4
    %v11218 = vmax.f32 %v11216, %v11217
    %v11219 = vrot.slane %v11218, 2
    %v11220 = vmax.f32 %v11218, %v11219
    %v11221 = vrot.slane %v11220, 1
    %v11222 = vmax.f32 %v11220, %v11221
    %v11223 = vsel %vm10074, %v11171, -inf
    %v11224 = vrot.slane %v11223, 4
    %v11225 = vmax.f32 %v11223, %v11224
    %v11226 = vrot.slane %v11225, 2
    %v11227 = vmax.f32 %v11225, %v11226
    %v11228 = vrot.slane %v11227, 1
    %v11229 = vmax.f32 %v11227, %v11228
    %v11230 = vsel %vm10074, %v11178, -inf
    %v11231 = vrot.slane %v11230, 4
    %v11232 = vmax.f32 %v11230, %v11231
    %v11233 = vrot.slane %v11232, 2
    %v11234 = vmax.f32 %v11232, %v11233
    %v11235 = vrot.slane %v11234, 1
    %v11236 = vmax.f32 %v11234, %v11235
    %v11237 = vsel %vm10074, %v11179, -inf
    %v11238 = vrot.slane %v11237, 4
    %v11239 = vmax.f32 %v11237, %v11238
    %v11240 = vrot.slane %v11239, 2
    %v11241 = vmax.f32 %v11239, %v11240
    %v11242 = vrot.slane %v11241, 1
    %v11243 = vmax.f32 %v11241, %v11242
    %v11244 = vmax.f32 %v11194, %v11208
    %v11245 = vmax.f32 %v11201, %v11215
    %v11246 = vmax.f32 %v11222, %v11236
    %v11247 = vmax.f32 %v11229, %v11243
    %v11248 = vadd.f32 %v11244, 0.0
    %v11249 = vadd.f32 %v11245, 0.0
    %v11250 = vadd.f32 %v11246, 0.0
    %v11251 = vadd.f32 %v11247, 0.0
    %v11252 = vld [vmem:[#allocation14] sm:$0xff]
    %v11253 = vld [vmem:[#allocation14 + $0x8] sm:$0xff]
    %v11254 = vld [vmem:[#allocation14 + $0x10] sm:$0xff]
    %v11255 = vld [vmem:[#allocation14 + $0x18] sm:$0xff]
    %v11256 = vld [vmem:[#allocation14 + $0x20] sm:$0xff]
    %v11257 = vld [vmem:[#allocation14 + $0x28] sm:$0xff]
    %v11258 = vld [vmem:[#allocation14 + $0x30] sm:$0xff]
    %v11259 = vld [vmem:[#allocation14 + $0x38] sm:$0xff]
    %v11260 = vld [vmem:[#allocation14 + $0x40] sm:$0xff]
    %v11261 = vld [vmem:[#allocation14 + $0x48] sm:$0xff]
    %v11262 = vld [vmem:[#allocation14 + $0x50] sm:$0xff]
    %v11263 = vld [vmem:[#allocation14 + $0x58] sm:$0xff]
    %v11264 = vld [vmem:[#allocation14 + $0x60] sm:$0xff]
    %v11265 = vld [vmem:[#allocation14 + $0x68] sm:$0xff]
    %v11266 = vld [vmem:[#allocation14 + $0x70] sm:$0xff]
    %v11267 = vld [vmem:[#allocation14 + $0x78] sm:$0xff]
    %v11268 = vld [vmem:[#allocation14 + $0x80] sm:$0xff]
    %v11269 = vld [vmem:[#allocation14 + $0x88] sm:$0xff]
    %v11270 = vld [vmem:[#allocation14 + $0x90] sm:$0xff]
    %v11271 = vld [vmem:[#allocation14 + $0x98] sm:$0xff]
    %v11272 = vld [vmem:[#allocation14 + $0xa0] sm:$0xff]
    %v11273 = vld [vmem:[#allocation14 + $0xa8] sm:$0xff]
    %v11274 = vld [vmem:[#allocation14 + $0xb0] sm:$0xff]
    %v11275 = vld [vmem:[#allocation14 + $0xb8] sm:$0xff]
    %v11276 = vld [vmem:[#allocation14 + $0xc0] sm:$0xff]
    %v11277 = vld [vmem:[#allocation14 + $0xc8] sm:$0xff]
    %v11278 = vld [vmem:[#allocation14 + $0xd0] sm:$0xff]
    %v11279 = vld [vmem:[#allocation14 + $0xd8] sm:$0xff]
    %v11280 = vld [vmem:[#allocation14 + $0xe0] sm:$0xff]
    %v11281 = vld [vmem:[#allocation14 + $0xe8] sm:$0xff]
    %v11282 = vld [vmem:[#allocation14 + $0xf0] sm:$0xff]
    %v11283 = vld [vmem:[#allocation14 + $0xf8] sm:$0xff]
    %v11284 = vld [vmem:[#allocation16] sm:$0x1]
    %v11286 = vlaneseq
    %v11287 = vshrl.u32 %v11286, 7
    %v11288 = vsub.s32 0, %v11287
    %v11289 = vrot.slane %v11284, %v11288
    %v11295 = vsel %vm7391, %v11250, %v11248
    %v11296 = vsel %vm7391, %v11251, %v11249
    %11299 = vmatprep.subr.mxu0 0.0
    %11300 = vmatpush1.msra.mxu0 %v11252
    %11301 = vmatprep.subr.mxu0 0.0
    %11302 = vmatpush1.msra.mxu0 %v11253
    %11303 = vmatprep.subr.mxu0 0.0
    %11304 = vmatpush1.msra.mxu0 %v11254
    %11305 = vmatprep.subr.mxu0 0.0
    %11306 = vmatpush1.msra.mxu0 %v11255
    %11307 = vmatprep.subr.mxu0 0.0
    %11308 = vmatpush1.msra.mxu0 %v11256
    %11309 = vmatprep.subr.mxu0 0.0
    %11310 = vmatpush1.msra.mxu0 %v11257
    %11311 = vmatprep.subr.mxu0 0.0
    %11312 = vmatpush1.msra.mxu0 %v11258
    %11313 = vmatprep.subr.mxu0 0.0
    %11314 = vmatpush1.msra.mxu0 %v11259
    %11315 = vmatprep.subr.mxu0 0.0
    %11316 = vmatpush1.msra.mxu0 %v11260
    %11317 = vmatprep.subr.mxu0 0.0
    %11318 = vmatpush1.msra.mxu0 %v11261
    %11319 = vmatprep.subr.mxu0 0.0
    %11320 = vmatpush1.msra.mxu0 %v11262
    %11321 = vmatprep.subr.mxu0 0.0
    %11322 = vmatpush1.msra.mxu0 %v11263
    %11323 = vmatprep.subr.mxu0 0.0
    %11324 = vmatpush1.msra.mxu0 %v11264
    %11325 = vmatprep.subr.mxu0 0.0
    %11326 = vmatpush1.msra.mxu0 %v11265
    %11327 = vmatprep.subr.mxu0 0.0
    %11328 = vmatpush1.msra.mxu0 %v11266
    %11329 = vmatprep.subr.mxu0 0.0
    %11330 = vmatpush1.msra.mxu0 %v11267
    %11331 = vmatprep.subr.mxu0 0.0
    %11332 = vmatpush1.msra.mxu0 %v11268
    %11333 = vmatprep.subr.mxu0 0.0
    %11334 = vmatpush1.msra.mxu0 %v11269
    %11335 = vmatprep.subr.mxu0 0.0
    %11336 = vmatpush1.msra.mxu0 %v11270
    %11337 = vmatprep.subr.mxu0 0.0
    %11338 = vmatpush1.msra.mxu0 %v11271
    %11339 = vmatprep.subr.mxu0 0.0
    %11340 = vmatpush1.msra.mxu0 %v11272
    %11341 = vmatprep.subr.mxu0 0.0
    %11342 = vmatpush1.msra.mxu0 %v11273
    %11343 = vmatprep.subr.mxu0 0.0
    %11344 = vmatpush1.msra.mxu0 %v11274
    %11345 = vmatprep.subr.mxu0 0.0
    %11346 = vmatpush1.msra.mxu0 %v11275
    %11347 = vmatprep.subr.mxu0 0.0
    %11348 = vmatpush1.msra.mxu0 %v11276
    %11349 = vmatprep.subr.mxu0 0.0
    %11350 = vmatpush1.msra.mxu0 %v11277
    %11351 = vmatprep.subr.mxu0 0.0
    %11352 = vmatpush1.msra.mxu0 %v11278
    %11353 = vmatprep.subr.mxu0 0.0
    %11354 = vmatpush1.msra.mxu0 %v11279
    %11355 = vmatprep.subr.mxu0 0.0
    %11356 = vmatpush1.msra.mxu0 %v11280
    %11357 = vmatprep.subr.mxu0 0.0
    %11358 = vmatpush1.msra.mxu0 %v11281
    %11359 = vmatprep.subr.mxu0 0.0
    %11360 = vmatpush1.msra.mxu0 %v11282
    %11361 = vmatprep.subr.mxu0 0.0
    %11362 = vmatpush1.msra.mxu0 %v11283
    %11363 = vmatprep.mubr.f32.mxu0 %v11296
    %11364 = vmatmul.mubr.f32.gmra.mrb[0].mxu0 %v11295
    %v11365 = vpop.f32.mrb[0].mxu0
    %v11366 = vadd.f32 %v11289, %v11365
    %v11367 = vpop.f32.mrb[0].mxu0
    %11368 = vdwg.mxu0
    %v11369 = vmax.f32 %v11366, 0.0
    %v11370 = vld [vmem:[%s11] sm:$0xff]
    %v11371 = vld [vmem:[%s11 + $0x8] sm:$0xff]
    %v11372 = vld [vmem:[%s11 + $0x10] sm:$0xff]
    %v11373 = vld [vmem:[%s11 + $0x18] sm:$0xff]
    %v11374 = vld [vmem:[%s11 + $0x20] sm:$0xff]
    %v11375 = vld [vmem:[%s11 + $0x28] sm:$0xff]
    %v11376 = vld [vmem:[%s11 + $0x30] sm:$0xff]
    %v11377 = vld [vmem:[%s11 + $0x38] sm:$0xff]
    %v11378 = vld [vmem:[%s11 + $0x40] sm:$0xff]
    %v11379 = vld [vmem:[%s11 + $0x48] sm:$0xff]
    %v11380 = vld [vmem:[%s11 + $0x50] sm:$0xff]
    %v11381 = vld [vmem:[%s11 + $0x58] sm:$0xff]
    %v11382 = vld [vmem:[%s11 + $0x60] sm:$0xff]
    %v11383 = vld [vmem:[%s11 + $0x68] sm:$0xff]
    %v11384 = vld [vmem:[%s11 + $0x70] sm:$0xff]
    %v11385 = vld [vmem:[%s11 + $0x78] sm:$0xff]
    %v11386 = vld [vmem:[#allocation17] sm:$0x1]
    %v11388 = vlaneseq
    %v11389 = vshrl.u32 %v11388, 7
    %v11390 = vsub.s32 0, %v11389
    %v11391 = vrot.slane %v11386, %v11390
    %11393 = vmatprep.subr.mxu0 0.0
    %11394 = vmatpush1.msra.mxu0 %v11370
    %11395 = vmatprep.subr.mxu0 0.0
    %11396 = vmatpush1.msra.mxu0 %v11371
    %11397 = vmatprep.subr.mxu0 0.0
    %11398 = vmatpush1.msra.mxu0 %v11372
    %11399 = vmatprep.subr.mxu0 0.0
    %11400 = vmatpush1.msra.mxu0 %v11373
    %11401 = vmatprep.subr.mxu0 0.0
    %11402 = vmatpush1.msra.mxu0 %v11374
    %11403 = vmatprep.subr.mxu0 0.0
    %11404 = vmatpush1.msra.mxu0 %v11375
    %11405 = vmatprep.subr.mxu0 0.0
    %11406 = vmatpush1.msra.mxu0 %v11376
    %11407 = vmatprep.subr.mxu0 0.0
    %11408 = vmatpush1.msra.mxu0 %v11377
    %11409 = vmatprep.subr.mxu0 0.0
    %11410 = vmatpush1.msra.mxu0 %v11378
    %11411 = vmatprep.subr.mxu0 0.0
    %11412 = vmatpush1.msra.mxu0 %v11379
    %11413 = vmatprep.subr.mxu0 0.0
    %11414 = vmatpush1.msra.mxu0 %v11380
    %11415 = vmatprep.subr.mxu0 0.0
    %11416 = vmatpush1.msra.mxu0 %v11381
    %11417 = vmatprep.subr.mxu0 0.0
    %11418 = vmatpush1.msra.mxu0 %v11382
    %11419 = vmatprep.subr.mxu0 0.0
    %11420 = vmatpush1.msra.mxu0 %v11383
    %11421 = vmatprep.subr.mxu0 0.0
    %11422 = vmatpush1.msra.mxu0 %v11384
    %11423 = vmatprep.subr.mxu0 0.0
    %11424 = vmatpush1.msra.mxu0 %v11385
    %11425 = vmatprep.subr.mxu0 0.0
    %11426 = vmatpush1.msra.mxu0 0.0
    %11427 = vmatprep.subr.mxu0 0.0
    %11428 = vmatpush1.msra.mxu0 0.0
    %11429 = vmatprep.subr.mxu0 0.0
    %11430 = vmatpush1.msra.mxu0 0.0
    %11431 = vmatprep.subr.mxu0 0.0
    %11432 = vmatpush1.msra.mxu0 0.0
    %11433 = vmatprep.subr.mxu0 0.0
    %11434 = vmatpush1.msra.mxu0 0.0
    %11435 = vmatprep.subr.mxu0 0.0
    %11436 = vmatpush1.msra.mxu0 0.0
    %11437 = vmatprep.subr.mxu0 0.0
    %11438 = vmatpush1.msra.mxu0 0.0
    %11439 = vmatprep.subr.mxu0 0.0
    %11440 = vmatpush1.msra.mxu0 0.0
    %11441 = vmatprep.subr.mxu0 0.0
    %11442 = vmatpush1.msra.mxu0 0.0
    %11443 = vmatprep.subr.mxu0 0.0
    %11444 = vmatpush1.msra.mxu0 0.0
    %11445 = vmatprep.subr.mxu0 0.0
    %11446 = vmatpush1.msra.mxu0 0.0
    %11447 = vmatprep.subr.mxu0 0.0
    %11448 = vmatpush1.msra.mxu0 0.0
    %11449 = vmatprep.subr.mxu0 0.0
    %11450 = vmatpush1.msra.mxu0 0.0
    %11451 = vmatprep.subr.mxu0 0.0
    %11452 = vmatpush1.msra.mxu0 0.0
    %11453 = vmatprep.subr.mxu0 0.0
    %11454 = vmatpush1.msra.mxu0 0.0
    %11455 = vmatprep.subr.mxu0 0.0
    %11456 = vmatpush1.msra.mxu0 0.0
    %11457 = vmatprep.mubr.f32.mxu0 0.0
    %11458 = vmatmul.mubr.f32.gmra.mrb[0].mxu0 %v11369
    %v11459 = vpop.f32.mrb[0].mxu0
    %v11460 = vadd.f32 %v11391, %v11459
    %v11461 = vpop.f32.mrb[0].mxu0
    %11462 = vdwg.mxu0
    %v11463 = vmax.f32 %v11460, 0.0
    %v11464 = vld [vmem:[%s13] sm:$0xff]
    %v11465 = vld [vmem:[%s13 + $0x8] sm:$0xff]
    %v11466 = vld [vmem:[%s13 + $0x10] sm:$0xff]
    %v11467 = vld [vmem:[%s13 + $0x18] sm:$0xff]
    %v11468 = vld [vmem:[%s13 + $0x20] sm:$0xff]
    %v11469 = vld [vmem:[%s13 + $0x28] sm:$0xff]
    %v11470 = vld [vmem:[%s13 + $0x30] sm:$0xff]
    %v11471 = vld [vmem:[%s13 + $0x38] sm:$0xff]
    %v11472 = vld [vmem:[#allocation2] sm:$0x1]
    %v11474 = vlaneseq
    %v11475 = vshrl.u32 %v11474, 7
    %v11476 = vsub.s32 0, %v11475
    %v11477 = vrot.slane %v11472, %v11476
    %v11480 = vsel %vm8011, %v11463, 0
    %11482 = vmatprep.subr.mxu0 0.0
    %11483 = vmatpush1.msra.mxu0 %v11464
    %11484 = vmatprep.subr.mxu0 0.0
    %11485 = vmatpush1.msra.mxu0 %v11465
    %11486 = vmatprep.subr.mxu0 0.0
    %11487 = vmatpush1.msra.mxu0 %v11466
    %11488 = vmatprep.subr.mxu0 0.0
    %11489 = vmatpush1.msra.mxu0 %v11467
    %11490 = vmatprep.subr.mxu0 0.0
    %11491 = vmatpush1.msra.mxu0 %v11468
    %11492 = vmatprep.subr.mxu0 0.0
    %11493 = vmatpush1.msra.mxu0 %v11469
    %11494 = vmatprep.subr.mxu0 0.0
    %11495 = vmatpush1.msra.mxu0 %v11470
    %11496 = vmatprep.subr.mxu0 0.0
    %11497 = vmatpush1.msra.mxu0 %v11471
    %11498 = vmatprep.subr.mxu0 0.0
    %11499 = vmatpush1.msra.mxu0 0.0
    %11500 = vmatprep.subr.mxu0 0.0
    %11501 = vmatpush1.msra.mxu0 0.0
    %11502 = vmatprep.subr.mxu0 0.0
    %11503 = vmatpush1.msra.mxu0 0.0
    %11504 = vmatprep.subr.mxu0 0.0
    %11505 = vmatpush1.msra.mxu0 0.0
    %11506 = vmatprep.subr.mxu0 0.0
    %11507 = vmatpush1.msra.mxu0 0.0
    %11508 = vmatprep.subr.mxu0 0.0
    %11509 = vmatpush1.msra.mxu0 0.0
    %11510 = vmatprep.subr.mxu0 0.0
    %11511 = vmatpush1.msra.mxu0 0.0
    %11512 = vmatprep.subr.mxu0 0.0
    %11513 = vmatpush1.msra.mxu0 0.0
    %11514 = vmatprep.subr.mxu0 0.0
    %11515 = vmatpush1.msra.mxu0 0.0
    %11516 = vmatprep.subr.mxu0 0.0
    %11517 = vmatpush1.msra.mxu0 0.0
    %11518 = vmatprep.subr.mxu0 0.0
    %11519 = vmatpush1.msra.mxu0 0.0
    %11520 = vmatprep.subr.mxu0 0.0
    %11521 = vmatpush1.msra.mxu0 0.0
    %11522 = vmatprep.subr.mxu0 0.0
    %11523 = vmatpush1.msra.mxu0 0.0
    %11524 = vmatprep.subr.mxu0 0.0
    %11525 = vmatpush1.msra.mxu0 0.0
    %11526 = vmatprep.subr.mxu0 0.0
    %11527 = vmatpush1.msra.mxu0 0.0
    %11528 = vmatprep.subr.mxu0 0.0
    %11529 = vmatpush1.msra.mxu0 0.0
    %11530 = vmatprep.subr.mxu0 0.0
    %11531 = vmatpush1.msra.mxu0 0.0
    %11532 = vmatprep.subr.mxu0 0.0
    %11533 = vmatpush1.msra.mxu0 0.0
    %11534 = vmatprep.subr.mxu0 0.0
    %11535 = vmatpush1.msra.mxu0 0.0
    %11536 = vmatprep.subr.mxu0 0.0
    %11537 = vmatpush1.msra.mxu0 0.0
    %11538 = vmatprep.subr.mxu0 0.0
    %11539 = vmatpush1.msra.mxu0 0.0
    %11540 = vmatprep.subr.mxu0 0.0
    %11541 = vmatpush1.msra.mxu0 0.0
    %11542 = vmatprep.subr.mxu0 0.0
    %11543 = vmatpush1.msra.mxu0 0.0
    %11544 = vmatprep.subr.mxu0 0.0
    %11545 = vmatpush1.msra.mxu0 0.0
    %11546 = vmatprep.mubr.f32.mxu0 0.0
    %11547 = vmatmul.mubr.f32.gmra.mrb[0].mxu0 %v11480
    %v11548 = vpop.f32.mrb[0].mxu0
    %v11549 = vadd.f32 %v11477, %v11548
    %v11550 = vpop.f32.mrb[0].mxu0
    %11551 = vdwg.mxu0
    %v11552 = vxor.u32 %v11549, 2147483648
    %v11553 = vmul.f32 %v11552, 1.442695
    %v11554 = vpow.pop %v11553
    %v11555 = vadd.f32 %v11554, 1.0
    %v11556 = vrcp.pop %v11555
    %v11557 = vmul.f32 1.0, %v11556
    %v11558 = vmul.f32 %v11557, 180.0
    %vm11559 = vcmask 1024
    %11560 = vst.msk [vmem:[%s15] sm:$0x3] %vm11559, %v11558
    // Predicated region
    $region102: #{cnn_forward.1} parent=1 // pred_check
      _
    $region103: #{cnn_forward.1} parent=1 // pred_check_branch
      %11562 = sbr.rel (0) target = $region105
    $region104: #{cnn_forward.1} parent=1 // pred_region
      _
    $region105: #{cnn_forward.1} parent=1 // pred_fallthru
      _
    // Predicated region
    $region106: #{cnn_forward.1} parent=1 // pred_check
      _
    $region107: #{cnn_forward.1} parent=1 // pred_check_branch
      %11564 = sbr.rel (0) target = $region109
    $region108: #{cnn_forward.1} parent=1 // pred_region
      _
    $region109: #{cnn_forward.1} parent=1 // pred_fallthru
      _
    %11565 = vsyncpa [#allocation4], 1
    %11566 = vsyncpa [#allocation6], 1
    %11567 = vsyncpa [#allocation9], 1
    %11568 = vsyncpa [#allocation12], 1
    %11569 = vsyncpa [#allocation15], 1
    %11570 = vsyncpa [#allocation18], 1

</llo_original>
